<compile_context>
chip_gen: v5e
topology: v5e:2x2
jax: 0.10.0
libtpu: 0.0.40
codegen_flags: <defaults>
</compile_context>

<pallas_src>
import jax
import jax.numpy as jnp
from jax.experimental import pallas as pl
from jax.experimental.pallas import tpu as pltpu

HEADS = 6  # fixed by the module


def _dot(a, b):
    # Kernel-side matmul: DEFAULT precision (one bf16 MXU pass) — the biggest win on a
    # latency-bound serial chain of tiny matmuls.
    return jnp.dot(a, b, preferred_element_type=jnp.float32)


def _dot_ref(a, b):
    # Reference-side matmul: full fp32 ground truth.
    return jnp.dot(a, b, precision=jax.lax.Precision.HIGHEST,
                   preferred_element_type=jnp.float32)


# --------------------------- Fused GRUNet kernel --------------------------- #
def grunet_kernel(x_ref, h0_ref, wih_ref, whhp_ref, bih_ref, bhhn_ref,
                  w1_ref, b1_ref, w2_ref, b2_ref, w3_ref, b3_ref,
                  wout_ref, bout_ref,
                  out_ref, hcat_ref,
                  gi_scr, whh_scr):
    # x_ref:    (T*B, D)        time-major flattened input (row t*B + b == x[b, t])
    # h0_ref:   (B, HP)         fused initial hidden; head i at lanes [i*H, (i+1)*H)
    # wih_ref:  (D, 3*HP)       fused W_ih^T, gate-major slabs [r | z | n]
    # whhp_ref: (HEADS, H, 3H)  packed per-head W_hh^T (expanded to block-diag in-kernel)
    # bih_ref:  (1, 3*HP)       b_ih with b_hr/b_hz folded in; bhhn_ref: (1, HP) = b_hn
    # w1_ref:   (HEADS, HP, H)  interline1^T zero-padded rows; w2: (HEADS, H, H)
    # w3_ref:   (HEADS, H, HP)  interline3^T shifted to the head's output lanes
    # wout_ref: (HP, O) zero-padded rows; out_ref: (B, O); hcat_ref: (B, HP)
    # gi_scr:   VMEM (T*B, 3*HP); whh_scr: VMEM (HP, 3*HP)
    B, HP = h0_ref.shape
    T = x_ref.shape[0] // B
    H = w2_ref.shape[-1]

    # ---- (5) expand packed per-head W_hh into the block-diagonal scratch, once ----
    whh_scr[...] = jnp.zeros_like(whh_scr)
    for i in range(HEADS):
        lo = i * H
        for g in range(3):
            whh_scr[lo:lo + H, g * HP + lo:g * HP + lo + H] = \
                whhp_ref[i, :, g * H:(g + 1) * H]

    # ---- (2) hoisted input projection for all timesteps, staged to VMEM scratch ----
    # TODO(synk): if T*B grows, chunk this projection over T (emit_pipeline) instead of
    # materializing the full (T*B, 3*HP) scratch.
    gi_scr[...] = _dot(x_ref[...], wih_ref[...]) + bih_ref[...]

    bhh_n = bhhn_ref[...]                                   # (1, HP)

    # ---- (3) fused GRU recurrence: carry is just h; one (B,HP)x(HP,3HP) matmul/step ----
    def gru_step(t, h):
        start = pl.multiple_of(t * B, B)
        gi = gi_scr[pl.ds(start, B), :]                     # (B, 3*HP)
        gh = _dot(h, whh_scr[...])                          # (B, 3*HP), no bias add
        rz = jax.nn.sigmoid(gi[:, :2 * HP] + gh[:, :2 * HP])   # (6) one contiguous slab
        r, z = rz[:, :HP], rz[:, HP:]
        n = jnp.tanh(gi[:, 2 * HP:] + r * (gh[:, 2 * HP:] + bhh_n))
        return (1.0 - z) * n + z * h

    h = jax.lax.fori_loop(0, T, gru_step, h0_ref[...], unroll=True)

    # (7) full padded lane-dense slab (unmasked stores); sliced to 6H outside the kernel
    hcat_ref[...] = h

    # ---- (4) interline1/2/3 chain + lin_out: cat stays a vreg value ----
    # cat holds [mlp_0 .. mlp_{i-1}, 0 ...]; slot i is filled with last_i via a masked
    # select (h already has head i at those lanes), and mlp_i lands back in slot i
    # because w3/b3 were pre-shifted to that lane range on the host.  Zero-padded w1
    # rows make the truncated-cat semantics exact.
    lane = jax.lax.broadcasted_iota(jnp.int32, (B, HP), 1)
    cat = jnp.zeros((B, HP), jnp.float32)
    for i in range(HEADS):
        sel = (lane >= i * H) & (lane < (i + 1) * H)
        cat_in = jnp.where(sel, h, cat)                     # slot i := last_i
        u = _dot(jax.nn.relu(cat_in), w1_ref[i]) + b1_ref[i]
        u = _dot(jax.nn.relu(u), w2_ref[i]) + b2_ref[i]
        v = _dot(jax.nn.relu(u), w3_ref[i]) + b3_ref[i]     # (B, HP): nonzero only in slot i
        cat = jnp.where(sel, v, cat)                        # slot i := mlp_i
    out_ref[...] = _dot(jax.nn.relu(cat), wout_ref[...]) + bout_ref[...]


def run_grunet(x_flat, h0_f, wih_f, whh_p, bih_f, bhhn_f,
               w1p, b1, w2, b2, w3p, b3p, woutp, bout, *, B, O):
    TB, D = x_flat.shape
    HP = h0_f.shape[1]
    H = w2.shape[-1]
    G = 3 * HP

    def full(shape):
        n = len(shape)
        return pl.BlockSpec(shape, lambda i, n=n: (0,) * n)

    # NOTE (v7x): grid=(1,) runs on one TensorCore; at B=8/H=32 the cross-core sync would
    # exceed the work, so the 3/3 head split across cores is intentionally not done.
    return pl.pallas_call(
        grunet_kernel,
        out_shape=(jax.ShapeDtypeStruct((B, O), jnp.float32),
                   jax.ShapeDtypeStruct((B, HP), jnp.float32)),
        grid=(1,),
        in_specs=[
            full((TB, D)),                 # x (time-major, flattened)
            full((B, HP)),                 # fused h0
            full((D, G)),                  # fused W_ih^T (gate-major r|z|n)
            full((HEADS, H, 3 * H)),       # packed per-head W_hh^T
            full((1, G)),                  # fused b_ih (+ folded b_hr/b_hz)
            full((1, HP)),                 # b_hn
            full((HEADS, HP, H)),          # interline1^T (zero-padded rows)
            full((HEADS, 1, H)),
            full((HEADS, H, H)),           # interline2^T
            full((HEADS, 1, H)),
            full((HEADS, H, HP)),          # interline3^T (output lanes pre-shifted)
            full((HEADS, 1, HP)),
            full((HP, O)),                 # lin_out^T (zero-padded rows)
            full((1, O)),
        ],
        out_specs=[full((B, O)), full((B, HP))],
        scratch_shapes=[pltpu.VMEM((TB, G), jnp.float32),    # staged gi_all
                        pltpu.VMEM((HP, G), jnp.float32)],   # expanded block-diag W_hh
        compiler_params=pltpu.CompilerParams(
            dimension_semantics=("arbitrary",)),
    )(x_flat, h0_f, wih_f, whh_p, bih_f, bhhn_f,
      w1p, b1, w2, b2, w3p, b3p, woutp, bout)


# -------------------- Parameter fusion (host-side, once) ------------------- #
def fuse_gru_params(p, *, D, H, HP):
    """Fused W_ih / biases in gate-major [r|z|n] layout; b_hr/b_hz folded into b_ih."""
    wih = jnp.zeros((D, 3, HP), jnp.float32)
    bih = jnp.zeros((1, 3, HP), jnp.float32)
    bhh_n = jnp.zeros((1, HP), jnp.float32)
    for i in range(HEADS):
        lo, hi = i * H, (i + 1) * H
        wih = wih.at[:, :, lo:hi].set(p["wih_t"][i].reshape(D, 3, H))
        bi = p["bih"][i, 0].reshape(3, H)
        bh = p["bhh"][i, 0].reshape(3, H)
        bih = bih.at[0, 0, lo:hi].set(bi[0] + bh[0])   # r: b_ir + b_hr
        bih = bih.at[0, 1, lo:hi].set(bi[1] + bh[1])   # z: b_iz + b_hz
        bih = bih.at[0, 2, lo:hi].set(bi[2])           # n: b_in only
        bhh_n = bhh_n.at[0, lo:hi].set(bh[2])          # b_hn stays inside r * (...)
    return wih.reshape(D, 3 * HP), bih.reshape(1, 3 * HP), bhh_n


def fuse_mlp_params(p, *, H, O, HP):
    """Pad interline1/lin_out rows to HP and shift interline3 outputs to slot lanes."""
    HH = HEADS * H
    w1p = jnp.pad(p["w1"], ((0, 0), (0, HP - HH), (0, 0)))          # (HEADS, HP, H)
    w3p = jnp.zeros((HEADS, H, HP), jnp.float32)
    b3p = jnp.zeros((HEADS, 1, HP), jnp.float32)
    for i in range(HEADS):
        lo, hi = i * H, (i + 1) * H
        w3p = w3p.at[i, :, lo:hi].set(p["w3"][i])
        b3p = b3p.at[i, 0, lo:hi].set(p["b3"][i, 0])
    woutp = jnp.pad(p["wout"], ((0, HP - HH), (0, 0)))               # (HP, O)
    return w1p, w3p, b3p, woutp


# ------------------------------- Wrapper ----------------------------------- #
def grunet_forward(x_btd, h0, p):
    """x_btd: (B, T, D); h0: (HEADS, B, H). Returns (out (B, O), h_new (HEADS, B, H))."""
    B, T, D = x_btd.shape
    H = p["w2"].shape[-1]
    O = p["wout"].shape[-1]
    HH = HEADS * H
    HP = ((HH + 127) // 128) * 128          # pad fused hidden to a 128-lane multiple

    wih_f, bih_f, bhhn_f = fuse_gru_params(p, D=D, H=H, HP=HP)
    w1p, w3p, b3p, woutp = fuse_mlp_params(p, H=H, O=O, HP=HP)

    # time-major flattened input: row t*B + b == x[b, t]
    x_flat = jnp.transpose(x_btd, (1, 0, 2)).reshape(T * B, D)
    # fused initial hidden: head i at lanes [i*H, (i+1)*H); padded lanes are zero
    h0_f = jnp.pad(jnp.transpose(h0, (1, 0, 2)).reshape(B, HH),
                   ((0, 0), (0, HP - HH)))

    out, h_cat = run_grunet(x_flat, h0_f, wih_f, p["whh_t"], bih_f, bhhn_f,
                            w1p, p["b1"], p["w2"], p["b2"], w3p, b3p,
                            woutp, p["bout"], B=B, O=O)
    h_new = jnp.transpose(h_cat[:, :HH].reshape(B, HEADS, H), (1, 0, 2))
    return out, h_new


# --------------------------- Pure-JAX reference ---------------------------- #
def ref_forward(x, h0, p):
    B, T, D = x.shape
    H = p["w2"].shape[-1]
    last = []
    for i in range(HEADS):
        h = h0[i]
        for t in range(T):
            xt = x[:, t, :]
            gi = _dot_ref(xt, p["wih_t"][i]) + p["bih"][i, 0]
            gh = _dot_ref(h, p["whh_t"][i]) + p["bhh"][i, 0]
            r = jax.nn.sigmoid(gi[:, :H] + gh[:, :H])
            z = jax.nn.sigmoid(gi[:, H:2 * H] + gh[:, H:2 * H])
            n = jnp.tanh(gi[:, 2 * H:] + r * gh[:, 2 * H:])
            h = (1.0 - z) * n + z * h
        last.append(h)
    h_new = jnp.stack(last)

    def mlp(i, inp):
        o = _dot_ref(jax.nn.relu(inp), p["w1"][i][: inp.shape[1]]) + p["b1"][i, 0]
        o = _dot_ref(jax.nn.relu(o), p["w2"][i]) + p["b2"][i, 0]
        o = _dot_ref(jax.nn.relu(o), p["w3"][i]) + p["b3"][i, 0]
        return o

    cat = mlp(0, last[0])
    for i in range(1, HEADS):
        o = mlp(i, jnp.concatenate([cat, last[i]], axis=1))
        cat = jnp.concatenate([cat, o], axis=1)
    out = _dot_ref(jax.nn.relu(cat), p["wout"]) + p["bout"][0]
    return out, h_new


# ------------------------------- Params ------------------------------------ #
def init_params(key, D, H, O):
    ks = jax.random.split(key, 12)
    s = 1.0 / jnp.sqrt(H)
    u = lambda k, shape: jax.random.uniform(k, shape, jnp.float32, -s, s)
    # interline1[i] is Linear(H*(i+1), H); stored transposed and zero-padded to
    # (6H, H) rows so all heads stack into one array.  Padded rows are exactly 0.
    w1 = u(ks[4], (HEADS, HEADS * H, H))
    row = jnp.arange(HEADS * H)[None, :, None]
    valid = row < (jnp.arange(1, HEADS + 1) * H)[:, None, None]
    w1 = jnp.where(valid, w1, 0.0)
    return {
        # GRU (per head), pre-transposed: gate order r|z|n along the 3H axis
        "wih_t": u(ks[0], (HEADS, D, 3 * H)),
        "whh_t": u(ks[1], (HEADS, H, 3 * H)),
        "bih":   u(ks[2], (HEADS, 1, 3 * H)),
        "bhh":   u(ks[3], (HEADS, 1, 3 * H)),
        "w1": w1,
        "b1": u(ks[5], (HEADS, 1, H)),
        "w2": u(ks[6], (HEADS, H, H)),
        "b2": u(ks[7], (HEADS, 1, H)),
        "w3": u(ks[8], (HEADS, H, H)),
        "b3": u(ks[9], (HEADS, 1, H)),
        # lin_out: Linear(6H, O), transposed
        "wout": u(ks[10], (HEADS * H, O)),
        "bout": u(ks[11], (1, O)),
    }


if __name__ == "__main__":
    B, T, D, H, O = 8, 8, 8, 32, 16

    key = jax.random.PRNGKey(0)
    kx, kh, kp = jax.random.split(key, 3)
    x = jax.random.normal(kx, (B, T, D), jnp.float32)
    h0 = 0.1 * jax.random.normal(kh, (HEADS, B, H), jnp.float32)
    params = init_params(kp, D, H, O)

    out, h_new = grunet_forward(x, h0, params)
    out = jax.block_until_ready(out)
    h_new = jax.block_until_ready(h_new)

    out_ref, h_ref = ref_forward(x, h0, params)
    assert out.shape == (B, O) and h_new.shape == (HEADS, B, H)
    err_out = float(jnp.max(jnp.abs(out - out_ref)))
    err_h = float(jnp.max(jnp.abs(h_new - h_ref)))
    # Kernel matmuls use DEFAULT precision (single bf16 MXU pass) per the perf review,
    # while the reference is full fp32 (HIGHEST); the tolerance is loosened accordingly
    # (bf16 input rounding propagated through 8 recurrence steps + 19 chained matmuls).
    assert err_out < 5e-2, f"out mismatch: {err_out}"
    assert err_h < 2e-2, f"h mismatch: {err_h}"

    print("KERNEL_OK")
</pallas_src>

<mosaic_0001>
module attributes {stable_mosaic.version = 11 : i64} {
  func.func @grunet_kernel(%arg0: i32, %arg1: memref<64x8xf32, #tpu.memory_space<vmem>>, %arg2: memref<8x256xf32, #tpu.memory_space<vmem>>, %arg3: memref<8x768xf32, #tpu.memory_space<vmem>>, %arg4: memref<6x32x96xf32, #tpu.memory_space<vmem>>, %arg5: memref<1x768xf32, #tpu.memory_space<vmem>>, %arg6: memref<1x256xf32, #tpu.memory_space<vmem>>, %arg7: memref<6x256x32xf32, #tpu.memory_space<vmem>>, %arg8: memref<6x1x32xf32, #tpu.memory_space<vmem>>, %arg9: memref<6x32x32xf32, #tpu.memory_space<vmem>>, %arg10: memref<6x1x32xf32, #tpu.memory_space<vmem>>, %arg11: memref<6x32x256xf32, #tpu.memory_space<vmem>>, %arg12: memref<6x1x256xf32, #tpu.memory_space<vmem>>, %arg13: memref<256x16xf32, #tpu.memory_space<vmem>>, %arg14: memref<1x16xf32, #tpu.memory_space<vmem>>, %arg15: memref<8x16xf32, #tpu.memory_space<vmem>>, %arg16: memref<8x256xf32, #tpu.memory_space<vmem>>, %arg17: memref<64x768xf32, #tpu.memory_space<vmem>>, %arg18: memref<256x768xf32, #tpu.memory_space<vmem>>) attributes {dimension_semantics = [#tpu.dimension_semantics<arbitrary>], iteration_bounds = array<i64: 1>, scalar_prefetch = 0 : i64, scratch_operands = 2 : i64, tpu.core_type = #tpu.core_type<tc>, window_params = [{pipeline_mode = #tpu.pipeline_mode<synchronous>, transform_indices = @transform_0, window_bounds = array<i64: 64, 8>}, {pipeline_mode = #tpu.pipeline_mode<synchronous>, transform_indices = @transform_1, window_bounds = array<i64: 8, 256>}, {pipeline_mode = #tpu.pipeline_mode<synchronous>, transform_indices = @transform_2, window_bounds = array<i64: 8, 768>}, {pipeline_mode = #tpu.pipeline_mode<synchronous>, transform_indices = @transform_3, window_bounds = array<i64: 6, 32, 96>}, {pipeline_mode = #tpu.pipeline_mode<synchronous>, transform_indices = @transform_4, window_bounds = array<i64: 1, 768>}, {pipeline_mode = #tpu.pipeline_mode<synchronous>, transform_indices = @transform_5, window_bounds = array<i64: 1, 256>}, {pipeline_mode = #tpu.pipeline_mode<synchronous>, transform_indices = @transform_6, window_bounds = array<i64: 6, 256, 32>}, {pipeline_mode = #tpu.pipeline_mode<synchronous>, transform_indices = @transform_7, window_bounds = array<i64: 6, 1, 32>}, {pipeline_mode = #tpu.pipeline_mode<synchronous>, transform_indices = @transform_8, window_bounds = array<i64: 6, 32, 32>}, {pipeline_mode = #tpu.pipeline_mode<synchronous>, transform_indices = @transform_9, window_bounds = array<i64: 6, 1, 32>}, {pipeline_mode = #tpu.pipeline_mode<synchronous>, transform_indices = @transform_10, window_bounds = array<i64: 6, 32, 256>}, {pipeline_mode = #tpu.pipeline_mode<synchronous>, transform_indices = @transform_11, window_bounds = array<i64: 6, 1, 256>}, {pipeline_mode = #tpu.pipeline_mode<synchronous>, transform_indices = @transform_12, window_bounds = array<i64: 256, 16>}, {pipeline_mode = #tpu.pipeline_mode<synchronous>, transform_indices = @transform_13, window_bounds = array<i64: 1, 16>}, {pipeline_mode = #tpu.pipeline_mode<synchronous>, transform_indices = @transform_14, window_bounds = array<i64: 8, 16>}, {pipeline_mode = #tpu.pipeline_mode<synchronous>, transform_indices = @transform_15, window_bounds = array<i64: 8, 256>}]} {
    %cst = arith.constant 0.000000e+00 : f32
    %0 = vector.broadcast %cst : f32 to vector<256x768xf32>
    %c0 = arith.constant 0 : index
    %c0_0 = arith.constant 0 : index
    %1 = vector.load %arg18[%c0, %c0_0] : memref<256x768xf32, #tpu.memory_space<vmem>>, vector<256x768xf32>
    tpu.vector_store %arg18[%c0, %c0_0], %0 {strides = array<i32>} : memref<256x768xf32, #tpu.memory_space<vmem>>, vector<256x768xf32>,
    %c0_1 = arith.constant 0 : index
    %c0_2 = arith.constant 0 : index
    %c0_3 = arith.constant 0 : index
    %2 = vector.load %arg4[%c0_1, %c0_2, %c0_3] : memref<6x32x96xf32, #tpu.memory_space<vmem>>, vector<1x32x32xf32>
    %3 = vector.shape_cast %2 : vector<1x32x32xf32> to vector<32x32xf32>
    %c0_4 = arith.constant 0 : index
    %c0_5 = arith.constant 0 : index
    %4 = vector.load %arg18[%c0_4, %c0_5] : memref<256x768xf32, #tpu.memory_space<vmem>>, vector<32x32xf32>
    tpu.vector_store %arg18[%c0_4, %c0_5], %3 {strides = array<i32>} : memref<256x768xf32, #tpu.memory_space<vmem>>, vector<32x32xf32>,
    %c0_6 = arith.constant 0 : index
    %c0_7 = arith.constant 0 : index
    %c32 = arith.constant 32 : index
    %5 = vector.load %arg4[%c0_6, %c0_7, %c32] : memref<6x32x96xf32, #tpu.memory_space<vmem>>, vector<1x32x32xf32>
    %6 = vector.shape_cast %5 : vector<1x32x32xf32> to vector<32x32xf32>
    %c0_8 = arith.constant 0 : index
    %c256 = arith.constant 256 : index
    %7 = vector.load %arg18[%c0_8, %c256] : memref<256x768xf32, #tpu.memory_space<vmem>>, vector<32x32xf32>
    tpu.vector_store %arg18[%c0_8, %c256], %6 {strides = array<i32>} : memref<256x768xf32, #tpu.memory_space<vmem>>, vector<32x32xf32>,
    %c0_9 = arith.constant 0 : index
    %c0_10 = arith.constant 0 : index
    %c64 = arith.constant 64 : index
    %8 = vector.load %arg4[%c0_9, %c0_10, %c64] : memref<6x32x96xf32, #tpu.memory_space<vmem>>, vector<1x32x32xf32>
    %9 = vector.shape_cast %8 : vector<1x32x32xf32> to vector<32x32xf32>
    %c0_11 = arith.constant 0 : index
    %c512 = arith.constant 512 : index
    %10 = vector.load %arg18[%c0_11, %c512] : memref<256x768xf32, #tpu.memory_space<vmem>>, vector<32x32xf32>
    tpu.vector_store %arg18[%c0_11, %c512], %9 {strides = array<i32>} : memref<256x768xf32, #tpu.memory_space<vmem>>, vector<32x32xf32>,
    %c1 = arith.constant 1 : index
    %c0_12 = arith.constant 0 : index
    %c0_13 = arith.constant 0 : index
    %11 = vector.load %arg4[%c1, %c0_12, %c0_13] : memref<6x32x96xf32, #tpu.memory_space<vmem>>, vector<1x32x32xf32>
    %12 = vector.shape_cast %11 : vector<1x32x32xf32> to vector<32x32xf32>
    %c32_14 = arith.constant 32 : index
    %c32_15 = arith.constant 32 : index
    %13 = vector.load %arg18[%c32_14, %c32_15] : memref<256x768xf32, #tpu.memory_space<vmem>>, vector<32x32xf32>
    tpu.vector_store %arg18[%c32_14, %c32_15], %12 {strides = array<i32>} : memref<256x768xf32, #tpu.memory_space<vmem>>, vector<32x32xf32>,
    %c1_16 = arith.constant 1 : index
    %c0_17 = arith.constant 0 : index
    %c32_18 = arith.constant 32 : index
    %14 = vector.load %arg4[%c1_16, %c0_17, %c32_18] : memref<6x32x96xf32, #tpu.memory_space<vmem>>, vector<1x32x32xf32>
    %15 = vector.shape_cast %14 : vector<1x32x32xf32> to vector<32x32xf32>
    %c32_19 = arith.constant 32 : index
    %c288 = arith.constant 288 : index
    %16 = vector.load %arg18[%c32_19, %c288] : memref<256x768xf32, #tpu.memory_space<vmem>>, vector<32x32xf32>
    tpu.vector_store %arg18[%c32_19, %c288], %15 {strides = array<i32>} : memref<256x768xf32, #tpu.memory_space<vmem>>, vector<32x32xf32>,
    %c1_20 = arith.constant 1 : index
    %c0_21 = arith.constant 0 : index
    %c64_22 = arith.constant 64 : index
    %17 = vector.load %arg4[%c1_20, %c0_21, %c64_22] : memref<6x32x96xf32, #tpu.memory_space<vmem>>, vector<1x32x32xf32>
    %18 = vector.shape_cast %17 : vector<1x32x32xf32> to vector<32x32xf32>
    %c32_23 = arith.constant 32 : index
    %c544 = arith.constant 544 : index
    %19 = vector.load %arg18[%c32_23, %c544] : memref<256x768xf32, #tpu.memory_space<vmem>>, vector<32x32xf32>
    tpu.vector_store %arg18[%c32_23, %c544], %18 {strides = array<i32>} : memref<256x768xf32, #tpu.memory_space<vmem>>, vector<32x32xf32>,
    %c2 = arith.constant 2 : index
    %c0_24 = arith.constant 0 : index
    %c0_25 = arith.constant 0 : index
    %20 = vector.load %arg4[%c2, %c0_24, %c0_25] : memref<6x32x96xf32, #tpu.memory_space<vmem>>, vector<1x32x32xf32>
    %21 = vector.shape_cast %20 : vector<1x32x32xf32> to vector<32x32xf32>
    %c64_26 = arith.constant 64 : index
    %c64_27 = arith.constant 64 : index
    %22 = vector.load %arg18[%c64_26, %c64_27] : memref<256x768xf32, #tpu.memory_space<vmem>>, vector<32x32xf32>
    tpu.vector_store %arg18[%c64_26, %c64_27], %21 {strides = array<i32>} : memref<256x768xf32, #tpu.memory_space<vmem>>, vector<32x32xf32>,
    %c2_28 = arith.constant 2 : index
    %c0_29 = arith.constant 0 : index
    %c32_30 = arith.constant 32 : index
    %23 = vector.load %arg4[%c2_28, %c0_29, %c32_30] : memref<6x32x96xf32, #tpu.memory_space<vmem>>, vector<1x32x32xf32>
    %24 = vector.shape_cast %23 : vector<1x32x32xf32> to vector<32x32xf32>
    %c64_31 = arith.constant 64 : index
    %c320 = arith.constant 320 : index
    %25 = vector.load %arg18[%c64_31, %c320] : memref<256x768xf32, #tpu.memory_space<vmem>>, vector<32x32xf32>
    tpu.vector_store %arg18[%c64_31, %c320], %24 {strides = array<i32>} : memref<256x768xf32, #tpu.memory_space<vmem>>, vector<32x32xf32>,
    %c2_32 = arith.constant 2 : index
    %c0_33 = arith.constant 0 : index
    %c64_34 = arith.constant 64 : index
    %26 = vector.load %arg4[%c2_32, %c0_33, %c64_34] : memref<6x32x96xf32, #tpu.memory_space<vmem>>, vector<1x32x32xf32>
    %27 = vector.shape_cast %26 : vector<1x32x32xf32> to vector<32x32xf32>
    %c64_35 = arith.constant 64 : index
    %c576 = arith.constant 576 : index
    %28 = vector.load %arg18[%c64_35, %c576] : memref<256x768xf32, #tpu.memory_space<vmem>>, vector<32x32xf32>
    tpu.vector_store %arg18[%c64_35, %c576], %27 {strides = array<i32>} : memref<256x768xf32, #tpu.memory_space<vmem>>, vector<32x32xf32>,
    %c3 = arith.constant 3 : index
    %c0_36 = arith.constant 0 : index
    %c0_37 = arith.constant 0 : index
    %29 = vector.load %arg4[%c3, %c0_36, %c0_37] : memref<6x32x96xf32, #tpu.memory_space<vmem>>, vector<1x32x32xf32>
    %30 = vector.shape_cast %29 : vector<1x32x32xf32> to vector<32x32xf32>
    %c96 = arith.constant 96 : index
    %c96_38 = arith.constant 96 : index
    %31 = vector.load %arg18[%c96, %c96_38] : memref<256x768xf32, #tpu.memory_space<vmem>>, vector<32x32xf32>
    tpu.vector_store %arg18[%c96, %c96_38], %30 {strides = array<i32>} : memref<256x768xf32, #tpu.memory_space<vmem>>, vector<32x32xf32>,
    %c3_39 = arith.constant 3 : index
    %c0_40 = arith.constant 0 : index
    %c32_41 = arith.constant 32 : index
    %32 = vector.load %arg4[%c3_39, %c0_40, %c32_41] : memref<6x32x96xf32, #tpu.memory_space<vmem>>, vector<1x32x32xf32>
    %33 = vector.shape_cast %32 : vector<1x32x32xf32> to vector<32x32xf32>
    %c96_42 = arith.constant 96 : index
    %c352 = arith.constant 352 : index
    %34 = vector.load %arg18[%c96_42, %c352] : memref<256x768xf32, #tpu.memory_space<vmem>>, vector<32x32xf32>
    tpu.vector_store %arg18[%c96_42, %c352], %33 {strides = array<i32>} : memref<256x768xf32, #tpu.memory_space<vmem>>, vector<32x32xf32>,
    %c3_43 = arith.constant 3 : index
    %c0_44 = arith.constant 0 : index
    %c64_45 = arith.constant 64 : index
    %35 = vector.load %arg4[%c3_43, %c0_44, %c64_45] : memref<6x32x96xf32, #tpu.memory_space<vmem>>, vector<1x32x32xf32>
    %36 = vector.shape_cast %35 : vector<1x32x32xf32> to vector<32x32xf32>
    %c96_46 = arith.constant 96 : index
    %c608 = arith.constant 608 : index
    %37 = vector.load %arg18[%c96_46, %c608] : memref<256x768xf32, #tpu.memory_space<vmem>>, vector<32x32xf32>
    tpu.vector_store %arg18[%c96_46, %c608], %36 {strides = array<i32>} : memref<256x768xf32, #tpu.memory_space<vmem>>, vector<32x32xf32>,
    %c4 = arith.constant 4 : index
    %c0_47 = arith.constant 0 : index
    %c0_48 = arith.constant 0 : index
    %38 = vector.load %arg4[%c4, %c0_47, %c0_48] : memref<6x32x96xf32, #tpu.memory_space<vmem>>, vector<1x32x32xf32>
    %39 = vector.shape_cast %38 : vector<1x32x32xf32> to vector<32x32xf32>
    %c128 = arith.constant 128 : index
    %c128_49 = arith.constant 128 : index
    %40 = vector.load %arg18[%c128, %c128_49] : memref<256x768xf32, #tpu.memory_space<vmem>>, vector<32x32xf32>
    tpu.vector_store %arg18[%c128, %c128_49], %39 {strides = array<i32>} : memref<256x768xf32, #tpu.memory_space<vmem>>, vector<32x32xf32>,
    %c4_50 = arith.constant 4 : index
    %c0_51 = arith.constant 0 : index
    %c32_52 = arith.constant 32 : index
    %41 = vector.load %arg4[%c4_50, %c0_51, %c32_52] : memref<6x32x96xf32, #tpu.memory_space<vmem>>, vector<1x32x32xf32>
    %42 = vector.shape_cast %41 : vector<1x32x32xf32> to vector<32x32xf32>
    %c128_53 = arith.constant 128 : index
    %c384 = arith.constant 384 : index
    %43 = vector.load %arg18[%c128_53, %c384] : memref<256x768xf32, #tpu.memory_space<vmem>>, vector<32x32xf32>
    tpu.vector_store %arg18[%c128_53, %c384], %42 {strides = array<i32>} : memref<256x768xf32, #tpu.memory_space<vmem>>, vector<32x32xf32>,
    %c4_54 = arith.constant 4 : index
    %c0_55 = arith.constant 0 : index
    %c64_56 = arith.constant 64 : index
    %44 = vector.load %arg4[%c4_54, %c0_55, %c64_56] : memref<6x32x96xf32, #tpu.memory_space<vmem>>, vector<1x32x32xf32>
    %45 = vector.shape_cast %44 : vector<1x32x32xf32> to vector<32x32xf32>
    %c128_57 = arith.constant 128 : index
    %c640 = arith.constant 640 : index
    %46 = vector.load %arg18[%c128_57, %c640] : memref<256x768xf32, #tpu.memory_space<vmem>>, vector<32x32xf32>
    tpu.vector_store %arg18[%c128_57, %c640], %45 {strides = array<i32>} : memref<256x768xf32, #tpu.memory_space<vmem>>, vector<32x32xf32>,
    %c5 = arith.constant 5 : index
    %c0_58 = arith.constant 0 : index
    %c0_59 = arith.constant 0 : index
    %47 = vector.load %arg4[%c5, %c0_58, %c0_59] : memref<6x32x96xf32, #tpu.memory_space<vmem>>, vector<1x32x32xf32>
    %48 = vector.shape_cast %47 : vector<1x32x32xf32> to vector<32x32xf32>
    %c160 = arith.constant 160 : index
    %c160_60 = arith.constant 160 : index
    %49 = vector.load %arg18[%c160, %c160_60] : memref<256x768xf32, #tpu.memory_space<vmem>>, vector<32x32xf32>
    tpu.vector_store %arg18[%c160, %c160_60], %48 {strides = array<i32>} : memref<256x768xf32, #tpu.memory_space<vmem>>, vector<32x32xf32>,
    %c5_61 = arith.constant 5 : index
    %c0_62 = arith.constant 0 : index
    %c32_63 = arith.constant 32 : index
    %50 = vector.load %arg4[%c5_61, %c0_62, %c32_63] : memref<6x32x96xf32, #tpu.memory_space<vmem>>, vector<1x32x32xf32>
    %51 = vector.shape_cast %50 : vector<1x32x32xf32> to vector<32x32xf32>
    %c160_64 = arith.constant 160 : index
    %c416 = arith.constant 416 : index
    %52 = vector.load %arg18[%c160_64, %c416] : memref<256x768xf32, #tpu.memory_space<vmem>>, vector<32x32xf32>
    tpu.vector_store %arg18[%c160_64, %c416], %51 {strides = array<i32>} : memref<256x768xf32, #tpu.memory_space<vmem>>, vector<32x32xf32>,
    %c5_65 = arith.constant 5 : index
    %c0_66 = arith.constant 0 : index
    %c64_67 = arith.constant 64 : index
    %53 = vector.load %arg4[%c5_65, %c0_66, %c64_67] : memref<6x32x96xf32, #tpu.memory_space<vmem>>, vector<1x32x32xf32>
    %54 = vector.shape_cast %53 : vector<1x32x32xf32> to vector<32x32xf32>
    %c160_68 = arith.constant 160 : index
    %c672 = arith.constant 672 : index
    %55 = vector.load %arg18[%c160_68, %c672] : memref<256x768xf32, #tpu.memory_space<vmem>>, vector<32x32xf32>
    tpu.vector_store %arg18[%c160_68, %c672], %54 {strides = array<i32>} : memref<256x768xf32, #tpu.memory_space<vmem>>, vector<32x32xf32>,
    %c0_69 = arith.constant 0 : index
    %c0_70 = arith.constant 0 : index
    %56 = vector.load %arg1[%c0_69, %c0_70] : memref<64x8xf32, #tpu.memory_space<vmem>>, vector<64x8xf32>
    %c0_71 = arith.constant 0 : index
    %c0_72 = arith.constant 0 : index
    %57 = vector.load %arg3[%c0_71, %c0_72] : memref<8x768xf32, #tpu.memory_space<vmem>>, vector<8x768xf32>
    %cst_73 = arith.constant dense<0.000000e+00> : vector<64x768xf32>
    %58 = tpu.matmul %56, %57, %cst_73 {dimension_numbers = #tpu.dot_dimension_numbers<[1], [0], [0], [1], [0, 0, 1, 1], [], []>} : vector<64x8xf32>, vector<8x768xf32>, vector<64x768xf32> -> vector<64x768xf32>
    %c0_74 = arith.constant 0 : index
    %c0_75 = arith.constant 0 : index
    %59 = vector.load %arg5[%c0_74, %c0_75] : memref<1x768xf32, #tpu.memory_space<vmem>>, vector<1x768xf32>
    %60 = vector.broadcast %59 : vector<1x768xf32> to vector<64x768xf32>
    %61 = arith.addf %58, %60 : vector<64x768xf32>
    %c0_76 = arith.constant 0 : index
    %c0_77 = arith.constant 0 : index
    %62 = vector.load %arg17[%c0_76, %c0_77] : memref<64x768xf32, #tpu.memory_space<vmem>>, vector<64x768xf32>
    tpu.vector_store %arg17[%c0_76, %c0_77], %61 {strides = array<i32>} : memref<64x768xf32, #tpu.memory_space<vmem>>, vector<64x768xf32>,
    %c0_78 = arith.constant 0 : index
    %c0_79 = arith.constant 0 : index
    %63 = vector.load %arg6[%c0_78, %c0_79] : memref<1x256xf32, #tpu.memory_space<vmem>>, vector<1x256xf32>
    %c0_80 = arith.constant 0 : index
    %c0_81 = arith.constant 0 : index
    %64 = vector.load %arg2[%c0_80, %c0_81] : memref<8x256xf32, #tpu.memory_space<vmem>>, vector<8x256xf32>
    %c0_i32 = arith.constant 0 : i32
    %c8_i32 = arith.constant 8 : i32
    %65 = arith.muli %c0_i32, %c8_i32 : i32
    %66 = tpu.assume_multiple %65, 8 : i32
    %67 = arith.index_cast %66 : i32 to index
    %c0_82 = arith.constant 0 : index
    %68 = vector.load %arg17[%67, %c0_82] : memref<64x768xf32, #tpu.memory_space<vmem>>, vector<8x768xf32>
    %c0_83 = arith.constant 0 : index
    %c0_84 = arith.constant 0 : index
    %69 = vector.load %arg18[%c0_83, %c0_84] : memref<256x768xf32, #tpu.memory_space<vmem>>, vector<256x768xf32>
    %cst_85 = arith.constant dense<0.000000e+00> : vector<8x768xf32>
    %70 = tpu.matmul %64, %69, %cst_85 {dimension_numbers = #tpu.dot_dimension_numbers<[1], [0], [0], [1], [0, 0, 1, 1], [], []>} : vector<8x256xf32>, vector<256x768xf32>, vector<8x768xf32> -> vector<8x768xf32>
    %71 = vector.extract_strided_slice %68 {offsets = [0, 0], sizes = [8, 512], strides = [1, 1]} : vector<8x768xf32> to vector<8x512xf32>
    %72 = vector.extract_strided_slice %70 {offsets = [0, 0], sizes = [8, 512], strides = [1, 1]} : vector<8x768xf32> to vector<8x512xf32>
    %73 = arith.addf %71, %72 : vector<8x512xf32>
    %74 = arith.negf %73 : vector<8x512xf32>
    %75 = math.exp %74 : vector<8x512xf32>
    %cst_86 = arith.constant 1.000000e+00 : f32
    %76 = vector.broadcast %cst_86 : f32 to vector<8x512xf32>
    %77 = arith.addf %76, %75 : vector<8x512xf32>
    %78 = arith.divf %76, %77 : vector<8x512xf32>
    %79 = vector.extract_strided_slice %78 {offsets = [0, 0], sizes = [8, 256], strides = [1, 1]} : vector<8x512xf32> to vector<8x256xf32>
    %80 = vector.extract_strided_slice %78 {offsets = [0, 256], sizes = [8, 256], strides = [1, 1]} : vector<8x512xf32> to vector<8x256xf32>
    %81 = vector.extract_strided_slice %68 {offsets = [0, 512], sizes = [8, 256], strides = [1, 1]} : vector<8x768xf32> to vector<8x256xf32>
    %82 = vector.extract_strided_slice %70 {offsets = [0, 512], sizes = [8, 256], strides = [1, 1]} : vector<8x768xf32> to vector<8x256xf32>
    %83 = vector.broadcast %63 : vector<1x256xf32> to vector<8x256xf32>
    %84 = arith.addf %82, %83 : vector<8x256xf32>
    %85 = arith.mulf %79, %84 : vector<8x256xf32>
    %86 = arith.addf %81, %85 : vector<8x256xf32>
    %87 = math.tanh %86 : vector<8x256xf32>
    %cst_87 = arith.constant 1.000000e+00 : f32
    %88 = vector.broadcast %cst_87 : f32 to vector<8x256xf32>
    %89 = arith.subf %88, %80 : vector<8x256xf32>
    %90 = arith.mulf %89, %87 : vector<8x256xf32>
    %91 = arith.mulf %80, %64 : vector<8x256xf32>
    %92 = arith.addf %90, %91 : vector<8x256xf32>
    %c1_i32 = arith.constant 1 : i32
    %c8_i32_88 = arith.constant 8 : i32
    %93 = arith.muli %c1_i32, %c8_i32_88 : i32
    %94 = tpu.assume_multiple %93, 8 : i32
    %95 = arith.index_cast %94 : i32 to index
    %c0_89 = arith.constant 0 : index
    %96 = vector.load %arg17[%95, %c0_89] : memref<64x768xf32, #tpu.memory_space<vmem>>, vector<8x768xf32>
    %c0_90 = arith.constant 0 : index
    %c0_91 = arith.constant 0 : index
    %97 = vector.load %arg18[%c0_90, %c0_91] : memref<256x768xf32, #tpu.memory_space<vmem>>, vector<256x768xf32>
    %cst_92 = arith.constant dense<0.000000e+00> : vector<8x768xf32>
    %98 = tpu.matmul %92, %97, %cst_92 {dimension_numbers = #tpu.dot_dimension_numbers<[1], [0], [0], [1], [0, 0, 1, 1], [], []>} : vector<8x256xf32>, vector<256x768xf32>, vector<8x768xf32> -> vector<8x768xf32>
    %99 = vector.extract_strided_slice %96 {offsets = [0, 0], sizes = [8, 512], strides = [1, 1]} : vector<8x768xf32> to vector<8x512xf32>
    %100 = vector.extract_strided_slice %98 {offsets = [0, 0], sizes = [8, 512], strides = [1, 1]} : vector<8x768xf32> to vector<8x512xf32>
    %101 = arith.addf %99, %100 : vector<8x512xf32>
    %102 = arith.negf %101 : vector<8x512xf32>
    %103 = math.exp %102 : vector<8x512xf32>
    %cst_93 = arith.constant 1.000000e+00 : f32
    %104 = vector.broadcast %cst_93 : f32 to vector<8x512xf32>
    %105 = arith.addf %104, %103 : vector<8x512xf32>
    %106 = arith.divf %104, %105 : vector<8x512xf32>
    %107 = vector.extract_strided_slice %106 {offsets = [0, 0], sizes = [8, 256], strides = [1, 1]} : vector<8x512xf32> to vector<8x256xf32>
    %108 = vector.extract_strided_slice %106 {offsets = [0, 256], sizes = [8, 256], strides = [1, 1]} : vector<8x512xf32> to vector<8x256xf32>
    %109 = vector.extract_strided_slice %96 {offsets = [0, 512], sizes = [8, 256], strides = [1, 1]} : vector<8x768xf32> to vector<8x256xf32>
    %110 = vector.extract_strided_slice %98 {offsets = [0, 512], sizes = [8, 256], strides = [1, 1]} : vector<8x768xf32> to vector<8x256xf32>
    %111 = vector.broadcast %63 : vector<1x256xf32> to vector<8x256xf32>
    %112 = arith.addf %110, %111 : vector<8x256xf32>
    %113 = arith.mulf %107, %112 : vector<8x256xf32>
    %114 = arith.addf %109, %113 : vector<8x256xf32>
    %115 = math.tanh %114 : vector<8x256xf32>
    %cst_94 = arith.constant 1.000000e+00 : f32
    %116 = vector.broadcast %cst_94 : f32 to vector<8x256xf32>
    %117 = arith.subf %116, %108 : vector<8x256xf32>
    %118 = arith.mulf %117, %115 : vector<8x256xf32>
    %119 = arith.mulf %108, %92 : vector<8x256xf32>
    %120 = arith.addf %118, %119 : vector<8x256xf32>
    %c2_i32 = arith.constant 2 : i32
    %c8_i32_95 = arith.constant 8 : i32
    %121 = arith.muli %c2_i32, %c8_i32_95 : i32
    %122 = tpu.assume_multiple %121, 8 : i32
    %123 = arith.index_cast %122 : i32 to index
    %c0_96 = arith.constant 0 : index
    %124 = vector.load %arg17[%123, %c0_96] : memref<64x768xf32, #tpu.memory_space<vmem>>, vector<8x768xf32>
    %c0_97 = arith.constant 0 : index
    %c0_98 = arith.constant 0 : index
    %125 = vector.load %arg18[%c0_97, %c0_98] : memref<256x768xf32, #tpu.memory_space<vmem>>, vector<256x768xf32>
    %cst_99 = arith.constant dense<0.000000e+00> : vector<8x768xf32>
    %126 = tpu.matmul %120, %125, %cst_99 {dimension_numbers = #tpu.dot_dimension_numbers<[1], [0], [0], [1], [0, 0, 1, 1], [], []>} : vector<8x256xf32>, vector<256x768xf32>, vector<8x768xf32> -> vector<8x768xf32>
    %127 = vector.extract_strided_slice %124 {offsets = [0, 0], sizes = [8, 512], strides = [1, 1]} : vector<8x768xf32> to vector<8x512xf32>
    %128 = vector.extract_strided_slice %126 {offsets = [0, 0], sizes = [8, 512], strides = [1, 1]} : vector<8x768xf32> to vector<8x512xf32>
    %129 = arith.addf %127, %128 : vector<8x512xf32>
    %130 = arith.negf %129 : vector<8x512xf32>
    %131 = math.exp %130 : vector<8x512xf32>
    %cst_100 = arith.constant 1.000000e+00 : f32
    %132 = vector.broadcast %cst_100 : f32 to vector<8x512xf32>
    %133 = arith.addf %132, %131 : vector<8x512xf32>
    %134 = arith.divf %132, %133 : vector<8x512xf32>
    %135 = vector.extract_strided_slice %134 {offsets = [0, 0], sizes = [8, 256], strides = [1, 1]} : vector<8x512xf32> to vector<8x256xf32>
    %136 = vector.extract_strided_slice %134 {offsets = [0, 256], sizes = [8, 256], strides = [1, 1]} : vector<8x512xf32> to vector<8x256xf32>
    %137 = vector.extract_strided_slice %124 {offsets = [0, 512], sizes = [8, 256], strides = [1, 1]} : vector<8x768xf32> to vector<8x256xf32>
    %138 = vector.extract_strided_slice %126 {offsets = [0, 512], sizes = [8, 256], strides = [1, 1]} : vector<8x768xf32> to vector<8x256xf32>
    %139 = vector.broadcast %63 : vector<1x256xf32> to vector<8x256xf32>
    %140 = arith.addf %138, %139 : vector<8x256xf32>
    %141 = arith.mulf %135, %140 : vector<8x256xf32>
    %142 = arith.addf %137, %141 : vector<8x256xf32>
    %143 = math.tanh %142 : vector<8x256xf32>
    %cst_101 = arith.constant 1.000000e+00 : f32
    %144 = vector.broadcast %cst_101 : f32 to vector<8x256xf32>
    %145 = arith.subf %144, %136 : vector<8x256xf32>
    %146 = arith.mulf %145, %143 : vector<8x256xf32>
    %147 = arith.mulf %136, %120 : vector<8x256xf32>
    %148 = arith.addf %146, %147 : vector<8x256xf32>
    %c3_i32 = arith.constant 3 : i32
    %c8_i32_102 = arith.constant 8 : i32
    %149 = arith.muli %c3_i32, %c8_i32_102 : i32
    %150 = tpu.assume_multiple %149, 8 : i32
    %151 = arith.index_cast %150 : i32 to index
    %c0_103 = arith.constant 0 : index
    %152 = vector.load %arg17[%151, %c0_103] : memref<64x768xf32, #tpu.memory_space<vmem>>, vector<8x768xf32>
    %c0_104 = arith.constant 0 : index
    %c0_105 = arith.constant 0 : index
    %153 = vector.load %arg18[%c0_104, %c0_105] : memref<256x768xf32, #tpu.memory_space<vmem>>, vector<256x768xf32>
    %cst_106 = arith.constant dense<0.000000e+00> : vector<8x768xf32>
    %154 = tpu.matmul %148, %153, %cst_106 {dimension_numbers = #tpu.dot_dimension_numbers<[1], [0], [0], [1], [0, 0, 1, 1], [], []>} : vector<8x256xf32>, vector<256x768xf32>, vector<8x768xf32> -> vector<8x768xf32>
    %155 = vector.extract_strided_slice %152 {offsets = [0, 0], sizes = [8, 512], strides = [1, 1]} : vector<8x768xf32> to vector<8x512xf32>
    %156 = vector.extract_strided_slice %154 {offsets = [0, 0], sizes = [8, 512], strides = [1, 1]} : vector<8x768xf32> to vector<8x512xf32>
    %157 = arith.addf %155, %156 : vector<8x512xf32>
    %158 = arith.negf %157 : vector<8x512xf32>
    %159 = math.exp %158 : vector<8x512xf32>
    %cst_107 = arith.constant 1.000000e+00 : f32
    %160 = vector.broadcast %cst_107 : f32 to vector<8x512xf32>
    %161 = arith.addf %160, %159 : vector<8x512xf32>
    %162 = arith.divf %160, %161 : vector<8x512xf32>
    %163 = vector.extract_strided_slice %162 {offsets = [0, 0], sizes = [8, 256], strides = [1, 1]} : vector<8x512xf32> to vector<8x256xf32>
    %164 = vector.extract_strided_slice %162 {offsets = [0, 256], sizes = [8, 256], strides = [1, 1]} : vector<8x512xf32> to vector<8x256xf32>
    %165 = vector.extract_strided_slice %152 {offsets = [0, 512], sizes = [8, 256], strides = [1, 1]} : vector<8x768xf32> to vector<8x256xf32>
    %166 = vector.extract_strided_slice %154 {offsets = [0, 512], sizes = [8, 256], strides = [1, 1]} : vector<8x768xf32> to vector<8x256xf32>
    %167 = vector.broadcast %63 : vector<1x256xf32> to vector<8x256xf32>
    %168 = arith.addf %166, %167 : vector<8x256xf32>
    %169 = arith.mulf %163, %168 : vector<8x256xf32>
    %170 = arith.addf %165, %169 : vector<8x256xf32>
    %171 = math.tanh %170 : vector<8x256xf32>
    %cst_108 = arith.constant 1.000000e+00 : f32
    %172 = vector.broadcast %cst_108 : f32 to vector<8x256xf32>
    %173 = arith.subf %172, %164 : vector<8x256xf32>
    %174 = arith.mulf %173, %171 : vector<8x256xf32>
    %175 = arith.mulf %164, %148 : vector<8x256xf32>
    %176 = arith.addf %174, %175 : vector<8x256xf32>
    %c4_i32 = arith.constant 4 : i32
    %c8_i32_109 = arith.constant 8 : i32
    %177 = arith.muli %c4_i32, %c8_i32_109 : i32
    %178 = tpu.assume_multiple %177, 8 : i32
    %179 = arith.index_cast %178 : i32 to index
    %c0_110 = arith.constant 0 : index
    %180 = vector.load %arg17[%179, %c0_110] : memref<64x768xf32, #tpu.memory_space<vmem>>, vector<8x768xf32>
    %c0_111 = arith.constant 0 : index
    %c0_112 = arith.constant 0 : index
    %181 = vector.load %arg18[%c0_111, %c0_112] : memref<256x768xf32, #tpu.memory_space<vmem>>, vector<256x768xf32>
    %cst_113 = arith.constant dense<0.000000e+00> : vector<8x768xf32>
    %182 = tpu.matmul %176, %181, %cst_113 {dimension_numbers = #tpu.dot_dimension_numbers<[1], [0], [0], [1], [0, 0, 1, 1], [], []>} : vector<8x256xf32>, vector<256x768xf32>, vector<8x768xf32> -> vector<8x768xf32>
    %183 = vector.extract_strided_slice %180 {offsets = [0, 0], sizes = [8, 512], strides = [1, 1]} : vector<8x768xf32> to vector<8x512xf32>
    %184 = vector.extract_strided_slice %182 {offsets = [0, 0], sizes = [8, 512], strides = [1, 1]} : vector<8x768xf32> to vector<8x512xf32>
    %185 = arith.addf %183, %184 : vector<8x512xf32>
    %186 = arith.negf %185 : vector<8x512xf32>
    %187 = math.exp %186 : vector<8x512xf32>
    %cst_114 = arith.constant 1.000000e+00 : f32
    %188 = vector.broadcast %cst_114 : f32 to vector<8x512xf32>
    %189 = arith.addf %188, %187 : vector<8x512xf32>
    %190 = arith.divf %188, %189 : vector<8x512xf32>
    %191 = vector.extract_strided_slice %190 {offsets = [0, 0], sizes = [8, 256], strides = [1, 1]} : vector<8x512xf32> to vector<8x256xf32>
    %192 = vector.extract_strided_slice %190 {offsets = [0, 256], sizes = [8, 256], strides = [1, 1]} : vector<8x512xf32> to vector<8x256xf32>
    %193 = vector.extract_strided_slice %180 {offsets = [0, 512], sizes = [8, 256], strides = [1, 1]} : vector<8x768xf32> to vector<8x256xf32>
    %194 = vector.extract_strided_slice %182 {offsets = [0, 512], sizes = [8, 256], strides = [1, 1]} : vector<8x768xf32> to vector<8x256xf32>
    %195 = vector.broadcast %63 : vector<1x256xf32> to vector<8x256xf32>
    %196 = arith.addf %194, %195 : vector<8x256xf32>
    %197 = arith.mulf %191, %196 : vector<8x256xf32>
    %198 = arith.addf %193, %197 : vector<8x256xf32>
    %199 = math.tanh %198 : vector<8x256xf32>
    %cst_115 = arith.constant 1.000000e+00 : f32
    %200 = vector.broadcast %cst_115 : f32 to vector<8x256xf32>
    %201 = arith.subf %200, %192 : vector<8x256xf32>
    %202 = arith.mulf %201, %199 : vector<8x256xf32>
    %203 = arith.mulf %192, %176 : vector<8x256xf32>
    %204 = arith.addf %202, %203 : vector<8x256xf32>
    %c5_i32 = arith.constant 5 : i32
    %c8_i32_116 = arith.constant 8 : i32
    %205 = arith.muli %c5_i32, %c8_i32_116 : i32
    %206 = tpu.assume_multiple %205, 8 : i32
    %207 = arith.index_cast %206 : i32 to index
    %c0_117 = arith.constant 0 : index
    %208 = vector.load %arg17[%207, %c0_117] : memref<64x768xf32, #tpu.memory_space<vmem>>, vector<8x768xf32>
    %c0_118 = arith.constant 0 : index
    %c0_119 = arith.constant 0 : index
    %209 = vector.load %arg18[%c0_118, %c0_119] : memref<256x768xf32, #tpu.memory_space<vmem>>, vector<256x768xf32>
    %cst_120 = arith.constant dense<0.000000e+00> : vector<8x768xf32>
    %210 = tpu.matmul %204, %209, %cst_120 {dimension_numbers = #tpu.dot_dimension_numbers<[1], [0], [0], [1], [0, 0, 1, 1], [], []>} : vector<8x256xf32>, vector<256x768xf32>, vector<8x768xf32> -> vector<8x768xf32>
    %211 = vector.extract_strided_slice %208 {offsets = [0, 0], sizes = [8, 512], strides = [1, 1]} : vector<8x768xf32> to vector<8x512xf32>
    %212 = vector.extract_strided_slice %210 {offsets = [0, 0], sizes = [8, 512], strides = [1, 1]} : vector<8x768xf32> to vector<8x512xf32>
    %213 = arith.addf %211, %212 : vector<8x512xf32>
    %214 = arith.negf %213 : vector<8x512xf32>
    %215 = math.exp %214 : vector<8x512xf32>
    %cst_121 = arith.constant 1.000000e+00 : f32
    %216 = vector.broadcast %cst_121 : f32 to vector<8x512xf32>
    %217 = arith.addf %216, %215 : vector<8x512xf32>
    %218 = arith.divf %216, %217 : vector<8x512xf32>
    %219 = vector.extract_strided_slice %218 {offsets = [0, 0], sizes = [8, 256], strides = [1, 1]} : vector<8x512xf32> to vector<8x256xf32>
    %220 = vector.extract_strided_slice %218 {offsets = [0, 256], sizes = [8, 256], strides = [1, 1]} : vector<8x512xf32> to vector<8x256xf32>
    %221 = vector.extract_strided_slice %208 {offsets = [0, 512], sizes = [8, 256], strides = [1, 1]} : vector<8x768xf32> to vector<8x256xf32>
    %222 = vector.extract_strided_slice %210 {offsets = [0, 512], sizes = [8, 256], strides = [1, 1]} : vector<8x768xf32> to vector<8x256xf32>
    %223 = vector.broadcast %63 : vector<1x256xf32> to vector<8x256xf32>
    %224 = arith.addf %222, %223 : vector<8x256xf32>
    %225 = arith.mulf %219, %224 : vector<8x256xf32>
    %226 = arith.addf %221, %225 : vector<8x256xf32>
    %227 = math.tanh %226 : vector<8x256xf32>
    %cst_122 = arith.constant 1.000000e+00 : f32
    %228 = vector.broadcast %cst_122 : f32 to vector<8x256xf32>
    %229 = arith.subf %228, %220 : vector<8x256xf32>
    %230 = arith.mulf %229, %227 : vector<8x256xf32>
    %231 = arith.mulf %220, %204 : vector<8x256xf32>
    %232 = arith.addf %230, %231 : vector<8x256xf32>
    %c6_i32 = arith.constant 6 : i32
    %c8_i32_123 = arith.constant 8 : i32
    %233 = arith.muli %c6_i32, %c8_i32_123 : i32
    %234 = tpu.assume_multiple %233, 8 : i32
    %235 = arith.index_cast %234 : i32 to index
    %c0_124 = arith.constant 0 : index
    %236 = vector.load %arg17[%235, %c0_124] : memref<64x768xf32, #tpu.memory_space<vmem>>, vector<8x768xf32>
    %c0_125 = arith.constant 0 : index
    %c0_126 = arith.constant 0 : index
    %237 = vector.load %arg18[%c0_125, %c0_126] : memref<256x768xf32, #tpu.memory_space<vmem>>, vector<256x768xf32>
    %cst_127 = arith.constant dense<0.000000e+00> : vector<8x768xf32>
    %238 = tpu.matmul %232, %237, %cst_127 {dimension_numbers = #tpu.dot_dimension_numbers<[1], [0], [0], [1], [0, 0, 1, 1], [], []>} : vector<8x256xf32>, vector<256x768xf32>, vector<8x768xf32> -> vector<8x768xf32>
    %239 = vector.extract_strided_slice %236 {offsets = [0, 0], sizes = [8, 512], strides = [1, 1]} : vector<8x768xf32> to vector<8x512xf32>
    %240 = vector.extract_strided_slice %238 {offsets = [0, 0], sizes = [8, 512], strides = [1, 1]} : vector<8x768xf32> to vector<8x512xf32>
    %241 = arith.addf %239, %240 : vector<8x512xf32>
    %242 = arith.negf %241 : vector<8x512xf32>
    %243 = math.exp %242 : vector<8x512xf32>
    %cst_128 = arith.constant 1.000000e+00 : f32
    %244 = vector.broadcast %cst_128 : f32 to vector<8x512xf32>
    %245 = arith.addf %244, %243 : vector<8x512xf32>
    %246 = arith.divf %244, %245 : vector<8x512xf32>
    %247 = vector.extract_strided_slice %246 {offsets = [0, 0], sizes = [8, 256], strides = [1, 1]} : vector<8x512xf32> to vector<8x256xf32>
    %248 = vector.extract_strided_slice %246 {offsets = [0, 256], sizes = [8, 256], strides = [1, 1]} : vector<8x512xf32> to vector<8x256xf32>
    %249 = vector.extract_strided_slice %236 {offsets = [0, 512], sizes = [8, 256], strides = [1, 1]} : vector<8x768xf32> to vector<8x256xf32>
    %250 = vector.extract_strided_slice %238 {offsets = [0, 512], sizes = [8, 256], strides = [1, 1]} : vector<8x768xf32> to vector<8x256xf32>
    %251 = vector.broadcast %63 : vector<1x256xf32> to vector<8x256xf32>
    %252 = arith.addf %250, %251 : vector<8x256xf32>
    %253 = arith.mulf %247, %252 : vector<8x256xf32>
    %254 = arith.addf %249, %253 : vector<8x256xf32>
    %255 = math.tanh %254 : vector<8x256xf32>
    %cst_129 = arith.constant 1.000000e+00 : f32
    %256 = vector.broadcast %cst_129 : f32 to vector<8x256xf32>
    %257 = arith.subf %256, %248 : vector<8x256xf32>
    %258 = arith.mulf %257, %255 : vector<8x256xf32>
    %259 = arith.mulf %248, %232 : vector<8x256xf32>
    %260 = arith.addf %258, %259 : vector<8x256xf32>
    %c7_i32 = arith.constant 7 : i32
    %c8_i32_130 = arith.constant 8 : i32
    %261 = arith.muli %c7_i32, %c8_i32_130 : i32
    %262 = tpu.assume_multiple %261, 8 : i32
    %263 = arith.index_cast %262 : i32 to index
    %c0_131 = arith.constant 0 : index
    %264 = vector.load %arg17[%263, %c0_131] : memref<64x768xf32, #tpu.memory_space<vmem>>, vector<8x768xf32>
    %c0_132 = arith.constant 0 : index
    %c0_133 = arith.constant 0 : index
    %265 = vector.load %arg18[%c0_132, %c0_133] : memref<256x768xf32, #tpu.memory_space<vmem>>, vector<256x768xf32>
    %cst_134 = arith.constant dense<0.000000e+00> : vector<8x768xf32>
    %266 = tpu.matmul %260, %265, %cst_134 {dimension_numbers = #tpu.dot_dimension_numbers<[1], [0], [0], [1], [0, 0, 1, 1], [], []>} : vector<8x256xf32>, vector<256x768xf32>, vector<8x768xf32> -> vector<8x768xf32>
    %267 = vector.extract_strided_slice %264 {offsets = [0, 0], sizes = [8, 512], strides = [1, 1]} : vector<8x768xf32> to vector<8x512xf32>
    %268 = vector.extract_strided_slice %266 {offsets = [0, 0], sizes = [8, 512], strides = [1, 1]} : vector<8x768xf32> to vector<8x512xf32>
    %269 = arith.addf %267, %268 : vector<8x512xf32>
    %270 = arith.negf %269 : vector<8x512xf32>
    %271 = math.exp %270 : vector<8x512xf32>
    %cst_135 = arith.constant 1.000000e+00 : f32
    %272 = vector.broadcast %cst_135 : f32 to vector<8x512xf32>
    %273 = arith.addf %272, %271 : vector<8x512xf32>
    %274 = arith.divf %272, %273 : vector<8x512xf32>
    %275 = vector.extract_strided_slice %274 {offsets = [0, 0], sizes = [8, 256], strides = [1, 1]} : vector<8x512xf32> to vector<8x256xf32>
    %276 = vector.extract_strided_slice %274 {offsets = [0, 256], sizes = [8, 256], strides = [1, 1]} : vector<8x512xf32> to vector<8x256xf32>
    %277 = vector.extract_strided_slice %264 {offsets = [0, 512], sizes = [8, 256], strides = [1, 1]} : vector<8x768xf32> to vector<8x256xf32>
    %278 = vector.extract_strided_slice %266 {offsets = [0, 512], sizes = [8, 256], strides = [1, 1]} : vector<8x768xf32> to vector<8x256xf32>
    %279 = vector.broadcast %63 : vector<1x256xf32> to vector<8x256xf32>
    %280 = arith.addf %278, %279 : vector<8x256xf32>
    %281 = arith.mulf %275, %280 : vector<8x256xf32>
    %282 = arith.addf %277, %281 : vector<8x256xf32>
    %283 = math.tanh %282 : vector<8x256xf32>
    %cst_136 = arith.constant 1.000000e+00 : f32
    %284 = vector.broadcast %cst_136 : f32 to vector<8x256xf32>
    %285 = arith.subf %284, %276 : vector<8x256xf32>
    %286 = arith.mulf %285, %283 : vector<8x256xf32>
    %287 = arith.mulf %276, %260 : vector<8x256xf32>
    %288 = arith.addf %286, %287 : vector<8x256xf32>
    %c8_i32_137 = arith.constant 8 : i32
    %c0_138 = arith.constant 0 : index
    %c0_139 = arith.constant 0 : index
    %289 = vector.load %arg16[%c0_138, %c0_139] : memref<8x256xf32, #tpu.memory_space<vmem>>, vector<8x256xf32>
    tpu.vector_store %arg16[%c0_138, %c0_139], %288 {strides = array<i32>} : memref<8x256xf32, #tpu.memory_space<vmem>>, vector<8x256xf32>,
    %290 = tpu.iota {dimensions = array<i32: 1>} : vector<8x256xi32>
    %cst_140 = arith.constant 0.000000e+00 : f32
    %291 = vector.broadcast %cst_140 : f32 to vector<8x256xf32>
    %c0_i32_141 = arith.constant 0 : i32
    %292 = vector.broadcast %c0_i32_141 : i32 to vector<8x256xi32>
    %293 = arith.cmpi sge, %290, %292 : vector<8x256xi32>
    %c32_i32 = arith.constant 32 : i32
    %294 = vector.broadcast %c32_i32 : i32 to vector<8x256xi32>
    %295 = arith.cmpi slt, %290, %294 : vector<8x256xi32>
    %296 = arith.andi %293, %295 : vector<8x256xi1>
    %297 = arith.select %296, %288, %291 : vector<8x256xi1>, vector<8x256xf32>
    %cst_142 = arith.constant 0.000000e+00 : f32
    %298 = vector.broadcast %cst_142 : f32 to vector<8x256xf32>
    %299 = arith.maximumf %297, %298 : vector<8x256xf32>
    %c0_143 = arith.constant 0 : index
    %c0_144 = arith.constant 0 : index
    %c0_145 = arith.constant 0 : index
    %300 = vector.load %arg7[%c0_143, %c0_144, %c0_145] : memref<6x256x32xf32, #tpu.memory_space<vmem>>, vector<1x256x32xf32>
    %301 = vector.shape_cast %300 : vector<1x256x32xf32> to vector<256x32xf32>
    %cst_146 = arith.constant dense<0.000000e+00> : vector<8x32xf32>
    %302 = tpu.matmul %299, %301, %cst_146 {dimension_numbers = #tpu.dot_dimension_numbers<[1], [0], [0], [1], [0, 0, 1, 1], [], []>} : vector<8x256xf32>, vector<256x32xf32>, vector<8x32xf32> -> vector<8x32xf32>
    %c0_147 = arith.constant 0 : index
    %c0_148 = arith.constant 0 : index
    %c0_149 = arith.constant 0 : index
    %303 = vector.load %arg8[%c0_147, %c0_148, %c0_149] : memref<6x1x32xf32, #tpu.memory_space<vmem>>, vector<1x1x32xf32>
    %304 = vector.shape_cast %303 : vector<1x1x32xf32> to vector<1x32xf32>
    %305 = vector.broadcast %304 : vector<1x32xf32> to vector<8x32xf32>
    %306 = arith.addf %302, %305 : vector<8x32xf32>
    %cst_150 = arith.constant 0.000000e+00 : f32
    %307 = vector.broadcast %cst_150 : f32 to vector<8x32xf32>
    %308 = arith.maximumf %306, %307 : vector<8x32xf32>
    %c0_151 = arith.constant 0 : index
    %c0_152 = arith.constant 0 : index
    %c0_153 = arith.constant 0 : index
    %309 = vector.load %arg9[%c0_151, %c0_152, %c0_153] : memref<6x32x32xf32, #tpu.memory_space<vmem>>, vector<1x32x32xf32>
    %310 = vector.shape_cast %309 : vector<1x32x32xf32> to vector<32x32xf32>
    %cst_154 = arith.constant dense<0.000000e+00> : vector<8x32xf32>
    %311 = tpu.matmul %308, %310, %cst_154 {dimension_numbers = #tpu.dot_dimension_numbers<[1], [0], [0], [1], [0, 0, 1, 1], [], []>} : vector<8x32xf32>, vector<32x32xf32>, vector<8x32xf32> -> vector<8x32xf32>
    %c0_155 = arith.constant 0 : index
    %c0_156 = arith.constant 0 : index
    %c0_157 = arith.constant 0 : index
    %312 = vector.load %arg10[%c0_155, %c0_156, %c0_157] : memref<6x1x32xf32, #tpu.memory_space<vmem>>, vector<1x1x32xf32>
    %313 = vector.shape_cast %312 : vector<1x1x32xf32> to vector<1x32xf32>
    %314 = vector.broadcast %313 : vector<1x32xf32> to vector<8x32xf32>
    %315 = arith.addf %311, %314 : vector<8x32xf32>
    %cst_158 = arith.constant 0.000000e+00 : f32
    %316 = vector.broadcast %cst_158 : f32 to vector<8x32xf32>
    %317 = arith.maximumf %315, %316 : vector<8x32xf32>
    %c0_159 = arith.constant 0 : index
    %c0_160 = arith.constant 0 : index
    %c0_161 = arith.constant 0 : index
    %318 = vector.load %arg11[%c0_159, %c0_160, %c0_161] : memref<6x32x256xf32, #tpu.memory_space<vmem>>, vector<1x32x256xf32>
    %319 = vector.shape_cast %318 : vector<1x32x256xf32> to vector<32x256xf32>
    %cst_162 = arith.constant dense<0.000000e+00> : vector<8x256xf32>
    %320 = tpu.matmul %317, %319, %cst_162 {dimension_numbers = #tpu.dot_dimension_numbers<[1], [0], [0], [1], [0, 0, 1, 1], [], []>} : vector<8x32xf32>, vector<32x256xf32>, vector<8x256xf32> -> vector<8x256xf32>
    %c0_163 = arith.constant 0 : index
    %c0_164 = arith.constant 0 : index
    %c0_165 = arith.constant 0 : index
    %321 = vector.load %arg12[%c0_163, %c0_164, %c0_165] : memref<6x1x256xf32, #tpu.memory_space<vmem>>, vector<1x1x256xf32>
    %322 = vector.shape_cast %321 : vector<1x1x256xf32> to vector<1x256xf32>
    %323 = vector.broadcast %322 : vector<1x256xf32> to vector<8x256xf32>
    %324 = arith.addf %320, %323 : vector<8x256xf32>
    %325 = arith.select %296, %324, %291 : vector<8x256xi1>, vector<8x256xf32>
    %c32_i32_166 = arith.constant 32 : i32
    %326 = vector.broadcast %c32_i32_166 : i32 to vector<8x256xi32>
    %327 = arith.cmpi sge, %290, %326 : vector<8x256xi32>
    %c64_i32 = arith.constant 64 : i32
    %328 = vector.broadcast %c64_i32 : i32 to vector<8x256xi32>
    %329 = arith.cmpi slt, %290, %328 : vector<8x256xi32>
    %330 = arith.andi %327, %329 : vector<8x256xi1>
    %331 = arith.select %330, %288, %325 : vector<8x256xi1>, vector<8x256xf32>
    %cst_167 = arith.constant 0.000000e+00 : f32
    %332 = vector.broadcast %cst_167 : f32 to vector<8x256xf32>
    %333 = arith.maximumf %331, %332 : vector<8x256xf32>
    %c1_168 = arith.constant 1 : index
    %c0_169 = arith.constant 0 : index
    %c0_170 = arith.constant 0 : index
    %334 = vector.load %arg7[%c1_168, %c0_169, %c0_170] : memref<6x256x32xf32, #tpu.memory_space<vmem>>, vector<1x256x32xf32>
    %335 = vector.shape_cast %334 : vector<1x256x32xf32> to vector<256x32xf32>
    %cst_171 = arith.constant dense<0.000000e+00> : vector<8x32xf32>
    %336 = tpu.matmul %333, %335, %cst_171 {dimension_numbers = #tpu.dot_dimension_numbers<[1], [0], [0], [1], [0, 0, 1, 1], [], []>} : vector<8x256xf32>, vector<256x32xf32>, vector<8x32xf32> -> vector<8x32xf32>
    %c1_172 = arith.constant 1 : index
    %c0_173 = arith.constant 0 : index
    %c0_174 = arith.constant 0 : index
    %337 = vector.load %arg8[%c1_172, %c0_173, %c0_174] : memref<6x1x32xf32, #tpu.memory_space<vmem>>, vector<1x1x32xf32>
    %338 = vector.shape_cast %337 : vector<1x1x32xf32> to vector<1x32xf32>
    %339 = vector.broadcast %338 : vector<1x32xf32> to vector<8x32xf32>
    %340 = arith.addf %336, %339 : vector<8x32xf32>
    %cst_175 = arith.constant 0.000000e+00 : f32
    %341 = vector.broadcast %cst_175 : f32 to vector<8x32xf32>
    %342 = arith.maximumf %340, %341 : vector<8x32xf32>
    %c1_176 = arith.constant 1 : index
    %c0_177 = arith.constant 0 : index
    %c0_178 = arith.constant 0 : index
    %343 = vector.load %arg9[%c1_176, %c0_177, %c0_178] : memref<6x32x32xf32, #tpu.memory_space<vmem>>, vector<1x32x32xf32>
    %344 = vector.shape_cast %343 : vector<1x32x32xf32> to vector<32x32xf32>
    %cst_179 = arith.constant dense<0.000000e+00> : vector<8x32xf32>
    %345 = tpu.matmul %342, %344, %cst_179 {dimension_numbers = #tpu.dot_dimension_numbers<[1], [0], [0], [1], [0, 0, 1, 1], [], []>} : vector<8x32xf32>, vector<32x32xf32>, vector<8x32xf32> -> vector<8x32xf32>
    %c1_180 = arith.constant 1 : index
    %c0_181 = arith.constant 0 : index
    %c0_182 = arith.constant 0 : index
    %346 = vector.load %arg10[%c1_180, %c0_181, %c0_182] : memref<6x1x32xf32, #tpu.memory_space<vmem>>, vector<1x1x32xf32>
    %347 = vector.shape_cast %346 : vector<1x1x32xf32> to vector<1x32xf32>
    %348 = vector.broadcast %347 : vector<1x32xf32> to vector<8x32xf32>
    %349 = arith.addf %345, %348 : vector<8x32xf32>
    %cst_183 = arith.constant 0.000000e+00 : f32
    %350 = vector.broadcast %cst_183 : f32 to vector<8x32xf32>
    %351 = arith.maximumf %349, %350 : vector<8x32xf32>
    %c1_184 = arith.constant 1 : index
    %c0_185 = arith.constant 0 : index
    %c0_186 = arith.constant 0 : index
    %352 = vector.load %arg11[%c1_184, %c0_185, %c0_186] : memref<6x32x256xf32, #tpu.memory_space<vmem>>, vector<1x32x256xf32>
    %353 = vector.shape_cast %352 : vector<1x32x256xf32> to vector<32x256xf32>
    %cst_187 = arith.constant dense<0.000000e+00> : vector<8x256xf32>
    %354 = tpu.matmul %351, %353, %cst_187 {dimension_numbers = #tpu.dot_dimension_numbers<[1], [0], [0], [1], [0, 0, 1, 1], [], []>} : vector<8x32xf32>, vector<32x256xf32>, vector<8x256xf32> -> vector<8x256xf32>
    %c1_188 = arith.constant 1 : index
    %c0_189 = arith.constant 0 : index
    %c0_190 = arith.constant 0 : index
    %355 = vector.load %arg12[%c1_188, %c0_189, %c0_190] : memref<6x1x256xf32, #tpu.memory_space<vmem>>, vector<1x1x256xf32>
    %356 = vector.shape_cast %355 : vector<1x1x256xf32> to vector<1x256xf32>
    %357 = vector.broadcast %356 : vector<1x256xf32> to vector<8x256xf32>
    %358 = arith.addf %354, %357 : vector<8x256xf32>
    %359 = arith.select %330, %358, %325 : vector<8x256xi1>, vector<8x256xf32>
    %c64_i32_191 = arith.constant 64 : i32
    %360 = vector.broadcast %c64_i32_191 : i32 to vector<8x256xi32>
    %361 = arith.cmpi sge, %290, %360 : vector<8x256xi32>
    %c96_i32 = arith.constant 96 : i32
    %362 = vector.broadcast %c96_i32 : i32 to vector<8x256xi32>
    %363 = arith.cmpi slt, %290, %362 : vector<8x256xi32>
    %364 = arith.andi %361, %363 : vector<8x256xi1>
    %365 = arith.select %364, %288, %359 : vector<8x256xi1>, vector<8x256xf32>
    %cst_192 = arith.constant 0.000000e+00 : f32
    %366 = vector.broadcast %cst_192 : f32 to vector<8x256xf32>
    %367 = arith.maximumf %365, %366 : vector<8x256xf32>
    %c2_193 = arith.constant 2 : index
    %c0_194 = arith.constant 0 : index
    %c0_195 = arith.constant 0 : index
    %368 = vector.load %arg7[%c2_193, %c0_194, %c0_195] : memref<6x256x32xf32, #tpu.memory_space<vmem>>, vector<1x256x32xf32>
    %369 = vector.shape_cast %368 : vector<1x256x32xf32> to vector<256x32xf32>
    %cst_196 = arith.constant dense<0.000000e+00> : vector<8x32xf32>
    %370 = tpu.matmul %367, %369, %cst_196 {dimension_numbers = #tpu.dot_dimension_numbers<[1], [0], [0], [1], [0, 0, 1, 1], [], []>} : vector<8x256xf32>, vector<256x32xf32>, vector<8x32xf32> -> vector<8x32xf32>
    %c2_197 = arith.constant 2 : index
    %c0_198 = arith.constant 0 : index
    %c0_199 = arith.constant 0 : index
    %371 = vector.load %arg8[%c2_197, %c0_198, %c0_199] : memref<6x1x32xf32, #tpu.memory_space<vmem>>, vector<1x1x32xf32>
    %372 = vector.shape_cast %371 : vector<1x1x32xf32> to vector<1x32xf32>
    %373 = vector.broadcast %372 : vector<1x32xf32> to vector<8x32xf32>
    %374 = arith.addf %370, %373 : vector<8x32xf32>
    %cst_200 = arith.constant 0.000000e+00 : f32
    %375 = vector.broadcast %cst_200 : f32 to vector<8x32xf32>
    %376 = arith.maximumf %374, %375 : vector<8x32xf32>
    %c2_201 = arith.constant 2 : index
    %c0_202 = arith.constant 0 : index
    %c0_203 = arith.constant 0 : index
    %377 = vector.load %arg9[%c2_201, %c0_202, %c0_203] : memref<6x32x32xf32, #tpu.memory_space<vmem>>, vector<1x32x32xf32>
    %378 = vector.shape_cast %377 : vector<1x32x32xf32> to vector<32x32xf32>
    %cst_204 = arith.constant dense<0.000000e+00> : vector<8x32xf32>
    %379 = tpu.matmul %376, %378, %cst_204 {dimension_numbers = #tpu.dot_dimension_numbers<[1], [0], [0], [1], [0, 0, 1, 1], [], []>} : vector<8x32xf32>, vector<32x32xf32>, vector<8x32xf32> -> vector<8x32xf32>
    %c2_205 = arith.constant 2 : index
    %c0_206 = arith.constant 0 : index
    %c0_207 = arith.constant 0 : index
    %380 = vector.load %arg10[%c2_205, %c0_206, %c0_207] : memref<6x1x32xf32, #tpu.memory_space<vmem>>, vector<1x1x32xf32>
    %381 = vector.shape_cast %380 : vector<1x1x32xf32> to vector<1x32xf32>
    %382 = vector.broadcast %381 : vector<1x32xf32> to vector<8x32xf32>
    %383 = arith.addf %379, %382 : vector<8x32xf32>
    %cst_208 = arith.constant 0.000000e+00 : f32
    %384 = vector.broadcast %cst_208 : f32 to vector<8x32xf32>
    %385 = arith.maximumf %383, %384 : vector<8x32xf32>
    %c2_209 = arith.constant 2 : index
    %c0_210 = arith.constant 0 : index
    %c0_211 = arith.constant 0 : index
    %386 = vector.load %arg11[%c2_209, %c0_210, %c0_211] : memref<6x32x256xf32, #tpu.memory_space<vmem>>, vector<1x32x256xf32>
    %387 = vector.shape_cast %386 : vector<1x32x256xf32> to vector<32x256xf32>
    %cst_212 = arith.constant dense<0.000000e+00> : vector<8x256xf32>
    %388 = tpu.matmul %385, %387, %cst_212 {dimension_numbers = #tpu.dot_dimension_numbers<[1], [0], [0], [1], [0, 0, 1, 1], [], []>} : vector<8x32xf32>, vector<32x256xf32>, vector<8x256xf32> -> vector<8x256xf32>
    %c2_213 = arith.constant 2 : index
    %c0_214 = arith.constant 0 : index
    %c0_215 = arith.constant 0 : index
    %389 = vector.load %arg12[%c2_213, %c0_214, %c0_215] : memref<6x1x256xf32, #tpu.memory_space<vmem>>, vector<1x1x256xf32>
    %390 = vector.shape_cast %389 : vector<1x1x256xf32> to vector<1x256xf32>
    %391 = vector.broadcast %390 : vector<1x256xf32> to vector<8x256xf32>
    %392 = arith.addf %388, %391 : vector<8x256xf32>
    %393 = arith.select %364, %392, %359 : vector<8x256xi1>, vector<8x256xf32>
    %c96_i32_216 = arith.constant 96 : i32
    %394 = vector.broadcast %c96_i32_216 : i32 to vector<8x256xi32>
    %395 = arith.cmpi sge, %290, %394 : vector<8x256xi32>
    %c128_i32 = arith.constant 128 : i32
    %396 = vector.broadcast %c128_i32 : i32 to vector<8x256xi32>
    %397 = arith.cmpi slt, %290, %396 : vector<8x256xi32>
    %398 = arith.andi %395, %397 : vector<8x256xi1>
    %399 = arith.select %398, %288, %393 : vector<8x256xi1>, vector<8x256xf32>
    %cst_217 = arith.constant 0.000000e+00 : f32
    %400 = vector.broadcast %cst_217 : f32 to vector<8x256xf32>
    %401 = arith.maximumf %399, %400 : vector<8x256xf32>
    %c3_218 = arith.constant 3 : index
    %c0_219 = arith.constant 0 : index
    %c0_220 = arith.constant 0 : index
    %402 = vector.load %arg7[%c3_218, %c0_219, %c0_220] : memref<6x256x32xf32, #tpu.memory_space<vmem>>, vector<1x256x32xf32>
    %403 = vector.shape_cast %402 : vector<1x256x32xf32> to vector<256x32xf32>
    %cst_221 = arith.constant dense<0.000000e+00> : vector<8x32xf32>
    %404 = tpu.matmul %401, %403, %cst_221 {dimension_numbers = #tpu.dot_dimension_numbers<[1], [0], [0], [1], [0, 0, 1, 1], [], []>} : vector<8x256xf32>, vector<256x32xf32>, vector<8x32xf32> -> vector<8x32xf32>
    %c3_222 = arith.constant 3 : index
    %c0_223 = arith.constant 0 : index
    %c0_224 = arith.constant 0 : index
    %405 = vector.load %arg8[%c3_222, %c0_223, %c0_224] : memref<6x1x32xf32, #tpu.memory_space<vmem>>, vector<1x1x32xf32>
    %406 = vector.shape_cast %405 : vector<1x1x32xf32> to vector<1x32xf32>
    %407 = vector.broadcast %406 : vector<1x32xf32> to vector<8x32xf32>
    %408 = arith.addf %404, %407 : vector<8x32xf32>
    %cst_225 = arith.constant 0.000000e+00 : f32
    %409 = vector.broadcast %cst_225 : f32 to vector<8x32xf32>
    %410 = arith.maximumf %408, %409 : vector<8x32xf32>
    %c3_226 = arith.constant 3 : index
    %c0_227 = arith.constant 0 : index
    %c0_228 = arith.constant 0 : index
    %411 = vector.load %arg9[%c3_226, %c0_227, %c0_228] : memref<6x32x32xf32, #tpu.memory_space<vmem>>, vector<1x32x32xf32>
    %412 = vector.shape_cast %411 : vector<1x32x32xf32> to vector<32x32xf32>
    %cst_229 = arith.constant dense<0.000000e+00> : vector<8x32xf32>
    %413 = tpu.matmul %410, %412, %cst_229 {dimension_numbers = #tpu.dot_dimension_numbers<[1], [0], [0], [1], [0, 0, 1, 1], [], []>} : vector<8x32xf32>, vector<32x32xf32>, vector<8x32xf32> -> vector<8x32xf32>
    %c3_230 = arith.constant 3 : index
    %c0_231 = arith.constant 0 : index
    %c0_232 = arith.constant 0 : index
    %414 = vector.load %arg10[%c3_230, %c0_231, %c0_232] : memref<6x1x32xf32, #tpu.memory_space<vmem>>, vector<1x1x32xf32>
    %415 = vector.shape_cast %414 : vector<1x1x32xf32> to vector<1x32xf32>
    %416 = vector.broadcast %415 : vector<1x32xf32> to vector<8x32xf32>
    %417 = arith.addf %413, %416 : vector<8x32xf32>
    %cst_233 = arith.constant 0.000000e+00 : f32
    %418 = vector.broadcast %cst_233 : f32 to vector<8x32xf32>
    %419 = arith.maximumf %417, %418 : vector<8x32xf32>
    %c3_234 = arith.constant 3 : index
    %c0_235 = arith.constant 0 : index
    %c0_236 = arith.constant 0 : index
    %420 = vector.load %arg11[%c3_234, %c0_235, %c0_236] : memref<6x32x256xf32, #tpu.memory_space<vmem>>, vector<1x32x256xf32>
    %421 = vector.shape_cast %420 : vector<1x32x256xf32> to vector<32x256xf32>
    %cst_237 = arith.constant dense<0.000000e+00> : vector<8x256xf32>
    %422 = tpu.matmul %419, %421, %cst_237 {dimension_numbers = #tpu.dot_dimension_numbers<[1], [0], [0], [1], [0, 0, 1, 1], [], []>} : vector<8x32xf32>, vector<32x256xf32>, vector<8x256xf32> -> vector<8x256xf32>
    %c3_238 = arith.constant 3 : index
    %c0_239 = arith.constant 0 : index
    %c0_240 = arith.constant 0 : index
    %423 = vector.load %arg12[%c3_238, %c0_239, %c0_240] : memref<6x1x256xf32, #tpu.memory_space<vmem>>, vector<1x1x256xf32>
    %424 = vector.shape_cast %423 : vector<1x1x256xf32> to vector<1x256xf32>
    %425 = vector.broadcast %424 : vector<1x256xf32> to vector<8x256xf32>
    %426 = arith.addf %422, %425 : vector<8x256xf32>
    %427 = arith.select %398, %426, %393 : vector<8x256xi1>, vector<8x256xf32>
    %c128_i32_241 = arith.constant 128 : i32
    %428 = vector.broadcast %c128_i32_241 : i32 to vector<8x256xi32>
    %429 = arith.cmpi sge, %290, %428 : vector<8x256xi32>
    %c160_i32 = arith.constant 160 : i32
    %430 = vector.broadcast %c160_i32 : i32 to vector<8x256xi32>
    %431 = arith.cmpi slt, %290, %430 : vector<8x256xi32>
    %432 = arith.andi %429, %431 : vector<8x256xi1>
    %433 = arith.select %432, %288, %427 : vector<8x256xi1>, vector<8x256xf32>
    %cst_242 = arith.constant 0.000000e+00 : f32
    %434 = vector.broadcast %cst_242 : f32 to vector<8x256xf32>
    %435 = arith.maximumf %433, %434 : vector<8x256xf32>
    %c4_243 = arith.constant 4 : index
    %c0_244 = arith.constant 0 : index
    %c0_245 = arith.constant 0 : index
    %436 = vector.load %arg7[%c4_243, %c0_244, %c0_245] : memref<6x256x32xf32, #tpu.memory_space<vmem>>, vector<1x256x32xf32>
    %437 = vector.shape_cast %436 : vector<1x256x32xf32> to vector<256x32xf32>
    %cst_246 = arith.constant dense<0.000000e+00> : vector<8x32xf32>
    %438 = tpu.matmul %435, %437, %cst_246 {dimension_numbers = #tpu.dot_dimension_numbers<[1], [0], [0], [1], [0, 0, 1, 1], [], []>} : vector<8x256xf32>, vector<256x32xf32>, vector<8x32xf32> -> vector<8x32xf32>
    %c4_247 = arith.constant 4 : index
    %c0_248 = arith.constant 0 : index
    %c0_249 = arith.constant 0 : index
    %439 = vector.load %arg8[%c4_247, %c0_248, %c0_249] : memref<6x1x32xf32, #tpu.memory_space<vmem>>, vector<1x1x32xf32>
    %440 = vector.shape_cast %439 : vector<1x1x32xf32> to vector<1x32xf32>
    %441 = vector.broadcast %440 : vector<1x32xf32> to vector<8x32xf32>
    %442 = arith.addf %438, %441 : vector<8x32xf32>
    %cst_250 = arith.constant 0.000000e+00 : f32
    %443 = vector.broadcast %cst_250 : f32 to vector<8x32xf32>
    %444 = arith.maximumf %442, %443 : vector<8x32xf32>
    %c4_251 = arith.constant 4 : index
    %c0_252 = arith.constant 0 : index
    %c0_253 = arith.constant 0 : index
    %445 = vector.load %arg9[%c4_251, %c0_252, %c0_253] : memref<6x32x32xf32, #tpu.memory_space<vmem>>, vector<1x32x32xf32>
    %446 = vector.shape_cast %445 : vector<1x32x32xf32> to vector<32x32xf32>
    %cst_254 = arith.constant dense<0.000000e+00> : vector<8x32xf32>
    %447 = tpu.matmul %444, %446, %cst_254 {dimension_numbers = #tpu.dot_dimension_numbers<[1], [0], [0], [1], [0, 0, 1, 1], [], []>} : vector<8x32xf32>, vector<32x32xf32>, vector<8x32xf32> -> vector<8x32xf32>
    %c4_255 = arith.constant 4 : index
    %c0_256 = arith.constant 0 : index
    %c0_257 = arith.constant 0 : index
    %448 = vector.load %arg10[%c4_255, %c0_256, %c0_257] : memref<6x1x32xf32, #tpu.memory_space<vmem>>, vector<1x1x32xf32>
    %449 = vector.shape_cast %448 : vector<1x1x32xf32> to vector<1x32xf32>
    %450 = vector.broadcast %449 : vector<1x32xf32> to vector<8x32xf32>
    %451 = arith.addf %447, %450 : vector<8x32xf32>
    %cst_258 = arith.constant 0.000000e+00 : f32
    %452 = vector.broadcast %cst_258 : f32 to vector<8x32xf32>
    %453 = arith.maximumf %451, %452 : vector<8x32xf32>
    %c4_259 = arith.constant 4 : index
    %c0_260 = arith.constant 0 : index
    %c0_261 = arith.constant 0 : index
    %454 = vector.load %arg11[%c4_259, %c0_260, %c0_261] : memref<6x32x256xf32, #tpu.memory_space<vmem>>, vector<1x32x256xf32>
    %455 = vector.shape_cast %454 : vector<1x32x256xf32> to vector<32x256xf32>
    %cst_262 = arith.constant dense<0.000000e+00> : vector<8x256xf32>
    %456 = tpu.matmul %453, %455, %cst_262 {dimension_numbers = #tpu.dot_dimension_numbers<[1], [0], [0], [1], [0, 0, 1, 1], [], []>} : vector<8x32xf32>, vector<32x256xf32>, vector<8x256xf32> -> vector<8x256xf32>
    %c4_263 = arith.constant 4 : index
    %c0_264 = arith.constant 0 : index
    %c0_265 = arith.constant 0 : index
    %457 = vector.load %arg12[%c4_263, %c0_264, %c0_265] : memref<6x1x256xf32, #tpu.memory_space<vmem>>, vector<1x1x256xf32>
    %458 = vector.shape_cast %457 : vector<1x1x256xf32> to vector<1x256xf32>
    %459 = vector.broadcast %458 : vector<1x256xf32> to vector<8x256xf32>
    %460 = arith.addf %456, %459 : vector<8x256xf32>
    %461 = arith.select %432, %460, %427 : vector<8x256xi1>, vector<8x256xf32>
    %c160_i32_266 = arith.constant 160 : i32
    %462 = vector.broadcast %c160_i32_266 : i32 to vector<8x256xi32>
    %463 = arith.cmpi sge, %290, %462 : vector<8x256xi32>
    %c192_i32 = arith.constant 192 : i32
    %464 = vector.broadcast %c192_i32 : i32 to vector<8x256xi32>
    %465 = arith.cmpi slt, %290, %464 : vector<8x256xi32>
    %466 = arith.andi %463, %465 : vector<8x256xi1>
    %467 = arith.select %466, %288, %461 : vector<8x256xi1>, vector<8x256xf32>
    %cst_267 = arith.constant 0.000000e+00 : f32
    %468 = vector.broadcast %cst_267 : f32 to vector<8x256xf32>
    %469 = arith.maximumf %467, %468 : vector<8x256xf32>
    %c5_268 = arith.constant 5 : index
    %c0_269 = arith.constant 0 : index
    %c0_270 = arith.constant 0 : index
    %470 = vector.load %arg7[%c5_268, %c0_269, %c0_270] : memref<6x256x32xf32, #tpu.memory_space<vmem>>, vector<1x256x32xf32>
    %471 = vector.shape_cast %470 : vector<1x256x32xf32> to vector<256x32xf32>
    %cst_271 = arith.constant dense<0.000000e+00> : vector<8x32xf32>
    %472 = tpu.matmul %469, %471, %cst_271 {dimension_numbers = #tpu.dot_dimension_numbers<[1], [0], [0], [1], [0, 0, 1, 1], [], []>} : vector<8x256xf32>, vector<256x32xf32>, vector<8x32xf32> -> vector<8x32xf32>
    %c5_272 = arith.constant 5 : index
    %c0_273 = arith.constant 0 : index
    %c0_274 = arith.constant 0 : index
    %473 = vector.load %arg8[%c5_272, %c0_273, %c0_274] : memref<6x1x32xf32, #tpu.memory_space<vmem>>, vector<1x1x32xf32>
    %474 = vector.shape_cast %473 : vector<1x1x32xf32> to vector<1x32xf32>
    %475 = vector.broadcast %474 : vector<1x32xf32> to vector<8x32xf32>
    %476 = arith.addf %472, %475 : vector<8x32xf32>
    %cst_275 = arith.constant 0.000000e+00 : f32
    %477 = vector.broadcast %cst_275 : f32 to vector<8x32xf32>
    %478 = arith.maximumf %476, %477 : vector<8x32xf32>
    %c5_276 = arith.constant 5 : index
    %c0_277 = arith.constant 0 : index
    %c0_278 = arith.constant 0 : index
    %479 = vector.load %arg9[%c5_276, %c0_277, %c0_278] : memref<6x32x32xf32, #tpu.memory_space<vmem>>, vector<1x32x32xf32>
    %480 = vector.shape_cast %479 : vector<1x32x32xf32> to vector<32x32xf32>
    %cst_279 = arith.constant dense<0.000000e+00> : vector<8x32xf32>
    %481 = tpu.matmul %478, %480, %cst_279 {dimension_numbers = #tpu.dot_dimension_numbers<[1], [0], [0], [1], [0, 0, 1, 1], [], []>} : vector<8x32xf32>, vector<32x32xf32>, vector<8x32xf32> -> vector<8x32xf32>
    %c5_280 = arith.constant 5 : index
    %c0_281 = arith.constant 0 : index
    %c0_282 = arith.constant 0 : index
    %482 = vector.load %arg10[%c5_280, %c0_281, %c0_282] : memref<6x1x32xf32, #tpu.memory_space<vmem>>, vector<1x1x32xf32>
    %483 = vector.shape_cast %482 : vector<1x1x32xf32> to vector<1x32xf32>
    %484 = vector.broadcast %483 : vector<1x32xf32> to vector<8x32xf32>
    %485 = arith.addf %481, %484 : vector<8x32xf32>
    %cst_283 = arith.constant 0.000000e+00 : f32
    %486 = vector.broadcast %cst_283 : f32 to vector<8x32xf32>
    %487 = arith.maximumf %485, %486 : vector<8x32xf32>
    %c5_284 = arith.constant 5 : index
    %c0_285 = arith.constant 0 : index
    %c0_286 = arith.constant 0 : index
    %488 = vector.load %arg11[%c5_284, %c0_285, %c0_286] : memref<6x32x256xf32, #tpu.memory_space<vmem>>, vector<1x32x256xf32>
    %489 = vector.shape_cast %488 : vector<1x32x256xf32> to vector<32x256xf32>
    %cst_287 = arith.constant dense<0.000000e+00> : vector<8x256xf32>
    %490 = tpu.matmul %487, %489, %cst_287 {dimension_numbers = #tpu.dot_dimension_numbers<[1], [0], [0], [1], [0, 0, 1, 1], [], []>} : vector<8x32xf32>, vector<32x256xf32>, vector<8x256xf32> -> vector<8x256xf32>
    %c5_288 = arith.constant 5 : index
    %c0_289 = arith.constant 0 : index
    %c0_290 = arith.constant 0 : index
    %491 = vector.load %arg12[%c5_288, %c0_289, %c0_290] : memref<6x1x256xf32, #tpu.memory_space<vmem>>, vector<1x1x256xf32>
    %492 = vector.shape_cast %491 : vector<1x1x256xf32> to vector<1x256xf32>
    %493 = vector.broadcast %492 : vector<1x256xf32> to vector<8x256xf32>
    %494 = arith.addf %490, %493 : vector<8x256xf32>
    %495 = arith.select %466, %494, %461 : vector<8x256xi1>, vector<8x256xf32>
    %cst_291 = arith.constant 0.000000e+00 : f32
    %496 = vector.broadcast %cst_291 : f32 to vector<8x256xf32>
    %497 = arith.maximumf %495, %496 : vector<8x256xf32>
    %c0_292 = arith.constant 0 : index
    %c0_293 = arith.constant 0 : index
    %498 = vector.load %arg13[%c0_292, %c0_293] : memref<256x16xf32, #tpu.memory_space<vmem>>, vector<256x16xf32>
    %cst_294 = arith.constant dense<0.000000e+00> : vector<8x16xf32>
    %499 = tpu.matmul %497, %498, %cst_294 {dimension_numbers = #tpu.dot_dimension_numbers<[1], [0], [0], [1], [0, 0, 1, 1], [], []>} : vector<8x256xf32>, vector<256x16xf32>, vector<8x16xf32> -> vector<8x16xf32>
    %c0_295 = arith.constant 0 : index
    %c0_296 = arith.constant 0 : index
    %500 = vector.load %arg14[%c0_295, %c0_296] : memref<1x16xf32, #tpu.memory_space<vmem>>, vector<1x16xf32>
    %501 = vector.broadcast %500 : vector<1x16xf32> to vector<8x16xf32>
    %502 = arith.addf %499, %501 : vector<8x16xf32>
    %c0_297 = arith.constant 0 : index
    %c0_298 = arith.constant 0 : index
    %503 = vector.load %arg15[%c0_297, %c0_298] : memref<8x16xf32, #tpu.memory_space<vmem>>, vector<8x16xf32>
    tpu.vector_store %arg15[%c0_297, %c0_298], %502 {strides = array<i32>} : memref<8x16xf32, #tpu.memory_space<vmem>>, vector<8x16xf32>,
    return
  }
  func.func @transform_0(%arg0: i32) -> (i32, i32) {
    %c0_i32 = arith.constant 0 : i32
    %c0_i32_0 = arith.constant 0 : i32
    %c0_i32_1 = arith.constant 0 : i32
    return %c0_i32, %c0_i32_0 : i32, i32
  }
  func.func @transform_1(%arg0: i32) -> (i32, i32) {
    %c0_i32 = arith.constant 0 : i32
    %c0_i32_0 = arith.constant 0 : i32
    %c0_i32_1 = arith.constant 0 : i32
    return %c0_i32, %c0_i32_0 : i32, i32
  }
  func.func @transform_2(%arg0: i32) -> (i32, i32) {
    %c0_i32 = arith.constant 0 : i32
    %c0_i32_0 = arith.constant 0 : i32
    %c0_i32_1 = arith.constant 0 : i32
    return %c0_i32, %c0_i32_0 : i32, i32
  }
  func.func @transform_3(%arg0: i32) -> (i32, i32, i32) {
    %c0_i32 = arith.constant 0 : i32
    %c0_i32_0 = arith.constant 0 : i32
    %c0_i32_1 = arith.constant 0 : i32
    %c0_i32_2 = arith.constant 0 : i32
    return %c0_i32, %c0_i32_0, %c0_i32_1 : i32, i32, i32
  }
  func.func @transform_4(%arg0: i32) -> (i32, i32) {
    %c0_i32 = arith.constant 0 : i32
    %c0_i32_0 = arith.constant 0 : i32
    %c0_i32_1 = arith.constant 0 : i32
    return %c0_i32, %c0_i32_0 : i32, i32
  }
  func.func @transform_5(%arg0: i32) -> (i32, i32) {
    %c0_i32 = arith.constant 0 : i32
    %c0_i32_0 = arith.constant 0 : i32
    %c0_i32_1 = arith.constant 0 : i32
    return %c0_i32, %c0_i32_0 : i32, i32
  }
  func.func @transform_6(%arg0: i32) -> (i32, i32, i32) {
    %c0_i32 = arith.constant 0 : i32
    %c0_i32_0 = arith.constant 0 : i32
    %c0_i32_1 = arith.constant 0 : i32
    %c0_i32_2 = arith.constant 0 : i32
    return %c0_i32, %c0_i32_0, %c0_i32_1 : i32, i32, i32
  }
  func.func @transform_7(%arg0: i32) -> (i32, i32, i32) {
    %c0_i32 = arith.constant 0 : i32
    %c0_i32_0 = arith.constant 0 : i32
    %c0_i32_1 = arith.constant 0 : i32
    %c0_i32_2 = arith.constant 0 : i32
    return %c0_i32, %c0_i32_0, %c0_i32_1 : i32, i32, i32
  }
  func.func @transform_8(%arg0: i32) -> (i32, i32, i32) {
    %c0_i32 = arith.constant 0 : i32
    %c0_i32_0 = arith.constant 0 : i32
    %c0_i32_1 = arith.constant 0 : i32
    %c0_i32_2 = arith.constant 0 : i32
    return %c0_i32, %c0_i32_0, %c0_i32_1 : i32, i32, i32
  }
  func.func @transform_9(%arg0: i32) -> (i32, i32, i32) {
    %c0_i32 = arith.constant 0 : i32
    %c0_i32_0 = arith.constant 0 : i32
    %c0_i32_1 = arith.constant 0 : i32
    %c0_i32_2 = arith.constant 0 : i32
    return %c0_i32, %c0_i32_0, %c0_i32_1 : i32, i32, i32
  }
  func.func @transform_10(%arg0: i32) -> (i32, i32, i32) {
    %c0_i32 = arith.constant 0 : i32
    %c0_i32_0 = arith.constant 0 : i32
    %c0_i32_1 = arith.constant 0 : i32
    %c0_i32_2 = arith.constant 0 : i32
    return %c0_i32, %c0_i32_0, %c0_i32_1 : i32, i32, i32
  }
  func.func @transform_11(%arg0: i32) -> (i32, i32, i32) {
    %c0_i32 = arith.constant 0 : i32
    %c0_i32_0 = arith.constant 0 : i32
    %c0_i32_1 = arith.constant 0 : i32
    %c0_i32_2 = arith.constant 0 : i32
    return %c0_i32, %c0_i32_0, %c0_i32_1 : i32, i32, i32
  }
  func.func @transform_12(%arg0: i32) -> (i32, i32) {
    %c0_i32 = arith.constant 0 : i32
    %c0_i32_0 = arith.constant 0 : i32
    %c0_i32_1 = arith.constant 0 : i32
    return %c0_i32, %c0_i32_0 : i32, i32
  }
  func.func @transform_13(%arg0: i32) -> (i32, i32) {
    %c0_i32 = arith.constant 0 : i32
    %c0_i32_0 = arith.constant 0 : i32
    %c0_i32_1 = arith.constant 0 : i32
    return %c0_i32, %c0_i32_0 : i32, i32
  }
  func.func @transform_14(%arg0: i32) -> (i32, i32) {
    %c0_i32 = arith.constant 0 : i32
    %c0_i32_0 = arith.constant 0 : i32
    %c0_i32_1 = arith.constant 0 : i32
    return %c0_i32, %c0_i32_0 : i32, i32
  }
  func.func @transform_15(%arg0: i32) -> (i32, i32) {
    %c0_i32 = arith.constant 0 : i32
    %c0_i32_0 = arith.constant 0 : i32
    %c0_i32_1 = arith.constant 0 : i32
    return %c0_i32, %c0_i32_0 : i32, i32
  }
}

</mosaic_0001>

<llo_original>
// kernel: tpu_custom_call.1
$region0: #{tpu_custom_call.1}
  #allocation0 [shape = 'u32[]', space=smem, size = 0x4, offset = 0x4, fixed_abs, tag = 'smem constant byte address 0x4 - core index']
  #allocation1 [shape = 'u32[72,128]{1,0:T(1,128)}', space=vmem, size = 0x9000, scoped, tag = 'internal scratch']
  #allocation2 [shape = 'f32[64,768]{1,0:T(8,128)}', space=vmem, size = 0x30000, scoped, tag = 'scratch operand']
  #allocation3 [shape = 'f32[256,768]{1,0:T(8,128)}', space=vmem, size = 0xc0000, scoped, tag = 'scratch operand']
  %s0 = inlined_call_operand.vmem [shape: f32[64,8], index: 0, kind: input, shape index: {}]
  %s1 = inlined_call_operand.vmem [shape: f32[8,256], index: 1, kind: input, shape index: {}]
  %s2 = inlined_call_operand.vmem [shape: f32[8,768], index: 2, kind: input, shape index: {}]
  %s3 = inlined_call_operand.vmem [shape: f32[6,32,96], index: 3, kind: input, shape index: {}]
  %s4 = inlined_call_operand.vmem [shape: f32[1,768], index: 4, kind: input, shape index: {}]
  %s5 = inlined_call_operand.vmem [shape: f32[1,256], index: 5, kind: input, shape index: {}]
  %s6 = inlined_call_operand.vmem [shape: f32[6,256,32], index: 6, kind: input, shape index: {}]
  %s7 = inlined_call_operand.vmem [shape: f32[6,1,32], index: 7, kind: input, shape index: {}]
  %s8 = inlined_call_operand.vmem [shape: f32[6,32,32], index: 8, kind: input, shape index: {}]
  %s9 = inlined_call_operand.vmem [shape: f32[6,1,32], index: 9, kind: input, shape index: {}]
  %s10 = inlined_call_operand.vmem [shape: f32[6,32,256], index: 10, kind: input, shape index: {}]
  %s11 = inlined_call_operand.vmem [shape: f32[6,1,256], index: 11, kind: input, shape index: {}]
  %s12 = inlined_call_operand.vmem [shape: f32[256,16], index: 12, kind: input, shape index: {}]
  %s13 = inlined_call_operand.vmem [shape: f32[1,16], index: 13, kind: input, shape index: {}]
  %s14 = inlined_call_operand.hbm [shape: f32[8,16], index: 14, kind: output, shape index: {0}]
  %s15 = inlined_call_operand.hbm [shape: f32[8,256], index: 15, kind: output, shape index: {1}]
  %16 = xla_tuple %s14, %s15
  %s17 = sld [smem:[#allocation0]]
  $region74: #{tpu_custom_call.1} parent=0
    _
  %s19 = ssub.s32 1, %s17
  %s20 = scalar_select 0, %s19, %s17
  $region1: #{tpu_custom_call.1} parent=0
    #allocation4 [shape = 'u8[4096]{0}', space=vmem, size = 0x1000, scoped, tag = 'output window, operand 0, single buffered']
    #allocation5 [shape = 's32[1]{0}', space=sflag, size = 0x4, scoped, tag = 'scoped memory for tpu_custom_call.1']
    #allocation6 [shape = 'u8[8192]{0}', space=vmem, size = 0x2000, scoped, tag = 'output window, operand 1, single buffered']
    #allocation7 [shape = 's32[1]{0}', space=sflag, size = 0x4, scoped, tag = 'scoped memory for tpu_custom_call.1']
    %21 = vsyncpa [#allocation5], 0
    %22 = vsyncpa [#allocation7], 0
    // Predicated region
    $region2: #{tpu_custom_call.1} parent=1 // pred_check
      _
    $region3: #{tpu_custom_call.1} parent=1 // pred_check_branch
      %24 = sbr.rel (0) target = $region5
    $region4: #{tpu_custom_call.1} parent=1 // pred_region
      _
    $region5: #{tpu_custom_call.1} parent=1 // pred_fallthru
      _
    // Predicated region
    $region6: #{tpu_custom_call.1} parent=1 // pred_check
      _
    $region7: #{tpu_custom_call.1} parent=1 // pred_check_branch
      %26 = sbr.rel (0) target = $region9
    $region8: #{tpu_custom_call.1} parent=1 // pred_region
      _
    $region9: #{tpu_custom_call.1} parent=1 // pred_fallthru
      _
    // Predicated region
    $region10: #{tpu_custom_call.1} parent=1 // pred_check
      _
    $region11: #{tpu_custom_call.1} parent=1 // pred_check_branch
      %28 = sbr.rel (0) target = $region13
    $region12: #{tpu_custom_call.1} parent=1 // pred_region
      _
    $region13: #{tpu_custom_call.1} parent=1 // pred_fallthru
      _
    // Predicated region
    $region14: #{tpu_custom_call.1} parent=1 // pred_check
      _
    $region15: #{tpu_custom_call.1} parent=1 // pred_check_branch
      %30 = sbr.rel (0) target = $region17
    $region16: #{tpu_custom_call.1} parent=1 // pred_region
      _
    $region17: #{tpu_custom_call.1} parent=1 // pred_fallthru
      _
    // Predicated region
    $region18: #{tpu_custom_call.1} parent=1 // pred_check
      _
    $region19: #{tpu_custom_call.1} parent=1 // pred_check_branch
      %32 = sbr.rel (0) target = $region21
    $region20: #{tpu_custom_call.1} parent=1 // pred_region
      _
    $region21: #{tpu_custom_call.1} parent=1 // pred_fallthru
      _
    // Predicated region
    $region22: #{tpu_custom_call.1} parent=1 // pred_check
      _
    $region23: #{tpu_custom_call.1} parent=1 // pred_check_branch
      %34 = sbr.rel (0) target = $region25
    $region24: #{tpu_custom_call.1} parent=1 // pred_region
      _
    $region25: #{tpu_custom_call.1} parent=1 // pred_fallthru
      _
    // Predicated region
    $region26: #{tpu_custom_call.1} parent=1 // pred_check
      _
    $region27: #{tpu_custom_call.1} parent=1 // pred_check_branch
      %36 = sbr.rel (0) target = $region29
    $region28: #{tpu_custom_call.1} parent=1 // pred_region
      _
    $region29: #{tpu_custom_call.1} parent=1 // pred_fallthru
      _
    // Predicated region
    $region30: #{tpu_custom_call.1} parent=1 // pred_check
      _
    $region31: #{tpu_custom_call.1} parent=1 // pred_check_branch
      %38 = sbr.rel (0) target = $region33
    $region32: #{tpu_custom_call.1} parent=1 // pred_region
      _
    $region33: #{tpu_custom_call.1} parent=1 // pred_fallthru
      _
    // Predicated region
    $region34: #{tpu_custom_call.1} parent=1 // pred_check
      _
    $region35: #{tpu_custom_call.1} parent=1 // pred_check_branch
      %40 = sbr.rel (0) target = $region37
    $region36: #{tpu_custom_call.1} parent=1 // pred_region
      _
    $region37: #{tpu_custom_call.1} parent=1 // pred_fallthru
      _
    // Predicated region
    $region38: #{tpu_custom_call.1} parent=1 // pred_check
      _
    $region39: #{tpu_custom_call.1} parent=1 // pred_check_branch
      %42 = sbr.rel (0) target = $region41
    $region40: #{tpu_custom_call.1} parent=1 // pred_region
      _
    $region41: #{tpu_custom_call.1} parent=1 // pred_fallthru
      _
    // Predicated region
    $region42: #{tpu_custom_call.1} parent=1 // pred_check
      _
    $region43: #{tpu_custom_call.1} parent=1 // pred_check_branch
      %44 = sbr.rel (0) target = $region45
    $region44: #{tpu_custom_call.1} parent=1 // pred_region
      _
    $region45: #{tpu_custom_call.1} parent=1 // pred_fallthru
      _
    // Predicated region
    $region46: #{tpu_custom_call.1} parent=1 // pred_check
      _
    $region47: #{tpu_custom_call.1} parent=1 // pred_check_branch
      %46 = sbr.rel (0) target = $region49
    $region48: #{tpu_custom_call.1} parent=1 // pred_region
      _
    $region49: #{tpu_custom_call.1} parent=1 // pred_fallthru
      _
    // Predicated region
    $region50: #{tpu_custom_call.1} parent=1 // pred_check
      _
    $region51: #{tpu_custom_call.1} parent=1 // pred_check_branch
      %48 = sbr.rel (0) target = $region53
    $region52: #{tpu_custom_call.1} parent=1 // pred_region
      _
    $region53: #{tpu_custom_call.1} parent=1 // pred_fallthru
      _
    // Predicated region
    $region54: #{tpu_custom_call.1} parent=1 // pred_check
      _
    $region55: #{tpu_custom_call.1} parent=1 // pred_check_branch
      %50 = sbr.rel (0) target = $region57
    $region56: #{tpu_custom_call.1} parent=1 // pred_region
      _
    $region57: #{tpu_custom_call.1} parent=1 // pred_fallthru
      _
    %51 = vst [vmem:[#allocation3] sm:$0xff] 0.0
    %52 = vst [vmem:[#allocation3 + $0x8] sm:$0xff] 0.0
    %53 = vst [vmem:[#allocation3 + $0x10] sm:$0xff] 0.0
    %54 = vst [vmem:[#allocation3 + $0x18] sm:$0xff] 0.0
    %55 = vst [vmem:[#allocation3 + $0x20] sm:$0xff] 0.0
    %56 = vst [vmem:[#allocation3 + $0x28] sm:$0xff] 0.0
    %57 = vst [vmem:[#allocation3 + $0x30] sm:$0xff] 0.0
    %58 = vst [vmem:[#allocation3 + $0x38] sm:$0xff] 0.0
    %59 = vst [vmem:[#allocation3 + $0x40] sm:$0xff] 0.0
    %60 = vst [vmem:[#allocation3 + $0x48] sm:$0xff] 0.0
    %61 = vst [vmem:[#allocation3 + $0x50] sm:$0xff] 0.0
    %62 = vst [vmem:[#allocation3 + $0x58] sm:$0xff] 0.0
    %63 = vst [vmem:[#allocation3 + $0x60] sm:$0xff] 0.0
    %64 = vst [vmem:[#allocation3 + $0x68] sm:$0xff] 0.0
    %65 = vst [vmem:[#allocation3 + $0x70] sm:$0xff] 0.0
    %66 = vst [vmem:[#allocation3 + $0x78] sm:$0xff] 0.0
    %67 = vst [vmem:[#allocation3 + $0x80] sm:$0xff] 0.0
    %68 = vst [vmem:[#allocation3 + $0x88] sm:$0xff] 0.0
    %69 = vst [vmem:[#allocation3 + $0x90] sm:$0xff] 0.0
    %70 = vst [vmem:[#allocation3 + $0x98] sm:$0xff] 0.0
    %71 = vst [vmem:[#allocation3 + $0xa0] sm:$0xff] 0.0
    %72 = vst [vmem:[#allocation3 + $0xa8] sm:$0xff] 0.0
    %73 = vst [vmem:[#allocation3 + $0xb0] sm:$0xff] 0.0
    %74 = vst [vmem:[#allocation3 + $0xb8] sm:$0xff] 0.0
    %75 = vst [vmem:[#allocation3 + $0xc0] sm:$0xff] 0.0
    %76 = vst [vmem:[#allocation3 + $0xc8] sm:$0xff] 0.0
    %77 = vst [vmem:[#allocation3 + $0xd0] sm:$0xff] 0.0
    %78 = vst [vmem:[#allocation3 + $0xd8] sm:$0xff] 0.0
    %79 = vst [vmem:[#allocation3 + $0xe0] sm:$0xff] 0.0
    %80 = vst [vmem:[#allocation3 + $0xe8] sm:$0xff] 0.0
    %81 = vst [vmem:[#allocation3 + $0xf0] sm:$0xff] 0.0
    %82 = vst [vmem:[#allocation3 + $0xf8] sm:$0xff] 0.0
    %83 = vst [vmem:[#allocation3 + $0x100] sm:$0xff] 0.0
    %84 = vst [vmem:[#allocation3 + $0x108] sm:$0xff] 0.0
    %85 = vst [vmem:[#allocation3 + $0x110] sm:$0xff] 0.0
    %86 = vst [vmem:[#allocation3 + $0x118] sm:$0xff] 0.0
    %87 = vst [vmem:[#allocation3 + $0x120] sm:$0xff] 0.0
    %88 = vst [vmem:[#allocation3 + $0x128] sm:$0xff] 0.0
    %89 = vst [vmem:[#allocation3 + $0x130] sm:$0xff] 0.0
    %90 = vst [vmem:[#allocation3 + $0x138] sm:$0xff] 0.0
    %91 = vst [vmem:[#allocation3 + $0x140] sm:$0xff] 0.0
    %92 = vst [vmem:[#allocation3 + $0x148] sm:$0xff] 0.0
    %93 = vst [vmem:[#allocation3 + $0x150] sm:$0xff] 0.0
    %94 = vst [vmem:[#allocation3 + $0x158] sm:$0xff] 0.0
    %95 = vst [vmem:[#allocation3 + $0x160] sm:$0xff] 0.0
    %96 = vst [vmem:[#allocation3 + $0x168] sm:$0xff] 0.0
    %97 = vst [vmem:[#allocation3 + $0x170] sm:$0xff] 0.0
    %98 = vst [vmem:[#allocation3 + $0x178] sm:$0xff] 0.0
    %99 = vst [vmem:[#allocation3 + $0x180] sm:$0xff] 0.0
    %100 = vst [vmem:[#allocation3 + $0x188] sm:$0xff] 0.0
    %101 = vst [vmem:[#allocation3 + $0x190] sm:$0xff] 0.0
    %102 = vst [vmem:[#allocation3 + $0x198] sm:$0xff] 0.0
    %103 = vst [vmem:[#allocation3 + $0x1a0] sm:$0xff] 0.0
    %104 = vst [vmem:[#allocation3 + $0x1a8] sm:$0xff] 0.0
    %105 = vst [vmem:[#allocation3 + $0x1b0] sm:$0xff] 0.0
    %106 = vst [vmem:[#allocation3 + $0x1b8] sm:$0xff] 0.0
    %107 = vst [vmem:[#allocation3 + $0x1c0] sm:$0xff] 0.0
    %108 = vst [vmem:[#allocation3 + $0x1c8] sm:$0xff] 0.0
    %109 = vst [vmem:[#allocation3 + $0x1d0] sm:$0xff] 0.0
    %110 = vst [vmem:[#allocation3 + $0x1d8] sm:$0xff] 0.0
    %111 = vst [vmem:[#allocation3 + $0x1e0] sm:$0xff] 0.0
    %112 = vst [vmem:[#allocation3 + $0x1e8] sm:$0xff] 0.0
    %113 = vst [vmem:[#allocation3 + $0x1f0] sm:$0xff] 0.0
    %114 = vst [vmem:[#allocation3 + $0x1f8] sm:$0xff] 0.0
    %115 = vst [vmem:[#allocation3 + $0x200] sm:$0xff] 0.0
    %116 = vst [vmem:[#allocation3 + $0x208] sm:$0xff] 0.0
    %117 = vst [vmem:[#allocation3 + $0x210] sm:$0xff] 0.0
    %118 = vst [vmem:[#allocation3 + $0x218] sm:$0xff] 0.0
    %119 = vst [vmem:[#allocation3 + $0x220] sm:$0xff] 0.0
    %120 = vst [vmem:[#allocation3 + $0x228] sm:$0xff] 0.0
    %121 = vst [vmem:[#allocation3 + $0x230] sm:$0xff] 0.0
    %122 = vst [vmem:[#allocation3 + $0x238] sm:$0xff] 0.0
    %123 = vst [vmem:[#allocation3 + $0x240] sm:$0xff] 0.0
    %124 = vst [vmem:[#allocation3 + $0x248] sm:$0xff] 0.0
    %125 = vst [vmem:[#allocation3 + $0x250] sm:$0xff] 0.0
    %126 = vst [vmem:[#allocation3 + $0x258] sm:$0xff] 0.0
    %127 = vst [vmem:[#allocation3 + $0x260] sm:$0xff] 0.0
    %128 = vst [vmem:[#allocation3 + $0x268] sm:$0xff] 0.0
    %129 = vst [vmem:[#allocation3 + $0x270] sm:$0xff] 0.0
    %130 = vst [vmem:[#allocation3 + $0x278] sm:$0xff] 0.0
    %131 = vst [vmem:[#allocation3 + $0x280] sm:$0xff] 0.0
    %132 = vst [vmem:[#allocation3 + $0x288] sm:$0xff] 0.0
    %133 = vst [vmem:[#allocation3 + $0x290] sm:$0xff] 0.0
    %134 = vst [vmem:[#allocation3 + $0x298] sm:$0xff] 0.0
    %135 = vst [vmem:[#allocation3 + $0x2a0] sm:$0xff] 0.0
    %136 = vst [vmem:[#allocation3 + $0x2a8] sm:$0xff] 0.0
    %137 = vst [vmem:[#allocation3 + $0x2b0] sm:$0xff] 0.0
    %138 = vst [vmem:[#allocation3 + $0x2b8] sm:$0xff] 0.0
    %139 = vst [vmem:[#allocation3 + $0x2c0] sm:$0xff] 0.0
    %140 = vst [vmem:[#allocation3 + $0x2c8] sm:$0xff] 0.0
    %141 = vst [vmem:[#allocation3 + $0x2d0] sm:$0xff] 0.0
    %142 = vst [vmem:[#allocation3 + $0x2d8] sm:$0xff] 0.0
    %143 = vst [vmem:[#allocation3 + $0x2e0] sm:$0xff] 0.0
    %144 = vst [vmem:[#allocation3 + $0x2e8] sm:$0xff] 0.0
    %145 = vst [vmem:[#allocation3 + $0x2f0] sm:$0xff] 0.0
    %146 = vst [vmem:[#allocation3 + $0x2f8] sm:$0xff] 0.0
    %147 = vst [vmem:[#allocation3 + $0x300] sm:$0xff] 0.0
    %148 = vst [vmem:[#allocation3 + $0x308] sm:$0xff] 0.0
    %149 = vst [vmem:[#allocation3 + $0x310] sm:$0xff] 0.0
    %150 = vst [vmem:[#allocation3 + $0x318] sm:$0xff] 0.0
    %151 = vst [vmem:[#allocation3 + $0x320] sm:$0xff] 0.0
    %152 = vst [vmem:[#allocation3 + $0x328] sm:$0xff] 0.0
    %153 = vst [vmem:[#allocation3 + $0x330] sm:$0xff] 0.0
    %154 = vst [vmem:[#allocation3 + $0x338] sm:$0xff] 0.0
    %155 = vst [vmem:[#allocation3 + $0x340] sm:$0xff] 0.0
    %156 = vst [vmem:[#allocation3 + $0x348] sm:$0xff] 0.0
    %157 = vst [vmem:[#allocation3 + $0x350] sm:$0xff] 0.0
    %158 = vst [vmem:[#allocation3 + $0x358] sm:$0xff] 0.0
    %159 = vst [vmem:[#allocation3 + $0x360] sm:$0xff] 0.0
    %160 = vst [vmem:[#allocation3 + $0x368] sm:$0xff] 0.0
    %161 = vst [vmem:[#allocation3 + $0x370] sm:$0xff] 0.0
    %162 = vst [vmem:[#allocation3 + $0x378] sm:$0xff] 0.0
    %163 = vst [vmem:[#allocation3 + $0x380] sm:$0xff] 0.0
    %164 = vst [vmem:[#allocation3 + $0x388] sm:$0xff] 0.0
    %165 = vst [vmem:[#allocation3 + $0x390] sm:$0xff] 0.0
    %166 = vst [vmem:[#allocation3 + $0x398] sm:$0xff] 0.0
    %167 = vst [vmem:[#allocation3 + $0x3a0] sm:$0xff] 0.0
    %168 = vst [vmem:[#allocation3 + $0x3a8] sm:$0xff] 0.0
    %169 = vst [vmem:[#allocation3 + $0x3b0] sm:$0xff] 0.0
    %170 = vst [vmem:[#allocation3 + $0x3b8] sm:$0xff] 0.0
    %171 = vst [vmem:[#allocation3 + $0x3c0] sm:$0xff] 0.0
    %172 = vst [vmem:[#allocation3 + $0x3c8] sm:$0xff] 0.0
    %173 = vst [vmem:[#allocation3 + $0x3d0] sm:$0xff] 0.0
    %174 = vst [vmem:[#allocation3 + $0x3d8] sm:$0xff] 0.0
    %175 = vst [vmem:[#allocation3 + $0x3e0] sm:$0xff] 0.0
    %176 = vst [vmem:[#allocation3 + $0x3e8] sm:$0xff] 0.0
    %177 = vst [vmem:[#allocation3 + $0x3f0] sm:$0xff] 0.0
    %178 = vst [vmem:[#allocation3 + $0x3f8] sm:$0xff] 0.0
    %179 = vst [vmem:[#allocation3 + $0x400] sm:$0xff] 0.0
    %180 = vst [vmem:[#allocation3 + $0x408] sm:$0xff] 0.0
    %181 = vst [vmem:[#allocation3 + $0x410] sm:$0xff] 0.0
    %182 = vst [vmem:[#allocation3 + $0x418] sm:$0xff] 0.0
    %183 = vst [vmem:[#allocation3 + $0x420] sm:$0xff] 0.0
    %184 = vst [vmem:[#allocation3 + $0x428] sm:$0xff] 0.0
    %185 = vst [vmem:[#allocation3 + $0x430] sm:$0xff] 0.0
    %186 = vst [vmem:[#allocation3 + $0x438] sm:$0xff] 0.0
    %187 = vst [vmem:[#allocation3 + $0x440] sm:$0xff] 0.0
    %188 = vst [vmem:[#allocation3 + $0x448] sm:$0xff] 0.0
    %189 = vst [vmem:[#allocation3 + $0x450] sm:$0xff] 0.0
    %190 = vst [vmem:[#allocation3 + $0x458] sm:$0xff] 0.0
    %191 = vst [vmem:[#allocation3 + $0x460] sm:$0xff] 0.0
    %192 = vst [vmem:[#allocation3 + $0x468] sm:$0xff] 0.0
    %193 = vst [vmem:[#allocation3 + $0x470] sm:$0xff] 0.0
    %194 = vst [vmem:[#allocation3 + $0x478] sm:$0xff] 0.0
    %195 = vst [vmem:[#allocation3 + $0x480] sm:$0xff] 0.0
    %196 = vst [vmem:[#allocation3 + $0x488] sm:$0xff] 0.0
    %197 = vst [vmem:[#allocation3 + $0x490] sm:$0xff] 0.0
    %198 = vst [vmem:[#allocation3 + $0x498] sm:$0xff] 0.0
    %199 = vst [vmem:[#allocation3 + $0x4a0] sm:$0xff] 0.0
    %200 = vst [vmem:[#allocation3 + $0x4a8] sm:$0xff] 0.0
    %201 = vst [vmem:[#allocation3 + $0x4b0] sm:$0xff] 0.0
    %202 = vst [vmem:[#allocation3 + $0x4b8] sm:$0xff] 0.0
    %203 = vst [vmem:[#allocation3 + $0x4c0] sm:$0xff] 0.0
    %204 = vst [vmem:[#allocation3 + $0x4c8] sm:$0xff] 0.0
    %205 = vst [vmem:[#allocation3 + $0x4d0] sm:$0xff] 0.0
    %206 = vst [vmem:[#allocation3 + $0x4d8] sm:$0xff] 0.0
    %207 = vst [vmem:[#allocation3 + $0x4e0] sm:$0xff] 0.0
    %208 = vst [vmem:[#allocation3 + $0x4e8] sm:$0xff] 0.0
    %209 = vst [vmem:[#allocation3 + $0x4f0] sm:$0xff] 0.0
    %210 = vst [vmem:[#allocation3 + $0x4f8] sm:$0xff] 0.0
    %211 = vst [vmem:[#allocation3 + $0x500] sm:$0xff] 0.0
    %212 = vst [vmem:[#allocation3 + $0x508] sm:$0xff] 0.0
    %213 = vst [vmem:[#allocation3 + $0x510] sm:$0xff] 0.0
    %214 = vst [vmem:[#allocation3 + $0x518] sm:$0xff] 0.0
    %215 = vst [vmem:[#allocation3 + $0x520] sm:$0xff] 0.0
    %216 = vst [vmem:[#allocation3 + $0x528] sm:$0xff] 0.0
    %217 = vst [vmem:[#allocation3 + $0x530] sm:$0xff] 0.0
    %218 = vst [vmem:[#allocation3 + $0x538] sm:$0xff] 0.0
    %219 = vst [vmem:[#allocation3 + $0x540] sm:$0xff] 0.0
    %220 = vst [vmem:[#allocation3 + $0x548] sm:$0xff] 0.0
    %221 = vst [vmem:[#allocation3 + $0x550] sm:$0xff] 0.0
    %222 = vst [vmem:[#allocation3 + $0x558] sm:$0xff] 0.0
    %223 = vst [vmem:[#allocation3 + $0x560] sm:$0xff] 0.0
    %224 = vst [vmem:[#allocation3 + $0x568] sm:$0xff] 0.0
    %225 = vst [vmem:[#allocation3 + $0x570] sm:$0xff] 0.0
    %226 = vst [vmem:[#allocation3 + $0x578] sm:$0xff] 0.0
    %227 = vst [vmem:[#allocation3 + $0x580] sm:$0xff] 0.0
    %228 = vst [vmem:[#allocation3 + $0x588] sm:$0xff] 0.0
    %229 = vst [vmem:[#allocation3 + $0x590] sm:$0xff] 0.0
    %230 = vst [vmem:[#allocation3 + $0x598] sm:$0xff] 0.0
    %231 = vst [vmem:[#allocation3 + $0x5a0] sm:$0xff] 0.0
    %232 = vst [vmem:[#allocation3 + $0x5a8] sm:$0xff] 0.0
    %233 = vst [vmem:[#allocation3 + $0x5b0] sm:$0xff] 0.0
    %234 = vst [vmem:[#allocation3 + $0x5b8] sm:$0xff] 0.0
    %235 = vst [vmem:[#allocation3 + $0x5c0] sm:$0xff] 0.0
    %236 = vst [vmem:[#allocation3 + $0x5c8] sm:$0xff] 0.0
    %237 = vst [vmem:[#allocation3 + $0x5d0] sm:$0xff] 0.0
    %238 = vst [vmem:[#allocation3 + $0x5d8] sm:$0xff] 0.0
    %239 = vst [vmem:[#allocation3 + $0x5e0] sm:$0xff] 0.0
    %240 = vst [vmem:[#allocation3 + $0x5e8] sm:$0xff] 0.0
    %241 = vst [vmem:[#allocation3 + $0x5f0] sm:$0xff] 0.0
    %242 = vst [vmem:[#allocation3 + $0x5f8] sm:$0xff] 0.0
    %v243 = vld [vmem:[%s3] sm:$0xff]
    %v244 = vld [vmem:[%s3 + $0x8] sm:$0xff]
    %v245 = vld [vmem:[%s3 + $0x10] sm:$0xff]
    %v246 = vld [vmem:[%s3 + $0x18] sm:$0xff]
    %vm247 = vcmask 261120
    %248 = vst.msk [vmem:[#allocation3] sm:$0xff] %vm247, %v243
    %249 = vst.msk [vmem:[#allocation3 + $0x30] sm:$0xff] %vm247, %v244
    %250 = vst.msk [vmem:[#allocation3 + $0x60] sm:$0xff] %vm247, %v245
    %251 = vst.msk [vmem:[#allocation3 + $0x90] sm:$0xff] %vm247, %v246
    %v252 = vld [vmem:[%s3] sm:$0xff]
    %v253 = vld [vmem:[%s3 + $0x8] sm:$0xff]
    %v254 = vld [vmem:[%s3 + $0x10] sm:$0xff]
    %v255 = vld [vmem:[%s3 + $0x18] sm:$0xff]
    %260 = vrot.lane.b32.xlu0 %v252, 96
    %v261 = vpop.permute.xlu0 %260
    %262 = vrot.lane.b32.xlu0 %v253, 96
    %v263 = vpop.permute.xlu0 %262
    %264 = vrot.lane.b32.xlu0 %v254, 96
    %v265 = vpop.permute.xlu0 %264
    %266 = vrot.lane.b32.xlu0 %v255, 96
    %v267 = vpop.permute.xlu0 %266
    %272 = vst.msk [vmem:[#allocation3 + $0x10] sm:$0xff] %vm247, %v261
    %273 = vst.msk [vmem:[#allocation3 + $0x40] sm:$0xff] %vm247, %v263
    %274 = vst.msk [vmem:[#allocation3 + $0x70] sm:$0xff] %vm247, %v265
    %275 = vst.msk [vmem:[#allocation3 + $0xa0] sm:$0xff] %vm247, %v267
    %v276 = vld [vmem:[%s3] sm:$0xff]
    %v277 = vld [vmem:[%s3 + $0x8] sm:$0xff]
    %v278 = vld [vmem:[%s3 + $0x10] sm:$0xff]
    %v279 = vld [vmem:[%s3 + $0x18] sm:$0xff]
    %284 = vrot.lane.b32.xlu0 %v276, 64
    %v285 = vpop.permute.xlu0 %284
    %286 = vrot.lane.b32.xlu0 %v277, 64
    %v287 = vpop.permute.xlu0 %286
    %288 = vrot.lane.b32.xlu0 %v278, 64
    %v289 = vpop.permute.xlu0 %288
    %290 = vrot.lane.b32.xlu0 %v279, 64
    %v291 = vpop.permute.xlu0 %290
    %296 = vst.msk [vmem:[#allocation3 + $0x20] sm:$0xff] %vm247, %v285
    %297 = vst.msk [vmem:[#allocation3 + $0x50] sm:$0xff] %vm247, %v287
    %298 = vst.msk [vmem:[#allocation3 + $0x80] sm:$0xff] %vm247, %v289
    %299 = vst.msk [vmem:[#allocation3 + $0xb0] sm:$0xff] %vm247, %v291
    %s300 = scalar_lea.vmem %s3, 32
    %v301 = vld [vmem:[%s300] sm:$0xff]
    %v302 = vld [vmem:[%s300 + $0x8] sm:$0xff]
    %v303 = vld [vmem:[%s300 + $0x10] sm:$0xff]
    %v304 = vld [vmem:[%s300 + $0x18] sm:$0xff]
    %309 = vrot.lane.b32.xlu0 %v301, 32
    %v310 = vpop.permute.xlu0 %309
    %311 = vrot.lane.b32.xlu0 %v302, 32
    %v312 = vpop.permute.xlu0 %311
    %313 = vrot.lane.b32.xlu0 %v303, 32
    %v314 = vpop.permute.xlu0 %313
    %315 = vrot.lane.b32.xlu0 %v304, 32
    %v316 = vpop.permute.xlu0 %315
    %vm321 = vcmask 523520
    %322 = vst.msk [vmem:[#allocation3 + $0xc0] sm:$0xff] %vm321, %v310
    %323 = vst.msk [vmem:[#allocation3 + $0xf0] sm:$0xff] %vm321, %v312
    %324 = vst.msk [vmem:[#allocation3 + $0x120] sm:$0xff] %vm321, %v314
    %325 = vst.msk [vmem:[#allocation3 + $0x150] sm:$0xff] %vm321, %v316
    %v326 = vld [vmem:[%s300] sm:$0xff]
    %v327 = vld [vmem:[%s300 + $0x8] sm:$0xff]
    %v328 = vld [vmem:[%s300 + $0x10] sm:$0xff]
    %v329 = vld [vmem:[%s300 + $0x18] sm:$0xff]
    %330 = vst.msk [vmem:[#allocation3 + $0xd0] sm:$0xff] %vm321, %v326
    %331 = vst.msk [vmem:[#allocation3 + $0x100] sm:$0xff] %vm321, %v327
    %332 = vst.msk [vmem:[#allocation3 + $0x130] sm:$0xff] %vm321, %v328
    %333 = vst.msk [vmem:[#allocation3 + $0x160] sm:$0xff] %vm321, %v329
    %v334 = vld [vmem:[%s300] sm:$0xff]
    %v335 = vld [vmem:[%s300 + $0x8] sm:$0xff]
    %v336 = vld [vmem:[%s300 + $0x10] sm:$0xff]
    %v337 = vld [vmem:[%s300 + $0x18] sm:$0xff]
    %342 = vrot.lane.b32.xlu0 %v334, 96
    %v343 = vpop.permute.xlu0 %342
    %344 = vrot.lane.b32.xlu0 %v335, 96
    %v345 = vpop.permute.xlu0 %344
    %346 = vrot.lane.b32.xlu0 %v336, 96
    %v347 = vpop.permute.xlu0 %346
    %348 = vrot.lane.b32.xlu0 %v337, 96
    %v349 = vpop.permute.xlu0 %348
    %354 = vst.msk [vmem:[#allocation3 + $0xe0] sm:$0xff] %vm321, %v343
    %355 = vst.msk [vmem:[#allocation3 + $0x110] sm:$0xff] %vm321, %v345
    %356 = vst.msk [vmem:[#allocation3 + $0x140] sm:$0xff] %vm321, %v347
    %357 = vst.msk [vmem:[#allocation3 + $0x170] sm:$0xff] %vm321, %v349
    %s358 = scalar_lea.vmem %s3, 64
    %v359 = vld [vmem:[%s358] sm:$0xff]
    %v360 = vld [vmem:[%s358 + $0x8] sm:$0xff]
    %v361 = vld [vmem:[%s358 + $0x10] sm:$0xff]
    %v362 = vld [vmem:[%s358 + $0x18] sm:$0xff]
    %367 = vrot.lane.b32.xlu0 %v359, 64
    %v368 = vpop.permute.xlu0 %367
    %369 = vrot.lane.b32.xlu0 %v360, 64
    %v370 = vpop.permute.xlu0 %369
    %371 = vrot.lane.b32.xlu0 %v361, 64
    %v372 = vpop.permute.xlu0 %371
    %373 = vrot.lane.b32.xlu0 %v362, 64
    %v374 = vpop.permute.xlu0 %373
    %vm379 = vcmask 785920
    %380 = vst.msk [vmem:[#allocation3 + $0x180] sm:$0xff] %vm379, %v368
    %381 = vst.msk [vmem:[#allocation3 + $0x1b0] sm:$0xff] %vm379, %v370
    %382 = vst.msk [vmem:[#allocation3 + $0x1e0] sm:$0xff] %vm379, %v372
    %383 = vst.msk [vmem:[#allocation3 + $0x210] sm:$0xff] %vm379, %v374
    %v384 = vld [vmem:[%s358] sm:$0xff]
    %v385 = vld [vmem:[%s358 + $0x8] sm:$0xff]
    %v386 = vld [vmem:[%s358 + $0x10] sm:$0xff]
    %v387 = vld [vmem:[%s358 + $0x18] sm:$0xff]
    %392 = vrot.lane.b32.xlu0 %v384, 32
    %v393 = vpop.permute.xlu0 %392
    %394 = vrot.lane.b32.xlu0 %v385, 32
    %v395 = vpop.permute.xlu0 %394
    %396 = vrot.lane.b32.xlu0 %v386, 32
    %v397 = vpop.permute.xlu0 %396
    %398 = vrot.lane.b32.xlu0 %v387, 32
    %v399 = vpop.permute.xlu0 %398
    %404 = vst.msk [vmem:[#allocation3 + $0x190] sm:$0xff] %vm379, %v393
    %405 = vst.msk [vmem:[#allocation3 + $0x1c0] sm:$0xff] %vm379, %v395
    %406 = vst.msk [vmem:[#allocation3 + $0x1f0] sm:$0xff] %vm379, %v397
    %407 = vst.msk [vmem:[#allocation3 + $0x220] sm:$0xff] %vm379, %v399
    %v408 = vld [vmem:[%s358] sm:$0xff]
    %v409 = vld [vmem:[%s358 + $0x8] sm:$0xff]
    %v410 = vld [vmem:[%s358 + $0x10] sm:$0xff]
    %v411 = vld [vmem:[%s358 + $0x18] sm:$0xff]
    %412 = vst.msk [vmem:[#allocation3 + $0x1a0] sm:$0xff] %vm379, %v408
    %413 = vst.msk [vmem:[#allocation3 + $0x1d0] sm:$0xff] %vm379, %v409
    %414 = vst.msk [vmem:[#allocation3 + $0x200] sm:$0xff] %vm379, %v410
    %415 = vst.msk [vmem:[#allocation3 + $0x230] sm:$0xff] %vm379, %v411
    %s416 = scalar_lea.vmem %s3, 96
    %v417 = vld [vmem:[%s416] sm:$0xff]
    %v418 = vld [vmem:[%s416 + $0x8] sm:$0xff]
    %v419 = vld [vmem:[%s416 + $0x10] sm:$0xff]
    %v420 = vld [vmem:[%s416 + $0x18] sm:$0xff]
    %425 = vrot.lane.b32.xlu0 %v417, 96
    %v426 = vpop.permute.xlu0 %425
    %427 = vrot.lane.b32.xlu0 %v418, 96
    %v428 = vpop.permute.xlu0 %427
    %429 = vrot.lane.b32.xlu0 %v419, 96
    %v430 = vpop.permute.xlu0 %429
    %431 = vrot.lane.b32.xlu0 %v420, 96
    %v432 = vpop.permute.xlu0 %431
    %vm437 = vcmask 1048320
    %438 = vst.msk [vmem:[#allocation3 + $0x240] sm:$0xff] %vm437, %v426
    %439 = vst.msk [vmem:[#allocation3 + $0x270] sm:$0xff] %vm437, %v428
    %440 = vst.msk [vmem:[#allocation3 + $0x2a0] sm:$0xff] %vm437, %v430
    %441 = vst.msk [vmem:[#allocation3 + $0x2d0] sm:$0xff] %vm437, %v432
    %v442 = vld [vmem:[%s416] sm:$0xff]
    %v443 = vld [vmem:[%s416 + $0x8] sm:$0xff]
    %v444 = vld [vmem:[%s416 + $0x10] sm:$0xff]
    %v445 = vld [vmem:[%s416 + $0x18] sm:$0xff]
    %450 = vrot.lane.b32.xlu0 %v442, 64
    %v451 = vpop.permute.xlu0 %450
    %452 = vrot.lane.b32.xlu0 %v443, 64
    %v453 = vpop.permute.xlu0 %452
    %454 = vrot.lane.b32.xlu0 %v444, 64
    %v455 = vpop.permute.xlu0 %454
    %456 = vrot.lane.b32.xlu0 %v445, 64
    %v457 = vpop.permute.xlu0 %456
    %462 = vst.msk [vmem:[#allocation3 + $0x250] sm:$0xff] %vm437, %v451
    %463 = vst.msk [vmem:[#allocation3 + $0x280] sm:$0xff] %vm437, %v453
    %464 = vst.msk [vmem:[#allocation3 + $0x2b0] sm:$0xff] %vm437, %v455
    %465 = vst.msk [vmem:[#allocation3 + $0x2e0] sm:$0xff] %vm437, %v457
    %v466 = vld [vmem:[%s416] sm:$0xff]
    %v467 = vld [vmem:[%s416 + $0x8] sm:$0xff]
    %v468 = vld [vmem:[%s416 + $0x10] sm:$0xff]
    %v469 = vld [vmem:[%s416 + $0x18] sm:$0xff]
    %474 = vrot.lane.b32.xlu0 %v466, 32
    %v475 = vpop.permute.xlu0 %474
    %476 = vrot.lane.b32.xlu0 %v467, 32
    %v477 = vpop.permute.xlu0 %476
    %478 = vrot.lane.b32.xlu0 %v468, 32
    %v479 = vpop.permute.xlu0 %478
    %480 = vrot.lane.b32.xlu0 %v469, 32
    %v481 = vpop.permute.xlu0 %480
    %486 = vst.msk [vmem:[#allocation3 + $0x260] sm:$0xff] %vm437, %v475
    %487 = vst.msk [vmem:[#allocation3 + $0x290] sm:$0xff] %vm437, %v477
    %488 = vst.msk [vmem:[#allocation3 + $0x2c0] sm:$0xff] %vm437, %v479
    %489 = vst.msk [vmem:[#allocation3 + $0x2f0] sm:$0xff] %vm437, %v481
    %s490 = scalar_lea.vmem %s3, 128
    %v491 = vld [vmem:[%s490] sm:$0xff]
    %v492 = vld [vmem:[%s490 + $0x8] sm:$0xff]
    %v493 = vld [vmem:[%s490 + $0x10] sm:$0xff]
    %v494 = vld [vmem:[%s490 + $0x18] sm:$0xff]
    %495 = vst.msk [vmem:[#allocation3 + $0x308] sm:$0xff] %vm247, %v491
    %496 = vst.msk [vmem:[#allocation3 + $0x338] sm:$0xff] %vm247, %v492
    %497 = vst.msk [vmem:[#allocation3 + $0x368] sm:$0xff] %vm247, %v493
    %498 = vst.msk [vmem:[#allocation3 + $0x398] sm:$0xff] %vm247, %v494
    %v499 = vld [vmem:[%s490] sm:$0xff]
    %v500 = vld [vmem:[%s490 + $0x8] sm:$0xff]
    %v501 = vld [vmem:[%s490 + $0x10] sm:$0xff]
    %v502 = vld [vmem:[%s490 + $0x18] sm:$0xff]
    %507 = vrot.lane.b32.xlu0 %v499, 96
    %v508 = vpop.permute.xlu0 %507
    %509 = vrot.lane.b32.xlu0 %v500, 96
    %v510 = vpop.permute.xlu0 %509
    %511 = vrot.lane.b32.xlu0 %v501, 96
    %v512 = vpop.permute.xlu0 %511
    %513 = vrot.lane.b32.xlu0 %v502, 96
    %v514 = vpop.permute.xlu0 %513
    %519 = vst.msk [vmem:[#allocation3 + $0x318] sm:$0xff] %vm247, %v508
    %520 = vst.msk [vmem:[#allocation3 + $0x348] sm:$0xff] %vm247, %v510
    %521 = vst.msk [vmem:[#allocation3 + $0x378] sm:$0xff] %vm247, %v512
    %522 = vst.msk [vmem:[#allocation3 + $0x3a8] sm:$0xff] %vm247, %v514
    %v523 = vld [vmem:[%s490] sm:$0xff]
    %v524 = vld [vmem:[%s490 + $0x8] sm:$0xff]
    %v525 = vld [vmem:[%s490 + $0x10] sm:$0xff]
    %v526 = vld [vmem:[%s490 + $0x18] sm:$0xff]
    %531 = vrot.lane.b32.xlu0 %v523, 64
    %v532 = vpop.permute.xlu0 %531
    %533 = vrot.lane.b32.xlu0 %v524, 64
    %v534 = vpop.permute.xlu0 %533
    %535 = vrot.lane.b32.xlu0 %v525, 64
    %v536 = vpop.permute.xlu0 %535
    %537 = vrot.lane.b32.xlu0 %v526, 64
    %v538 = vpop.permute.xlu0 %537
    %543 = vst.msk [vmem:[#allocation3 + $0x328] sm:$0xff] %vm247, %v532
    %544 = vst.msk [vmem:[#allocation3 + $0x358] sm:$0xff] %vm247, %v534
    %545 = vst.msk [vmem:[#allocation3 + $0x388] sm:$0xff] %vm247, %v536
    %546 = vst.msk [vmem:[#allocation3 + $0x3b8] sm:$0xff] %vm247, %v538
    %s547 = scalar_lea.vmem %s3, 160
    %v548 = vld [vmem:[%s547] sm:$0xff]
    %v549 = vld [vmem:[%s547 + $0x8] sm:$0xff]
    %v550 = vld [vmem:[%s547 + $0x10] sm:$0xff]
    %v551 = vld [vmem:[%s547 + $0x18] sm:$0xff]
    %556 = vrot.lane.b32.xlu0 %v548, 32
    %v557 = vpop.permute.xlu0 %556
    %558 = vrot.lane.b32.xlu0 %v549, 32
    %v559 = vpop.permute.xlu0 %558
    %560 = vrot.lane.b32.xlu0 %v550, 32
    %v561 = vpop.permute.xlu0 %560
    %562 = vrot.lane.b32.xlu0 %v551, 32
    %v563 = vpop.permute.xlu0 %562
    %568 = vst.msk [vmem:[#allocation3 + $0x3c8] sm:$0xff] %vm321, %v557
    %569 = vst.msk [vmem:[#allocation3 + $0x3f8] sm:$0xff] %vm321, %v559
    %570 = vst.msk [vmem:[#allocation3 + $0x428] sm:$0xff] %vm321, %v561
    %571 = vst.msk [vmem:[#allocation3 + $0x458] sm:$0xff] %vm321, %v563
    %v572 = vld [vmem:[%s547] sm:$0xff]
    %v573 = vld [vmem:[%s547 + $0x8] sm:$0xff]
    %v574 = vld [vmem:[%s547 + $0x10] sm:$0xff]
    %v575 = vld [vmem:[%s547 + $0x18] sm:$0xff]
    %576 = vst.msk [vmem:[#allocation3 + $0x3d8] sm:$0xff] %vm321, %v572
    %577 = vst.msk [vmem:[#allocation3 + $0x408] sm:$0xff] %vm321, %v573
    %578 = vst.msk [vmem:[#allocation3 + $0x438] sm:$0xff] %vm321, %v574
    %579 = vst.msk [vmem:[#allocation3 + $0x468] sm:$0xff] %vm321, %v575
    %v580 = vld [vmem:[%s547] sm:$0xff]
    %v581 = vld [vmem:[%s547 + $0x8] sm:$0xff]
    %v582 = vld [vmem:[%s547 + $0x10] sm:$0xff]
    %v583 = vld [vmem:[%s547 + $0x18] sm:$0xff]
    %588 = vrot.lane.b32.xlu0 %v580, 96
    %v589 = vpop.permute.xlu0 %588
    %590 = vrot.lane.b32.xlu0 %v581, 96
    %v591 = vpop.permute.xlu0 %590
    %592 = vrot.lane.b32.xlu0 %v582, 96
    %v593 = vpop.permute.xlu0 %592
    %594 = vrot.lane.b32.xlu0 %v583, 96
    %v595 = vpop.permute.xlu0 %594
    %600 = vst.msk [vmem:[#allocation3 + $0x3e8] sm:$0xff] %vm321, %v589
    %601 = vst.msk [vmem:[#allocation3 + $0x418] sm:$0xff] %vm321, %v591
    %602 = vst.msk [vmem:[#allocation3 + $0x448] sm:$0xff] %vm321, %v593
    %603 = vst.msk [vmem:[#allocation3 + $0x478] sm:$0xff] %vm321, %v595
    %v604 = vld [vmem:[%s0] sm:$0xff]
    %v605 = vld [vmem:[%s0 + $0x8] sm:$0xff]
    %v606 = vld [vmem:[%s0 + $0x10] sm:$0xff]
    %v607 = vld [vmem:[%s0 + $0x18] sm:$0xff]
    %v608 = vld [vmem:[%s0 + $0x20] sm:$0xff]
    %v609 = vld [vmem:[%s0 + $0x28] sm:$0xff]
    %v610 = vld [vmem:[%s0 + $0x30] sm:$0xff]
    %v611 = vld [vmem:[%s0 + $0x38] sm:$0xff]
    %v612 = vld [vmem:[%s2] sm:$0xff]
    %v613 = vld [vmem:[%s2 + $0x8] sm:$0xff]
    %v614 = vld [vmem:[%s2 + $0x10] sm:$0xff]
    %v615 = vld [vmem:[%s2 + $0x18] sm:$0xff]
    %v616 = vld [vmem:[%s2 + $0x20] sm:$0xff]
    %v617 = vld [vmem:[%s2 + $0x28] sm:$0xff]
    %v618 = vld [vmem:[%s4] sm:$0x3f]
    %v620 = vperm.slane %v618, 0
    %v621 = vperm.slane %v618, 1
    %v622 = vperm.slane %v618, 2
    %v623 = vperm.slane %v618, 3
    %v624 = vperm.slane %v618, 4
    %v625 = vperm.slane %v618, 5
    %vm632 = vcmask 64512
    %v634 = vsel %vm632, %v604, 0
    %v637 = vsel %vm632, %v605, 0
    %v640 = vsel %vm632, %v606, 0
    %v643 = vsel %vm632, %v607, 0
    %v646 = vsel %vm632, %v608, 0
    %v649 = vsel %vm632, %v609, 0
    %v652 = vsel %vm632, %v610, 0
    %v655 = vsel %vm632, %v611, 0
    %657 = vmatpush.msra.mxu0 0.0
    %658 = vmatpush.msra.mxu0 0.0
    %659 = vmatpush.msra.mxu0 0.0
    %660 = vmatpush.msra.mxu0 0.0
    %661 = vmatpush.msra.mxu0 0.0
    %662 = vmatpush.msra.mxu0 0.0
    %663 = vmatpush.msra.mxu0 0.0
    %664 = vmatpush.msra.mxu0 0.0
    %665 = vmatpush.msra.mxu0 0.0
    %666 = vmatpush.msra.mxu0 0.0
    %667 = vmatpush.msra.mxu0 0.0
    %668 = vmatpush.msra.mxu0 0.0
    %669 = vmatpush.msra.mxu0 0.0
    %670 = vmatpush.msra.mxu0 0.0
    %671 = vmatpush.msra.mxu0 0.0
    %672 = vmatpush.msra.mxu0 %v612
    %673 = vmatmul.f32.gmra.mxu0 %v634
    %v674 = vpop.f32.mrf.mxu0
    %v675 = vadd.f32 %v620, %v674
    %676 = vmatmul.f32.gmra.mxu0 %v637
    %v677 = vpop.f32.mrf.mxu0
    %v678 = vadd.f32 %v620, %v677
    %679 = vmatmul.f32.gmra.mxu0 %v640
    %v680 = vpop.f32.mrf.mxu0
    %v681 = vadd.f32 %v620, %v680
    %682 = vmatmul.f32.gmra.mxu0 %v643
    %v683 = vpop.f32.mrf.mxu0
    %v684 = vadd.f32 %v620, %v683
    %685 = vmatmul.f32.gmra.mxu0 %v646
    %v686 = vpop.f32.mrf.mxu0
    %v687 = vadd.f32 %v620, %v686
    %688 = vmatmul.f32.gmra.mxu0 %v649
    %v689 = vpop.f32.mrf.mxu0
    %v690 = vadd.f32 %v620, %v689
    %691 = vmatmul.f32.gmra.mxu0 %v652
    %v692 = vpop.f32.mrf.mxu0
    %v693 = vadd.f32 %v620, %v692
    %694 = vmatmul.f32.gmra.mxu0 %v655
    %v695 = vpop.f32.mrf.mxu0
    %v696 = vadd.f32 %v620, %v695
    %697 = vdwg.mxu0
    %698 = vmatpush.msra.mxu0 0.0
    %699 = vmatpush.msra.mxu0 0.0
    %700 = vmatpush.msra.mxu0 0.0
    %701 = vmatpush.msra.mxu0 0.0
    %702 = vmatpush.msra.mxu0 0.0
    %703 = vmatpush.msra.mxu0 0.0
    %704 = vmatpush.msra.mxu0 0.0
    %705 = vmatpush.msra.mxu0 0.0
    %706 = vmatpush.msra.mxu0 0.0
    %707 = vmatpush.msra.mxu0 0.0
    %708 = vmatpush.msra.mxu0 0.0
    %709 = vmatpush.msra.mxu0 0.0
    %710 = vmatpush.msra.mxu0 0.0
    %711 = vmatpush.msra.mxu0 0.0
    %712 = vmatpush.msra.mxu0 0.0
    %713 = vmatpush.msra.mxu0 %v613
    %714 = vmatmul.f32.gmra.mxu0 %v634
    %v715 = vpop.f32.mrf.mxu0
    %v716 = vadd.f32 %v621, %v715
    %717 = vmatmul.f32.gmra.mxu0 %v637
    %v718 = vpop.f32.mrf.mxu0
    %v719 = vadd.f32 %v621, %v718
    %720 = vmatmul.f32.gmra.mxu0 %v640
    %v721 = vpop.f32.mrf.mxu0
    %v722 = vadd.f32 %v621, %v721
    %723 = vmatmul.f32.gmra.mxu0 %v643
    %v724 = vpop.f32.mrf.mxu0
    %v725 = vadd.f32 %v621, %v724
    %726 = vmatmul.f32.gmra.mxu0 %v646
    %v727 = vpop.f32.mrf.mxu0
    %v728 = vadd.f32 %v621, %v727
    %729 = vmatmul.f32.gmra.mxu0 %v649
    %v730 = vpop.f32.mrf.mxu0
    %v731 = vadd.f32 %v621, %v730
    %732 = vmatmul.f32.gmra.mxu0 %v652
    %v733 = vpop.f32.mrf.mxu0
    %v734 = vadd.f32 %v621, %v733
    %735 = vmatmul.f32.gmra.mxu0 %v655
    %v736 = vpop.f32.mrf.mxu0
    %v737 = vadd.f32 %v621, %v736
    %738 = vdwg.mxu0
    %739 = vmatpush.msra.mxu0 0.0
    %740 = vmatpush.msra.mxu0 0.0
    %741 = vmatpush.msra.mxu0 0.0
    %742 = vmatpush.msra.mxu0 0.0
    %743 = vmatpush.msra.mxu0 0.0
    %744 = vmatpush.msra.mxu0 0.0
    %745 = vmatpush.msra.mxu0 0.0
    %746 = vmatpush.msra.mxu0 0.0
    %747 = vmatpush.msra.mxu0 0.0
    %748 = vmatpush.msra.mxu0 0.0
    %749 = vmatpush.msra.mxu0 0.0
    %750 = vmatpush.msra.mxu0 0.0
    %751 = vmatpush.msra.mxu0 0.0
    %752 = vmatpush.msra.mxu0 0.0
    %753 = vmatpush.msra.mxu0 0.0
    %754 = vmatpush.msra.mxu0 %v614
    %755 = vmatmul.f32.gmra.mxu0 %v634
    %v756 = vpop.f32.mrf.mxu0
    %v757 = vadd.f32 %v622, %v756
    %758 = vmatmul.f32.gmra.mxu0 %v637
    %v759 = vpop.f32.mrf.mxu0
    %v760 = vadd.f32 %v622, %v759
    %761 = vmatmul.f32.gmra.mxu0 %v640
    %v762 = vpop.f32.mrf.mxu0
    %v763 = vadd.f32 %v622, %v762
    %764 = vmatmul.f32.gmra.mxu0 %v643
    %v765 = vpop.f32.mrf.mxu0
    %v766 = vadd.f32 %v622, %v765
    %767 = vmatmul.f32.gmra.mxu0 %v646
    %v768 = vpop.f32.mrf.mxu0
    %v769 = vadd.f32 %v622, %v768
    %770 = vmatmul.f32.gmra.mxu0 %v649
    %v771 = vpop.f32.mrf.mxu0
    %v772 = vadd.f32 %v622, %v771
    %773 = vmatmul.f32.gmra.mxu0 %v652
    %v774 = vpop.f32.mrf.mxu0
    %v775 = vadd.f32 %v622, %v774
    %776 = vmatmul.f32.gmra.mxu0 %v655
    %v777 = vpop.f32.mrf.mxu0
    %v778 = vadd.f32 %v622, %v777
    %779 = vdwg.mxu0
    %780 = vmatpush.msra.mxu0 0.0
    %781 = vmatpush.msra.mxu0 0.0
    %782 = vmatpush.msra.mxu0 0.0
    %783 = vmatpush.msra.mxu0 0.0
    %784 = vmatpush.msra.mxu0 0.0
    %785 = vmatpush.msra.mxu0 0.0
    %786 = vmatpush.msra.mxu0 0.0
    %787 = vmatpush.msra.mxu0 0.0
    %788 = vmatpush.msra.mxu0 0.0
    %789 = vmatpush.msra.mxu0 0.0
    %790 = vmatpush.msra.mxu0 0.0
    %791 = vmatpush.msra.mxu0 0.0
    %792 = vmatpush.msra.mxu0 0.0
    %793 = vmatpush.msra.mxu0 0.0
    %794 = vmatpush.msra.mxu0 0.0
    %795 = vmatpush.msra.mxu0 %v615
    %796 = vmatmul.f32.gmra.mxu0 %v634
    %v797 = vpop.f32.mrf.mxu0
    %v798 = vadd.f32 %v623, %v797
    %799 = vmatmul.f32.gmra.mxu0 %v637
    %v800 = vpop.f32.mrf.mxu0
    %v801 = vadd.f32 %v623, %v800
    %802 = vmatmul.f32.gmra.mxu0 %v640
    %v803 = vpop.f32.mrf.mxu0
    %v804 = vadd.f32 %v623, %v803
    %805 = vmatmul.f32.gmra.mxu0 %v643
    %v806 = vpop.f32.mrf.mxu0
    %v807 = vadd.f32 %v623, %v806
    %808 = vmatmul.f32.gmra.mxu0 %v646
    %v809 = vpop.f32.mrf.mxu0
    %v810 = vadd.f32 %v623, %v809
    %811 = vmatmul.f32.gmra.mxu0 %v649
    %v812 = vpop.f32.mrf.mxu0
    %v813 = vadd.f32 %v623, %v812
    %814 = vmatmul.f32.gmra.mxu0 %v652
    %v815 = vpop.f32.mrf.mxu0
    %v816 = vadd.f32 %v623, %v815
    %817 = vmatmul.f32.gmra.mxu0 %v655
    %v818 = vpop.f32.mrf.mxu0
    %v819 = vadd.f32 %v623, %v818
    %820 = vdwg.mxu0
    %821 = vmatpush.msra.mxu0 0.0
    %822 = vmatpush.msra.mxu0 0.0
    %823 = vmatpush.msra.mxu0 0.0
    %824 = vmatpush.msra.mxu0 0.0
    %825 = vmatpush.msra.mxu0 0.0
    %826 = vmatpush.msra.mxu0 0.0
    %827 = vmatpush.msra.mxu0 0.0
    %828 = vmatpush.msra.mxu0 0.0
    %829 = vmatpush.msra.mxu0 0.0
    %830 = vmatpush.msra.mxu0 0.0
    %831 = vmatpush.msra.mxu0 0.0
    %832 = vmatpush.msra.mxu0 0.0
    %833 = vmatpush.msra.mxu0 0.0
    %834 = vmatpush.msra.mxu0 0.0
    %835 = vmatpush.msra.mxu0 0.0
    %836 = vmatpush.msra.mxu0 %v616
    %837 = vmatmul.f32.gmra.mxu0 %v634
    %v838 = vpop.f32.mrf.mxu0
    %v839 = vadd.f32 %v624, %v838
    %840 = vmatmul.f32.gmra.mxu0 %v637
    %v841 = vpop.f32.mrf.mxu0
    %v842 = vadd.f32 %v624, %v841
    %843 = vmatmul.f32.gmra.mxu0 %v640
    %v844 = vpop.f32.mrf.mxu0
    %v845 = vadd.f32 %v624, %v844
    %846 = vmatmul.f32.gmra.mxu0 %v643
    %v847 = vpop.f32.mrf.mxu0
    %v848 = vadd.f32 %v624, %v847
    %849 = vmatmul.f32.gmra.mxu0 %v646
    %v850 = vpop.f32.mrf.mxu0
    %v851 = vadd.f32 %v624, %v850
    %852 = vmatmul.f32.gmra.mxu0 %v649
    %v853 = vpop.f32.mrf.mxu0
    %v854 = vadd.f32 %v624, %v853
    %855 = vmatmul.f32.gmra.mxu0 %v652
    %v856 = vpop.f32.mrf.mxu0
    %v857 = vadd.f32 %v624, %v856
    %858 = vmatmul.f32.gmra.mxu0 %v655
    %v859 = vpop.f32.mrf.mxu0
    %v860 = vadd.f32 %v624, %v859
    %861 = vdwg.mxu0
    %862 = vmatpush.msra.mxu0 0.0
    %863 = vmatpush.msra.mxu0 0.0
    %864 = vmatpush.msra.mxu0 0.0
    %865 = vmatpush.msra.mxu0 0.0
    %866 = vmatpush.msra.mxu0 0.0
    %867 = vmatpush.msra.mxu0 0.0
    %868 = vmatpush.msra.mxu0 0.0
    %869 = vmatpush.msra.mxu0 0.0
    %870 = vmatpush.msra.mxu0 0.0
    %871 = vmatpush.msra.mxu0 0.0
    %872 = vmatpush.msra.mxu0 0.0
    %873 = vmatpush.msra.mxu0 0.0
    %874 = vmatpush.msra.mxu0 0.0
    %875 = vmatpush.msra.mxu0 0.0
    %876 = vmatpush.msra.mxu0 0.0
    %877 = vmatpush.msra.mxu0 %v617
    %878 = vmatmul.f32.gmra.mxu0 %v634
    %v879 = vpop.f32.mrf.mxu0
    %v880 = vadd.f32 %v625, %v879
    %881 = vmatmul.f32.gmra.mxu0 %v637
    %v882 = vpop.f32.mrf.mxu0
    %v883 = vadd.f32 %v625, %v882
    %884 = vmatmul.f32.gmra.mxu0 %v640
    %v885 = vpop.f32.mrf.mxu0
    %v886 = vadd.f32 %v625, %v885
    %887 = vmatmul.f32.gmra.mxu0 %v643
    %v888 = vpop.f32.mrf.mxu0
    %v889 = vadd.f32 %v625, %v888
    %890 = vmatmul.f32.gmra.mxu0 %v646
    %v891 = vpop.f32.mrf.mxu0
    %v892 = vadd.f32 %v625, %v891
    %893 = vmatmul.f32.gmra.mxu0 %v649
    %v894 = vpop.f32.mrf.mxu0
    %v895 = vadd.f32 %v625, %v894
    %896 = vmatmul.f32.gmra.mxu0 %v652
    %v897 = vpop.f32.mrf.mxu0
    %v898 = vadd.f32 %v625, %v897
    %899 = vmatmul.f32.gmra.mxu0 %v655
    %v900 = vpop.f32.mrf.mxu0
    %v901 = vadd.f32 %v625, %v900
    %902 = vdwg.mxu0
    %903 = vst [vmem:[#allocation2] sm:$0xff] %v675
    %904 = vst [vmem:[#allocation2 + $0x8] sm:$0xff] %v716
    %905 = vst [vmem:[#allocation2 + $0x10] sm:$0xff] %v757
    %906 = vst [vmem:[#allocation2 + $0x18] sm:$0xff] %v798
    %907 = vst [vmem:[#allocation2 + $0x20] sm:$0xff] %v839
    %908 = vst [vmem:[#allocation2 + $0x28] sm:$0xff] %v880
    %909 = vst [vmem:[#allocation2 + $0x30] sm:$0xff] %v678
    %910 = vst [vmem:[#allocation2 + $0x38] sm:$0xff] %v719
    %911 = vst [vmem:[#allocation2 + $0x40] sm:$0xff] %v760
    %912 = vst [vmem:[#allocation2 + $0x48] sm:$0xff] %v801
    %913 = vst [vmem:[#allocation2 + $0x50] sm:$0xff] %v842
    %914 = vst [vmem:[#allocation2 + $0x58] sm:$0xff] %v883
    %915 = vst [vmem:[#allocation2 + $0x60] sm:$0xff] %v681
    %916 = vst [vmem:[#allocation2 + $0x68] sm:$0xff] %v722
    %917 = vst [vmem:[#allocation2 + $0x70] sm:$0xff] %v763
    %918 = vst [vmem:[#allocation2 + $0x78] sm:$0xff] %v804
    %919 = vst [vmem:[#allocation2 + $0x80] sm:$0xff] %v845
    %920 = vst [vmem:[#allocation2 + $0x88] sm:$0xff] %v886
    %921 = vst [vmem:[#allocation2 + $0x90] sm:$0xff] %v684
    %922 = vst [vmem:[#allocation2 + $0x98] sm:$0xff] %v725
    %923 = vst [vmem:[#allocation2 + $0xa0] sm:$0xff] %v766
    %924 = vst [vmem:[#allocation2 + $0xa8] sm:$0xff] %v807
    %925 = vst [vmem:[#allocation2 + $0xb0] sm:$0xff] %v848
    %926 = vst [vmem:[#allocation2 + $0xb8] sm:$0xff] %v889
    %927 = vst [vmem:[#allocation2 + $0xc0] sm:$0xff] %v687
    %928 = vst [vmem:[#allocation2 + $0xc8] sm:$0xff] %v728
    %929 = vst [vmem:[#allocation2 + $0xd0] sm:$0xff] %v769
    %930 = vst [vmem:[#allocation2 + $0xd8] sm:$0xff] %v810
    %931 = vst [vmem:[#allocation2 + $0xe0] sm:$0xff] %v851
    %932 = vst [vmem:[#allocation2 + $0xe8] sm:$0xff] %v892
    %933 = vst [vmem:[#allocation2 + $0xf0] sm:$0xff] %v690
    %934 = vst [vmem:[#allocation2 + $0xf8] sm:$0xff] %v731
    %935 = vst [vmem:[#allocation2 + $0x100] sm:$0xff] %v772
    %936 = vst [vmem:[#allocation2 + $0x108] sm:$0xff] %v813
    %937 = vst [vmem:[#allocation2 + $0x110] sm:$0xff] %v854
    %938 = vst [vmem:[#allocation2 + $0x118] sm:$0xff] %v895
    %939 = vst [vmem:[#allocation2 + $0x120] sm:$0xff] %v693
    %940 = vst [vmem:[#allocation2 + $0x128] sm:$0xff] %v734
    %941 = vst [vmem:[#allocation2 + $0x130] sm:$0xff] %v775
    %942 = vst [vmem:[#allocation2 + $0x138] sm:$0xff] %v816
    %943 = vst [vmem:[#allocation2 + $0x140] sm:$0xff] %v857
    %944 = vst [vmem:[#allocation2 + $0x148] sm:$0xff] %v898
    %945 = vst [vmem:[#allocation2 + $0x150] sm:$0xff] %v696
    %946 = vst [vmem:[#allocation2 + $0x158] sm:$0xff] %v737
    %947 = vst [vmem:[#allocation2 + $0x160] sm:$0xff] %v778
    %948 = vst [vmem:[#allocation2 + $0x168] sm:$0xff] %v819
    %949 = vst [vmem:[#allocation2 + $0x170] sm:$0xff] %v860
    %950 = vst [vmem:[#allocation2 + $0x178] sm:$0xff] %v901
    %v951 = vld [vmem:[%s5] sm:$0x3]
    %v952 = vld [vmem:[%s1] sm:$0xff]
    %v953 = vld [vmem:[%s1 + $0x8] sm:$0xff]
    %s954 = smul.u32 0, 6
    %s955 = smul.addr %s954, 8
    %s956 = scalar_lea.vmem [#allocation2], %s955
    %v957 = vld [vmem:[%s956] sm:$0xff]
    %v958 = vld [vmem:[%s956 + $0x8] sm:$0xff]
    %v959 = vld [vmem:[%s956 + $0x10] sm:$0xff]
    %v960 = vld [vmem:[%s956 + $0x18] sm:$0xff]
    %v961 = vld [vmem:[%s956 + $0x20] sm:$0xff]
    %v962 = vld [vmem:[%s956 + $0x28] sm:$0xff]
    %v963 = vld [vmem:[#allocation3] sm:$0xff]
    %v964 = vld [vmem:[#allocation3 + $0x8] sm:$0xff]
    %v965 = vld [vmem:[#allocation3 + $0x10] sm:$0xff]
    %v966 = vld [vmem:[#allocation3 + $0x18] sm:$0xff]
    %v967 = vld [vmem:[#allocation3 + $0x20] sm:$0xff]
    %v968 = vld [vmem:[#allocation3 + $0x28] sm:$0xff]
    %v969 = vld [vmem:[#allocation3 + $0x30] sm:$0xff]
    %v970 = vld [vmem:[#allocation3 + $0x38] sm:$0xff]
    %v971 = vld [vmem:[#allocation3 + $0x40] sm:$0xff]
    %v972 = vld [vmem:[#allocation3 + $0x48] sm:$0xff]
    %v973 = vld [vmem:[#allocation3 + $0x50] sm:$0xff]
    %v974 = vld [vmem:[#allocation3 + $0x58] sm:$0xff]
    %v975 = vld [vmem:[#allocation3 + $0x60] sm:$0xff]
    %v976 = vld [vmem:[#allocation3 + $0x68] sm:$0xff]
    %v977 = vld [vmem:[#allocation3 + $0x70] sm:$0xff]
    %v978 = vld [vmem:[#allocation3 + $0x78] sm:$0xff]
    %v979 = vld [vmem:[#allocation3 + $0x80] sm:$0xff]
    %v980 = vld [vmem:[#allocation3 + $0x88] sm:$0xff]
    %v981 = vld [vmem:[#allocation3 + $0x90] sm:$0xff]
    %v982 = vld [vmem:[#allocation3 + $0x98] sm:$0xff]
    %v983 = vld [vmem:[#allocation3 + $0xa0] sm:$0xff]
    %v984 = vld [vmem:[#allocation3 + $0xa8] sm:$0xff]
    %v985 = vld [vmem:[#allocation3 + $0xb0] sm:$0xff]
    %v986 = vld [vmem:[#allocation3 + $0xb8] sm:$0xff]
    %v987 = vld [vmem:[#allocation3 + $0xc0] sm:$0xff]
    %v988 = vld [vmem:[#allocation3 + $0xc8] sm:$0xff]
    %v989 = vld [vmem:[#allocation3 + $0xd0] sm:$0xff]
    %v990 = vld [vmem:[#allocation3 + $0xd8] sm:$0xff]
    %v991 = vld [vmem:[#allocation3 + $0xe0] sm:$0xff]
    %v992 = vld [vmem:[#allocation3 + $0xe8] sm:$0xff]
    %v993 = vld [vmem:[#allocation3 + $0xf0] sm:$0xff]
    %v994 = vld [vmem:[#allocation3 + $0xf8] sm:$0xff]
    %v995 = vld [vmem:[#allocation3 + $0x100] sm:$0xff]
    %v996 = vld [vmem:[#allocation3 + $0x108] sm:$0xff]
    %v997 = vld [vmem:[#allocation3 + $0x110] sm:$0xff]
    %v998 = vld [vmem:[#allocation3 + $0x118] sm:$0xff]
    %v999 = vld [vmem:[#allocation3 + $0x120] sm:$0xff]
    %v1000 = vld [vmem:[#allocation3 + $0x128] sm:$0xff]
    %v1001 = vld [vmem:[#allocation3 + $0x130] sm:$0xff]
    %v1002 = vld [vmem:[#allocation3 + $0x138] sm:$0xff]
    %v1003 = vld [vmem:[#allocation3 + $0x140] sm:$0xff]
    %v1004 = vld [vmem:[#allocation3 + $0x148] sm:$0xff]
    %v1005 = vld [vmem:[#allocation3 + $0x150] sm:$0xff]
    %v1006 = vld [vmem:[#allocation3 + $0x158] sm:$0xff]
    %v1007 = vld [vmem:[#allocation3 + $0x160] sm:$0xff]
    %v1008 = vld [vmem:[#allocation3 + $0x168] sm:$0xff]
    %v1009 = vld [vmem:[#allocation3 + $0x170] sm:$0xff]
    %v1010 = vld [vmem:[#allocation3 + $0x178] sm:$0xff]
    %v1011 = vld [vmem:[#allocation3 + $0x180] sm:$0xff]
    %v1012 = vld [vmem:[#allocation3 + $0x188] sm:$0xff]
    %v1013 = vld [vmem:[#allocation3 + $0x190] sm:$0xff]
    %v1014 = vld [vmem:[#allocation3 + $0x198] sm:$0xff]
    %v1015 = vld [vmem:[#allocation3 + $0x1a0] sm:$0xff]
    %v1016 = vld [vmem:[#allocation3 + $0x1a8] sm:$0xff]
    %v1017 = vld [vmem:[#allocation3 + $0x1b0] sm:$0xff]
    %v1018 = vld [vmem:[#allocation3 + $0x1b8] sm:$0xff]
    %v1019 = vld [vmem:[#allocation3 + $0x1c0] sm:$0xff]
    %v1020 = vld [vmem:[#allocation3 + $0x1c8] sm:$0xff]
    %v1021 = vld [vmem:[#allocation3 + $0x1d0] sm:$0xff]
    %v1022 = vld [vmem:[#allocation3 + $0x1d8] sm:$0xff]
    %v1023 = vld [vmem:[#allocation3 + $0x1e0] sm:$0xff]
    %v1024 = vld [vmem:[#allocation3 + $0x1e8] sm:$0xff]
    %v1025 = vld [vmem:[#allocation3 + $0x1f0] sm:$0xff]
    %v1026 = vld [vmem:[#allocation3 + $0x1f8] sm:$0xff]
    %v1027 = vld [vmem:[#allocation3 + $0x200] sm:$0xff]
    %v1028 = vld [vmem:[#allocation3 + $0x208] sm:$0xff]
    %v1029 = vld [vmem:[#allocation3 + $0x210] sm:$0xff]
    %v1030 = vld [vmem:[#allocation3 + $0x218] sm:$0xff]
    %v1031 = vld [vmem:[#allocation3 + $0x220] sm:$0xff]
    %v1032 = vld [vmem:[#allocation3 + $0x228] sm:$0xff]
    %v1033 = vld [vmem:[#allocation3 + $0x230] sm:$0xff]
    %v1034 = vld [vmem:[#allocation3 + $0x238] sm:$0xff]
    %v1035 = vld [vmem:[#allocation3 + $0x240] sm:$0xff]
    %v1036 = vld [vmem:[#allocation3 + $0x248] sm:$0xff]
    %v1037 = vld [vmem:[#allocation3 + $0x250] sm:$0xff]
    %v1038 = vld [vmem:[#allocation3 + $0x258] sm:$0xff]
    %v1039 = vld [vmem:[#allocation3 + $0x260] sm:$0xff]
    %v1040 = vld [vmem:[#allocation3 + $0x268] sm:$0xff]
    %v1041 = vld [vmem:[#allocation3 + $0x270] sm:$0xff]
    %v1042 = vld [vmem:[#allocation3 + $0x278] sm:$0xff]
    %v1043 = vld [vmem:[#allocation3 + $0x280] sm:$0xff]
    %v1044 = vld [vmem:[#allocation3 + $0x288] sm:$0xff]
    %v1045 = vld [vmem:[#allocation3 + $0x290] sm:$0xff]
    %v1046 = vld [vmem:[#allocation3 + $0x298] sm:$0xff]
    %v1047 = vld [vmem:[#allocation3 + $0x2a0] sm:$0xff]
    %v1048 = vld [vmem:[#allocation3 + $0x2a8] sm:$0xff]
    %v1049 = vld [vmem:[#allocation3 + $0x2b0] sm:$0xff]
    %v1050 = vld [vmem:[#allocation3 + $0x2b8] sm:$0xff]
    %v1051 = vld [vmem:[#allocation3 + $0x2c0] sm:$0xff]
    %v1052 = vld [vmem:[#allocation3 + $0x2c8] sm:$0xff]
    %v1053 = vld [vmem:[#allocation3 + $0x2d0] sm:$0xff]
    %v1054 = vld [vmem:[#allocation3 + $0x2d8] sm:$0xff]
    %v1055 = vld [vmem:[#allocation3 + $0x2e0] sm:$0xff]
    %v1056 = vld [vmem:[#allocation3 + $0x2e8] sm:$0xff]
    %v1057 = vld [vmem:[#allocation3 + $0x2f0] sm:$0xff]
    %v1058 = vld [vmem:[#allocation3 + $0x2f8] sm:$0xff]
    %v1059 = vld [vmem:[#allocation3 + $0x300] sm:$0xff]
    %v1060 = vld [vmem:[#allocation3 + $0x308] sm:$0xff]
    %v1061 = vld [vmem:[#allocation3 + $0x310] sm:$0xff]
    %v1062 = vld [vmem:[#allocation3 + $0x318] sm:$0xff]
    %v1063 = vld [vmem:[#allocation3 + $0x320] sm:$0xff]
    %v1064 = vld [vmem:[#allocation3 + $0x328] sm:$0xff]
    %v1065 = vld [vmem:[#allocation3 + $0x330] sm:$0xff]
    %v1066 = vld [vmem:[#allocation3 + $0x338] sm:$0xff]
    %v1067 = vld [vmem:[#allocation3 + $0x340] sm:$0xff]
    %v1068 = vld [vmem:[#allocation3 + $0x348] sm:$0xff]
    %v1069 = vld [vmem:[#allocation3 + $0x350] sm:$0xff]
    %v1070 = vld [vmem:[#allocation3 + $0x358] sm:$0xff]
    %v1071 = vld [vmem:[#allocation3 + $0x360] sm:$0xff]
    %v1072 = vld [vmem:[#allocation3 + $0x368] sm:$0xff]
    %v1073 = vld [vmem:[#allocation3 + $0x370] sm:$0xff]
    %v1074 = vld [vmem:[#allocation3 + $0x378] sm:$0xff]
    %v1075 = vld [vmem:[#allocation3 + $0x380] sm:$0xff]
    %v1076 = vld [vmem:[#allocation3 + $0x388] sm:$0xff]
    %v1077 = vld [vmem:[#allocation3 + $0x390] sm:$0xff]
    %v1078 = vld [vmem:[#allocation3 + $0x398] sm:$0xff]
    %v1079 = vld [vmem:[#allocation3 + $0x3a0] sm:$0xff]
    %v1080 = vld [vmem:[#allocation3 + $0x3a8] sm:$0xff]
    %v1081 = vld [vmem:[#allocation3 + $0x3b0] sm:$0xff]
    %v1082 = vld [vmem:[#allocation3 + $0x3b8] sm:$0xff]
    %v1083 = vld [vmem:[#allocation3 + $0x3c0] sm:$0xff]
    %v1084 = vld [vmem:[#allocation3 + $0x3c8] sm:$0xff]
    %v1085 = vld [vmem:[#allocation3 + $0x3d0] sm:$0xff]
    %v1086 = vld [vmem:[#allocation3 + $0x3d8] sm:$0xff]
    %v1087 = vld [vmem:[#allocation3 + $0x3e0] sm:$0xff]
    %v1088 = vld [vmem:[#allocation3 + $0x3e8] sm:$0xff]
    %v1089 = vld [vmem:[#allocation3 + $0x3f0] sm:$0xff]
    %v1090 = vld [vmem:[#allocation3 + $0x3f8] sm:$0xff]
    %v1091 = vld [vmem:[#allocation3 + $0x400] sm:$0xff]
    %v1092 = vld [vmem:[#allocation3 + $0x408] sm:$0xff]
    %v1093 = vld [vmem:[#allocation3 + $0x410] sm:$0xff]
    %v1094 = vld [vmem:[#allocation3 + $0x418] sm:$0xff]
    %v1095 = vld [vmem:[#allocation3 + $0x420] sm:$0xff]
    %v1096 = vld [vmem:[#allocation3 + $0x428] sm:$0xff]
    %v1097 = vld [vmem:[#allocation3 + $0x430] sm:$0xff]
    %v1098 = vld [vmem:[#allocation3 + $0x438] sm:$0xff]
    %v1099 = vld [vmem:[#allocation3 + $0x440] sm:$0xff]
    %v1100 = vld [vmem:[#allocation3 + $0x448] sm:$0xff]
    %v1101 = vld [vmem:[#allocation3 + $0x450] sm:$0xff]
    %v1102 = vld [vmem:[#allocation3 + $0x458] sm:$0xff]
    %v1103 = vld [vmem:[#allocation3 + $0x460] sm:$0xff]
    %v1104 = vld [vmem:[#allocation3 + $0x468] sm:$0xff]
    %v1105 = vld [vmem:[#allocation3 + $0x470] sm:$0xff]
    %v1106 = vld [vmem:[#allocation3 + $0x478] sm:$0xff]
    %v1107 = vld [vmem:[#allocation3 + $0x480] sm:$0xff]
    %v1108 = vld [vmem:[#allocation3 + $0x488] sm:$0xff]
    %v1109 = vld [vmem:[#allocation3 + $0x490] sm:$0xff]
    %v1110 = vld [vmem:[#allocation3 + $0x498] sm:$0xff]
    %v1111 = vld [vmem:[#allocation3 + $0x4a0] sm:$0xff]
    %v1112 = vld [vmem:[#allocation3 + $0x4a8] sm:$0xff]
    %v1113 = vld [vmem:[#allocation3 + $0x4b0] sm:$0xff]
    %v1114 = vld [vmem:[#allocation3 + $0x4b8] sm:$0xff]
    %v1115 = vld [vmem:[#allocation3 + $0x4c0] sm:$0xff]
    %v1116 = vld [vmem:[#allocation3 + $0x4c8] sm:$0xff]
    %v1117 = vld [vmem:[#allocation3 + $0x4d0] sm:$0xff]
    %v1118 = vld [vmem:[#allocation3 + $0x4d8] sm:$0xff]
    %v1119 = vld [vmem:[#allocation3 + $0x4e0] sm:$0xff]
    %v1120 = vld [vmem:[#allocation3 + $0x4e8] sm:$0xff]
    %v1121 = vld [vmem:[#allocation3 + $0x4f0] sm:$0xff]
    %v1122 = vld [vmem:[#allocation3 + $0x4f8] sm:$0xff]
    %v1123 = vld [vmem:[#allocation3 + $0x500] sm:$0xff]
    %v1124 = vld [vmem:[#allocation3 + $0x508] sm:$0xff]
    %v1125 = vld [vmem:[#allocation3 + $0x510] sm:$0xff]
    %v1126 = vld [vmem:[#allocation3 + $0x518] sm:$0xff]
    %v1127 = vld [vmem:[#allocation3 + $0x520] sm:$0xff]
    %v1128 = vld [vmem:[#allocation3 + $0x528] sm:$0xff]
    %v1129 = vld [vmem:[#allocation3 + $0x530] sm:$0xff]
    %v1130 = vld [vmem:[#allocation3 + $0x538] sm:$0xff]
    %v1131 = vld [vmem:[#allocation3 + $0x540] sm:$0xff]
    %v1132 = vld [vmem:[#allocation3 + $0x548] sm:$0xff]
    %v1133 = vld [vmem:[#allocation3 + $0x550] sm:$0xff]
    %v1134 = vld [vmem:[#allocation3 + $0x558] sm:$0xff]
    %v1135 = vld [vmem:[#allocation3 + $0x560] sm:$0xff]
    %v1136 = vld [vmem:[#allocation3 + $0x568] sm:$0xff]
    %v1137 = vld [vmem:[#allocation3 + $0x570] sm:$0xff]
    %v1138 = vld [vmem:[#allocation3 + $0x578] sm:$0xff]
    %v1139 = vld [vmem:[#allocation3 + $0x580] sm:$0xff]
    %v1140 = vld [vmem:[#allocation3 + $0x588] sm:$0xff]
    %v1141 = vld [vmem:[#allocation3 + $0x590] sm:$0xff]
    %v1142 = vld [vmem:[#allocation3 + $0x598] sm:$0xff]
    %v1143 = vld [vmem:[#allocation3 + $0x5a0] sm:$0xff]
    %v1144 = vld [vmem:[#allocation3 + $0x5a8] sm:$0xff]
    %v1145 = vld [vmem:[#allocation3 + $0x5b0] sm:$0xff]
    %v1146 = vld [vmem:[#allocation3 + $0x5b8] sm:$0xff]
    %v1147 = vld [vmem:[#allocation3 + $0x5c0] sm:$0xff]
    %v1148 = vld [vmem:[#allocation3 + $0x5c8] sm:$0xff]
    %v1149 = vld [vmem:[#allocation3 + $0x5d0] sm:$0xff]
    %v1150 = vld [vmem:[#allocation3 + $0x5d8] sm:$0xff]
    %v1151 = vld [vmem:[#allocation3 + $0x5e0] sm:$0xff]
    %v1152 = vld [vmem:[#allocation3 + $0x5e8] sm:$0xff]
    %v1153 = vld [vmem:[#allocation3 + $0x5f0] sm:$0xff]
    %v1154 = vld [vmem:[#allocation3 + $0x5f8] sm:$0xff]
    %1155 = vmatpush.msra.mxu0 %v1053
    %1156 = vmatpush.msra.mxu0 %v1047
    %1157 = vmatpush.msra.mxu0 %v1041
    %1158 = vmatpush.msra.mxu0 %v1035
    %1159 = vmatpush.msra.mxu0 %v1029
    %1160 = vmatpush.msra.mxu0 %v1023
    %1161 = vmatpush.msra.mxu0 %v1017
    %1162 = vmatpush.msra.mxu0 %v1011
    %1163 = vmatpush.msra.mxu0 %v1005
    %1164 = vmatpush.msra.mxu0 %v999
    %1165 = vmatpush.msra.mxu0 %v993
    %1166 = vmatpush.msra.mxu0 %v987
    %1167 = vmatpush.msra.mxu0 %v981
    %1168 = vmatpush.msra.mxu0 %v975
    %1169 = vmatpush.msra.mxu0 %v969
    %1170 = vmatpush.msra.mxu0 %v963
    %1171 = vmatmul.f32.gmra.mxu0 %v952
    %v1172 = vpop.f32.mrf.mxu0
    %v1173 = vadd.f32 0.0, %v1172
    %1174 = vdwg.mxu0
    %1175 = vmatpush.msra.mxu0 %v1149
    %1176 = vmatpush.msra.mxu0 %v1143
    %1177 = vmatpush.msra.mxu0 %v1137
    %1178 = vmatpush.msra.mxu0 %v1131
    %1179 = vmatpush.msra.mxu0 %v1125
    %1180 = vmatpush.msra.mxu0 %v1119
    %1181 = vmatpush.msra.mxu0 %v1113
    %1182 = vmatpush.msra.mxu0 %v1107
    %1183 = vmatpush.msra.mxu0 %v1101
    %1184 = vmatpush.msra.mxu0 %v1095
    %1185 = vmatpush.msra.mxu0 %v1089
    %1186 = vmatpush.msra.mxu0 %v1083
    %1187 = vmatpush.msra.mxu0 %v1077
    %1188 = vmatpush.msra.mxu0 %v1071
    %1189 = vmatpush.msra.mxu0 %v1065
    %1190 = vmatpush.msra.mxu0 %v1059
    %1191 = vmatmul.f32.gmra.mxu0 %v953
    %v1192 = vpop.f32.mrf.mxu0
    %v1193 = vadd.f32 %v1173, %v1192
    %1194 = vdwg.mxu0
    %1195 = vmatpush.msra.mxu0 %v1054
    %1196 = vmatpush.msra.mxu0 %v1048
    %1197 = vmatpush.msra.mxu0 %v1042
    %1198 = vmatpush.msra.mxu0 %v1036
    %1199 = vmatpush.msra.mxu0 %v1030
    %1200 = vmatpush.msra.mxu0 %v1024
    %1201 = vmatpush.msra.mxu0 %v1018
    %1202 = vmatpush.msra.mxu0 %v1012
    %1203 = vmatpush.msra.mxu0 %v1006
    %1204 = vmatpush.msra.mxu0 %v1000
    %1205 = vmatpush.msra.mxu0 %v994
    %1206 = vmatpush.msra.mxu0 %v988
    %1207 = vmatpush.msra.mxu0 %v982
    %1208 = vmatpush.msra.mxu0 %v976
    %1209 = vmatpush.msra.mxu0 %v970
    %1210 = vmatpush.msra.mxu0 %v964
    %1211 = vmatmul.f32.gmra.mxu0 %v952
    %v1212 = vpop.f32.mrf.mxu0
    %v1213 = vadd.f32 0.0, %v1212
    %1214 = vdwg.mxu0
    %1215 = vmatpush.msra.mxu0 %v1150
    %1216 = vmatpush.msra.mxu0 %v1144
    %1217 = vmatpush.msra.mxu0 %v1138
    %1218 = vmatpush.msra.mxu0 %v1132
    %1219 = vmatpush.msra.mxu0 %v1126
    %1220 = vmatpush.msra.mxu0 %v1120
    %1221 = vmatpush.msra.mxu0 %v1114
    %1222 = vmatpush.msra.mxu0 %v1108
    %1223 = vmatpush.msra.mxu0 %v1102
    %1224 = vmatpush.msra.mxu0 %v1096
    %1225 = vmatpush.msra.mxu0 %v1090
    %1226 = vmatpush.msra.mxu0 %v1084
    %1227 = vmatpush.msra.mxu0 %v1078
    %1228 = vmatpush.msra.mxu0 %v1072
    %1229 = vmatpush.msra.mxu0 %v1066
    %1230 = vmatpush.msra.mxu0 %v1060
    %1231 = vmatmul.f32.gmra.mxu0 %v953
    %v1232 = vpop.f32.mrf.mxu0
    %v1233 = vadd.f32 %v1213, %v1232
    %1234 = vdwg.mxu0
    %1235 = vmatpush.msra.mxu0 %v1055
    %1236 = vmatpush.msra.mxu0 %v1049
    %1237 = vmatpush.msra.mxu0 %v1043
    %1238 = vmatpush.msra.mxu0 %v1037
    %1239 = vmatpush.msra.mxu0 %v1031
    %1240 = vmatpush.msra.mxu0 %v1025
    %1241 = vmatpush.msra.mxu0 %v1019
    %1242 = vmatpush.msra.mxu0 %v1013
    %1243 = vmatpush.msra.mxu0 %v1007
    %1244 = vmatpush.msra.mxu0 %v1001
    %1245 = vmatpush.msra.mxu0 %v995
    %1246 = vmatpush.msra.mxu0 %v989
    %1247 = vmatpush.msra.mxu0 %v983
    %1248 = vmatpush.msra.mxu0 %v977
    %1249 = vmatpush.msra.mxu0 %v971
    %1250 = vmatpush.msra.mxu0 %v965
    %1251 = vmatmul.f32.gmra.mxu0 %v952
    %v1252 = vpop.f32.mrf.mxu0
    %v1253 = vadd.f32 0.0, %v1252
    %1254 = vdwg.mxu0
    %1255 = vmatpush.msra.mxu0 %v1151
    %1256 = vmatpush.msra.mxu0 %v1145
    %1257 = vmatpush.msra.mxu0 %v1139
    %1258 = vmatpush.msra.mxu0 %v1133
    %1259 = vmatpush.msra.mxu0 %v1127
    %1260 = vmatpush.msra.mxu0 %v1121
    %1261 = vmatpush.msra.mxu0 %v1115
    %1262 = vmatpush.msra.mxu0 %v1109
    %1263 = vmatpush.msra.mxu0 %v1103
    %1264 = vmatpush.msra.mxu0 %v1097
    %1265 = vmatpush.msra.mxu0 %v1091
    %1266 = vmatpush.msra.mxu0 %v1085
    %1267 = vmatpush.msra.mxu0 %v1079
    %1268 = vmatpush.msra.mxu0 %v1073
    %1269 = vmatpush.msra.mxu0 %v1067
    %1270 = vmatpush.msra.mxu0 %v1061
    %1271 = vmatmul.f32.gmra.mxu0 %v953
    %v1272 = vpop.f32.mrf.mxu0
    %v1273 = vadd.f32 %v1253, %v1272
    %1274 = vdwg.mxu0
    %1275 = vmatpush.msra.mxu0 %v1056
    %1276 = vmatpush.msra.mxu0 %v1050
    %1277 = vmatpush.msra.mxu0 %v1044
    %1278 = vmatpush.msra.mxu0 %v1038
    %1279 = vmatpush.msra.mxu0 %v1032
    %1280 = vmatpush.msra.mxu0 %v1026
    %1281 = vmatpush.msra.mxu0 %v1020
    %1282 = vmatpush.msra.mxu0 %v1014
    %1283 = vmatpush.msra.mxu0 %v1008
    %1284 = vmatpush.msra.mxu0 %v1002
    %1285 = vmatpush.msra.mxu0 %v996
    %1286 = vmatpush.msra.mxu0 %v990
    %1287 = vmatpush.msra.mxu0 %v984
    %1288 = vmatpush.msra.mxu0 %v978
    %1289 = vmatpush.msra.mxu0 %v972
    %1290 = vmatpush.msra.mxu0 %v966
    %1291 = vmatmul.f32.gmra.mxu0 %v952
    %v1292 = vpop.f32.mrf.mxu0
    %v1293 = vadd.f32 0.0, %v1292
    %1294 = vdwg.mxu0
    %1295 = vmatpush.msra.mxu0 %v1152
    %1296 = vmatpush.msra.mxu0 %v1146
    %1297 = vmatpush.msra.mxu0 %v1140
    %1298 = vmatpush.msra.mxu0 %v1134
    %1299 = vmatpush.msra.mxu0 %v1128
    %1300 = vmatpush.msra.mxu0 %v1122
    %1301 = vmatpush.msra.mxu0 %v1116
    %1302 = vmatpush.msra.mxu0 %v1110
    %1303 = vmatpush.msra.mxu0 %v1104
    %1304 = vmatpush.msra.mxu0 %v1098
    %1305 = vmatpush.msra.mxu0 %v1092
    %1306 = vmatpush.msra.mxu0 %v1086
    %1307 = vmatpush.msra.mxu0 %v1080
    %1308 = vmatpush.msra.mxu0 %v1074
    %1309 = vmatpush.msra.mxu0 %v1068
    %1310 = vmatpush.msra.mxu0 %v1062
    %1311 = vmatmul.f32.gmra.mxu0 %v953
    %v1312 = vpop.f32.mrf.mxu0
    %v1313 = vadd.f32 %v1293, %v1312
    %1314 = vdwg.mxu0
    %1315 = vmatpush.msra.mxu0 %v1057
    %1316 = vmatpush.msra.mxu0 %v1051
    %1317 = vmatpush.msra.mxu0 %v1045
    %1318 = vmatpush.msra.mxu0 %v1039
    %1319 = vmatpush.msra.mxu0 %v1033
    %1320 = vmatpush.msra.mxu0 %v1027
    %1321 = vmatpush.msra.mxu0 %v1021
    %1322 = vmatpush.msra.mxu0 %v1015
    %1323 = vmatpush.msra.mxu0 %v1009
    %1324 = vmatpush.msra.mxu0 %v1003
    %1325 = vmatpush.msra.mxu0 %v997
    %1326 = vmatpush.msra.mxu0 %v991
    %1327 = vmatpush.msra.mxu0 %v985
    %1328 = vmatpush.msra.mxu0 %v979
    %1329 = vmatpush.msra.mxu0 %v973
    %1330 = vmatpush.msra.mxu0 %v967
    %1331 = vmatmul.f32.gmra.mxu0 %v952
    %v1332 = vpop.f32.mrf.mxu0
    %v1333 = vadd.f32 0.0, %v1332
    %1334 = vdwg.mxu0
    %1335 = vmatpush.msra.mxu0 %v1153
    %1336 = vmatpush.msra.mxu0 %v1147
    %1337 = vmatpush.msra.mxu0 %v1141
    %1338 = vmatpush.msra.mxu0 %v1135
    %1339 = vmatpush.msra.mxu0 %v1129
    %1340 = vmatpush.msra.mxu0 %v1123
    %1341 = vmatpush.msra.mxu0 %v1117
    %1342 = vmatpush.msra.mxu0 %v1111
    %1343 = vmatpush.msra.mxu0 %v1105
    %1344 = vmatpush.msra.mxu0 %v1099
    %1345 = vmatpush.msra.mxu0 %v1093
    %1346 = vmatpush.msra.mxu0 %v1087
    %1347 = vmatpush.msra.mxu0 %v1081
    %1348 = vmatpush.msra.mxu0 %v1075
    %1349 = vmatpush.msra.mxu0 %v1069
    %1350 = vmatpush.msra.mxu0 %v1063
    %1351 = vmatmul.f32.gmra.mxu0 %v953
    %v1352 = vpop.f32.mrf.mxu0
    %v1353 = vadd.f32 %v1333, %v1352
    %1354 = vdwg.mxu0
    %1355 = vmatpush.msra.mxu0 %v1058
    %1356 = vmatpush.msra.mxu0 %v1052
    %1357 = vmatpush.msra.mxu0 %v1046
    %1358 = vmatpush.msra.mxu0 %v1040
    %1359 = vmatpush.msra.mxu0 %v1034
    %1360 = vmatpush.msra.mxu0 %v1028
    %1361 = vmatpush.msra.mxu0 %v1022
    %1362 = vmatpush.msra.mxu0 %v1016
    %1363 = vmatpush.msra.mxu0 %v1010
    %1364 = vmatpush.msra.mxu0 %v1004
    %1365 = vmatpush.msra.mxu0 %v998
    %1366 = vmatpush.msra.mxu0 %v992
    %1367 = vmatpush.msra.mxu0 %v986
    %1368 = vmatpush.msra.mxu0 %v980
    %1369 = vmatpush.msra.mxu0 %v974
    %1370 = vmatpush.msra.mxu0 %v968
    %1371 = vmatmul.f32.gmra.mxu0 %v952
    %v1372 = vpop.f32.mrf.mxu0
    %v1373 = vadd.f32 0.0, %v1372
    %1374 = vdwg.mxu0
    %1375 = vmatpush.msra.mxu0 %v1154
    %1376 = vmatpush.msra.mxu0 %v1148
    %1377 = vmatpush.msra.mxu0 %v1142
    %1378 = vmatpush.msra.mxu0 %v1136
    %1379 = vmatpush.msra.mxu0 %v1130
    %1380 = vmatpush.msra.mxu0 %v1124
    %1381 = vmatpush.msra.mxu0 %v1118
    %1382 = vmatpush.msra.mxu0 %v1112
    %1383 = vmatpush.msra.mxu0 %v1106
    %1384 = vmatpush.msra.mxu0 %v1100
    %1385 = vmatpush.msra.mxu0 %v1094
    %1386 = vmatpush.msra.mxu0 %v1088
    %1387 = vmatpush.msra.mxu0 %v1082
    %1388 = vmatpush.msra.mxu0 %v1076
    %1389 = vmatpush.msra.mxu0 %v1070
    %1390 = vmatpush.msra.mxu0 %v1064
    %1391 = vmatmul.f32.gmra.mxu0 %v953
    %v1392 = vpop.f32.mrf.mxu0
    %v1393 = vadd.f32 %v1373, %v1392
    %1394 = vdwg.mxu0
    %v1395 = vadd.f32 %v957, %v1193
    %v1396 = vadd.f32 %v958, %v1233
    %v1397 = vadd.f32 %v959, %v1273
    %v1398 = vadd.f32 %v960, %v1313
    %v1399 = vxor.u32 %v1395, 2147483648
    %v1400 = vxor.u32 %v1396, 2147483648
    %v1401 = vxor.u32 %v1397, 2147483648
    %v1402 = vxor.u32 %v1398, 2147483648
    %v1403 = vmul.f32 %v1399, 1.442695
    %v1404 = vpow.pop %v1403
    %v1405 = vmul.f32 %v1400, 1.442695
    %v1406 = vpow.pop %v1405
    %v1407 = vmul.f32 %v1401, 1.442695
    %v1408 = vpow.pop %v1407
    %v1409 = vmul.f32 %v1402, 1.442695
    %v1410 = vpow.pop %v1409
    %v1411 = vadd.f32 %v1404, 1.0
    %v1412 = vadd.f32 %v1406, 1.0
    %v1413 = vadd.f32 %v1408, 1.0
    %v1414 = vadd.f32 %v1410, 1.0
    %v1415 = vrcp.pop %v1411
    %v1416 = vmul.f32 %v1411, %v1415
    %v1417 = vsub.f32 1.0, %v1416
    %v1418 = vmul.f32 %v1415, %v1417
    %v1419 = vadd.f32 %v1415, %v1418
    %vm1420 = vweird.f32 %v1411
    %vm1421 = vweird.f32 %v1415
    %vm1422 = vmor %vm1420, %vm1421
    %v1423 = vsel %vm1422, %v1415, %v1419
    %v1424 = vand.u32 2147483647, %v1411
    %vm1425 = vcmp.eq.f32.partialorder %v1424, 8.507059e+37
    %v1426 = vand.u32 %v1411, 2147483648
    %v1427 = vor.u32 1.1754944e-38, %v1426
    %v1428 = vsel %vm1425, %v1427, %v1423
    %v1429 = vmul.f32 1.0, %v1428
    %v1430 = vrcp.pop %v1412
    %v1431 = vmul.f32 %v1412, %v1430
    %v1432 = vsub.f32 1.0, %v1431
    %v1433 = vmul.f32 %v1430, %v1432
    %v1434 = vadd.f32 %v1430, %v1433
    %vm1435 = vweird.f32 %v1412
    %vm1436 = vweird.f32 %v1430
    %vm1437 = vmor %vm1435, %vm1436
    %v1438 = vsel %vm1437, %v1430, %v1434
    %v1439 = vand.u32 2147483647, %v1412
    %vm1440 = vcmp.eq.f32.partialorder %v1439, 8.507059e+37
    %v1441 = vand.u32 %v1412, 2147483648
    %v1442 = vor.u32 1.1754944e-38, %v1441
    %v1443 = vsel %vm1440, %v1442, %v1438
    %v1444 = vmul.f32 1.0, %v1443
    %v1445 = vrcp.pop %v1413
    %v1446 = vmul.f32 %v1413, %v1445
    %v1447 = vsub.f32 1.0, %v1446
    %v1448 = vmul.f32 %v1445, %v1447
    %v1449 = vadd.f32 %v1445, %v1448
    %vm1450 = vweird.f32 %v1413
    %vm1451 = vweird.f32 %v1445
    %vm1452 = vmor %vm1450, %vm1451
    %v1453 = vsel %vm1452, %v1445, %v1449
    %v1454 = vand.u32 2147483647, %v1413
    %vm1455 = vcmp.eq.f32.partialorder %v1454, 8.507059e+37
    %v1456 = vand.u32 %v1413, 2147483648
    %v1457 = vor.u32 1.1754944e-38, %v1456
    %v1458 = vsel %vm1455, %v1457, %v1453
    %v1459 = vmul.f32 1.0, %v1458
    %v1460 = vrcp.pop %v1414
    %v1461 = vmul.f32 %v1414, %v1460
    %v1462 = vsub.f32 1.0, %v1461
    %v1463 = vmul.f32 %v1460, %v1462
    %v1464 = vadd.f32 %v1460, %v1463
    %vm1465 = vweird.f32 %v1414
    %vm1466 = vweird.f32 %v1460
    %vm1467 = vmor %vm1465, %vm1466
    %v1468 = vsel %vm1467, %v1460, %v1464
    %v1469 = vand.u32 2147483647, %v1414
    %vm1470 = vcmp.eq.f32.partialorder %v1469, 8.507059e+37
    %v1471 = vand.u32 %v1414, 2147483648
    %v1472 = vor.u32 1.1754944e-38, %v1471
    %v1473 = vsel %vm1470, %v1472, %v1468
    %v1474 = vmul.f32 1.0, %v1473
    %v1476 = vperm.slane %v951, 0
    %v1477 = vperm.slane %v951, 1
    %v1480 = vadd.f32 %v1353, %v1476
    %v1481 = vadd.f32 %v1393, %v1477
    %v1482 = vmul.f32 %v1429, %v1480
    %v1483 = vmul.f32 %v1444, %v1481
    %v1484 = vadd.f32 %v961, %v1482
    %v1485 = vadd.f32 %v962, %v1483
    %v1486 = vtanh.pop %v1484
    %v1487 = vtanh.pop %v1485
    %v1488 = vsub.f32 1.0, %v1459
    %v1489 = vsub.f32 1.0, %v1474
    %v1490 = vmul.f32 %v1488, %v1486
    %v1491 = vmul.f32 %v1489, %v1487
    %v1492 = vmul.f32 %v1459, %v952
    %v1493 = vmul.f32 %v1474, %v953
    %v1494 = vadd.f32 %v1490, %v1492
    %v1495 = vadd.f32 %v1491, %v1493
    %s1496 = smul.u32 1, 6
    %s1497 = smul.addr %s1496, 8
    %s1498 = scalar_lea.vmem [#allocation2], %s1497
    %v1499 = vld [vmem:[%s1498] sm:$0xff]
    %v1500 = vld [vmem:[%s1498 + $0x8] sm:$0xff]
    %v1501 = vld [vmem:[%s1498 + $0x10] sm:$0xff]
    %v1502 = vld [vmem:[%s1498 + $0x18] sm:$0xff]
    %v1503 = vld [vmem:[%s1498 + $0x20] sm:$0xff]
    %v1504 = vld [vmem:[%s1498 + $0x28] sm:$0xff]
    %1505 = vmatpush.msra.mxu0 %v1053
    %1506 = vmatpush.msra.mxu0 %v1047
    %1507 = vmatpush.msra.mxu0 %v1041
    %1508 = vmatpush.msra.mxu0 %v1035
    %1509 = vmatpush.msra.mxu0 %v1029
    %1510 = vmatpush.msra.mxu0 %v1023
    %1511 = vmatpush.msra.mxu0 %v1017
    %1512 = vmatpush.msra.mxu0 %v1011
    %1513 = vmatpush.msra.mxu0 %v1005
    %1514 = vmatpush.msra.mxu0 %v999
    %1515 = vmatpush.msra.mxu0 %v993
    %1516 = vmatpush.msra.mxu0 %v987
    %1517 = vmatpush.msra.mxu0 %v981
    %1518 = vmatpush.msra.mxu0 %v975
    %1519 = vmatpush.msra.mxu0 %v969
    %1520 = vmatpush.msra.mxu0 %v963
    %1521 = vmatmul.f32.gmra.mxu0 %v1494
    %v1522 = vpop.f32.mrf.mxu0
    %v1523 = vadd.f32 0.0, %v1522
    %1524 = vdwg.mxu0
    %1525 = vmatpush.msra.mxu0 %v1149
    %1526 = vmatpush.msra.mxu0 %v1143
    %1527 = vmatpush.msra.mxu0 %v1137
    %1528 = vmatpush.msra.mxu0 %v1131
    %1529 = vmatpush.msra.mxu0 %v1125
    %1530 = vmatpush.msra.mxu0 %v1119
    %1531 = vmatpush.msra.mxu0 %v1113
    %1532 = vmatpush.msra.mxu0 %v1107
    %1533 = vmatpush.msra.mxu0 %v1101
    %1534 = vmatpush.msra.mxu0 %v1095
    %1535 = vmatpush.msra.mxu0 %v1089
    %1536 = vmatpush.msra.mxu0 %v1083
    %1537 = vmatpush.msra.mxu0 %v1077
    %1538 = vmatpush.msra.mxu0 %v1071
    %1539 = vmatpush.msra.mxu0 %v1065
    %1540 = vmatpush.msra.mxu0 %v1059
    %1541 = vmatmul.f32.gmra.mxu0 %v1495
    %v1542 = vpop.f32.mrf.mxu0
    %v1543 = vadd.f32 %v1523, %v1542
    %1544 = vdwg.mxu0
    %1545 = vmatpush.msra.mxu0 %v1054
    %1546 = vmatpush.msra.mxu0 %v1048
    %1547 = vmatpush.msra.mxu0 %v1042
    %1548 = vmatpush.msra.mxu0 %v1036
    %1549 = vmatpush.msra.mxu0 %v1030
    %1550 = vmatpush.msra.mxu0 %v1024
    %1551 = vmatpush.msra.mxu0 %v1018
    %1552 = vmatpush.msra.mxu0 %v1012
    %1553 = vmatpush.msra.mxu0 %v1006
    %1554 = vmatpush.msra.mxu0 %v1000
    %1555 = vmatpush.msra.mxu0 %v994
    %1556 = vmatpush.msra.mxu0 %v988
    %1557 = vmatpush.msra.mxu0 %v982
    %1558 = vmatpush.msra.mxu0 %v976
    %1559 = vmatpush.msra.mxu0 %v970
    %1560 = vmatpush.msra.mxu0 %v964
    %1561 = vmatmul.f32.gmra.mxu0 %v1494
    %v1562 = vpop.f32.mrf.mxu0
    %v1563 = vadd.f32 0.0, %v1562
    %1564 = vdwg.mxu0
    %1565 = vmatpush.msra.mxu0 %v1150
    %1566 = vmatpush.msra.mxu0 %v1144
    %1567 = vmatpush.msra.mxu0 %v1138
    %1568 = vmatpush.msra.mxu0 %v1132
    %1569 = vmatpush.msra.mxu0 %v1126
    %1570 = vmatpush.msra.mxu0 %v1120
    %1571 = vmatpush.msra.mxu0 %v1114
    %1572 = vmatpush.msra.mxu0 %v1108
    %1573 = vmatpush.msra.mxu0 %v1102
    %1574 = vmatpush.msra.mxu0 %v1096
    %1575 = vmatpush.msra.mxu0 %v1090
    %1576 = vmatpush.msra.mxu0 %v1084
    %1577 = vmatpush.msra.mxu0 %v1078
    %1578 = vmatpush.msra.mxu0 %v1072
    %1579 = vmatpush.msra.mxu0 %v1066
    %1580 = vmatpush.msra.mxu0 %v1060
    %1581 = vmatmul.f32.gmra.mxu0 %v1495
    %v1582 = vpop.f32.mrf.mxu0
    %v1583 = vadd.f32 %v1563, %v1582
    %1584 = vdwg.mxu0
    %1585 = vmatpush.msra.mxu0 %v1055
    %1586 = vmatpush.msra.mxu0 %v1049
    %1587 = vmatpush.msra.mxu0 %v1043
    %1588 = vmatpush.msra.mxu0 %v1037
    %1589 = vmatpush.msra.mxu0 %v1031
    %1590 = vmatpush.msra.mxu0 %v1025
    %1591 = vmatpush.msra.mxu0 %v1019
    %1592 = vmatpush.msra.mxu0 %v1013
    %1593 = vmatpush.msra.mxu0 %v1007
    %1594 = vmatpush.msra.mxu0 %v1001
    %1595 = vmatpush.msra.mxu0 %v995
    %1596 = vmatpush.msra.mxu0 %v989
    %1597 = vmatpush.msra.mxu0 %v983
    %1598 = vmatpush.msra.mxu0 %v977
    %1599 = vmatpush.msra.mxu0 %v971
    %1600 = vmatpush.msra.mxu0 %v965
    %1601 = vmatmul.f32.gmra.mxu0 %v1494
    %v1602 = vpop.f32.mrf.mxu0
    %v1603 = vadd.f32 0.0, %v1602
    %1604 = vdwg.mxu0
    %1605 = vmatpush.msra.mxu0 %v1151
    %1606 = vmatpush.msra.mxu0 %v1145
    %1607 = vmatpush.msra.mxu0 %v1139
    %1608 = vmatpush.msra.mxu0 %v1133
    %1609 = vmatpush.msra.mxu0 %v1127
    %1610 = vmatpush.msra.mxu0 %v1121
    %1611 = vmatpush.msra.mxu0 %v1115
    %1612 = vmatpush.msra.mxu0 %v1109
    %1613 = vmatpush.msra.mxu0 %v1103
    %1614 = vmatpush.msra.mxu0 %v1097
    %1615 = vmatpush.msra.mxu0 %v1091
    %1616 = vmatpush.msra.mxu0 %v1085
    %1617 = vmatpush.msra.mxu0 %v1079
    %1618 = vmatpush.msra.mxu0 %v1073
    %1619 = vmatpush.msra.mxu0 %v1067
    %1620 = vmatpush.msra.mxu0 %v1061
    %1621 = vmatmul.f32.gmra.mxu0 %v1495
    %v1622 = vpop.f32.mrf.mxu0
    %v1623 = vadd.f32 %v1603, %v1622
    %1624 = vdwg.mxu0
    %1625 = vmatpush.msra.mxu0 %v1056
    %1626 = vmatpush.msra.mxu0 %v1050
    %1627 = vmatpush.msra.mxu0 %v1044
    %1628 = vmatpush.msra.mxu0 %v1038
    %1629 = vmatpush.msra.mxu0 %v1032
    %1630 = vmatpush.msra.mxu0 %v1026
    %1631 = vmatpush.msra.mxu0 %v1020
    %1632 = vmatpush.msra.mxu0 %v1014
    %1633 = vmatpush.msra.mxu0 %v1008
    %1634 = vmatpush.msra.mxu0 %v1002
    %1635 = vmatpush.msra.mxu0 %v996
    %1636 = vmatpush.msra.mxu0 %v990
    %1637 = vmatpush.msra.mxu0 %v984
    %1638 = vmatpush.msra.mxu0 %v978
    %1639 = vmatpush.msra.mxu0 %v972
    %1640 = vmatpush.msra.mxu0 %v966
    %1641 = vmatmul.f32.gmra.mxu0 %v1494
    %v1642 = vpop.f32.mrf.mxu0
    %v1643 = vadd.f32 0.0, %v1642
    %1644 = vdwg.mxu0
    %1645 = vmatpush.msra.mxu0 %v1152
    %1646 = vmatpush.msra.mxu0 %v1146
    %1647 = vmatpush.msra.mxu0 %v1140
    %1648 = vmatpush.msra.mxu0 %v1134
    %1649 = vmatpush.msra.mxu0 %v1128
    %1650 = vmatpush.msra.mxu0 %v1122
    %1651 = vmatpush.msra.mxu0 %v1116
    %1652 = vmatpush.msra.mxu0 %v1110
    %1653 = vmatpush.msra.mxu0 %v1104
    %1654 = vmatpush.msra.mxu0 %v1098
    %1655 = vmatpush.msra.mxu0 %v1092
    %1656 = vmatpush.msra.mxu0 %v1086
    %1657 = vmatpush.msra.mxu0 %v1080
    %1658 = vmatpush.msra.mxu0 %v1074
    %1659 = vmatpush.msra.mxu0 %v1068
    %1660 = vmatpush.msra.mxu0 %v1062
    %1661 = vmatmul.f32.gmra.mxu0 %v1495
    %v1662 = vpop.f32.mrf.mxu0
    %v1663 = vadd.f32 %v1643, %v1662
    %1664 = vdwg.mxu0
    %1665 = vmatpush.msra.mxu0 %v1057
    %1666 = vmatpush.msra.mxu0 %v1051
    %1667 = vmatpush.msra.mxu0 %v1045
    %1668 = vmatpush.msra.mxu0 %v1039
    %1669 = vmatpush.msra.mxu0 %v1033
    %1670 = vmatpush.msra.mxu0 %v1027
    %1671 = vmatpush.msra.mxu0 %v1021
    %1672 = vmatpush.msra.mxu0 %v1015
    %1673 = vmatpush.msra.mxu0 %v1009
    %1674 = vmatpush.msra.mxu0 %v1003
    %1675 = vmatpush.msra.mxu0 %v997
    %1676 = vmatpush.msra.mxu0 %v991
    %1677 = vmatpush.msra.mxu0 %v985
    %1678 = vmatpush.msra.mxu0 %v979
    %1679 = vmatpush.msra.mxu0 %v973
    %1680 = vmatpush.msra.mxu0 %v967
    %1681 = vmatmul.f32.gmra.mxu0 %v1494
    %v1682 = vpop.f32.mrf.mxu0
    %v1683 = vadd.f32 0.0, %v1682
    %1684 = vdwg.mxu0
    %1685 = vmatpush.msra.mxu0 %v1153
    %1686 = vmatpush.msra.mxu0 %v1147
    %1687 = vmatpush.msra.mxu0 %v1141
    %1688 = vmatpush.msra.mxu0 %v1135
    %1689 = vmatpush.msra.mxu0 %v1129
    %1690 = vmatpush.msra.mxu0 %v1123
    %1691 = vmatpush.msra.mxu0 %v1117
    %1692 = vmatpush.msra.mxu0 %v1111
    %1693 = vmatpush.msra.mxu0 %v1105
    %1694 = vmatpush.msra.mxu0 %v1099
    %1695 = vmatpush.msra.mxu0 %v1093
    %1696 = vmatpush.msra.mxu0 %v1087
    %1697 = vmatpush.msra.mxu0 %v1081
    %1698 = vmatpush.msra.mxu0 %v1075
    %1699 = vmatpush.msra.mxu0 %v1069
    %1700 = vmatpush.msra.mxu0 %v1063
    %1701 = vmatmul.f32.gmra.mxu0 %v1495
    %v1702 = vpop.f32.mrf.mxu0
    %v1703 = vadd.f32 %v1683, %v1702
    %1704 = vdwg.mxu0
    %1705 = vmatpush.msra.mxu0 %v1058
    %1706 = vmatpush.msra.mxu0 %v1052
    %1707 = vmatpush.msra.mxu0 %v1046
    %1708 = vmatpush.msra.mxu0 %v1040
    %1709 = vmatpush.msra.mxu0 %v1034
    %1710 = vmatpush.msra.mxu0 %v1028
    %1711 = vmatpush.msra.mxu0 %v1022
    %1712 = vmatpush.msra.mxu0 %v1016
    %1713 = vmatpush.msra.mxu0 %v1010
    %1714 = vmatpush.msra.mxu0 %v1004
    %1715 = vmatpush.msra.mxu0 %v998
    %1716 = vmatpush.msra.mxu0 %v992
    %1717 = vmatpush.msra.mxu0 %v986
    %1718 = vmatpush.msra.mxu0 %v980
    %1719 = vmatpush.msra.mxu0 %v974
    %1720 = vmatpush.msra.mxu0 %v968
    %1721 = vmatmul.f32.gmra.mxu0 %v1494
    %v1722 = vpop.f32.mrf.mxu0
    %v1723 = vadd.f32 0.0, %v1722
    %1724 = vdwg.mxu0
    %1725 = vmatpush.msra.mxu0 %v1154
    %1726 = vmatpush.msra.mxu0 %v1148
    %1727 = vmatpush.msra.mxu0 %v1142
    %1728 = vmatpush.msra.mxu0 %v1136
    %1729 = vmatpush.msra.mxu0 %v1130
    %1730 = vmatpush.msra.mxu0 %v1124
    %1731 = vmatpush.msra.mxu0 %v1118
    %1732 = vmatpush.msra.mxu0 %v1112
    %1733 = vmatpush.msra.mxu0 %v1106
    %1734 = vmatpush.msra.mxu0 %v1100
    %1735 = vmatpush.msra.mxu0 %v1094
    %1736 = vmatpush.msra.mxu0 %v1088
    %1737 = vmatpush.msra.mxu0 %v1082
    %1738 = vmatpush.msra.mxu0 %v1076
    %1739 = vmatpush.msra.mxu0 %v1070
    %1740 = vmatpush.msra.mxu0 %v1064
    %1741 = vmatmul.f32.gmra.mxu0 %v1495
    %v1742 = vpop.f32.mrf.mxu0
    %v1743 = vadd.f32 %v1723, %v1742
    %1744 = vdwg.mxu0
    %v1745 = vadd.f32 %v1499, %v1543
    %v1746 = vadd.f32 %v1500, %v1583
    %v1747 = vadd.f32 %v1501, %v1623
    %v1748 = vadd.f32 %v1502, %v1663
    %v1749 = vxor.u32 %v1745, 2147483648
    %v1750 = vxor.u32 %v1746, 2147483648
    %v1751 = vxor.u32 %v1747, 2147483648
    %v1752 = vxor.u32 %v1748, 2147483648
    %v1753 = vmul.f32 %v1749, 1.442695
    %v1754 = vpow.pop %v1753
    %v1755 = vmul.f32 %v1750, 1.442695
    %v1756 = vpow.pop %v1755
    %v1757 = vmul.f32 %v1751, 1.442695
    %v1758 = vpow.pop %v1757
    %v1759 = vmul.f32 %v1752, 1.442695
    %v1760 = vpow.pop %v1759
    %v1761 = vadd.f32 %v1754, 1.0
    %v1762 = vadd.f32 %v1756, 1.0
    %v1763 = vadd.f32 %v1758, 1.0
    %v1764 = vadd.f32 %v1760, 1.0
    %v1765 = vrcp.pop %v1761
    %v1766 = vmul.f32 %v1761, %v1765
    %v1767 = vsub.f32 1.0, %v1766
    %v1768 = vmul.f32 %v1765, %v1767
    %v1769 = vadd.f32 %v1765, %v1768
    %vm1770 = vweird.f32 %v1761
    %vm1771 = vweird.f32 %v1765
    %vm1772 = vmor %vm1770, %vm1771
    %v1773 = vsel %vm1772, %v1765, %v1769
    %v1774 = vand.u32 2147483647, %v1761
    %vm1775 = vcmp.eq.f32.partialorder %v1774, 8.507059e+37
    %v1776 = vand.u32 %v1761, 2147483648
    %v1777 = vor.u32 1.1754944e-38, %v1776
    %v1778 = vsel %vm1775, %v1777, %v1773
    %v1779 = vmul.f32 1.0, %v1778
    %v1780 = vrcp.pop %v1762
    %v1781 = vmul.f32 %v1762, %v1780
    %v1782 = vsub.f32 1.0, %v1781
    %v1783 = vmul.f32 %v1780, %v1782
    %v1784 = vadd.f32 %v1780, %v1783
    %vm1785 = vweird.f32 %v1762
    %vm1786 = vweird.f32 %v1780
    %vm1787 = vmor %vm1785, %vm1786
    %v1788 = vsel %vm1787, %v1780, %v1784
    %v1789 = vand.u32 2147483647, %v1762
    %vm1790 = vcmp.eq.f32.partialorder %v1789, 8.507059e+37
    %v1791 = vand.u32 %v1762, 2147483648
    %v1792 = vor.u32 1.1754944e-38, %v1791
    %v1793 = vsel %vm1790, %v1792, %v1788
    %v1794 = vmul.f32 1.0, %v1793
    %v1795 = vrcp.pop %v1763
    %v1796 = vmul.f32 %v1763, %v1795
    %v1797 = vsub.f32 1.0, %v1796
    %v1798 = vmul.f32 %v1795, %v1797
    %v1799 = vadd.f32 %v1795, %v1798
    %vm1800 = vweird.f32 %v1763
    %vm1801 = vweird.f32 %v1795
    %vm1802 = vmor %vm1800, %vm1801
    %v1803 = vsel %vm1802, %v1795, %v1799
    %v1804 = vand.u32 2147483647, %v1763
    %vm1805 = vcmp.eq.f32.partialorder %v1804, 8.507059e+37
    %v1806 = vand.u32 %v1763, 2147483648
    %v1807 = vor.u32 1.1754944e-38, %v1806
    %v1808 = vsel %vm1805, %v1807, %v1803
    %v1809 = vmul.f32 1.0, %v1808
    %v1810 = vrcp.pop %v1764
    %v1811 = vmul.f32 %v1764, %v1810
    %v1812 = vsub.f32 1.0, %v1811
    %v1813 = vmul.f32 %v1810, %v1812
    %v1814 = vadd.f32 %v1810, %v1813
    %vm1815 = vweird.f32 %v1764
    %vm1816 = vweird.f32 %v1810
    %vm1817 = vmor %vm1815, %vm1816
    %v1818 = vsel %vm1817, %v1810, %v1814
    %v1819 = vand.u32 2147483647, %v1764
    %vm1820 = vcmp.eq.f32.partialorder %v1819, 8.507059e+37
    %v1821 = vand.u32 %v1764, 2147483648
    %v1822 = vor.u32 1.1754944e-38, %v1821
    %v1823 = vsel %vm1820, %v1822, %v1818
    %v1824 = vmul.f32 1.0, %v1823
    %v1825 = vadd.f32 %v1703, %v1476
    %v1826 = vadd.f32 %v1743, %v1477
    %v1827 = vmul.f32 %v1779, %v1825
    %v1828 = vmul.f32 %v1794, %v1826
    %v1829 = vadd.f32 %v1503, %v1827
    %v1830 = vadd.f32 %v1504, %v1828
    %v1831 = vtanh.pop %v1829
    %v1832 = vtanh.pop %v1830
    %v1833 = vsub.f32 1.0, %v1809
    %v1834 = vsub.f32 1.0, %v1824
    %v1835 = vmul.f32 %v1833, %v1831
    %v1836 = vmul.f32 %v1834, %v1832
    %v1837 = vmul.f32 %v1809, %v1494
    %v1838 = vmul.f32 %v1824, %v1495
    %v1839 = vadd.f32 %v1835, %v1837
    %v1840 = vadd.f32 %v1836, %v1838
    %s1841 = smul.u32 2, 6
    %s1842 = smul.addr %s1841, 8
    %s1843 = scalar_lea.vmem [#allocation2], %s1842
    %v1844 = vld [vmem:[%s1843] sm:$0xff]
    %v1845 = vld [vmem:[%s1843 + $0x8] sm:$0xff]
    %v1846 = vld [vmem:[%s1843 + $0x10] sm:$0xff]
    %v1847 = vld [vmem:[%s1843 + $0x18] sm:$0xff]
    %v1848 = vld [vmem:[%s1843 + $0x20] sm:$0xff]
    %v1849 = vld [vmem:[%s1843 + $0x28] sm:$0xff]
    %1850 = vmatpush.msra.mxu0 %v1053
    %1851 = vmatpush.msra.mxu0 %v1047
    %1852 = vmatpush.msra.mxu0 %v1041
    %1853 = vmatpush.msra.mxu0 %v1035
    %1854 = vmatpush.msra.mxu0 %v1029
    %1855 = vmatpush.msra.mxu0 %v1023
    %1856 = vmatpush.msra.mxu0 %v1017
    %1857 = vmatpush.msra.mxu0 %v1011
    %1858 = vmatpush.msra.mxu0 %v1005
    %1859 = vmatpush.msra.mxu0 %v999
    %1860 = vmatpush.msra.mxu0 %v993
    %1861 = vmatpush.msra.mxu0 %v987
    %1862 = vmatpush.msra.mxu0 %v981
    %1863 = vmatpush.msra.mxu0 %v975
    %1864 = vmatpush.msra.mxu0 %v969
    %1865 = vmatpush.msra.mxu0 %v963
    %1866 = vmatmul.f32.gmra.mxu0 %v1839
    %v1867 = vpop.f32.mrf.mxu0
    %v1868 = vadd.f32 0.0, %v1867
    %1869 = vdwg.mxu0
    %1870 = vmatpush.msra.mxu0 %v1149
    %1871 = vmatpush.msra.mxu0 %v1143
    %1872 = vmatpush.msra.mxu0 %v1137
    %1873 = vmatpush.msra.mxu0 %v1131
    %1874 = vmatpush.msra.mxu0 %v1125
    %1875 = vmatpush.msra.mxu0 %v1119
    %1876 = vmatpush.msra.mxu0 %v1113
    %1877 = vmatpush.msra.mxu0 %v1107
    %1878 = vmatpush.msra.mxu0 %v1101
    %1879 = vmatpush.msra.mxu0 %v1095
    %1880 = vmatpush.msra.mxu0 %v1089
    %1881 = vmatpush.msra.mxu0 %v1083
    %1882 = vmatpush.msra.mxu0 %v1077
    %1883 = vmatpush.msra.mxu0 %v1071
    %1884 = vmatpush.msra.mxu0 %v1065
    %1885 = vmatpush.msra.mxu0 %v1059
    %1886 = vmatmul.f32.gmra.mxu0 %v1840
    %v1887 = vpop.f32.mrf.mxu0
    %v1888 = vadd.f32 %v1868, %v1887
    %1889 = vdwg.mxu0
    %1890 = vmatpush.msra.mxu0 %v1054
    %1891 = vmatpush.msra.mxu0 %v1048
    %1892 = vmatpush.msra.mxu0 %v1042
    %1893 = vmatpush.msra.mxu0 %v1036
    %1894 = vmatpush.msra.mxu0 %v1030
    %1895 = vmatpush.msra.mxu0 %v1024
    %1896 = vmatpush.msra.mxu0 %v1018
    %1897 = vmatpush.msra.mxu0 %v1012
    %1898 = vmatpush.msra.mxu0 %v1006
    %1899 = vmatpush.msra.mxu0 %v1000
    %1900 = vmatpush.msra.mxu0 %v994
    %1901 = vmatpush.msra.mxu0 %v988
    %1902 = vmatpush.msra.mxu0 %v982
    %1903 = vmatpush.msra.mxu0 %v976
    %1904 = vmatpush.msra.mxu0 %v970
    %1905 = vmatpush.msra.mxu0 %v964
    %1906 = vmatmul.f32.gmra.mxu0 %v1839
    %v1907 = vpop.f32.mrf.mxu0
    %v1908 = vadd.f32 0.0, %v1907
    %1909 = vdwg.mxu0
    %1910 = vmatpush.msra.mxu0 %v1150
    %1911 = vmatpush.msra.mxu0 %v1144
    %1912 = vmatpush.msra.mxu0 %v1138
    %1913 = vmatpush.msra.mxu0 %v1132
    %1914 = vmatpush.msra.mxu0 %v1126
    %1915 = vmatpush.msra.mxu0 %v1120
    %1916 = vmatpush.msra.mxu0 %v1114
    %1917 = vmatpush.msra.mxu0 %v1108
    %1918 = vmatpush.msra.mxu0 %v1102
    %1919 = vmatpush.msra.mxu0 %v1096
    %1920 = vmatpush.msra.mxu0 %v1090
    %1921 = vmatpush.msra.mxu0 %v1084
    %1922 = vmatpush.msra.mxu0 %v1078
    %1923 = vmatpush.msra.mxu0 %v1072
    %1924 = vmatpush.msra.mxu0 %v1066
    %1925 = vmatpush.msra.mxu0 %v1060
    %1926 = vmatmul.f32.gmra.mxu0 %v1840
    %v1927 = vpop.f32.mrf.mxu0
    %v1928 = vadd.f32 %v1908, %v1927
    %1929 = vdwg.mxu0
    %1930 = vmatpush.msra.mxu0 %v1055
    %1931 = vmatpush.msra.mxu0 %v1049
    %1932 = vmatpush.msra.mxu0 %v1043
    %1933 = vmatpush.msra.mxu0 %v1037
    %1934 = vmatpush.msra.mxu0 %v1031
    %1935 = vmatpush.msra.mxu0 %v1025
    %1936 = vmatpush.msra.mxu0 %v1019
    %1937 = vmatpush.msra.mxu0 %v1013
    %1938 = vmatpush.msra.mxu0 %v1007
    %1939 = vmatpush.msra.mxu0 %v1001
    %1940 = vmatpush.msra.mxu0 %v995
    %1941 = vmatpush.msra.mxu0 %v989
    %1942 = vmatpush.msra.mxu0 %v983
    %1943 = vmatpush.msra.mxu0 %v977
    %1944 = vmatpush.msra.mxu0 %v971
    %1945 = vmatpush.msra.mxu0 %v965
    %1946 = vmatmul.f32.gmra.mxu0 %v1839
    %v1947 = vpop.f32.mrf.mxu0
    %v1948 = vadd.f32 0.0, %v1947
    %1949 = vdwg.mxu0
    %1950 = vmatpush.msra.mxu0 %v1151
    %1951 = vmatpush.msra.mxu0 %v1145
    %1952 = vmatpush.msra.mxu0 %v1139
    %1953 = vmatpush.msra.mxu0 %v1133
    %1954 = vmatpush.msra.mxu0 %v1127
    %1955 = vmatpush.msra.mxu0 %v1121
    %1956 = vmatpush.msra.mxu0 %v1115
    %1957 = vmatpush.msra.mxu0 %v1109
    %1958 = vmatpush.msra.mxu0 %v1103
    %1959 = vmatpush.msra.mxu0 %v1097
    %1960 = vmatpush.msra.mxu0 %v1091
    %1961 = vmatpush.msra.mxu0 %v1085
    %1962 = vmatpush.msra.mxu0 %v1079
    %1963 = vmatpush.msra.mxu0 %v1073
    %1964 = vmatpush.msra.mxu0 %v1067
    %1965 = vmatpush.msra.mxu0 %v1061
    %1966 = vmatmul.f32.gmra.mxu0 %v1840
    %v1967 = vpop.f32.mrf.mxu0
    %v1968 = vadd.f32 %v1948, %v1967
    %1969 = vdwg.mxu0
    %1970 = vmatpush.msra.mxu0 %v1056
    %1971 = vmatpush.msra.mxu0 %v1050
    %1972 = vmatpush.msra.mxu0 %v1044
    %1973 = vmatpush.msra.mxu0 %v1038
    %1974 = vmatpush.msra.mxu0 %v1032
    %1975 = vmatpush.msra.mxu0 %v1026
    %1976 = vmatpush.msra.mxu0 %v1020
    %1977 = vmatpush.msra.mxu0 %v1014
    %1978 = vmatpush.msra.mxu0 %v1008
    %1979 = vmatpush.msra.mxu0 %v1002
    %1980 = vmatpush.msra.mxu0 %v996
    %1981 = vmatpush.msra.mxu0 %v990
    %1982 = vmatpush.msra.mxu0 %v984
    %1983 = vmatpush.msra.mxu0 %v978
    %1984 = vmatpush.msra.mxu0 %v972
    %1985 = vmatpush.msra.mxu0 %v966
    %1986 = vmatmul.f32.gmra.mxu0 %v1839
    %v1987 = vpop.f32.mrf.mxu0
    %v1988 = vadd.f32 0.0, %v1987
    %1989 = vdwg.mxu0
    %1990 = vmatpush.msra.mxu0 %v1152
    %1991 = vmatpush.msra.mxu0 %v1146
    %1992 = vmatpush.msra.mxu0 %v1140
    %1993 = vmatpush.msra.mxu0 %v1134
    %1994 = vmatpush.msra.mxu0 %v1128
    %1995 = vmatpush.msra.mxu0 %v1122
    %1996 = vmatpush.msra.mxu0 %v1116
    %1997 = vmatpush.msra.mxu0 %v1110
    %1998 = vmatpush.msra.mxu0 %v1104
    %1999 = vmatpush.msra.mxu0 %v1098
    %2000 = vmatpush.msra.mxu0 %v1092
    %2001 = vmatpush.msra.mxu0 %v1086
    %2002 = vmatpush.msra.mxu0 %v1080
    %2003 = vmatpush.msra.mxu0 %v1074
    %2004 = vmatpush.msra.mxu0 %v1068
    %2005 = vmatpush.msra.mxu0 %v1062
    %2006 = vmatmul.f32.gmra.mxu0 %v1840
    %v2007 = vpop.f32.mrf.mxu0
    %v2008 = vadd.f32 %v1988, %v2007
    %2009 = vdwg.mxu0
    %2010 = vmatpush.msra.mxu0 %v1057
    %2011 = vmatpush.msra.mxu0 %v1051
    %2012 = vmatpush.msra.mxu0 %v1045
    %2013 = vmatpush.msra.mxu0 %v1039
    %2014 = vmatpush.msra.mxu0 %v1033
    %2015 = vmatpush.msra.mxu0 %v1027
    %2016 = vmatpush.msra.mxu0 %v1021
    %2017 = vmatpush.msra.mxu0 %v1015
    %2018 = vmatpush.msra.mxu0 %v1009
    %2019 = vmatpush.msra.mxu0 %v1003
    %2020 = vmatpush.msra.mxu0 %v997
    %2021 = vmatpush.msra.mxu0 %v991
    %2022 = vmatpush.msra.mxu0 %v985
    %2023 = vmatpush.msra.mxu0 %v979
    %2024 = vmatpush.msra.mxu0 %v973
    %2025 = vmatpush.msra.mxu0 %v967
    %2026 = vmatmul.f32.gmra.mxu0 %v1839
    %v2027 = vpop.f32.mrf.mxu0
    %v2028 = vadd.f32 0.0, %v2027
    %2029 = vdwg.mxu0
    %2030 = vmatpush.msra.mxu0 %v1153
    %2031 = vmatpush.msra.mxu0 %v1147
    %2032 = vmatpush.msra.mxu0 %v1141
    %2033 = vmatpush.msra.mxu0 %v1135
    %2034 = vmatpush.msra.mxu0 %v1129
    %2035 = vmatpush.msra.mxu0 %v1123
    %2036 = vmatpush.msra.mxu0 %v1117
    %2037 = vmatpush.msra.mxu0 %v1111
    %2038 = vmatpush.msra.mxu0 %v1105
    %2039 = vmatpush.msra.mxu0 %v1099
    %2040 = vmatpush.msra.mxu0 %v1093
    %2041 = vmatpush.msra.mxu0 %v1087
    %2042 = vmatpush.msra.mxu0 %v1081
    %2043 = vmatpush.msra.mxu0 %v1075
    %2044 = vmatpush.msra.mxu0 %v1069
    %2045 = vmatpush.msra.mxu0 %v1063
    %2046 = vmatmul.f32.gmra.mxu0 %v1840
    %v2047 = vpop.f32.mrf.mxu0
    %v2048 = vadd.f32 %v2028, %v2047
    %2049 = vdwg.mxu0
    %2050 = vmatpush.msra.mxu0 %v1058
    %2051 = vmatpush.msra.mxu0 %v1052
    %2052 = vmatpush.msra.mxu0 %v1046
    %2053 = vmatpush.msra.mxu0 %v1040
    %2054 = vmatpush.msra.mxu0 %v1034
    %2055 = vmatpush.msra.mxu0 %v1028
    %2056 = vmatpush.msra.mxu0 %v1022
    %2057 = vmatpush.msra.mxu0 %v1016
    %2058 = vmatpush.msra.mxu0 %v1010
    %2059 = vmatpush.msra.mxu0 %v1004
    %2060 = vmatpush.msra.mxu0 %v998
    %2061 = vmatpush.msra.mxu0 %v992
    %2062 = vmatpush.msra.mxu0 %v986
    %2063 = vmatpush.msra.mxu0 %v980
    %2064 = vmatpush.msra.mxu0 %v974
    %2065 = vmatpush.msra.mxu0 %v968
    %2066 = vmatmul.f32.gmra.mxu0 %v1839
    %v2067 = vpop.f32.mrf.mxu0
    %v2068 = vadd.f32 0.0, %v2067
    %2069 = vdwg.mxu0
    %2070 = vmatpush.msra.mxu0 %v1154
    %2071 = vmatpush.msra.mxu0 %v1148
    %2072 = vmatpush.msra.mxu0 %v1142
    %2073 = vmatpush.msra.mxu0 %v1136
    %2074 = vmatpush.msra.mxu0 %v1130
    %2075 = vmatpush.msra.mxu0 %v1124
    %2076 = vmatpush.msra.mxu0 %v1118
    %2077 = vmatpush.msra.mxu0 %v1112
    %2078 = vmatpush.msra.mxu0 %v1106
    %2079 = vmatpush.msra.mxu0 %v1100
    %2080 = vmatpush.msra.mxu0 %v1094
    %2081 = vmatpush.msra.mxu0 %v1088
    %2082 = vmatpush.msra.mxu0 %v1082
    %2083 = vmatpush.msra.mxu0 %v1076
    %2084 = vmatpush.msra.mxu0 %v1070
    %2085 = vmatpush.msra.mxu0 %v1064
    %2086 = vmatmul.f32.gmra.mxu0 %v1840
    %v2087 = vpop.f32.mrf.mxu0
    %v2088 = vadd.f32 %v2068, %v2087
    %2089 = vdwg.mxu0
    %v2090 = vadd.f32 %v1844, %v1888
    %v2091 = vadd.f32 %v1845, %v1928
    %v2092 = vadd.f32 %v1846, %v1968
    %v2093 = vadd.f32 %v1847, %v2008
    %v2094 = vxor.u32 %v2090, 2147483648
    %v2095 = vxor.u32 %v2091, 2147483648
    %v2096 = vxor.u32 %v2092, 2147483648
    %v2097 = vxor.u32 %v2093, 2147483648
    %v2098 = vmul.f32 %v2094, 1.442695
    %v2099 = vpow.pop %v2098
    %v2100 = vmul.f32 %v2095, 1.442695
    %v2101 = vpow.pop %v2100
    %v2102 = vmul.f32 %v2096, 1.442695
    %v2103 = vpow.pop %v2102
    %v2104 = vmul.f32 %v2097, 1.442695
    %v2105 = vpow.pop %v2104
    %v2106 = vadd.f32 %v2099, 1.0
    %v2107 = vadd.f32 %v2101, 1.0
    %v2108 = vadd.f32 %v2103, 1.0
    %v2109 = vadd.f32 %v2105, 1.0
    %v2110 = vrcp.pop %v2106
    %v2111 = vmul.f32 %v2106, %v2110
    %v2112 = vsub.f32 1.0, %v2111
    %v2113 = vmul.f32 %v2110, %v2112
    %v2114 = vadd.f32 %v2110, %v2113
    %vm2115 = vweird.f32 %v2106
    %vm2116 = vweird.f32 %v2110
    %vm2117 = vmor %vm2115, %vm2116
    %v2118 = vsel %vm2117, %v2110, %v2114
    %v2119 = vand.u32 2147483647, %v2106
    %vm2120 = vcmp.eq.f32.partialorder %v2119, 8.507059e+37
    %v2121 = vand.u32 %v2106, 2147483648
    %v2122 = vor.u32 1.1754944e-38, %v2121
    %v2123 = vsel %vm2120, %v2122, %v2118
    %v2124 = vmul.f32 1.0, %v2123
    %v2125 = vrcp.pop %v2107
    %v2126 = vmul.f32 %v2107, %v2125
    %v2127 = vsub.f32 1.0, %v2126
    %v2128 = vmul.f32 %v2125, %v2127
    %v2129 = vadd.f32 %v2125, %v2128
    %vm2130 = vweird.f32 %v2107
    %vm2131 = vweird.f32 %v2125
    %vm2132 = vmor %vm2130, %vm2131
    %v2133 = vsel %vm2132, %v2125, %v2129
    %v2134 = vand.u32 2147483647, %v2107
    %vm2135 = vcmp.eq.f32.partialorder %v2134, 8.507059e+37
    %v2136 = vand.u32 %v2107, 2147483648
    %v2137 = vor.u32 1.1754944e-38, %v2136
    %v2138 = vsel %vm2135, %v2137, %v2133
    %v2139 = vmul.f32 1.0, %v2138
    %v2140 = vrcp.pop %v2108
    %v2141 = vmul.f32 %v2108, %v2140
    %v2142 = vsub.f32 1.0, %v2141
    %v2143 = vmul.f32 %v2140, %v2142
    %v2144 = vadd.f32 %v2140, %v2143
    %vm2145 = vweird.f32 %v2108
    %vm2146 = vweird.f32 %v2140
    %vm2147 = vmor %vm2145, %vm2146
    %v2148 = vsel %vm2147, %v2140, %v2144
    %v2149 = vand.u32 2147483647, %v2108
    %vm2150 = vcmp.eq.f32.partialorder %v2149, 8.507059e+37
    %v2151 = vand.u32 %v2108, 2147483648
    %v2152 = vor.u32 1.1754944e-38, %v2151
    %v2153 = vsel %vm2150, %v2152, %v2148
    %v2154 = vmul.f32 1.0, %v2153
    %v2155 = vrcp.pop %v2109
    %v2156 = vmul.f32 %v2109, %v2155
    %v2157 = vsub.f32 1.0, %v2156
    %v2158 = vmul.f32 %v2155, %v2157
    %v2159 = vadd.f32 %v2155, %v2158
    %vm2160 = vweird.f32 %v2109
    %vm2161 = vweird.f32 %v2155
    %vm2162 = vmor %vm2160, %vm2161
    %v2163 = vsel %vm2162, %v2155, %v2159
    %v2164 = vand.u32 2147483647, %v2109
    %vm2165 = vcmp.eq.f32.partialorder %v2164, 8.507059e+37
    %v2166 = vand.u32 %v2109, 2147483648
    %v2167 = vor.u32 1.1754944e-38, %v2166
    %v2168 = vsel %vm2165, %v2167, %v2163
    %v2169 = vmul.f32 1.0, %v2168
    %v2170 = vadd.f32 %v2048, %v1476
    %v2171 = vadd.f32 %v2088, %v1477
    %v2172 = vmul.f32 %v2124, %v2170
    %v2173 = vmul.f32 %v2139, %v2171
    %v2174 = vadd.f32 %v1848, %v2172
    %v2175 = vadd.f32 %v1849, %v2173
    %v2176 = vtanh.pop %v2174
    %v2177 = vtanh.pop %v2175
    %v2178 = vsub.f32 1.0, %v2154
    %v2179 = vsub.f32 1.0, %v2169
    %v2180 = vmul.f32 %v2178, %v2176
    %v2181 = vmul.f32 %v2179, %v2177
    %v2182 = vmul.f32 %v2154, %v1839
    %v2183 = vmul.f32 %v2169, %v1840
    %v2184 = vadd.f32 %v2180, %v2182
    %v2185 = vadd.f32 %v2181, %v2183
    %s2186 = smul.u32 3, 6
    %s2187 = smul.addr %s2186, 8
    %s2188 = scalar_lea.vmem [#allocation2], %s2187
    %v2189 = vld [vmem:[%s2188] sm:$0xff]
    %v2190 = vld [vmem:[%s2188 + $0x8] sm:$0xff]
    %v2191 = vld [vmem:[%s2188 + $0x10] sm:$0xff]
    %v2192 = vld [vmem:[%s2188 + $0x18] sm:$0xff]
    %v2193 = vld [vmem:[%s2188 + $0x20] sm:$0xff]
    %v2194 = vld [vmem:[%s2188 + $0x28] sm:$0xff]
    %2195 = vmatpush.msra.mxu0 %v1053
    %2196 = vmatpush.msra.mxu0 %v1047
    %2197 = vmatpush.msra.mxu0 %v1041
    %2198 = vmatpush.msra.mxu0 %v1035
    %2199 = vmatpush.msra.mxu0 %v1029
    %2200 = vmatpush.msra.mxu0 %v1023
    %2201 = vmatpush.msra.mxu0 %v1017
    %2202 = vmatpush.msra.mxu0 %v1011
    %2203 = vmatpush.msra.mxu0 %v1005
    %2204 = vmatpush.msra.mxu0 %v999
    %2205 = vmatpush.msra.mxu0 %v993
    %2206 = vmatpush.msra.mxu0 %v987
    %2207 = vmatpush.msra.mxu0 %v981
    %2208 = vmatpush.msra.mxu0 %v975
    %2209 = vmatpush.msra.mxu0 %v969
    %2210 = vmatpush.msra.mxu0 %v963
    %2211 = vmatmul.f32.gmra.mxu0 %v2184
    %v2212 = vpop.f32.mrf.mxu0
    %v2213 = vadd.f32 0.0, %v2212
    %2214 = vdwg.mxu0
    %2215 = vmatpush.msra.mxu0 %v1149
    %2216 = vmatpush.msra.mxu0 %v1143
    %2217 = vmatpush.msra.mxu0 %v1137
    %2218 = vmatpush.msra.mxu0 %v1131
    %2219 = vmatpush.msra.mxu0 %v1125
    %2220 = vmatpush.msra.mxu0 %v1119
    %2221 = vmatpush.msra.mxu0 %v1113
    %2222 = vmatpush.msra.mxu0 %v1107
    %2223 = vmatpush.msra.mxu0 %v1101
    %2224 = vmatpush.msra.mxu0 %v1095
    %2225 = vmatpush.msra.mxu0 %v1089
    %2226 = vmatpush.msra.mxu0 %v1083
    %2227 = vmatpush.msra.mxu0 %v1077
    %2228 = vmatpush.msra.mxu0 %v1071
    %2229 = vmatpush.msra.mxu0 %v1065
    %2230 = vmatpush.msra.mxu0 %v1059
    %2231 = vmatmul.f32.gmra.mxu0 %v2185
    %v2232 = vpop.f32.mrf.mxu0
    %v2233 = vadd.f32 %v2213, %v2232
    %2234 = vdwg.mxu0
    %2235 = vmatpush.msra.mxu0 %v1054
    %2236 = vmatpush.msra.mxu0 %v1048
    %2237 = vmatpush.msra.mxu0 %v1042
    %2238 = vmatpush.msra.mxu0 %v1036
    %2239 = vmatpush.msra.mxu0 %v1030
    %2240 = vmatpush.msra.mxu0 %v1024
    %2241 = vmatpush.msra.mxu0 %v1018
    %2242 = vmatpush.msra.mxu0 %v1012
    %2243 = vmatpush.msra.mxu0 %v1006
    %2244 = vmatpush.msra.mxu0 %v1000
    %2245 = vmatpush.msra.mxu0 %v994
    %2246 = vmatpush.msra.mxu0 %v988
    %2247 = vmatpush.msra.mxu0 %v982
    %2248 = vmatpush.msra.mxu0 %v976
    %2249 = vmatpush.msra.mxu0 %v970
    %2250 = vmatpush.msra.mxu0 %v964
    %2251 = vmatmul.f32.gmra.mxu0 %v2184
    %v2252 = vpop.f32.mrf.mxu0
    %v2253 = vadd.f32 0.0, %v2252
    %2254 = vdwg.mxu0
    %2255 = vmatpush.msra.mxu0 %v1150
    %2256 = vmatpush.msra.mxu0 %v1144
    %2257 = vmatpush.msra.mxu0 %v1138
    %2258 = vmatpush.msra.mxu0 %v1132
    %2259 = vmatpush.msra.mxu0 %v1126
    %2260 = vmatpush.msra.mxu0 %v1120
    %2261 = vmatpush.msra.mxu0 %v1114
    %2262 = vmatpush.msra.mxu0 %v1108
    %2263 = vmatpush.msra.mxu0 %v1102
    %2264 = vmatpush.msra.mxu0 %v1096
    %2265 = vmatpush.msra.mxu0 %v1090
    %2266 = vmatpush.msra.mxu0 %v1084
    %2267 = vmatpush.msra.mxu0 %v1078
    %2268 = vmatpush.msra.mxu0 %v1072
    %2269 = vmatpush.msra.mxu0 %v1066
    %2270 = vmatpush.msra.mxu0 %v1060
    %2271 = vmatmul.f32.gmra.mxu0 %v2185
    %v2272 = vpop.f32.mrf.mxu0
    %v2273 = vadd.f32 %v2253, %v2272
    %2274 = vdwg.mxu0
    %2275 = vmatpush.msra.mxu0 %v1055
    %2276 = vmatpush.msra.mxu0 %v1049
    %2277 = vmatpush.msra.mxu0 %v1043
    %2278 = vmatpush.msra.mxu0 %v1037
    %2279 = vmatpush.msra.mxu0 %v1031
    %2280 = vmatpush.msra.mxu0 %v1025
    %2281 = vmatpush.msra.mxu0 %v1019
    %2282 = vmatpush.msra.mxu0 %v1013
    %2283 = vmatpush.msra.mxu0 %v1007
    %2284 = vmatpush.msra.mxu0 %v1001
    %2285 = vmatpush.msra.mxu0 %v995
    %2286 = vmatpush.msra.mxu0 %v989
    %2287 = vmatpush.msra.mxu0 %v983
    %2288 = vmatpush.msra.mxu0 %v977
    %2289 = vmatpush.msra.mxu0 %v971
    %2290 = vmatpush.msra.mxu0 %v965
    %2291 = vmatmul.f32.gmra.mxu0 %v2184
    %v2292 = vpop.f32.mrf.mxu0
    %v2293 = vadd.f32 0.0, %v2292
    %2294 = vdwg.mxu0
    %2295 = vmatpush.msra.mxu0 %v1151
    %2296 = vmatpush.msra.mxu0 %v1145
    %2297 = vmatpush.msra.mxu0 %v1139
    %2298 = vmatpush.msra.mxu0 %v1133
    %2299 = vmatpush.msra.mxu0 %v1127
    %2300 = vmatpush.msra.mxu0 %v1121
    %2301 = vmatpush.msra.mxu0 %v1115
    %2302 = vmatpush.msra.mxu0 %v1109
    %2303 = vmatpush.msra.mxu0 %v1103
    %2304 = vmatpush.msra.mxu0 %v1097
    %2305 = vmatpush.msra.mxu0 %v1091
    %2306 = vmatpush.msra.mxu0 %v1085
    %2307 = vmatpush.msra.mxu0 %v1079
    %2308 = vmatpush.msra.mxu0 %v1073
    %2309 = vmatpush.msra.mxu0 %v1067
    %2310 = vmatpush.msra.mxu0 %v1061
    %2311 = vmatmul.f32.gmra.mxu0 %v2185
    %v2312 = vpop.f32.mrf.mxu0
    %v2313 = vadd.f32 %v2293, %v2312
    %2314 = vdwg.mxu0
    %2315 = vmatpush.msra.mxu0 %v1056
    %2316 = vmatpush.msra.mxu0 %v1050
    %2317 = vmatpush.msra.mxu0 %v1044
    %2318 = vmatpush.msra.mxu0 %v1038
    %2319 = vmatpush.msra.mxu0 %v1032
    %2320 = vmatpush.msra.mxu0 %v1026
    %2321 = vmatpush.msra.mxu0 %v1020
    %2322 = vmatpush.msra.mxu0 %v1014
    %2323 = vmatpush.msra.mxu0 %v1008
    %2324 = vmatpush.msra.mxu0 %v1002
    %2325 = vmatpush.msra.mxu0 %v996
    %2326 = vmatpush.msra.mxu0 %v990
    %2327 = vmatpush.msra.mxu0 %v984
    %2328 = vmatpush.msra.mxu0 %v978
    %2329 = vmatpush.msra.mxu0 %v972
    %2330 = vmatpush.msra.mxu0 %v966
    %2331 = vmatmul.f32.gmra.mxu0 %v2184
    %v2332 = vpop.f32.mrf.mxu0
    %v2333 = vadd.f32 0.0, %v2332
    %2334 = vdwg.mxu0
    %2335 = vmatpush.msra.mxu0 %v1152
    %2336 = vmatpush.msra.mxu0 %v1146
    %2337 = vmatpush.msra.mxu0 %v1140
    %2338 = vmatpush.msra.mxu0 %v1134
    %2339 = vmatpush.msra.mxu0 %v1128
    %2340 = vmatpush.msra.mxu0 %v1122
    %2341 = vmatpush.msra.mxu0 %v1116
    %2342 = vmatpush.msra.mxu0 %v1110
    %2343 = vmatpush.msra.mxu0 %v1104
    %2344 = vmatpush.msra.mxu0 %v1098
    %2345 = vmatpush.msra.mxu0 %v1092
    %2346 = vmatpush.msra.mxu0 %v1086
    %2347 = vmatpush.msra.mxu0 %v1080
    %2348 = vmatpush.msra.mxu0 %v1074
    %2349 = vmatpush.msra.mxu0 %v1068
    %2350 = vmatpush.msra.mxu0 %v1062
    %2351 = vmatmul.f32.gmra.mxu0 %v2185
    %v2352 = vpop.f32.mrf.mxu0
    %v2353 = vadd.f32 %v2333, %v2352
    %2354 = vdwg.mxu0
    %2355 = vmatpush.msra.mxu0 %v1057
    %2356 = vmatpush.msra.mxu0 %v1051
    %2357 = vmatpush.msra.mxu0 %v1045
    %2358 = vmatpush.msra.mxu0 %v1039
    %2359 = vmatpush.msra.mxu0 %v1033
    %2360 = vmatpush.msra.mxu0 %v1027
    %2361 = vmatpush.msra.mxu0 %v1021
    %2362 = vmatpush.msra.mxu0 %v1015
    %2363 = vmatpush.msra.mxu0 %v1009
    %2364 = vmatpush.msra.mxu0 %v1003
    %2365 = vmatpush.msra.mxu0 %v997
    %2366 = vmatpush.msra.mxu0 %v991
    %2367 = vmatpush.msra.mxu0 %v985
    %2368 = vmatpush.msra.mxu0 %v979
    %2369 = vmatpush.msra.mxu0 %v973
    %2370 = vmatpush.msra.mxu0 %v967
    %2371 = vmatmul.f32.gmra.mxu0 %v2184
    %v2372 = vpop.f32.mrf.mxu0
    %v2373 = vadd.f32 0.0, %v2372
    %2374 = vdwg.mxu0
    %2375 = vmatpush.msra.mxu0 %v1153
    %2376 = vmatpush.msra.mxu0 %v1147
    %2377 = vmatpush.msra.mxu0 %v1141
    %2378 = vmatpush.msra.mxu0 %v1135
    %2379 = vmatpush.msra.mxu0 %v1129
    %2380 = vmatpush.msra.mxu0 %v1123
    %2381 = vmatpush.msra.mxu0 %v1117
    %2382 = vmatpush.msra.mxu0 %v1111
    %2383 = vmatpush.msra.mxu0 %v1105
    %2384 = vmatpush.msra.mxu0 %v1099
    %2385 = vmatpush.msra.mxu0 %v1093
    %2386 = vmatpush.msra.mxu0 %v1087
    %2387 = vmatpush.msra.mxu0 %v1081
    %2388 = vmatpush.msra.mxu0 %v1075
    %2389 = vmatpush.msra.mxu0 %v1069
    %2390 = vmatpush.msra.mxu0 %v1063
    %2391 = vmatmul.f32.gmra.mxu0 %v2185
    %v2392 = vpop.f32.mrf.mxu0
    %v2393 = vadd.f32 %v2373, %v2392
    %2394 = vdwg.mxu0
    %2395 = vmatpush.msra.mxu0 %v1058
    %2396 = vmatpush.msra.mxu0 %v1052
    %2397 = vmatpush.msra.mxu0 %v1046
    %2398 = vmatpush.msra.mxu0 %v1040
    %2399 = vmatpush.msra.mxu0 %v1034
    %2400 = vmatpush.msra.mxu0 %v1028
    %2401 = vmatpush.msra.mxu0 %v1022
    %2402 = vmatpush.msra.mxu0 %v1016
    %2403 = vmatpush.msra.mxu0 %v1010
    %2404 = vmatpush.msra.mxu0 %v1004
    %2405 = vmatpush.msra.mxu0 %v998
    %2406 = vmatpush.msra.mxu0 %v992
    %2407 = vmatpush.msra.mxu0 %v986
    %2408 = vmatpush.msra.mxu0 %v980
    %2409 = vmatpush.msra.mxu0 %v974
    %2410 = vmatpush.msra.mxu0 %v968
    %2411 = vmatmul.f32.gmra.mxu0 %v2184
    %v2412 = vpop.f32.mrf.mxu0
    %v2413 = vadd.f32 0.0, %v2412
    %2414 = vdwg.mxu0
    %2415 = vmatpush.msra.mxu0 %v1154
    %2416 = vmatpush.msra.mxu0 %v1148
    %2417 = vmatpush.msra.mxu0 %v1142
    %2418 = vmatpush.msra.mxu0 %v1136
    %2419 = vmatpush.msra.mxu0 %v1130
    %2420 = vmatpush.msra.mxu0 %v1124
    %2421 = vmatpush.msra.mxu0 %v1118
    %2422 = vmatpush.msra.mxu0 %v1112
    %2423 = vmatpush.msra.mxu0 %v1106
    %2424 = vmatpush.msra.mxu0 %v1100
    %2425 = vmatpush.msra.mxu0 %v1094
    %2426 = vmatpush.msra.mxu0 %v1088
    %2427 = vmatpush.msra.mxu0 %v1082
    %2428 = vmatpush.msra.mxu0 %v1076
    %2429 = vmatpush.msra.mxu0 %v1070
    %2430 = vmatpush.msra.mxu0 %v1064
    %2431 = vmatmul.f32.gmra.mxu0 %v2185
    %v2432 = vpop.f32.mrf.mxu0
    %v2433 = vadd.f32 %v2413, %v2432
    %2434 = vdwg.mxu0
    %v2435 = vadd.f32 %v2189, %v2233
    %v2436 = vadd.f32 %v2190, %v2273
    %v2437 = vadd.f32 %v2191, %v2313
    %v2438 = vadd.f32 %v2192, %v2353
    %v2439 = vxor.u32 %v2435, 2147483648
    %v2440 = vxor.u32 %v2436, 2147483648
    %v2441 = vxor.u32 %v2437, 2147483648
    %v2442 = vxor.u32 %v2438, 2147483648
    %v2443 = vmul.f32 %v2439, 1.442695
    %v2444 = vpow.pop %v2443
    %v2445 = vmul.f32 %v2440, 1.442695
    %v2446 = vpow.pop %v2445
    %v2447 = vmul.f32 %v2441, 1.442695
    %v2448 = vpow.pop %v2447
    %v2449 = vmul.f32 %v2442, 1.442695
    %v2450 = vpow.pop %v2449
    %v2451 = vadd.f32 %v2444, 1.0
    %v2452 = vadd.f32 %v2446, 1.0
    %v2453 = vadd.f32 %v2448, 1.0
    %v2454 = vadd.f32 %v2450, 1.0
    %v2455 = vrcp.pop %v2451
    %v2456 = vmul.f32 %v2451, %v2455
    %v2457 = vsub.f32 1.0, %v2456
    %v2458 = vmul.f32 %v2455, %v2457
    %v2459 = vadd.f32 %v2455, %v2458
    %vm2460 = vweird.f32 %v2451
    %vm2461 = vweird.f32 %v2455
    %vm2462 = vmor %vm2460, %vm2461
    %v2463 = vsel %vm2462, %v2455, %v2459
    %v2464 = vand.u32 2147483647, %v2451
    %vm2465 = vcmp.eq.f32.partialorder %v2464, 8.507059e+37
    %v2466 = vand.u32 %v2451, 2147483648
    %v2467 = vor.u32 1.1754944e-38, %v2466
    %v2468 = vsel %vm2465, %v2467, %v2463
    %v2469 = vmul.f32 1.0, %v2468
    %v2470 = vrcp.pop %v2452
    %v2471 = vmul.f32 %v2452, %v2470
    %v2472 = vsub.f32 1.0, %v2471
    %v2473 = vmul.f32 %v2470, %v2472
    %v2474 = vadd.f32 %v2470, %v2473
    %vm2475 = vweird.f32 %v2452
    %vm2476 = vweird.f32 %v2470
    %vm2477 = vmor %vm2475, %vm2476
    %v2478 = vsel %vm2477, %v2470, %v2474
    %v2479 = vand.u32 2147483647, %v2452
    %vm2480 = vcmp.eq.f32.partialorder %v2479, 8.507059e+37
    %v2481 = vand.u32 %v2452, 2147483648
    %v2482 = vor.u32 1.1754944e-38, %v2481
    %v2483 = vsel %vm2480, %v2482, %v2478
    %v2484 = vmul.f32 1.0, %v2483
    %v2485 = vrcp.pop %v2453
    %v2486 = vmul.f32 %v2453, %v2485
    %v2487 = vsub.f32 1.0, %v2486
    %v2488 = vmul.f32 %v2485, %v2487
    %v2489 = vadd.f32 %v2485, %v2488
    %vm2490 = vweird.f32 %v2453
    %vm2491 = vweird.f32 %v2485
    %vm2492 = vmor %vm2490, %vm2491
    %v2493 = vsel %vm2492, %v2485, %v2489
    %v2494 = vand.u32 2147483647, %v2453
    %vm2495 = vcmp.eq.f32.partialorder %v2494, 8.507059e+37
    %v2496 = vand.u32 %v2453, 2147483648
    %v2497 = vor.u32 1.1754944e-38, %v2496
    %v2498 = vsel %vm2495, %v2497, %v2493
    %v2499 = vmul.f32 1.0, %v2498
    %v2500 = vrcp.pop %v2454
    %v2501 = vmul.f32 %v2454, %v2500
    %v2502 = vsub.f32 1.0, %v2501
    %v2503 = vmul.f32 %v2500, %v2502
    %v2504 = vadd.f32 %v2500, %v2503
    %vm2505 = vweird.f32 %v2454
    %vm2506 = vweird.f32 %v2500
    %vm2507 = vmor %vm2505, %vm2506
    %v2508 = vsel %vm2507, %v2500, %v2504
    %v2509 = vand.u32 2147483647, %v2454
    %vm2510 = vcmp.eq.f32.partialorder %v2509, 8.507059e+37
    %v2511 = vand.u32 %v2454, 2147483648
    %v2512 = vor.u32 1.1754944e-38, %v2511
    %v2513 = vsel %vm2510, %v2512, %v2508
    %v2514 = vmul.f32 1.0, %v2513
    %v2515 = vadd.f32 %v2393, %v1476
    %v2516 = vadd.f32 %v2433, %v1477
    %v2517 = vmul.f32 %v2469, %v2515
    %v2518 = vmul.f32 %v2484, %v2516
    %v2519 = vadd.f32 %v2193, %v2517
    %v2520 = vadd.f32 %v2194, %v2518
    %v2521 = vtanh.pop %v2519
    %v2522 = vtanh.pop %v2520
    %v2523 = vsub.f32 1.0, %v2499
    %v2524 = vsub.f32 1.0, %v2514
    %v2525 = vmul.f32 %v2523, %v2521
    %v2526 = vmul.f32 %v2524, %v2522
    %v2527 = vmul.f32 %v2499, %v2184
    %v2528 = vmul.f32 %v2514, %v2185
    %v2529 = vadd.f32 %v2525, %v2527
    %v2530 = vadd.f32 %v2526, %v2528
    %s2531 = smul.u32 4, 6
    %s2532 = smul.addr %s2531, 8
    %s2533 = scalar_lea.vmem [#allocation2], %s2532
    %v2534 = vld [vmem:[%s2533] sm:$0xff]
    %v2535 = vld [vmem:[%s2533 + $0x8] sm:$0xff]
    %v2536 = vld [vmem:[%s2533 + $0x10] sm:$0xff]
    %v2537 = vld [vmem:[%s2533 + $0x18] sm:$0xff]
    %v2538 = vld [vmem:[%s2533 + $0x20] sm:$0xff]
    %v2539 = vld [vmem:[%s2533 + $0x28] sm:$0xff]
    %2540 = vmatpush.msra.mxu0 %v1053
    %2541 = vmatpush.msra.mxu0 %v1047
    %2542 = vmatpush.msra.mxu0 %v1041
    %2543 = vmatpush.msra.mxu0 %v1035
    %2544 = vmatpush.msra.mxu0 %v1029
    %2545 = vmatpush.msra.mxu0 %v1023
    %2546 = vmatpush.msra.mxu0 %v1017
    %2547 = vmatpush.msra.mxu0 %v1011
    %2548 = vmatpush.msra.mxu0 %v1005
    %2549 = vmatpush.msra.mxu0 %v999
    %2550 = vmatpush.msra.mxu0 %v993
    %2551 = vmatpush.msra.mxu0 %v987
    %2552 = vmatpush.msra.mxu0 %v981
    %2553 = vmatpush.msra.mxu0 %v975
    %2554 = vmatpush.msra.mxu0 %v969
    %2555 = vmatpush.msra.mxu0 %v963
    %2556 = vmatmul.f32.gmra.mxu0 %v2529
    %v2557 = vpop.f32.mrf.mxu0
    %v2558 = vadd.f32 0.0, %v2557
    %2559 = vdwg.mxu0
    %2560 = vmatpush.msra.mxu0 %v1149
    %2561 = vmatpush.msra.mxu0 %v1143
    %2562 = vmatpush.msra.mxu0 %v1137
    %2563 = vmatpush.msra.mxu0 %v1131
    %2564 = vmatpush.msra.mxu0 %v1125
    %2565 = vmatpush.msra.mxu0 %v1119
    %2566 = vmatpush.msra.mxu0 %v1113
    %2567 = vmatpush.msra.mxu0 %v1107
    %2568 = vmatpush.msra.mxu0 %v1101
    %2569 = vmatpush.msra.mxu0 %v1095
    %2570 = vmatpush.msra.mxu0 %v1089
    %2571 = vmatpush.msra.mxu0 %v1083
    %2572 = vmatpush.msra.mxu0 %v1077
    %2573 = vmatpush.msra.mxu0 %v1071
    %2574 = vmatpush.msra.mxu0 %v1065
    %2575 = vmatpush.msra.mxu0 %v1059
    %2576 = vmatmul.f32.gmra.mxu0 %v2530
    %v2577 = vpop.f32.mrf.mxu0
    %v2578 = vadd.f32 %v2558, %v2577
    %2579 = vdwg.mxu0
    %2580 = vmatpush.msra.mxu0 %v1054
    %2581 = vmatpush.msra.mxu0 %v1048
    %2582 = vmatpush.msra.mxu0 %v1042
    %2583 = vmatpush.msra.mxu0 %v1036
    %2584 = vmatpush.msra.mxu0 %v1030
    %2585 = vmatpush.msra.mxu0 %v1024
    %2586 = vmatpush.msra.mxu0 %v1018
    %2587 = vmatpush.msra.mxu0 %v1012
    %2588 = vmatpush.msra.mxu0 %v1006
    %2589 = vmatpush.msra.mxu0 %v1000
    %2590 = vmatpush.msra.mxu0 %v994
    %2591 = vmatpush.msra.mxu0 %v988
    %2592 = vmatpush.msra.mxu0 %v982
    %2593 = vmatpush.msra.mxu0 %v976
    %2594 = vmatpush.msra.mxu0 %v970
    %2595 = vmatpush.msra.mxu0 %v964
    %2596 = vmatmul.f32.gmra.mxu0 %v2529
    %v2597 = vpop.f32.mrf.mxu0
    %v2598 = vadd.f32 0.0, %v2597
    %2599 = vdwg.mxu0
    %2600 = vmatpush.msra.mxu0 %v1150
    %2601 = vmatpush.msra.mxu0 %v1144
    %2602 = vmatpush.msra.mxu0 %v1138
    %2603 = vmatpush.msra.mxu0 %v1132
    %2604 = vmatpush.msra.mxu0 %v1126
    %2605 = vmatpush.msra.mxu0 %v1120
    %2606 = vmatpush.msra.mxu0 %v1114
    %2607 = vmatpush.msra.mxu0 %v1108
    %2608 = vmatpush.msra.mxu0 %v1102
    %2609 = vmatpush.msra.mxu0 %v1096
    %2610 = vmatpush.msra.mxu0 %v1090
    %2611 = vmatpush.msra.mxu0 %v1084
    %2612 = vmatpush.msra.mxu0 %v1078
    %2613 = vmatpush.msra.mxu0 %v1072
    %2614 = vmatpush.msra.mxu0 %v1066
    %2615 = vmatpush.msra.mxu0 %v1060
    %2616 = vmatmul.f32.gmra.mxu0 %v2530
    %v2617 = vpop.f32.mrf.mxu0
    %v2618 = vadd.f32 %v2598, %v2617
    %2619 = vdwg.mxu0
    %2620 = vmatpush.msra.mxu0 %v1055
    %2621 = vmatpush.msra.mxu0 %v1049
    %2622 = vmatpush.msra.mxu0 %v1043
    %2623 = vmatpush.msra.mxu0 %v1037
    %2624 = vmatpush.msra.mxu0 %v1031
    %2625 = vmatpush.msra.mxu0 %v1025
    %2626 = vmatpush.msra.mxu0 %v1019
    %2627 = vmatpush.msra.mxu0 %v1013
    %2628 = vmatpush.msra.mxu0 %v1007
    %2629 = vmatpush.msra.mxu0 %v1001
    %2630 = vmatpush.msra.mxu0 %v995
    %2631 = vmatpush.msra.mxu0 %v989
    %2632 = vmatpush.msra.mxu0 %v983
    %2633 = vmatpush.msra.mxu0 %v977
    %2634 = vmatpush.msra.mxu0 %v971
    %2635 = vmatpush.msra.mxu0 %v965
    %2636 = vmatmul.f32.gmra.mxu0 %v2529
    %v2637 = vpop.f32.mrf.mxu0
    %v2638 = vadd.f32 0.0, %v2637
    %2639 = vdwg.mxu0
    %2640 = vmatpush.msra.mxu0 %v1151
    %2641 = vmatpush.msra.mxu0 %v1145
    %2642 = vmatpush.msra.mxu0 %v1139
    %2643 = vmatpush.msra.mxu0 %v1133
    %2644 = vmatpush.msra.mxu0 %v1127
    %2645 = vmatpush.msra.mxu0 %v1121
    %2646 = vmatpush.msra.mxu0 %v1115
    %2647 = vmatpush.msra.mxu0 %v1109
    %2648 = vmatpush.msra.mxu0 %v1103
    %2649 = vmatpush.msra.mxu0 %v1097
    %2650 = vmatpush.msra.mxu0 %v1091
    %2651 = vmatpush.msra.mxu0 %v1085
    %2652 = vmatpush.msra.mxu0 %v1079
    %2653 = vmatpush.msra.mxu0 %v1073
    %2654 = vmatpush.msra.mxu0 %v1067
    %2655 = vmatpush.msra.mxu0 %v1061
    %2656 = vmatmul.f32.gmra.mxu0 %v2530
    %v2657 = vpop.f32.mrf.mxu0
    %v2658 = vadd.f32 %v2638, %v2657
    %2659 = vdwg.mxu0
    %2660 = vmatpush.msra.mxu0 %v1056
    %2661 = vmatpush.msra.mxu0 %v1050
    %2662 = vmatpush.msra.mxu0 %v1044
    %2663 = vmatpush.msra.mxu0 %v1038
    %2664 = vmatpush.msra.mxu0 %v1032
    %2665 = vmatpush.msra.mxu0 %v1026
    %2666 = vmatpush.msra.mxu0 %v1020
    %2667 = vmatpush.msra.mxu0 %v1014
    %2668 = vmatpush.msra.mxu0 %v1008
    %2669 = vmatpush.msra.mxu0 %v1002
    %2670 = vmatpush.msra.mxu0 %v996
    %2671 = vmatpush.msra.mxu0 %v990
    %2672 = vmatpush.msra.mxu0 %v984
    %2673 = vmatpush.msra.mxu0 %v978
    %2674 = vmatpush.msra.mxu0 %v972
    %2675 = vmatpush.msra.mxu0 %v966
    %2676 = vmatmul.f32.gmra.mxu0 %v2529
    %v2677 = vpop.f32.mrf.mxu0
    %v2678 = vadd.f32 0.0, %v2677
    %2679 = vdwg.mxu0
    %2680 = vmatpush.msra.mxu0 %v1152
    %2681 = vmatpush.msra.mxu0 %v1146
    %2682 = vmatpush.msra.mxu0 %v1140
    %2683 = vmatpush.msra.mxu0 %v1134
    %2684 = vmatpush.msra.mxu0 %v1128
    %2685 = vmatpush.msra.mxu0 %v1122
    %2686 = vmatpush.msra.mxu0 %v1116
    %2687 = vmatpush.msra.mxu0 %v1110
    %2688 = vmatpush.msra.mxu0 %v1104
    %2689 = vmatpush.msra.mxu0 %v1098
    %2690 = vmatpush.msra.mxu0 %v1092
    %2691 = vmatpush.msra.mxu0 %v1086
    %2692 = vmatpush.msra.mxu0 %v1080
    %2693 = vmatpush.msra.mxu0 %v1074
    %2694 = vmatpush.msra.mxu0 %v1068
    %2695 = vmatpush.msra.mxu0 %v1062
    %2696 = vmatmul.f32.gmra.mxu0 %v2530
    %v2697 = vpop.f32.mrf.mxu0
    %v2698 = vadd.f32 %v2678, %v2697
    %2699 = vdwg.mxu0
    %2700 = vmatpush.msra.mxu0 %v1057
    %2701 = vmatpush.msra.mxu0 %v1051
    %2702 = vmatpush.msra.mxu0 %v1045
    %2703 = vmatpush.msra.mxu0 %v1039
    %2704 = vmatpush.msra.mxu0 %v1033
    %2705 = vmatpush.msra.mxu0 %v1027
    %2706 = vmatpush.msra.mxu0 %v1021
    %2707 = vmatpush.msra.mxu0 %v1015
    %2708 = vmatpush.msra.mxu0 %v1009
    %2709 = vmatpush.msra.mxu0 %v1003
    %2710 = vmatpush.msra.mxu0 %v997
    %2711 = vmatpush.msra.mxu0 %v991
    %2712 = vmatpush.msra.mxu0 %v985
    %2713 = vmatpush.msra.mxu0 %v979
    %2714 = vmatpush.msra.mxu0 %v973
    %2715 = vmatpush.msra.mxu0 %v967
    %2716 = vmatmul.f32.gmra.mxu0 %v2529
    %v2717 = vpop.f32.mrf.mxu0
    %v2718 = vadd.f32 0.0, %v2717
    %2719 = vdwg.mxu0
    %2720 = vmatpush.msra.mxu0 %v1153
    %2721 = vmatpush.msra.mxu0 %v1147
    %2722 = vmatpush.msra.mxu0 %v1141
    %2723 = vmatpush.msra.mxu0 %v1135
    %2724 = vmatpush.msra.mxu0 %v1129
    %2725 = vmatpush.msra.mxu0 %v1123
    %2726 = vmatpush.msra.mxu0 %v1117
    %2727 = vmatpush.msra.mxu0 %v1111
    %2728 = vmatpush.msra.mxu0 %v1105
    %2729 = vmatpush.msra.mxu0 %v1099
    %2730 = vmatpush.msra.mxu0 %v1093
    %2731 = vmatpush.msra.mxu0 %v1087
    %2732 = vmatpush.msra.mxu0 %v1081
    %2733 = vmatpush.msra.mxu0 %v1075
    %2734 = vmatpush.msra.mxu0 %v1069
    %2735 = vmatpush.msra.mxu0 %v1063
    %2736 = vmatmul.f32.gmra.mxu0 %v2530
    %v2737 = vpop.f32.mrf.mxu0
    %v2738 = vadd.f32 %v2718, %v2737
    %2739 = vdwg.mxu0
    %2740 = vmatpush.msra.mxu0 %v1058
    %2741 = vmatpush.msra.mxu0 %v1052
    %2742 = vmatpush.msra.mxu0 %v1046
    %2743 = vmatpush.msra.mxu0 %v1040
    %2744 = vmatpush.msra.mxu0 %v1034
    %2745 = vmatpush.msra.mxu0 %v1028
    %2746 = vmatpush.msra.mxu0 %v1022
    %2747 = vmatpush.msra.mxu0 %v1016
    %2748 = vmatpush.msra.mxu0 %v1010
    %2749 = vmatpush.msra.mxu0 %v1004
    %2750 = vmatpush.msra.mxu0 %v998
    %2751 = vmatpush.msra.mxu0 %v992
    %2752 = vmatpush.msra.mxu0 %v986
    %2753 = vmatpush.msra.mxu0 %v980
    %2754 = vmatpush.msra.mxu0 %v974
    %2755 = vmatpush.msra.mxu0 %v968
    %2756 = vmatmul.f32.gmra.mxu0 %v2529
    %v2757 = vpop.f32.mrf.mxu0
    %v2758 = vadd.f32 0.0, %v2757
    %2759 = vdwg.mxu0
    %2760 = vmatpush.msra.mxu0 %v1154
    %2761 = vmatpush.msra.mxu0 %v1148
    %2762 = vmatpush.msra.mxu0 %v1142
    %2763 = vmatpush.msra.mxu0 %v1136
    %2764 = vmatpush.msra.mxu0 %v1130
    %2765 = vmatpush.msra.mxu0 %v1124
    %2766 = vmatpush.msra.mxu0 %v1118
    %2767 = vmatpush.msra.mxu0 %v1112
    %2768 = vmatpush.msra.mxu0 %v1106
    %2769 = vmatpush.msra.mxu0 %v1100
    %2770 = vmatpush.msra.mxu0 %v1094
    %2771 = vmatpush.msra.mxu0 %v1088
    %2772 = vmatpush.msra.mxu0 %v1082
    %2773 = vmatpush.msra.mxu0 %v1076
    %2774 = vmatpush.msra.mxu0 %v1070
    %2775 = vmatpush.msra.mxu0 %v1064
    %2776 = vmatmul.f32.gmra.mxu0 %v2530
    %v2777 = vpop.f32.mrf.mxu0
    %v2778 = vadd.f32 %v2758, %v2777
    %2779 = vdwg.mxu0
    %v2780 = vadd.f32 %v2534, %v2578
    %v2781 = vadd.f32 %v2535, %v2618
    %v2782 = vadd.f32 %v2536, %v2658
    %v2783 = vadd.f32 %v2537, %v2698
    %v2784 = vxor.u32 %v2780, 2147483648
    %v2785 = vxor.u32 %v2781, 2147483648
    %v2786 = vxor.u32 %v2782, 2147483648
    %v2787 = vxor.u32 %v2783, 2147483648
    %v2788 = vmul.f32 %v2784, 1.442695
    %v2789 = vpow.pop %v2788
    %v2790 = vmul.f32 %v2785, 1.442695
    %v2791 = vpow.pop %v2790
    %v2792 = vmul.f32 %v2786, 1.442695
    %v2793 = vpow.pop %v2792
    %v2794 = vmul.f32 %v2787, 1.442695
    %v2795 = vpow.pop %v2794
    %v2796 = vadd.f32 %v2789, 1.0
    %v2797 = vadd.f32 %v2791, 1.0
    %v2798 = vadd.f32 %v2793, 1.0
    %v2799 = vadd.f32 %v2795, 1.0
    %v2800 = vrcp.pop %v2796
    %v2801 = vmul.f32 %v2796, %v2800
    %v2802 = vsub.f32 1.0, %v2801
    %v2803 = vmul.f32 %v2800, %v2802
    %v2804 = vadd.f32 %v2800, %v2803
    %vm2805 = vweird.f32 %v2796
    %vm2806 = vweird.f32 %v2800
    %vm2807 = vmor %vm2805, %vm2806
    %v2808 = vsel %vm2807, %v2800, %v2804
    %v2809 = vand.u32 2147483647, %v2796
    %vm2810 = vcmp.eq.f32.partialorder %v2809, 8.507059e+37
    %v2811 = vand.u32 %v2796, 2147483648
    %v2812 = vor.u32 1.1754944e-38, %v2811
    %v2813 = vsel %vm2810, %v2812, %v2808
    %v2814 = vmul.f32 1.0, %v2813
    %v2815 = vrcp.pop %v2797
    %v2816 = vmul.f32 %v2797, %v2815
    %v2817 = vsub.f32 1.0, %v2816
    %v2818 = vmul.f32 %v2815, %v2817
    %v2819 = vadd.f32 %v2815, %v2818
    %vm2820 = vweird.f32 %v2797
    %vm2821 = vweird.f32 %v2815
    %vm2822 = vmor %vm2820, %vm2821
    %v2823 = vsel %vm2822, %v2815, %v2819
    %v2824 = vand.u32 2147483647, %v2797
    %vm2825 = vcmp.eq.f32.partialorder %v2824, 8.507059e+37
    %v2826 = vand.u32 %v2797, 2147483648
    %v2827 = vor.u32 1.1754944e-38, %v2826
    %v2828 = vsel %vm2825, %v2827, %v2823
    %v2829 = vmul.f32 1.0, %v2828
    %v2830 = vrcp.pop %v2798
    %v2831 = vmul.f32 %v2798, %v2830
    %v2832 = vsub.f32 1.0, %v2831
    %v2833 = vmul.f32 %v2830, %v2832
    %v2834 = vadd.f32 %v2830, %v2833
    %vm2835 = vweird.f32 %v2798
    %vm2836 = vweird.f32 %v2830
    %vm2837 = vmor %vm2835, %vm2836
    %v2838 = vsel %vm2837, %v2830, %v2834
    %v2839 = vand.u32 2147483647, %v2798
    %vm2840 = vcmp.eq.f32.partialorder %v2839, 8.507059e+37
    %v2841 = vand.u32 %v2798, 2147483648
    %v2842 = vor.u32 1.1754944e-38, %v2841
    %v2843 = vsel %vm2840, %v2842, %v2838
    %v2844 = vmul.f32 1.0, %v2843
    %v2845 = vrcp.pop %v2799
    %v2846 = vmul.f32 %v2799, %v2845
    %v2847 = vsub.f32 1.0, %v2846
    %v2848 = vmul.f32 %v2845, %v2847
    %v2849 = vadd.f32 %v2845, %v2848
    %vm2850 = vweird.f32 %v2799
    %vm2851 = vweird.f32 %v2845
    %vm2852 = vmor %vm2850, %vm2851
    %v2853 = vsel %vm2852, %v2845, %v2849
    %v2854 = vand.u32 2147483647, %v2799
    %vm2855 = vcmp.eq.f32.partialorder %v2854, 8.507059e+37
    %v2856 = vand.u32 %v2799, 2147483648
    %v2857 = vor.u32 1.1754944e-38, %v2856
    %v2858 = vsel %vm2855, %v2857, %v2853
    %v2859 = vmul.f32 1.0, %v2858
    %v2860 = vadd.f32 %v2738, %v1476
    %v2861 = vadd.f32 %v2778, %v1477
    %v2862 = vmul.f32 %v2814, %v2860
    %v2863 = vmul.f32 %v2829, %v2861
    %v2864 = vadd.f32 %v2538, %v2862
    %v2865 = vadd.f32 %v2539, %v2863
    %v2866 = vtanh.pop %v2864
    %v2867 = vtanh.pop %v2865
    %v2868 = vsub.f32 1.0, %v2844
    %v2869 = vsub.f32 1.0, %v2859
    %v2870 = vmul.f32 %v2868, %v2866
    %v2871 = vmul.f32 %v2869, %v2867
    %v2872 = vmul.f32 %v2844, %v2529
    %v2873 = vmul.f32 %v2859, %v2530
    %v2874 = vadd.f32 %v2870, %v2872
    %v2875 = vadd.f32 %v2871, %v2873
    %s2876 = smul.u32 5, 6
    %s2877 = smul.addr %s2876, 8
    %s2878 = scalar_lea.vmem [#allocation2], %s2877
    %v2879 = vld [vmem:[%s2878] sm:$0xff]
    %v2880 = vld [vmem:[%s2878 + $0x8] sm:$0xff]
    %v2881 = vld [vmem:[%s2878 + $0x10] sm:$0xff]
    %v2882 = vld [vmem:[%s2878 + $0x18] sm:$0xff]
    %v2883 = vld [vmem:[%s2878 + $0x20] sm:$0xff]
    %v2884 = vld [vmem:[%s2878 + $0x28] sm:$0xff]
    %2885 = vmatpush.msra.mxu0 %v1053
    %2886 = vmatpush.msra.mxu0 %v1047
    %2887 = vmatpush.msra.mxu0 %v1041
    %2888 = vmatpush.msra.mxu0 %v1035
    %2889 = vmatpush.msra.mxu0 %v1029
    %2890 = vmatpush.msra.mxu0 %v1023
    %2891 = vmatpush.msra.mxu0 %v1017
    %2892 = vmatpush.msra.mxu0 %v1011
    %2893 = vmatpush.msra.mxu0 %v1005
    %2894 = vmatpush.msra.mxu0 %v999
    %2895 = vmatpush.msra.mxu0 %v993
    %2896 = vmatpush.msra.mxu0 %v987
    %2897 = vmatpush.msra.mxu0 %v981
    %2898 = vmatpush.msra.mxu0 %v975
    %2899 = vmatpush.msra.mxu0 %v969
    %2900 = vmatpush.msra.mxu0 %v963
    %2901 = vmatmul.f32.gmra.mxu0 %v2874
    %v2902 = vpop.f32.mrf.mxu0
    %v2903 = vadd.f32 0.0, %v2902
    %2904 = vdwg.mxu0
    %2905 = vmatpush.msra.mxu0 %v1149
    %2906 = vmatpush.msra.mxu0 %v1143
    %2907 = vmatpush.msra.mxu0 %v1137
    %2908 = vmatpush.msra.mxu0 %v1131
    %2909 = vmatpush.msra.mxu0 %v1125
    %2910 = vmatpush.msra.mxu0 %v1119
    %2911 = vmatpush.msra.mxu0 %v1113
    %2912 = vmatpush.msra.mxu0 %v1107
    %2913 = vmatpush.msra.mxu0 %v1101
    %2914 = vmatpush.msra.mxu0 %v1095
    %2915 = vmatpush.msra.mxu0 %v1089
    %2916 = vmatpush.msra.mxu0 %v1083
    %2917 = vmatpush.msra.mxu0 %v1077
    %2918 = vmatpush.msra.mxu0 %v1071
    %2919 = vmatpush.msra.mxu0 %v1065
    %2920 = vmatpush.msra.mxu0 %v1059
    %2921 = vmatmul.f32.gmra.mxu0 %v2875
    %v2922 = vpop.f32.mrf.mxu0
    %v2923 = vadd.f32 %v2903, %v2922
    %2924 = vdwg.mxu0
    %2925 = vmatpush.msra.mxu0 %v1054
    %2926 = vmatpush.msra.mxu0 %v1048
    %2927 = vmatpush.msra.mxu0 %v1042
    %2928 = vmatpush.msra.mxu0 %v1036
    %2929 = vmatpush.msra.mxu0 %v1030
    %2930 = vmatpush.msra.mxu0 %v1024
    %2931 = vmatpush.msra.mxu0 %v1018
    %2932 = vmatpush.msra.mxu0 %v1012
    %2933 = vmatpush.msra.mxu0 %v1006
    %2934 = vmatpush.msra.mxu0 %v1000
    %2935 = vmatpush.msra.mxu0 %v994
    %2936 = vmatpush.msra.mxu0 %v988
    %2937 = vmatpush.msra.mxu0 %v982
    %2938 = vmatpush.msra.mxu0 %v976
    %2939 = vmatpush.msra.mxu0 %v970
    %2940 = vmatpush.msra.mxu0 %v964
    %2941 = vmatmul.f32.gmra.mxu0 %v2874
    %v2942 = vpop.f32.mrf.mxu0
    %v2943 = vadd.f32 0.0, %v2942
    %2944 = vdwg.mxu0
    %2945 = vmatpush.msra.mxu0 %v1150
    %2946 = vmatpush.msra.mxu0 %v1144
    %2947 = vmatpush.msra.mxu0 %v1138
    %2948 = vmatpush.msra.mxu0 %v1132
    %2949 = vmatpush.msra.mxu0 %v1126
    %2950 = vmatpush.msra.mxu0 %v1120
    %2951 = vmatpush.msra.mxu0 %v1114
    %2952 = vmatpush.msra.mxu0 %v1108
    %2953 = vmatpush.msra.mxu0 %v1102
    %2954 = vmatpush.msra.mxu0 %v1096
    %2955 = vmatpush.msra.mxu0 %v1090
    %2956 = vmatpush.msra.mxu0 %v1084
    %2957 = vmatpush.msra.mxu0 %v1078
    %2958 = vmatpush.msra.mxu0 %v1072
    %2959 = vmatpush.msra.mxu0 %v1066
    %2960 = vmatpush.msra.mxu0 %v1060
    %2961 = vmatmul.f32.gmra.mxu0 %v2875
    %v2962 = vpop.f32.mrf.mxu0
    %v2963 = vadd.f32 %v2943, %v2962
    %2964 = vdwg.mxu0
    %2965 = vmatpush.msra.mxu0 %v1055
    %2966 = vmatpush.msra.mxu0 %v1049
    %2967 = vmatpush.msra.mxu0 %v1043
    %2968 = vmatpush.msra.mxu0 %v1037
    %2969 = vmatpush.msra.mxu0 %v1031
    %2970 = vmatpush.msra.mxu0 %v1025
    %2971 = vmatpush.msra.mxu0 %v1019
    %2972 = vmatpush.msra.mxu0 %v1013
    %2973 = vmatpush.msra.mxu0 %v1007
    %2974 = vmatpush.msra.mxu0 %v1001
    %2975 = vmatpush.msra.mxu0 %v995
    %2976 = vmatpush.msra.mxu0 %v989
    %2977 = vmatpush.msra.mxu0 %v983
    %2978 = vmatpush.msra.mxu0 %v977
    %2979 = vmatpush.msra.mxu0 %v971
    %2980 = vmatpush.msra.mxu0 %v965
    %2981 = vmatmul.f32.gmra.mxu0 %v2874
    %v2982 = vpop.f32.mrf.mxu0
    %v2983 = vadd.f32 0.0, %v2982
    %2984 = vdwg.mxu0
    %2985 = vmatpush.msra.mxu0 %v1151
    %2986 = vmatpush.msra.mxu0 %v1145
    %2987 = vmatpush.msra.mxu0 %v1139
    %2988 = vmatpush.msra.mxu0 %v1133
    %2989 = vmatpush.msra.mxu0 %v1127
    %2990 = vmatpush.msra.mxu0 %v1121
    %2991 = vmatpush.msra.mxu0 %v1115
    %2992 = vmatpush.msra.mxu0 %v1109
    %2993 = vmatpush.msra.mxu0 %v1103
    %2994 = vmatpush.msra.mxu0 %v1097
    %2995 = vmatpush.msra.mxu0 %v1091
    %2996 = vmatpush.msra.mxu0 %v1085
    %2997 = vmatpush.msra.mxu0 %v1079
    %2998 = vmatpush.msra.mxu0 %v1073
    %2999 = vmatpush.msra.mxu0 %v1067
    %3000 = vmatpush.msra.mxu0 %v1061
    %3001 = vmatmul.f32.gmra.mxu0 %v2875
    %v3002 = vpop.f32.mrf.mxu0
    %v3003 = vadd.f32 %v2983, %v3002
    %3004 = vdwg.mxu0
    %3005 = vmatpush.msra.mxu0 %v1056
    %3006 = vmatpush.msra.mxu0 %v1050
    %3007 = vmatpush.msra.mxu0 %v1044
    %3008 = vmatpush.msra.mxu0 %v1038
    %3009 = vmatpush.msra.mxu0 %v1032
    %3010 = vmatpush.msra.mxu0 %v1026
    %3011 = vmatpush.msra.mxu0 %v1020
    %3012 = vmatpush.msra.mxu0 %v1014
    %3013 = vmatpush.msra.mxu0 %v1008
    %3014 = vmatpush.msra.mxu0 %v1002
    %3015 = vmatpush.msra.mxu0 %v996
    %3016 = vmatpush.msra.mxu0 %v990
    %3017 = vmatpush.msra.mxu0 %v984
    %3018 = vmatpush.msra.mxu0 %v978
    %3019 = vmatpush.msra.mxu0 %v972
    %3020 = vmatpush.msra.mxu0 %v966
    %3021 = vmatmul.f32.gmra.mxu0 %v2874
    %v3022 = vpop.f32.mrf.mxu0
    %v3023 = vadd.f32 0.0, %v3022
    %3024 = vdwg.mxu0
    %3025 = vmatpush.msra.mxu0 %v1152
    %3026 = vmatpush.msra.mxu0 %v1146
    %3027 = vmatpush.msra.mxu0 %v1140
    %3028 = vmatpush.msra.mxu0 %v1134
    %3029 = vmatpush.msra.mxu0 %v1128
    %3030 = vmatpush.msra.mxu0 %v1122
    %3031 = vmatpush.msra.mxu0 %v1116
    %3032 = vmatpush.msra.mxu0 %v1110
    %3033 = vmatpush.msra.mxu0 %v1104
    %3034 = vmatpush.msra.mxu0 %v1098
    %3035 = vmatpush.msra.mxu0 %v1092
    %3036 = vmatpush.msra.mxu0 %v1086
    %3037 = vmatpush.msra.mxu0 %v1080
    %3038 = vmatpush.msra.mxu0 %v1074
    %3039 = vmatpush.msra.mxu0 %v1068
    %3040 = vmatpush.msra.mxu0 %v1062
    %3041 = vmatmul.f32.gmra.mxu0 %v2875
    %v3042 = vpop.f32.mrf.mxu0
    %v3043 = vadd.f32 %v3023, %v3042
    %3044 = vdwg.mxu0
    %3045 = vmatpush.msra.mxu0 %v1057
    %3046 = vmatpush.msra.mxu0 %v1051
    %3047 = vmatpush.msra.mxu0 %v1045
    %3048 = vmatpush.msra.mxu0 %v1039
    %3049 = vmatpush.msra.mxu0 %v1033
    %3050 = vmatpush.msra.mxu0 %v1027
    %3051 = vmatpush.msra.mxu0 %v1021
    %3052 = vmatpush.msra.mxu0 %v1015
    %3053 = vmatpush.msra.mxu0 %v1009
    %3054 = vmatpush.msra.mxu0 %v1003
    %3055 = vmatpush.msra.mxu0 %v997
    %3056 = vmatpush.msra.mxu0 %v991
    %3057 = vmatpush.msra.mxu0 %v985
    %3058 = vmatpush.msra.mxu0 %v979
    %3059 = vmatpush.msra.mxu0 %v973
    %3060 = vmatpush.msra.mxu0 %v967
    %3061 = vmatmul.f32.gmra.mxu0 %v2874
    %v3062 = vpop.f32.mrf.mxu0
    %v3063 = vadd.f32 0.0, %v3062
    %3064 = vdwg.mxu0
    %3065 = vmatpush.msra.mxu0 %v1153
    %3066 = vmatpush.msra.mxu0 %v1147
    %3067 = vmatpush.msra.mxu0 %v1141
    %3068 = vmatpush.msra.mxu0 %v1135
    %3069 = vmatpush.msra.mxu0 %v1129
    %3070 = vmatpush.msra.mxu0 %v1123
    %3071 = vmatpush.msra.mxu0 %v1117
    %3072 = vmatpush.msra.mxu0 %v1111
    %3073 = vmatpush.msra.mxu0 %v1105
    %3074 = vmatpush.msra.mxu0 %v1099
    %3075 = vmatpush.msra.mxu0 %v1093
    %3076 = vmatpush.msra.mxu0 %v1087
    %3077 = vmatpush.msra.mxu0 %v1081
    %3078 = vmatpush.msra.mxu0 %v1075
    %3079 = vmatpush.msra.mxu0 %v1069
    %3080 = vmatpush.msra.mxu0 %v1063
    %3081 = vmatmul.f32.gmra.mxu0 %v2875
    %v3082 = vpop.f32.mrf.mxu0
    %v3083 = vadd.f32 %v3063, %v3082
    %3084 = vdwg.mxu0
    %3085 = vmatpush.msra.mxu0 %v1058
    %3086 = vmatpush.msra.mxu0 %v1052
    %3087 = vmatpush.msra.mxu0 %v1046
    %3088 = vmatpush.msra.mxu0 %v1040
    %3089 = vmatpush.msra.mxu0 %v1034
    %3090 = vmatpush.msra.mxu0 %v1028
    %3091 = vmatpush.msra.mxu0 %v1022
    %3092 = vmatpush.msra.mxu0 %v1016
    %3093 = vmatpush.msra.mxu0 %v1010
    %3094 = vmatpush.msra.mxu0 %v1004
    %3095 = vmatpush.msra.mxu0 %v998
    %3096 = vmatpush.msra.mxu0 %v992
    %3097 = vmatpush.msra.mxu0 %v986
    %3098 = vmatpush.msra.mxu0 %v980
    %3099 = vmatpush.msra.mxu0 %v974
    %3100 = vmatpush.msra.mxu0 %v968
    %3101 = vmatmul.f32.gmra.mxu0 %v2874
    %v3102 = vpop.f32.mrf.mxu0
    %v3103 = vadd.f32 0.0, %v3102
    %3104 = vdwg.mxu0
    %3105 = vmatpush.msra.mxu0 %v1154
    %3106 = vmatpush.msra.mxu0 %v1148
    %3107 = vmatpush.msra.mxu0 %v1142
    %3108 = vmatpush.msra.mxu0 %v1136
    %3109 = vmatpush.msra.mxu0 %v1130
    %3110 = vmatpush.msra.mxu0 %v1124
    %3111 = vmatpush.msra.mxu0 %v1118
    %3112 = vmatpush.msra.mxu0 %v1112
    %3113 = vmatpush.msra.mxu0 %v1106
    %3114 = vmatpush.msra.mxu0 %v1100
    %3115 = vmatpush.msra.mxu0 %v1094
    %3116 = vmatpush.msra.mxu0 %v1088
    %3117 = vmatpush.msra.mxu0 %v1082
    %3118 = vmatpush.msra.mxu0 %v1076
    %3119 = vmatpush.msra.mxu0 %v1070
    %3120 = vmatpush.msra.mxu0 %v1064
    %3121 = vmatmul.f32.gmra.mxu0 %v2875
    %v3122 = vpop.f32.mrf.mxu0
    %v3123 = vadd.f32 %v3103, %v3122
    %3124 = vdwg.mxu0
    %v3125 = vadd.f32 %v2879, %v2923
    %v3126 = vadd.f32 %v2880, %v2963
    %v3127 = vadd.f32 %v2881, %v3003
    %v3128 = vadd.f32 %v2882, %v3043
    %v3129 = vxor.u32 %v3125, 2147483648
    %v3130 = vxor.u32 %v3126, 2147483648
    %v3131 = vxor.u32 %v3127, 2147483648
    %v3132 = vxor.u32 %v3128, 2147483648
    %v3133 = vmul.f32 %v3129, 1.442695
    %v3134 = vpow.pop %v3133
    %v3135 = vmul.f32 %v3130, 1.442695
    %v3136 = vpow.pop %v3135
    %v3137 = vmul.f32 %v3131, 1.442695
    %v3138 = vpow.pop %v3137
    %v3139 = vmul.f32 %v3132, 1.442695
    %v3140 = vpow.pop %v3139
    %v3141 = vadd.f32 %v3134, 1.0
    %v3142 = vadd.f32 %v3136, 1.0
    %v3143 = vadd.f32 %v3138, 1.0
    %v3144 = vadd.f32 %v3140, 1.0
    %v3145 = vrcp.pop %v3141
    %v3146 = vmul.f32 %v3141, %v3145
    %v3147 = vsub.f32 1.0, %v3146
    %v3148 = vmul.f32 %v3145, %v3147
    %v3149 = vadd.f32 %v3145, %v3148
    %vm3150 = vweird.f32 %v3141
    %vm3151 = vweird.f32 %v3145
    %vm3152 = vmor %vm3150, %vm3151
    %v3153 = vsel %vm3152, %v3145, %v3149
    %v3154 = vand.u32 2147483647, %v3141
    %vm3155 = vcmp.eq.f32.partialorder %v3154, 8.507059e+37
    %v3156 = vand.u32 %v3141, 2147483648
    %v3157 = vor.u32 1.1754944e-38, %v3156
    %v3158 = vsel %vm3155, %v3157, %v3153
    %v3159 = vmul.f32 1.0, %v3158
    %v3160 = vrcp.pop %v3142
    %v3161 = vmul.f32 %v3142, %v3160
    %v3162 = vsub.f32 1.0, %v3161
    %v3163 = vmul.f32 %v3160, %v3162
    %v3164 = vadd.f32 %v3160, %v3163
    %vm3165 = vweird.f32 %v3142
    %vm3166 = vweird.f32 %v3160
    %vm3167 = vmor %vm3165, %vm3166
    %v3168 = vsel %vm3167, %v3160, %v3164
    %v3169 = vand.u32 2147483647, %v3142
    %vm3170 = vcmp.eq.f32.partialorder %v3169, 8.507059e+37
    %v3171 = vand.u32 %v3142, 2147483648
    %v3172 = vor.u32 1.1754944e-38, %v3171
    %v3173 = vsel %vm3170, %v3172, %v3168
    %v3174 = vmul.f32 1.0, %v3173
    %v3175 = vrcp.pop %v3143
    %v3176 = vmul.f32 %v3143, %v3175
    %v3177 = vsub.f32 1.0, %v3176
    %v3178 = vmul.f32 %v3175, %v3177
    %v3179 = vadd.f32 %v3175, %v3178
    %vm3180 = vweird.f32 %v3143
    %vm3181 = vweird.f32 %v3175
    %vm3182 = vmor %vm3180, %vm3181
    %v3183 = vsel %vm3182, %v3175, %v3179
    %v3184 = vand.u32 2147483647, %v3143
    %vm3185 = vcmp.eq.f32.partialorder %v3184, 8.507059e+37
    %v3186 = vand.u32 %v3143, 2147483648
    %v3187 = vor.u32 1.1754944e-38, %v3186
    %v3188 = vsel %vm3185, %v3187, %v3183
    %v3189 = vmul.f32 1.0, %v3188
    %v3190 = vrcp.pop %v3144
    %v3191 = vmul.f32 %v3144, %v3190
    %v3192 = vsub.f32 1.0, %v3191
    %v3193 = vmul.f32 %v3190, %v3192
    %v3194 = vadd.f32 %v3190, %v3193
    %vm3195 = vweird.f32 %v3144
    %vm3196 = vweird.f32 %v3190
    %vm3197 = vmor %vm3195, %vm3196
    %v3198 = vsel %vm3197, %v3190, %v3194
    %v3199 = vand.u32 2147483647, %v3144
    %vm3200 = vcmp.eq.f32.partialorder %v3199, 8.507059e+37
    %v3201 = vand.u32 %v3144, 2147483648
    %v3202 = vor.u32 1.1754944e-38, %v3201
    %v3203 = vsel %vm3200, %v3202, %v3198
    %v3204 = vmul.f32 1.0, %v3203
    %v3205 = vadd.f32 %v3083, %v1476
    %v3206 = vadd.f32 %v3123, %v1477
    %v3207 = vmul.f32 %v3159, %v3205
    %v3208 = vmul.f32 %v3174, %v3206
    %v3209 = vadd.f32 %v2883, %v3207
    %v3210 = vadd.f32 %v2884, %v3208
    %v3211 = vtanh.pop %v3209
    %v3212 = vtanh.pop %v3210
    %v3213 = vsub.f32 1.0, %v3189
    %v3214 = vsub.f32 1.0, %v3204
    %v3215 = vmul.f32 %v3213, %v3211
    %v3216 = vmul.f32 %v3214, %v3212
    %v3217 = vmul.f32 %v3189, %v2874
    %v3218 = vmul.f32 %v3204, %v2875
    %v3219 = vadd.f32 %v3215, %v3217
    %v3220 = vadd.f32 %v3216, %v3218
    %s3221 = smul.u32 6, 6
    %s3222 = smul.addr %s3221, 8
    %s3223 = scalar_lea.vmem [#allocation2], %s3222
    %v3224 = vld [vmem:[%s3223] sm:$0xff]
    %v3225 = vld [vmem:[%s3223 + $0x8] sm:$0xff]
    %v3226 = vld [vmem:[%s3223 + $0x10] sm:$0xff]
    %v3227 = vld [vmem:[%s3223 + $0x18] sm:$0xff]
    %v3228 = vld [vmem:[%s3223 + $0x20] sm:$0xff]
    %v3229 = vld [vmem:[%s3223 + $0x28] sm:$0xff]
    %3230 = vmatpush.msra.mxu0 %v1053
    %3231 = vmatpush.msra.mxu0 %v1047
    %3232 = vmatpush.msra.mxu0 %v1041
    %3233 = vmatpush.msra.mxu0 %v1035
    %3234 = vmatpush.msra.mxu0 %v1029
    %3235 = vmatpush.msra.mxu0 %v1023
    %3236 = vmatpush.msra.mxu0 %v1017
    %3237 = vmatpush.msra.mxu0 %v1011
    %3238 = vmatpush.msra.mxu0 %v1005
    %3239 = vmatpush.msra.mxu0 %v999
    %3240 = vmatpush.msra.mxu0 %v993
    %3241 = vmatpush.msra.mxu0 %v987
    %3242 = vmatpush.msra.mxu0 %v981
    %3243 = vmatpush.msra.mxu0 %v975
    %3244 = vmatpush.msra.mxu0 %v969
    %3245 = vmatpush.msra.mxu0 %v963
    %3246 = vmatmul.f32.gmra.mxu0 %v3219
    %v3247 = vpop.f32.mrf.mxu0
    %v3248 = vadd.f32 0.0, %v3247
    %3249 = vdwg.mxu0
    %3250 = vmatpush.msra.mxu0 %v1149
    %3251 = vmatpush.msra.mxu0 %v1143
    %3252 = vmatpush.msra.mxu0 %v1137
    %3253 = vmatpush.msra.mxu0 %v1131
    %3254 = vmatpush.msra.mxu0 %v1125
    %3255 = vmatpush.msra.mxu0 %v1119
    %3256 = vmatpush.msra.mxu0 %v1113
    %3257 = vmatpush.msra.mxu0 %v1107
    %3258 = vmatpush.msra.mxu0 %v1101
    %3259 = vmatpush.msra.mxu0 %v1095
    %3260 = vmatpush.msra.mxu0 %v1089
    %3261 = vmatpush.msra.mxu0 %v1083
    %3262 = vmatpush.msra.mxu0 %v1077
    %3263 = vmatpush.msra.mxu0 %v1071
    %3264 = vmatpush.msra.mxu0 %v1065
    %3265 = vmatpush.msra.mxu0 %v1059
    %3266 = vmatmul.f32.gmra.mxu0 %v3220
    %v3267 = vpop.f32.mrf.mxu0
    %v3268 = vadd.f32 %v3248, %v3267
    %3269 = vdwg.mxu0
    %3270 = vmatpush.msra.mxu0 %v1054
    %3271 = vmatpush.msra.mxu0 %v1048
    %3272 = vmatpush.msra.mxu0 %v1042
    %3273 = vmatpush.msra.mxu0 %v1036
    %3274 = vmatpush.msra.mxu0 %v1030
    %3275 = vmatpush.msra.mxu0 %v1024
    %3276 = vmatpush.msra.mxu0 %v1018
    %3277 = vmatpush.msra.mxu0 %v1012
    %3278 = vmatpush.msra.mxu0 %v1006
    %3279 = vmatpush.msra.mxu0 %v1000
    %3280 = vmatpush.msra.mxu0 %v994
    %3281 = vmatpush.msra.mxu0 %v988
    %3282 = vmatpush.msra.mxu0 %v982
    %3283 = vmatpush.msra.mxu0 %v976
    %3284 = vmatpush.msra.mxu0 %v970
    %3285 = vmatpush.msra.mxu0 %v964
    %3286 = vmatmul.f32.gmra.mxu0 %v3219
    %v3287 = vpop.f32.mrf.mxu0
    %v3288 = vadd.f32 0.0, %v3287
    %3289 = vdwg.mxu0
    %3290 = vmatpush.msra.mxu0 %v1150
    %3291 = vmatpush.msra.mxu0 %v1144
    %3292 = vmatpush.msra.mxu0 %v1138
    %3293 = vmatpush.msra.mxu0 %v1132
    %3294 = vmatpush.msra.mxu0 %v1126
    %3295 = vmatpush.msra.mxu0 %v1120
    %3296 = vmatpush.msra.mxu0 %v1114
    %3297 = vmatpush.msra.mxu0 %v1108
    %3298 = vmatpush.msra.mxu0 %v1102
    %3299 = vmatpush.msra.mxu0 %v1096
    %3300 = vmatpush.msra.mxu0 %v1090
    %3301 = vmatpush.msra.mxu0 %v1084
    %3302 = vmatpush.msra.mxu0 %v1078
    %3303 = vmatpush.msra.mxu0 %v1072
    %3304 = vmatpush.msra.mxu0 %v1066
    %3305 = vmatpush.msra.mxu0 %v1060
    %3306 = vmatmul.f32.gmra.mxu0 %v3220
    %v3307 = vpop.f32.mrf.mxu0
    %v3308 = vadd.f32 %v3288, %v3307
    %3309 = vdwg.mxu0
    %3310 = vmatpush.msra.mxu0 %v1055
    %3311 = vmatpush.msra.mxu0 %v1049
    %3312 = vmatpush.msra.mxu0 %v1043
    %3313 = vmatpush.msra.mxu0 %v1037
    %3314 = vmatpush.msra.mxu0 %v1031
    %3315 = vmatpush.msra.mxu0 %v1025
    %3316 = vmatpush.msra.mxu0 %v1019
    %3317 = vmatpush.msra.mxu0 %v1013
    %3318 = vmatpush.msra.mxu0 %v1007
    %3319 = vmatpush.msra.mxu0 %v1001
    %3320 = vmatpush.msra.mxu0 %v995
    %3321 = vmatpush.msra.mxu0 %v989
    %3322 = vmatpush.msra.mxu0 %v983
    %3323 = vmatpush.msra.mxu0 %v977
    %3324 = vmatpush.msra.mxu0 %v971
    %3325 = vmatpush.msra.mxu0 %v965
    %3326 = vmatmul.f32.gmra.mxu0 %v3219
    %v3327 = vpop.f32.mrf.mxu0
    %v3328 = vadd.f32 0.0, %v3327
    %3329 = vdwg.mxu0
    %3330 = vmatpush.msra.mxu0 %v1151
    %3331 = vmatpush.msra.mxu0 %v1145
    %3332 = vmatpush.msra.mxu0 %v1139
    %3333 = vmatpush.msra.mxu0 %v1133
    %3334 = vmatpush.msra.mxu0 %v1127
    %3335 = vmatpush.msra.mxu0 %v1121
    %3336 = vmatpush.msra.mxu0 %v1115
    %3337 = vmatpush.msra.mxu0 %v1109
    %3338 = vmatpush.msra.mxu0 %v1103
    %3339 = vmatpush.msra.mxu0 %v1097
    %3340 = vmatpush.msra.mxu0 %v1091
    %3341 = vmatpush.msra.mxu0 %v1085
    %3342 = vmatpush.msra.mxu0 %v1079
    %3343 = vmatpush.msra.mxu0 %v1073
    %3344 = vmatpush.msra.mxu0 %v1067
    %3345 = vmatpush.msra.mxu0 %v1061
    %3346 = vmatmul.f32.gmra.mxu0 %v3220
    %v3347 = vpop.f32.mrf.mxu0
    %v3348 = vadd.f32 %v3328, %v3347
    %3349 = vdwg.mxu0
    %3350 = vmatpush.msra.mxu0 %v1056
    %3351 = vmatpush.msra.mxu0 %v1050
    %3352 = vmatpush.msra.mxu0 %v1044
    %3353 = vmatpush.msra.mxu0 %v1038
    %3354 = vmatpush.msra.mxu0 %v1032
    %3355 = vmatpush.msra.mxu0 %v1026
    %3356 = vmatpush.msra.mxu0 %v1020
    %3357 = vmatpush.msra.mxu0 %v1014
    %3358 = vmatpush.msra.mxu0 %v1008
    %3359 = vmatpush.msra.mxu0 %v1002
    %3360 = vmatpush.msra.mxu0 %v996
    %3361 = vmatpush.msra.mxu0 %v990
    %3362 = vmatpush.msra.mxu0 %v984
    %3363 = vmatpush.msra.mxu0 %v978
    %3364 = vmatpush.msra.mxu0 %v972
    %3365 = vmatpush.msra.mxu0 %v966
    %3366 = vmatmul.f32.gmra.mxu0 %v3219
    %v3367 = vpop.f32.mrf.mxu0
    %v3368 = vadd.f32 0.0, %v3367
    %3369 = vdwg.mxu0
    %3370 = vmatpush.msra.mxu0 %v1152
    %3371 = vmatpush.msra.mxu0 %v1146
    %3372 = vmatpush.msra.mxu0 %v1140
    %3373 = vmatpush.msra.mxu0 %v1134
    %3374 = vmatpush.msra.mxu0 %v1128
    %3375 = vmatpush.msra.mxu0 %v1122
    %3376 = vmatpush.msra.mxu0 %v1116
    %3377 = vmatpush.msra.mxu0 %v1110
    %3378 = vmatpush.msra.mxu0 %v1104
    %3379 = vmatpush.msra.mxu0 %v1098
    %3380 = vmatpush.msra.mxu0 %v1092
    %3381 = vmatpush.msra.mxu0 %v1086
    %3382 = vmatpush.msra.mxu0 %v1080
    %3383 = vmatpush.msra.mxu0 %v1074
    %3384 = vmatpush.msra.mxu0 %v1068
    %3385 = vmatpush.msra.mxu0 %v1062
    %3386 = vmatmul.f32.gmra.mxu0 %v3220
    %v3387 = vpop.f32.mrf.mxu0
    %v3388 = vadd.f32 %v3368, %v3387
    %3389 = vdwg.mxu0
    %3390 = vmatpush.msra.mxu0 %v1057
    %3391 = vmatpush.msra.mxu0 %v1051
    %3392 = vmatpush.msra.mxu0 %v1045
    %3393 = vmatpush.msra.mxu0 %v1039
    %3394 = vmatpush.msra.mxu0 %v1033
    %3395 = vmatpush.msra.mxu0 %v1027
    %3396 = vmatpush.msra.mxu0 %v1021
    %3397 = vmatpush.msra.mxu0 %v1015
    %3398 = vmatpush.msra.mxu0 %v1009
    %3399 = vmatpush.msra.mxu0 %v1003
    %3400 = vmatpush.msra.mxu0 %v997
    %3401 = vmatpush.msra.mxu0 %v991
    %3402 = vmatpush.msra.mxu0 %v985
    %3403 = vmatpush.msra.mxu0 %v979
    %3404 = vmatpush.msra.mxu0 %v973
    %3405 = vmatpush.msra.mxu0 %v967
    %3406 = vmatmul.f32.gmra.mxu0 %v3219
    %v3407 = vpop.f32.mrf.mxu0
    %v3408 = vadd.f32 0.0, %v3407
    %3409 = vdwg.mxu0
    %3410 = vmatpush.msra.mxu0 %v1153
    %3411 = vmatpush.msra.mxu0 %v1147
    %3412 = vmatpush.msra.mxu0 %v1141
    %3413 = vmatpush.msra.mxu0 %v1135
    %3414 = vmatpush.msra.mxu0 %v1129
    %3415 = vmatpush.msra.mxu0 %v1123
    %3416 = vmatpush.msra.mxu0 %v1117
    %3417 = vmatpush.msra.mxu0 %v1111
    %3418 = vmatpush.msra.mxu0 %v1105
    %3419 = vmatpush.msra.mxu0 %v1099
    %3420 = vmatpush.msra.mxu0 %v1093
    %3421 = vmatpush.msra.mxu0 %v1087
    %3422 = vmatpush.msra.mxu0 %v1081
    %3423 = vmatpush.msra.mxu0 %v1075
    %3424 = vmatpush.msra.mxu0 %v1069
    %3425 = vmatpush.msra.mxu0 %v1063
    %3426 = vmatmul.f32.gmra.mxu0 %v3220
    %v3427 = vpop.f32.mrf.mxu0
    %v3428 = vadd.f32 %v3408, %v3427
    %3429 = vdwg.mxu0
    %3430 = vmatpush.msra.mxu0 %v1058
    %3431 = vmatpush.msra.mxu0 %v1052
    %3432 = vmatpush.msra.mxu0 %v1046
    %3433 = vmatpush.msra.mxu0 %v1040
    %3434 = vmatpush.msra.mxu0 %v1034
    %3435 = vmatpush.msra.mxu0 %v1028
    %3436 = vmatpush.msra.mxu0 %v1022
    %3437 = vmatpush.msra.mxu0 %v1016
    %3438 = vmatpush.msra.mxu0 %v1010
    %3439 = vmatpush.msra.mxu0 %v1004
    %3440 = vmatpush.msra.mxu0 %v998
    %3441 = vmatpush.msra.mxu0 %v992
    %3442 = vmatpush.msra.mxu0 %v986
    %3443 = vmatpush.msra.mxu0 %v980
    %3444 = vmatpush.msra.mxu0 %v974
    %3445 = vmatpush.msra.mxu0 %v968
    %3446 = vmatmul.f32.gmra.mxu0 %v3219
    %v3447 = vpop.f32.mrf.mxu0
    %v3448 = vadd.f32 0.0, %v3447
    %3449 = vdwg.mxu0
    %3450 = vmatpush.msra.mxu0 %v1154
    %3451 = vmatpush.msra.mxu0 %v1148
    %3452 = vmatpush.msra.mxu0 %v1142
    %3453 = vmatpush.msra.mxu0 %v1136
    %3454 = vmatpush.msra.mxu0 %v1130
    %3455 = vmatpush.msra.mxu0 %v1124
    %3456 = vmatpush.msra.mxu0 %v1118
    %3457 = vmatpush.msra.mxu0 %v1112
    %3458 = vmatpush.msra.mxu0 %v1106
    %3459 = vmatpush.msra.mxu0 %v1100
    %3460 = vmatpush.msra.mxu0 %v1094
    %3461 = vmatpush.msra.mxu0 %v1088
    %3462 = vmatpush.msra.mxu0 %v1082
    %3463 = vmatpush.msra.mxu0 %v1076
    %3464 = vmatpush.msra.mxu0 %v1070
    %3465 = vmatpush.msra.mxu0 %v1064
    %3466 = vmatmul.f32.gmra.mxu0 %v3220
    %v3467 = vpop.f32.mrf.mxu0
    %v3468 = vadd.f32 %v3448, %v3467
    %3469 = vdwg.mxu0
    %v3470 = vadd.f32 %v3224, %v3268
    %v3471 = vadd.f32 %v3225, %v3308
    %v3472 = vadd.f32 %v3226, %v3348
    %v3473 = vadd.f32 %v3227, %v3388
    %v3474 = vxor.u32 %v3470, 2147483648
    %v3475 = vxor.u32 %v3471, 2147483648
    %v3476 = vxor.u32 %v3472, 2147483648
    %v3477 = vxor.u32 %v3473, 2147483648
    %v3478 = vmul.f32 %v3474, 1.442695
    %v3479 = vpow.pop %v3478
    %v3480 = vmul.f32 %v3475, 1.442695
    %v3481 = vpow.pop %v3480
    %v3482 = vmul.f32 %v3476, 1.442695
    %v3483 = vpow.pop %v3482
    %v3484 = vmul.f32 %v3477, 1.442695
    %v3485 = vpow.pop %v3484
    %v3486 = vadd.f32 %v3479, 1.0
    %v3487 = vadd.f32 %v3481, 1.0
    %v3488 = vadd.f32 %v3483, 1.0
    %v3489 = vadd.f32 %v3485, 1.0
    %v3490 = vrcp.pop %v3486
    %v3491 = vmul.f32 %v3486, %v3490
    %v3492 = vsub.f32 1.0, %v3491
    %v3493 = vmul.f32 %v3490, %v3492
    %v3494 = vadd.f32 %v3490, %v3493
    %vm3495 = vweird.f32 %v3486
    %vm3496 = vweird.f32 %v3490
    %vm3497 = vmor %vm3495, %vm3496
    %v3498 = vsel %vm3497, %v3490, %v3494
    %v3499 = vand.u32 2147483647, %v3486
    %vm3500 = vcmp.eq.f32.partialorder %v3499, 8.507059e+37
    %v3501 = vand.u32 %v3486, 2147483648
    %v3502 = vor.u32 1.1754944e-38, %v3501
    %v3503 = vsel %vm3500, %v3502, %v3498
    %v3504 = vmul.f32 1.0, %v3503
    %v3505 = vrcp.pop %v3487
    %v3506 = vmul.f32 %v3487, %v3505
    %v3507 = vsub.f32 1.0, %v3506
    %v3508 = vmul.f32 %v3505, %v3507
    %v3509 = vadd.f32 %v3505, %v3508
    %vm3510 = vweird.f32 %v3487
    %vm3511 = vweird.f32 %v3505
    %vm3512 = vmor %vm3510, %vm3511
    %v3513 = vsel %vm3512, %v3505, %v3509
    %v3514 = vand.u32 2147483647, %v3487
    %vm3515 = vcmp.eq.f32.partialorder %v3514, 8.507059e+37
    %v3516 = vand.u32 %v3487, 2147483648
    %v3517 = vor.u32 1.1754944e-38, %v3516
    %v3518 = vsel %vm3515, %v3517, %v3513
    %v3519 = vmul.f32 1.0, %v3518
    %v3520 = vrcp.pop %v3488
    %v3521 = vmul.f32 %v3488, %v3520
    %v3522 = vsub.f32 1.0, %v3521
    %v3523 = vmul.f32 %v3520, %v3522
    %v3524 = vadd.f32 %v3520, %v3523
    %vm3525 = vweird.f32 %v3488
    %vm3526 = vweird.f32 %v3520
    %vm3527 = vmor %vm3525, %vm3526
    %v3528 = vsel %vm3527, %v3520, %v3524
    %v3529 = vand.u32 2147483647, %v3488
    %vm3530 = vcmp.eq.f32.partialorder %v3529, 8.507059e+37
    %v3531 = vand.u32 %v3488, 2147483648
    %v3532 = vor.u32 1.1754944e-38, %v3531
    %v3533 = vsel %vm3530, %v3532, %v3528
    %v3534 = vmul.f32 1.0, %v3533
    %v3535 = vrcp.pop %v3489
    %v3536 = vmul.f32 %v3489, %v3535
    %v3537 = vsub.f32 1.0, %v3536
    %v3538 = vmul.f32 %v3535, %v3537
    %v3539 = vadd.f32 %v3535, %v3538
    %vm3540 = vweird.f32 %v3489
    %vm3541 = vweird.f32 %v3535
    %vm3542 = vmor %vm3540, %vm3541
    %v3543 = vsel %vm3542, %v3535, %v3539
    %v3544 = vand.u32 2147483647, %v3489
    %vm3545 = vcmp.eq.f32.partialorder %v3544, 8.507059e+37
    %v3546 = vand.u32 %v3489, 2147483648
    %v3547 = vor.u32 1.1754944e-38, %v3546
    %v3548 = vsel %vm3545, %v3547, %v3543
    %v3549 = vmul.f32 1.0, %v3548
    %v3550 = vadd.f32 %v3428, %v1476
    %v3551 = vadd.f32 %v3468, %v1477
    %v3552 = vmul.f32 %v3504, %v3550
    %v3553 = vmul.f32 %v3519, %v3551
    %v3554 = vadd.f32 %v3228, %v3552
    %v3555 = vadd.f32 %v3229, %v3553
    %v3556 = vtanh.pop %v3554
    %v3557 = vtanh.pop %v3555
    %v3558 = vsub.f32 1.0, %v3534
    %v3559 = vsub.f32 1.0, %v3549
    %v3560 = vmul.f32 %v3558, %v3556
    %v3561 = vmul.f32 %v3559, %v3557
    %v3562 = vmul.f32 %v3534, %v3219
    %v3563 = vmul.f32 %v3549, %v3220
    %v3564 = vadd.f32 %v3560, %v3562
    %v3565 = vadd.f32 %v3561, %v3563
    %s3566 = smul.u32 7, 6
    %s3567 = smul.addr %s3566, 8
    %s3568 = scalar_lea.vmem [#allocation2], %s3567
    %v3569 = vld [vmem:[%s3568] sm:$0xff]
    %v3570 = vld [vmem:[%s3568 + $0x8] sm:$0xff]
    %v3571 = vld [vmem:[%s3568 + $0x10] sm:$0xff]
    %v3572 = vld [vmem:[%s3568 + $0x18] sm:$0xff]
    %v3573 = vld [vmem:[%s3568 + $0x20] sm:$0xff]
    %v3574 = vld [vmem:[%s3568 + $0x28] sm:$0xff]
    %3575 = vmatpush.msra.mxu0 %v1053
    %3576 = vmatpush.msra.mxu0 %v1047
    %3577 = vmatpush.msra.mxu0 %v1041
    %3578 = vmatpush.msra.mxu0 %v1035
    %3579 = vmatpush.msra.mxu0 %v1029
    %3580 = vmatpush.msra.mxu0 %v1023
    %3581 = vmatpush.msra.mxu0 %v1017
    %3582 = vmatpush.msra.mxu0 %v1011
    %3583 = vmatpush.msra.mxu0 %v1005
    %3584 = vmatpush.msra.mxu0 %v999
    %3585 = vmatpush.msra.mxu0 %v993
    %3586 = vmatpush.msra.mxu0 %v987
    %3587 = vmatpush.msra.mxu0 %v981
    %3588 = vmatpush.msra.mxu0 %v975
    %3589 = vmatpush.msra.mxu0 %v969
    %3590 = vmatpush.msra.mxu0 %v963
    %3591 = vmatmul.f32.gmra.mxu0 %v3564
    %v3592 = vpop.f32.mrf.mxu0
    %v3593 = vadd.f32 0.0, %v3592
    %3594 = vdwg.mxu0
    %3595 = vmatpush.msra.mxu0 %v1149
    %3596 = vmatpush.msra.mxu0 %v1143
    %3597 = vmatpush.msra.mxu0 %v1137
    %3598 = vmatpush.msra.mxu0 %v1131
    %3599 = vmatpush.msra.mxu0 %v1125
    %3600 = vmatpush.msra.mxu0 %v1119
    %3601 = vmatpush.msra.mxu0 %v1113
    %3602 = vmatpush.msra.mxu0 %v1107
    %3603 = vmatpush.msra.mxu0 %v1101
    %3604 = vmatpush.msra.mxu0 %v1095
    %3605 = vmatpush.msra.mxu0 %v1089
    %3606 = vmatpush.msra.mxu0 %v1083
    %3607 = vmatpush.msra.mxu0 %v1077
    %3608 = vmatpush.msra.mxu0 %v1071
    %3609 = vmatpush.msra.mxu0 %v1065
    %3610 = vmatpush.msra.mxu0 %v1059
    %3611 = vmatmul.f32.gmra.mxu0 %v3565
    %v3612 = vpop.f32.mrf.mxu0
    %v3613 = vadd.f32 %v3593, %v3612
    %3614 = vdwg.mxu0
    %3615 = vmatpush.msra.mxu0 %v1054
    %3616 = vmatpush.msra.mxu0 %v1048
    %3617 = vmatpush.msra.mxu0 %v1042
    %3618 = vmatpush.msra.mxu0 %v1036
    %3619 = vmatpush.msra.mxu0 %v1030
    %3620 = vmatpush.msra.mxu0 %v1024
    %3621 = vmatpush.msra.mxu0 %v1018
    %3622 = vmatpush.msra.mxu0 %v1012
    %3623 = vmatpush.msra.mxu0 %v1006
    %3624 = vmatpush.msra.mxu0 %v1000
    %3625 = vmatpush.msra.mxu0 %v994
    %3626 = vmatpush.msra.mxu0 %v988
    %3627 = vmatpush.msra.mxu0 %v982
    %3628 = vmatpush.msra.mxu0 %v976
    %3629 = vmatpush.msra.mxu0 %v970
    %3630 = vmatpush.msra.mxu0 %v964
    %3631 = vmatmul.f32.gmra.mxu0 %v3564
    %v3632 = vpop.f32.mrf.mxu0
    %v3633 = vadd.f32 0.0, %v3632
    %3634 = vdwg.mxu0
    %3635 = vmatpush.msra.mxu0 %v1150
    %3636 = vmatpush.msra.mxu0 %v1144
    %3637 = vmatpush.msra.mxu0 %v1138
    %3638 = vmatpush.msra.mxu0 %v1132
    %3639 = vmatpush.msra.mxu0 %v1126
    %3640 = vmatpush.msra.mxu0 %v1120
    %3641 = vmatpush.msra.mxu0 %v1114
    %3642 = vmatpush.msra.mxu0 %v1108
    %3643 = vmatpush.msra.mxu0 %v1102
    %3644 = vmatpush.msra.mxu0 %v1096
    %3645 = vmatpush.msra.mxu0 %v1090
    %3646 = vmatpush.msra.mxu0 %v1084
    %3647 = vmatpush.msra.mxu0 %v1078
    %3648 = vmatpush.msra.mxu0 %v1072
    %3649 = vmatpush.msra.mxu0 %v1066
    %3650 = vmatpush.msra.mxu0 %v1060
    %3651 = vmatmul.f32.gmra.mxu0 %v3565
    %v3652 = vpop.f32.mrf.mxu0
    %v3653 = vadd.f32 %v3633, %v3652
    %3654 = vdwg.mxu0
    %3655 = vmatpush.msra.mxu0 %v1055
    %3656 = vmatpush.msra.mxu0 %v1049
    %3657 = vmatpush.msra.mxu0 %v1043
    %3658 = vmatpush.msra.mxu0 %v1037
    %3659 = vmatpush.msra.mxu0 %v1031
    %3660 = vmatpush.msra.mxu0 %v1025
    %3661 = vmatpush.msra.mxu0 %v1019
    %3662 = vmatpush.msra.mxu0 %v1013
    %3663 = vmatpush.msra.mxu0 %v1007
    %3664 = vmatpush.msra.mxu0 %v1001
    %3665 = vmatpush.msra.mxu0 %v995
    %3666 = vmatpush.msra.mxu0 %v989
    %3667 = vmatpush.msra.mxu0 %v983
    %3668 = vmatpush.msra.mxu0 %v977
    %3669 = vmatpush.msra.mxu0 %v971
    %3670 = vmatpush.msra.mxu0 %v965
    %3671 = vmatmul.f32.gmra.mxu0 %v3564
    %v3672 = vpop.f32.mrf.mxu0
    %v3673 = vadd.f32 0.0, %v3672
    %3674 = vdwg.mxu0
    %3675 = vmatpush.msra.mxu0 %v1151
    %3676 = vmatpush.msra.mxu0 %v1145
    %3677 = vmatpush.msra.mxu0 %v1139
    %3678 = vmatpush.msra.mxu0 %v1133
    %3679 = vmatpush.msra.mxu0 %v1127
    %3680 = vmatpush.msra.mxu0 %v1121
    %3681 = vmatpush.msra.mxu0 %v1115
    %3682 = vmatpush.msra.mxu0 %v1109
    %3683 = vmatpush.msra.mxu0 %v1103
    %3684 = vmatpush.msra.mxu0 %v1097
    %3685 = vmatpush.msra.mxu0 %v1091
    %3686 = vmatpush.msra.mxu0 %v1085
    %3687 = vmatpush.msra.mxu0 %v1079
    %3688 = vmatpush.msra.mxu0 %v1073
    %3689 = vmatpush.msra.mxu0 %v1067
    %3690 = vmatpush.msra.mxu0 %v1061
    %3691 = vmatmul.f32.gmra.mxu0 %v3565
    %v3692 = vpop.f32.mrf.mxu0
    %v3693 = vadd.f32 %v3673, %v3692
    %3694 = vdwg.mxu0
    %3695 = vmatpush.msra.mxu0 %v1056
    %3696 = vmatpush.msra.mxu0 %v1050
    %3697 = vmatpush.msra.mxu0 %v1044
    %3698 = vmatpush.msra.mxu0 %v1038
    %3699 = vmatpush.msra.mxu0 %v1032
    %3700 = vmatpush.msra.mxu0 %v1026
    %3701 = vmatpush.msra.mxu0 %v1020
    %3702 = vmatpush.msra.mxu0 %v1014
    %3703 = vmatpush.msra.mxu0 %v1008
    %3704 = vmatpush.msra.mxu0 %v1002
    %3705 = vmatpush.msra.mxu0 %v996
    %3706 = vmatpush.msra.mxu0 %v990
    %3707 = vmatpush.msra.mxu0 %v984
    %3708 = vmatpush.msra.mxu0 %v978
    %3709 = vmatpush.msra.mxu0 %v972
    %3710 = vmatpush.msra.mxu0 %v966
    %3711 = vmatmul.f32.gmra.mxu0 %v3564
    %v3712 = vpop.f32.mrf.mxu0
    %v3713 = vadd.f32 0.0, %v3712
    %3714 = vdwg.mxu0
    %3715 = vmatpush.msra.mxu0 %v1152
    %3716 = vmatpush.msra.mxu0 %v1146
    %3717 = vmatpush.msra.mxu0 %v1140
    %3718 = vmatpush.msra.mxu0 %v1134
    %3719 = vmatpush.msra.mxu0 %v1128
    %3720 = vmatpush.msra.mxu0 %v1122
    %3721 = vmatpush.msra.mxu0 %v1116
    %3722 = vmatpush.msra.mxu0 %v1110
    %3723 = vmatpush.msra.mxu0 %v1104
    %3724 = vmatpush.msra.mxu0 %v1098
    %3725 = vmatpush.msra.mxu0 %v1092
    %3726 = vmatpush.msra.mxu0 %v1086
    %3727 = vmatpush.msra.mxu0 %v1080
    %3728 = vmatpush.msra.mxu0 %v1074
    %3729 = vmatpush.msra.mxu0 %v1068
    %3730 = vmatpush.msra.mxu0 %v1062
    %3731 = vmatmul.f32.gmra.mxu0 %v3565
    %v3732 = vpop.f32.mrf.mxu0
    %v3733 = vadd.f32 %v3713, %v3732
    %3734 = vdwg.mxu0
    %3735 = vmatpush.msra.mxu0 %v1057
    %3736 = vmatpush.msra.mxu0 %v1051
    %3737 = vmatpush.msra.mxu0 %v1045
    %3738 = vmatpush.msra.mxu0 %v1039
    %3739 = vmatpush.msra.mxu0 %v1033
    %3740 = vmatpush.msra.mxu0 %v1027
    %3741 = vmatpush.msra.mxu0 %v1021
    %3742 = vmatpush.msra.mxu0 %v1015
    %3743 = vmatpush.msra.mxu0 %v1009
    %3744 = vmatpush.msra.mxu0 %v1003
    %3745 = vmatpush.msra.mxu0 %v997
    %3746 = vmatpush.msra.mxu0 %v991
    %3747 = vmatpush.msra.mxu0 %v985
    %3748 = vmatpush.msra.mxu0 %v979
    %3749 = vmatpush.msra.mxu0 %v973
    %3750 = vmatpush.msra.mxu0 %v967
    %3751 = vmatmul.f32.gmra.mxu0 %v3564
    %v3752 = vpop.f32.mrf.mxu0
    %v3753 = vadd.f32 0.0, %v3752
    %3754 = vdwg.mxu0
    %3755 = vmatpush.msra.mxu0 %v1153
    %3756 = vmatpush.msra.mxu0 %v1147
    %3757 = vmatpush.msra.mxu0 %v1141
    %3758 = vmatpush.msra.mxu0 %v1135
    %3759 = vmatpush.msra.mxu0 %v1129
    %3760 = vmatpush.msra.mxu0 %v1123
    %3761 = vmatpush.msra.mxu0 %v1117
    %3762 = vmatpush.msra.mxu0 %v1111
    %3763 = vmatpush.msra.mxu0 %v1105
    %3764 = vmatpush.msra.mxu0 %v1099
    %3765 = vmatpush.msra.mxu0 %v1093
    %3766 = vmatpush.msra.mxu0 %v1087
    %3767 = vmatpush.msra.mxu0 %v1081
    %3768 = vmatpush.msra.mxu0 %v1075
    %3769 = vmatpush.msra.mxu0 %v1069
    %3770 = vmatpush.msra.mxu0 %v1063
    %3771 = vmatmul.f32.gmra.mxu0 %v3565
    %v3772 = vpop.f32.mrf.mxu0
    %v3773 = vadd.f32 %v3753, %v3772
    %3774 = vdwg.mxu0
    %3775 = vmatpush.msra.mxu0 %v1058
    %3776 = vmatpush.msra.mxu0 %v1052
    %3777 = vmatpush.msra.mxu0 %v1046
    %3778 = vmatpush.msra.mxu0 %v1040
    %3779 = vmatpush.msra.mxu0 %v1034
    %3780 = vmatpush.msra.mxu0 %v1028
    %3781 = vmatpush.msra.mxu0 %v1022
    %3782 = vmatpush.msra.mxu0 %v1016
    %3783 = vmatpush.msra.mxu0 %v1010
    %3784 = vmatpush.msra.mxu0 %v1004
    %3785 = vmatpush.msra.mxu0 %v998
    %3786 = vmatpush.msra.mxu0 %v992
    %3787 = vmatpush.msra.mxu0 %v986
    %3788 = vmatpush.msra.mxu0 %v980
    %3789 = vmatpush.msra.mxu0 %v974
    %3790 = vmatpush.msra.mxu0 %v968
    %3791 = vmatmul.f32.gmra.mxu0 %v3564
    %v3792 = vpop.f32.mrf.mxu0
    %v3793 = vadd.f32 0.0, %v3792
    %3794 = vdwg.mxu0
    %3795 = vmatpush.msra.mxu0 %v1154
    %3796 = vmatpush.msra.mxu0 %v1148
    %3797 = vmatpush.msra.mxu0 %v1142
    %3798 = vmatpush.msra.mxu0 %v1136
    %3799 = vmatpush.msra.mxu0 %v1130
    %3800 = vmatpush.msra.mxu0 %v1124
    %3801 = vmatpush.msra.mxu0 %v1118
    %3802 = vmatpush.msra.mxu0 %v1112
    %3803 = vmatpush.msra.mxu0 %v1106
    %3804 = vmatpush.msra.mxu0 %v1100
    %3805 = vmatpush.msra.mxu0 %v1094
    %3806 = vmatpush.msra.mxu0 %v1088
    %3807 = vmatpush.msra.mxu0 %v1082
    %3808 = vmatpush.msra.mxu0 %v1076
    %3809 = vmatpush.msra.mxu0 %v1070
    %3810 = vmatpush.msra.mxu0 %v1064
    %3811 = vmatmul.f32.gmra.mxu0 %v3565
    %v3812 = vpop.f32.mrf.mxu0
    %v3813 = vadd.f32 %v3793, %v3812
    %3814 = vdwg.mxu0
    %v3815 = vadd.f32 %v3569, %v3613
    %v3816 = vadd.f32 %v3570, %v3653
    %v3817 = vadd.f32 %v3571, %v3693
    %v3818 = vadd.f32 %v3572, %v3733
    %v3819 = vxor.u32 %v3815, 2147483648
    %v3820 = vxor.u32 %v3816, 2147483648
    %v3821 = vxor.u32 %v3817, 2147483648
    %v3822 = vxor.u32 %v3818, 2147483648
    %v3823 = vmul.f32 %v3819, 1.442695
    %v3824 = vpow.pop %v3823
    %v3825 = vmul.f32 %v3820, 1.442695
    %v3826 = vpow.pop %v3825
    %v3827 = vmul.f32 %v3821, 1.442695
    %v3828 = vpow.pop %v3827
    %v3829 = vmul.f32 %v3822, 1.442695
    %v3830 = vpow.pop %v3829
    %v3831 = vadd.f32 %v3824, 1.0
    %v3832 = vadd.f32 %v3826, 1.0
    %v3833 = vadd.f32 %v3828, 1.0
    %v3834 = vadd.f32 %v3830, 1.0
    %v3835 = vrcp.pop %v3831
    %v3836 = vmul.f32 %v3831, %v3835
    %v3837 = vsub.f32 1.0, %v3836
    %v3838 = vmul.f32 %v3835, %v3837
    %v3839 = vadd.f32 %v3835, %v3838
    %vm3840 = vweird.f32 %v3831
    %vm3841 = vweird.f32 %v3835
    %vm3842 = vmor %vm3840, %vm3841
    %v3843 = vsel %vm3842, %v3835, %v3839
    %v3844 = vand.u32 2147483647, %v3831
    %vm3845 = vcmp.eq.f32.partialorder %v3844, 8.507059e+37
    %v3846 = vand.u32 %v3831, 2147483648
    %v3847 = vor.u32 1.1754944e-38, %v3846
    %v3848 = vsel %vm3845, %v3847, %v3843
    %v3849 = vmul.f32 1.0, %v3848
    %v3850 = vrcp.pop %v3832
    %v3851 = vmul.f32 %v3832, %v3850
    %v3852 = vsub.f32 1.0, %v3851
    %v3853 = vmul.f32 %v3850, %v3852
    %v3854 = vadd.f32 %v3850, %v3853
    %vm3855 = vweird.f32 %v3832
    %vm3856 = vweird.f32 %v3850
    %vm3857 = vmor %vm3855, %vm3856
    %v3858 = vsel %vm3857, %v3850, %v3854
    %v3859 = vand.u32 2147483647, %v3832
    %vm3860 = vcmp.eq.f32.partialorder %v3859, 8.507059e+37
    %v3861 = vand.u32 %v3832, 2147483648
    %v3862 = vor.u32 1.1754944e-38, %v3861
    %v3863 = vsel %vm3860, %v3862, %v3858
    %v3864 = vmul.f32 1.0, %v3863
    %v3865 = vrcp.pop %v3833
    %v3866 = vmul.f32 %v3833, %v3865
    %v3867 = vsub.f32 1.0, %v3866
    %v3868 = vmul.f32 %v3865, %v3867
    %v3869 = vadd.f32 %v3865, %v3868
    %vm3870 = vweird.f32 %v3833
    %vm3871 = vweird.f32 %v3865
    %vm3872 = vmor %vm3870, %vm3871
    %v3873 = vsel %vm3872, %v3865, %v3869
    %v3874 = vand.u32 2147483647, %v3833
    %vm3875 = vcmp.eq.f32.partialorder %v3874, 8.507059e+37
    %v3876 = vand.u32 %v3833, 2147483648
    %v3877 = vor.u32 1.1754944e-38, %v3876
    %v3878 = vsel %vm3875, %v3877, %v3873
    %v3879 = vmul.f32 1.0, %v3878
    %v3880 = vrcp.pop %v3834
    %v3881 = vmul.f32 %v3834, %v3880
    %v3882 = vsub.f32 1.0, %v3881
    %v3883 = vmul.f32 %v3880, %v3882
    %v3884 = vadd.f32 %v3880, %v3883
    %vm3885 = vweird.f32 %v3834
    %vm3886 = vweird.f32 %v3880
    %vm3887 = vmor %vm3885, %vm3886
    %v3888 = vsel %vm3887, %v3880, %v3884
    %v3889 = vand.u32 2147483647, %v3834
    %vm3890 = vcmp.eq.f32.partialorder %v3889, 8.507059e+37
    %v3891 = vand.u32 %v3834, 2147483648
    %v3892 = vor.u32 1.1754944e-38, %v3891
    %v3893 = vsel %vm3890, %v3892, %v3888
    %v3894 = vmul.f32 1.0, %v3893
    %v3895 = vadd.f32 %v3773, %v1476
    %v3896 = vadd.f32 %v3813, %v1477
    %v3897 = vmul.f32 %v3849, %v3895
    %v3898 = vmul.f32 %v3864, %v3896
    %v3899 = vadd.f32 %v3573, %v3897
    %v3900 = vadd.f32 %v3574, %v3898
    %v3901 = vtanh.pop %v3899
    %v3902 = vtanh.pop %v3900
    %v3903 = vsub.f32 1.0, %v3879
    %v3904 = vsub.f32 1.0, %v3894
    %v3905 = vmul.f32 %v3903, %v3901
    %v3906 = vmul.f32 %v3904, %v3902
    %v3907 = vmul.f32 %v3879, %v3564
    %v3908 = vmul.f32 %v3894, %v3565
    %v3909 = vadd.f32 %v3905, %v3907
    %v3910 = vadd.f32 %v3906, %v3908
    %3911 = vst [vmem:[#allocation6] sm:$0xff] %v3909
    %3912 = vst [vmem:[#allocation6 + $0x8] sm:$0xff] %v3910
    %v3913 = vlaneseq
    %v3914 = vand.u32 %v3913, 127
    %v3915 = vadd.s32 %v3914, 128
    %vm3916 = vcmp.ge.s32.totalorder %v3914, 0
    %vm3917 = vcmp.ge.s32.totalorder %v3915, 0
    %vm3918 = vcmp.lt.s32.totalorder %v3914, 32
    %vm3919 = vcmp.lt.s32.totalorder %v3915, 32
    %vm3920 = vmand %vm3916, %vm3918
    %vm3921 = vmand %vm3917, %vm3919
    %v3922 = vsel %vm3920, %v3909, 0.0
    %v3923 = vsel %vm3921, %v3910, 0.0
    %v3924 = vmax.f32 %v3922, 0.0
    %v3925 = vmax.f32 %v3923, 0.0
    %v3926 = vld [vmem:[%s6] sm:$0xff]
    %v3927 = vld [vmem:[%s6 + $0x8] sm:$0xff]
    %v3928 = vld [vmem:[%s6 + $0x10] sm:$0xff]
    %v3929 = vld [vmem:[%s6 + $0x18] sm:$0xff]
    %v3930 = vld [vmem:[%s6 + $0x20] sm:$0xff]
    %v3931 = vld [vmem:[%s6 + $0x28] sm:$0xff]
    %v3932 = vld [vmem:[%s6 + $0x30] sm:$0xff]
    %v3933 = vld [vmem:[%s6 + $0x38] sm:$0xff]
    %v3934 = vld [vmem:[%s6 + $0x40] sm:$0xff]
    %v3935 = vld [vmem:[%s6 + $0x48] sm:$0xff]
    %v3936 = vld [vmem:[%s6 + $0x50] sm:$0xff]
    %v3937 = vld [vmem:[%s6 + $0x58] sm:$0xff]
    %v3938 = vld [vmem:[%s6 + $0x60] sm:$0xff]
    %v3939 = vld [vmem:[%s6 + $0x68] sm:$0xff]
    %v3940 = vld [vmem:[%s6 + $0x70] sm:$0xff]
    %v3941 = vld [vmem:[%s6 + $0x78] sm:$0xff]
    %v3942 = vld [vmem:[%s6 + $0x80] sm:$0xff]
    %v3943 = vld [vmem:[%s6 + $0x88] sm:$0xff]
    %v3944 = vld [vmem:[%s6 + $0x90] sm:$0xff]
    %v3945 = vld [vmem:[%s6 + $0x98] sm:$0xff]
    %v3946 = vld [vmem:[%s6 + $0xa0] sm:$0xff]
    %v3947 = vld [vmem:[%s6 + $0xa8] sm:$0xff]
    %v3948 = vld [vmem:[%s6 + $0xb0] sm:$0xff]
    %v3949 = vld [vmem:[%s6 + $0xb8] sm:$0xff]
    %v3950 = vld [vmem:[%s6 + $0xc0] sm:$0xff]
    %v3951 = vld [vmem:[%s6 + $0xc8] sm:$0xff]
    %v3952 = vld [vmem:[%s6 + $0xd0] sm:$0xff]
    %v3953 = vld [vmem:[%s6 + $0xd8] sm:$0xff]
    %v3954 = vld [vmem:[%s6 + $0xe0] sm:$0xff]
    %v3955 = vld [vmem:[%s6 + $0xe8] sm:$0xff]
    %v3956 = vld [vmem:[%s6 + $0xf0] sm:$0xff]
    %v3957 = vld [vmem:[%s6 + $0xf8] sm:$0xff]
    %v3958 = vld [vmem:[%s7] sm:$0x1]
    %v3960 = vperm.slane %v3958, 0
    %3962 = vmatpush.msra.mxu0 %v3941
    %3963 = vmatpush.msra.mxu0 %v3940
    %3964 = vmatpush.msra.mxu0 %v3939
    %3965 = vmatpush.msra.mxu0 %v3938
    %3966 = vmatpush.msra.mxu0 %v3937
    %3967 = vmatpush.msra.mxu0 %v3936
    %3968 = vmatpush.msra.mxu0 %v3935
    %3969 = vmatpush.msra.mxu0 %v3934
    %3970 = vmatpush.msra.mxu0 %v3933
    %3971 = vmatpush.msra.mxu0 %v3932
    %3972 = vmatpush.msra.mxu0 %v3931
    %3973 = vmatpush.msra.mxu0 %v3930
    %3974 = vmatpush.msra.mxu0 %v3929
    %3975 = vmatpush.msra.mxu0 %v3928
    %3976 = vmatpush.msra.mxu0 %v3927
    %3977 = vmatpush.msra.mxu0 %v3926
    %3978 = vmatmul.f32.gmra.mxu0 %v3924
    %v3979 = vpop.f32.mrf.mxu0
    %v3980 = vadd.f32 %v3960, %v3979
    %3981 = vdwg.mxu0
    %3982 = vmatpush.msra.mxu0 %v3957
    %3983 = vmatpush.msra.mxu0 %v3956
    %3984 = vmatpush.msra.mxu0 %v3955
    %3985 = vmatpush.msra.mxu0 %v3954
    %3986 = vmatpush.msra.mxu0 %v3953
    %3987 = vmatpush.msra.mxu0 %v3952
    %3988 = vmatpush.msra.mxu0 %v3951
    %3989 = vmatpush.msra.mxu0 %v3950
    %3990 = vmatpush.msra.mxu0 %v3949
    %3991 = vmatpush.msra.mxu0 %v3948
    %3992 = vmatpush.msra.mxu0 %v3947
    %3993 = vmatpush.msra.mxu0 %v3946
    %3994 = vmatpush.msra.mxu0 %v3945
    %3995 = vmatpush.msra.mxu0 %v3944
    %3996 = vmatpush.msra.mxu0 %v3943
    %3997 = vmatpush.msra.mxu0 %v3942
    %3998 = vmatmul.f32.gmra.mxu0 %v3925
    %v3999 = vpop.f32.mrf.mxu0
    %v4000 = vadd.f32 %v3980, %v3999
    %4001 = vdwg.mxu0
    %v4002 = vmax.f32 %v4000, 0.0
    %v4003 = vld [vmem:[%s8] sm:$0xff]
    %v4004 = vld [vmem:[%s8 + $0x8] sm:$0xff]
    %v4005 = vld [vmem:[%s8 + $0x10] sm:$0xff]
    %v4006 = vld [vmem:[%s8 + $0x18] sm:$0xff]
    %v4007 = vld [vmem:[%s9] sm:$0x1]
    %v4009 = vperm.slane %v4007, 0
    %v4012 = vsel %vm247, %v4002, 0
    %4014 = vmatpush.msra.mxu0 0.0
    %4015 = vmatpush.msra.mxu0 0.0
    %4016 = vmatpush.msra.mxu0 0.0
    %4017 = vmatpush.msra.mxu0 0.0
    %4018 = vmatpush.msra.mxu0 0.0
    %4019 = vmatpush.msra.mxu0 0.0
    %4020 = vmatpush.msra.mxu0 0.0
    %4021 = vmatpush.msra.mxu0 0.0
    %4022 = vmatpush.msra.mxu0 0.0
    %4023 = vmatpush.msra.mxu0 0.0
    %4024 = vmatpush.msra.mxu0 0.0
    %4025 = vmatpush.msra.mxu0 0.0
    %4026 = vmatpush.msra.mxu0 %v4006
    %4027 = vmatpush.msra.mxu0 %v4005
    %4028 = vmatpush.msra.mxu0 %v4004
    %4029 = vmatpush.msra.mxu0 %v4003
    %4030 = vmatmul.f32.gmra.mxu0 %v4012
    %v4031 = vpop.f32.mrf.mxu0
    %v4032 = vadd.f32 %v4009, %v4031
    %4033 = vdwg.mxu0
    %v4034 = vmax.f32 %v4032, 0.0
    %v4035 = vld [vmem:[%s10] sm:$0xff]
    %v4036 = vld [vmem:[%s10 + $0x8] sm:$0xff]
    %v4037 = vld [vmem:[%s10 + $0x10] sm:$0xff]
    %v4038 = vld [vmem:[%s10 + $0x18] sm:$0xff]
    %v4039 = vld [vmem:[%s10 + $0x20] sm:$0xff]
    %v4040 = vld [vmem:[%s10 + $0x28] sm:$0xff]
    %v4041 = vld [vmem:[%s10 + $0x30] sm:$0xff]
    %v4042 = vld [vmem:[%s10 + $0x38] sm:$0xff]
    %v4043 = vld [vmem:[%s11] sm:$0x3]
    %v4045 = vperm.slane %v4043, 0
    %v4046 = vperm.slane %v4043, 1
    %v4050 = vsel %vm247, %v4034, 0
    %4052 = vmatpush.msra.mxu0 0.0
    %4053 = vmatpush.msra.mxu0 0.0
    %4054 = vmatpush.msra.mxu0 0.0
    %4055 = vmatpush.msra.mxu0 0.0
    %4056 = vmatpush.msra.mxu0 0.0
    %4057 = vmatpush.msra.mxu0 0.0
    %4058 = vmatpush.msra.mxu0 0.0
    %4059 = vmatpush.msra.mxu0 0.0
    %4060 = vmatpush.msra.mxu0 0.0
    %4061 = vmatpush.msra.mxu0 0.0
    %4062 = vmatpush.msra.mxu0 0.0
    %4063 = vmatpush.msra.mxu0 0.0
    %4064 = vmatpush.msra.mxu0 %v4041
    %4065 = vmatpush.msra.mxu0 %v4039
    %4066 = vmatpush.msra.mxu0 %v4037
    %4067 = vmatpush.msra.mxu0 %v4035
    %4068 = vmatmul.f32.gmra.mxu0 %v4050
    %v4069 = vpop.f32.mrf.mxu0
    %v4070 = vadd.f32 %v4045, %v4069
    %4071 = vdwg.mxu0
    %4072 = vmatpush.msra.mxu0 0.0
    %4073 = vmatpush.msra.mxu0 0.0
    %4074 = vmatpush.msra.mxu0 0.0
    %4075 = vmatpush.msra.mxu0 0.0
    %4076 = vmatpush.msra.mxu0 0.0
    %4077 = vmatpush.msra.mxu0 0.0
    %4078 = vmatpush.msra.mxu0 0.0
    %4079 = vmatpush.msra.mxu0 0.0
    %4080 = vmatpush.msra.mxu0 0.0
    %4081 = vmatpush.msra.mxu0 0.0
    %4082 = vmatpush.msra.mxu0 0.0
    %4083 = vmatpush.msra.mxu0 0.0
    %4084 = vmatpush.msra.mxu0 %v4042
    %4085 = vmatpush.msra.mxu0 %v4040
    %4086 = vmatpush.msra.mxu0 %v4038
    %4087 = vmatpush.msra.mxu0 %v4036
    %4088 = vmatmul.f32.gmra.mxu0 %v4050
    %v4089 = vpop.f32.mrf.mxu0
    %v4090 = vadd.f32 %v4046, %v4089
    %4091 = vdwg.mxu0
    %v4092 = vsel %vm3920, %v4070, 0.0
    %v4093 = vsel %vm3921, %v4090, 0.0
    %vm4094 = vcmp.ge.s32.totalorder %v3914, 32
    %vm4095 = vcmp.ge.s32.totalorder %v3915, 32
    %vm4096 = vcmp.lt.s32.totalorder %v3914, 64
    %vm4097 = vcmp.lt.s32.totalorder %v3915, 64
    %vm4098 = vmand %vm4094, %vm4096
    %vm4099 = vmand %vm4095, %vm4097
    %v4100 = vsel %vm4098, %v3909, %v4092
    %v4101 = vsel %vm4099, %v3910, %v4093
    %v4102 = vmax.f32 %v4100, 0.0
    %v4103 = vmax.f32 %v4101, 0.0
    %s4104 = scalar_lea.vmem %s6, 256
    %v4105 = vld [vmem:[%s4104] sm:$0xff]
    %v4106 = vld [vmem:[%s4104 + $0x8] sm:$0xff]
    %v4107 = vld [vmem:[%s4104 + $0x10] sm:$0xff]
    %v4108 = vld [vmem:[%s4104 + $0x18] sm:$0xff]
    %v4109 = vld [vmem:[%s4104 + $0x20] sm:$0xff]
    %v4110 = vld [vmem:[%s4104 + $0x28] sm:$0xff]
    %v4111 = vld [vmem:[%s4104 + $0x30] sm:$0xff]
    %v4112 = vld [vmem:[%s4104 + $0x38] sm:$0xff]
    %v4113 = vld [vmem:[%s4104 + $0x40] sm:$0xff]
    %v4114 = vld [vmem:[%s4104 + $0x48] sm:$0xff]
    %v4115 = vld [vmem:[%s4104 + $0x50] sm:$0xff]
    %v4116 = vld [vmem:[%s4104 + $0x58] sm:$0xff]
    %v4117 = vld [vmem:[%s4104 + $0x60] sm:$0xff]
    %v4118 = vld [vmem:[%s4104 + $0x68] sm:$0xff]
    %v4119 = vld [vmem:[%s4104 + $0x70] sm:$0xff]
    %v4120 = vld [vmem:[%s4104 + $0x78] sm:$0xff]
    %v4121 = vld [vmem:[%s4104 + $0x80] sm:$0xff]
    %v4122 = vld [vmem:[%s4104 + $0x88] sm:$0xff]
    %v4123 = vld [vmem:[%s4104 + $0x90] sm:$0xff]
    %v4124 = vld [vmem:[%s4104 + $0x98] sm:$0xff]
    %v4125 = vld [vmem:[%s4104 + $0xa0] sm:$0xff]
    %v4126 = vld [vmem:[%s4104 + $0xa8] sm:$0xff]
    %v4127 = vld [vmem:[%s4104 + $0xb0] sm:$0xff]
    %v4128 = vld [vmem:[%s4104 + $0xb8] sm:$0xff]
    %v4129 = vld [vmem:[%s4104 + $0xc0] sm:$0xff]
    %v4130 = vld [vmem:[%s4104 + $0xc8] sm:$0xff]
    %v4131 = vld [vmem:[%s4104 + $0xd0] sm:$0xff]
    %v4132 = vld [vmem:[%s4104 + $0xd8] sm:$0xff]
    %v4133 = vld [vmem:[%s4104 + $0xe0] sm:$0xff]
    %v4134 = vld [vmem:[%s4104 + $0xe8] sm:$0xff]
    %v4135 = vld [vmem:[%s4104 + $0xf0] sm:$0xff]
    %v4136 = vld [vmem:[%s4104 + $0xf8] sm:$0xff]
    %s4137 = scalar_lea.vmem %s7, 1
    %v4138 = vld [vmem:[%s4137] sm:$0x1]
    %v4140 = vperm.slane %v4138, 0
    %4142 = vmatpush.msra.mxu0 %v4120
    %4143 = vmatpush.msra.mxu0 %v4119
    %4144 = vmatpush.msra.mxu0 %v4118
    %4145 = vmatpush.msra.mxu0 %v4117
    %4146 = vmatpush.msra.mxu0 %v4116
    %4147 = vmatpush.msra.mxu0 %v4115
    %4148 = vmatpush.msra.mxu0 %v4114
    %4149 = vmatpush.msra.mxu0 %v4113
    %4150 = vmatpush.msra.mxu0 %v4112
    %4151 = vmatpush.msra.mxu0 %v4111
    %4152 = vmatpush.msra.mxu0 %v4110
    %4153 = vmatpush.msra.mxu0 %v4109
    %4154 = vmatpush.msra.mxu0 %v4108
    %4155 = vmatpush.msra.mxu0 %v4107
    %4156 = vmatpush.msra.mxu0 %v4106
    %4157 = vmatpush.msra.mxu0 %v4105
    %4158 = vmatmul.f32.gmra.mxu0 %v4102
    %v4159 = vpop.f32.mrf.mxu0
    %v4160 = vadd.f32 %v4140, %v4159
    %4161 = vdwg.mxu0
    %4162 = vmatpush.msra.mxu0 %v4136
    %4163 = vmatpush.msra.mxu0 %v4135
    %4164 = vmatpush.msra.mxu0 %v4134
    %4165 = vmatpush.msra.mxu0 %v4133
    %4166 = vmatpush.msra.mxu0 %v4132
    %4167 = vmatpush.msra.mxu0 %v4131
    %4168 = vmatpush.msra.mxu0 %v4130
    %4169 = vmatpush.msra.mxu0 %v4129
    %4170 = vmatpush.msra.mxu0 %v4128
    %4171 = vmatpush.msra.mxu0 %v4127
    %4172 = vmatpush.msra.mxu0 %v4126
    %4173 = vmatpush.msra.mxu0 %v4125
    %4174 = vmatpush.msra.mxu0 %v4124
    %4175 = vmatpush.msra.mxu0 %v4123
    %4176 = vmatpush.msra.mxu0 %v4122
    %4177 = vmatpush.msra.mxu0 %v4121
    %4178 = vmatmul.f32.gmra.mxu0 %v4103
    %v4179 = vpop.f32.mrf.mxu0
    %v4180 = vadd.f32 %v4160, %v4179
    %4181 = vdwg.mxu0
    %v4182 = vmax.f32 %v4180, 0.0
    %s4183 = scalar_lea.vmem %s8, 32
    %v4184 = vld [vmem:[%s4183] sm:$0xff]
    %v4185 = vld [vmem:[%s4183 + $0x8] sm:$0xff]
    %v4186 = vld [vmem:[%s4183 + $0x10] sm:$0xff]
    %v4187 = vld [vmem:[%s4183 + $0x18] sm:$0xff]
    %s4188 = scalar_lea.vmem %s9, 1
    %v4189 = vld [vmem:[%s4188] sm:$0x1]
    %v4191 = vperm.slane %v4189, 0
    %v4194 = vsel %vm247, %v4182, 0
    %4196 = vmatpush.msra.mxu0 0.0
    %4197 = vmatpush.msra.mxu0 0.0
    %4198 = vmatpush.msra.mxu0 0.0
    %4199 = vmatpush.msra.mxu0 0.0
    %4200 = vmatpush.msra.mxu0 0.0
    %4201 = vmatpush.msra.mxu0 0.0
    %4202 = vmatpush.msra.mxu0 0.0
    %4203 = vmatpush.msra.mxu0 0.0
    %4204 = vmatpush.msra.mxu0 0.0
    %4205 = vmatpush.msra.mxu0 0.0
    %4206 = vmatpush.msra.mxu0 0.0
    %4207 = vmatpush.msra.mxu0 0.0
    %4208 = vmatpush.msra.mxu0 %v4187
    %4209 = vmatpush.msra.mxu0 %v4186
    %4210 = vmatpush.msra.mxu0 %v4185
    %4211 = vmatpush.msra.mxu0 %v4184
    %4212 = vmatmul.f32.gmra.mxu0 %v4194
    %v4213 = vpop.f32.mrf.mxu0
    %v4214 = vadd.f32 %v4191, %v4213
    %4215 = vdwg.mxu0
    %v4216 = vmax.f32 %v4214, 0.0
    %s4217 = scalar_lea.vmem %s10, 64
    %v4218 = vld [vmem:[%s4217] sm:$0xff]
    %v4219 = vld [vmem:[%s4217 + $0x8] sm:$0xff]
    %v4220 = vld [vmem:[%s4217 + $0x10] sm:$0xff]
    %v4221 = vld [vmem:[%s4217 + $0x18] sm:$0xff]
    %v4222 = vld [vmem:[%s4217 + $0x20] sm:$0xff]
    %v4223 = vld [vmem:[%s4217 + $0x28] sm:$0xff]
    %v4224 = vld [vmem:[%s4217 + $0x30] sm:$0xff]
    %v4225 = vld [vmem:[%s4217 + $0x38] sm:$0xff]
    %s4226 = scalar_lea.vmem %s11, 2
    %v4227 = vld [vmem:[%s4226] sm:$0x3]
    %v4229 = vperm.slane %v4227, 0
    %v4230 = vperm.slane %v4227, 1
    %v4234 = vsel %vm247, %v4216, 0
    %4236 = vmatpush.msra.mxu0 0.0
    %4237 = vmatpush.msra.mxu0 0.0
    %4238 = vmatpush.msra.mxu0 0.0
    %4239 = vmatpush.msra.mxu0 0.0
    %4240 = vmatpush.msra.mxu0 0.0
    %4241 = vmatpush.msra.mxu0 0.0
    %4242 = vmatpush.msra.mxu0 0.0
    %4243 = vmatpush.msra.mxu0 0.0
    %4244 = vmatpush.msra.mxu0 0.0
    %4245 = vmatpush.msra.mxu0 0.0
    %4246 = vmatpush.msra.mxu0 0.0
    %4247 = vmatpush.msra.mxu0 0.0
    %4248 = vmatpush.msra.mxu0 %v4224
    %4249 = vmatpush.msra.mxu0 %v4222
    %4250 = vmatpush.msra.mxu0 %v4220
    %4251 = vmatpush.msra.mxu0 %v4218
    %4252 = vmatmul.f32.gmra.mxu0 %v4234
    %v4253 = vpop.f32.mrf.mxu0
    %v4254 = vadd.f32 %v4229, %v4253
    %4255 = vdwg.mxu0
    %4256 = vmatpush.msra.mxu0 0.0
    %4257 = vmatpush.msra.mxu0 0.0
    %4258 = vmatpush.msra.mxu0 0.0
    %4259 = vmatpush.msra.mxu0 0.0
    %4260 = vmatpush.msra.mxu0 0.0
    %4261 = vmatpush.msra.mxu0 0.0
    %4262 = vmatpush.msra.mxu0 0.0
    %4263 = vmatpush.msra.mxu0 0.0
    %4264 = vmatpush.msra.mxu0 0.0
    %4265 = vmatpush.msra.mxu0 0.0
    %4266 = vmatpush.msra.mxu0 0.0
    %4267 = vmatpush.msra.mxu0 0.0
    %4268 = vmatpush.msra.mxu0 %v4225
    %4269 = vmatpush.msra.mxu0 %v4223
    %4270 = vmatpush.msra.mxu0 %v4221
    %4271 = vmatpush.msra.mxu0 %v4219
    %4272 = vmatmul.f32.gmra.mxu0 %v4234
    %v4273 = vpop.f32.mrf.mxu0
    %v4274 = vadd.f32 %v4230, %v4273
    %4275 = vdwg.mxu0
    %v4276 = vsel %vm4098, %v4254, %v4092
    %v4277 = vsel %vm4099, %v4274, %v4093
    %vm4278 = vcmp.ge.s32.totalorder %v3914, 64
    %vm4279 = vcmp.ge.s32.totalorder %v3915, 64
    %vm4280 = vcmp.lt.s32.totalorder %v3914, 96
    %vm4281 = vcmp.lt.s32.totalorder %v3915, 96
    %vm4282 = vmand %vm4278, %vm4280
    %vm4283 = vmand %vm4279, %vm4281
    %v4284 = vsel %vm4282, %v3909, %v4276
    %v4285 = vsel %vm4283, %v3910, %v4277
    %v4286 = vmax.f32 %v4284, 0.0
    %v4287 = vmax.f32 %v4285, 0.0
    %s4288 = scalar_lea.vmem %s6, 512
    %v4289 = vld [vmem:[%s4288] sm:$0xff]
    %v4290 = vld [vmem:[%s4288 + $0x8] sm:$0xff]
    %v4291 = vld [vmem:[%s4288 + $0x10] sm:$0xff]
    %v4292 = vld [vmem:[%s4288 + $0x18] sm:$0xff]
    %v4293 = vld [vmem:[%s4288 + $0x20] sm:$0xff]
    %v4294 = vld [vmem:[%s4288 + $0x28] sm:$0xff]
    %v4295 = vld [vmem:[%s4288 + $0x30] sm:$0xff]
    %v4296 = vld [vmem:[%s4288 + $0x38] sm:$0xff]
    %v4297 = vld [vmem:[%s4288 + $0x40] sm:$0xff]
    %v4298 = vld [vmem:[%s4288 + $0x48] sm:$0xff]
    %v4299 = vld [vmem:[%s4288 + $0x50] sm:$0xff]
    %v4300 = vld [vmem:[%s4288 + $0x58] sm:$0xff]
    %v4301 = vld [vmem:[%s4288 + $0x60] sm:$0xff]
    %v4302 = vld [vmem:[%s4288 + $0x68] sm:$0xff]
    %v4303 = vld [vmem:[%s4288 + $0x70] sm:$0xff]
    %v4304 = vld [vmem:[%s4288 + $0x78] sm:$0xff]
    %v4305 = vld [vmem:[%s4288 + $0x80] sm:$0xff]
    %v4306 = vld [vmem:[%s4288 + $0x88] sm:$0xff]
    %v4307 = vld [vmem:[%s4288 + $0x90] sm:$0xff]
    %v4308 = vld [vmem:[%s4288 + $0x98] sm:$0xff]
    %v4309 = vld [vmem:[%s4288 + $0xa0] sm:$0xff]
    %v4310 = vld [vmem:[%s4288 + $0xa8] sm:$0xff]
    %v4311 = vld [vmem:[%s4288 + $0xb0] sm:$0xff]
    %v4312 = vld [vmem:[%s4288 + $0xb8] sm:$0xff]
    %v4313 = vld [vmem:[%s4288 + $0xc0] sm:$0xff]
    %v4314 = vld [vmem:[%s4288 + $0xc8] sm:$0xff]
    %v4315 = vld [vmem:[%s4288 + $0xd0] sm:$0xff]
    %v4316 = vld [vmem:[%s4288 + $0xd8] sm:$0xff]
    %v4317 = vld [vmem:[%s4288 + $0xe0] sm:$0xff]
    %v4318 = vld [vmem:[%s4288 + $0xe8] sm:$0xff]
    %v4319 = vld [vmem:[%s4288 + $0xf0] sm:$0xff]
    %v4320 = vld [vmem:[%s4288 + $0xf8] sm:$0xff]
    %s4321 = scalar_lea.vmem %s7, 2
    %v4322 = vld [vmem:[%s4321] sm:$0x1]
    %v4324 = vperm.slane %v4322, 0
    %4326 = vmatpush.msra.mxu0 %v4304
    %4327 = vmatpush.msra.mxu0 %v4303
    %4328 = vmatpush.msra.mxu0 %v4302
    %4329 = vmatpush.msra.mxu0 %v4301
    %4330 = vmatpush.msra.mxu0 %v4300
    %4331 = vmatpush.msra.mxu0 %v4299
    %4332 = vmatpush.msra.mxu0 %v4298
    %4333 = vmatpush.msra.mxu0 %v4297
    %4334 = vmatpush.msra.mxu0 %v4296
    %4335 = vmatpush.msra.mxu0 %v4295
    %4336 = vmatpush.msra.mxu0 %v4294
    %4337 = vmatpush.msra.mxu0 %v4293
    %4338 = vmatpush.msra.mxu0 %v4292
    %4339 = vmatpush.msra.mxu0 %v4291
    %4340 = vmatpush.msra.mxu0 %v4290
    %4341 = vmatpush.msra.mxu0 %v4289
    %4342 = vmatmul.f32.gmra.mxu0 %v4286
    %v4343 = vpop.f32.mrf.mxu0
    %v4344 = vadd.f32 %v4324, %v4343
    %4345 = vdwg.mxu0
    %4346 = vmatpush.msra.mxu0 %v4320
    %4347 = vmatpush.msra.mxu0 %v4319
    %4348 = vmatpush.msra.mxu0 %v4318
    %4349 = vmatpush.msra.mxu0 %v4317
    %4350 = vmatpush.msra.mxu0 %v4316
    %4351 = vmatpush.msra.mxu0 %v4315
    %4352 = vmatpush.msra.mxu0 %v4314
    %4353 = vmatpush.msra.mxu0 %v4313
    %4354 = vmatpush.msra.mxu0 %v4312
    %4355 = vmatpush.msra.mxu0 %v4311
    %4356 = vmatpush.msra.mxu0 %v4310
    %4357 = vmatpush.msra.mxu0 %v4309
    %4358 = vmatpush.msra.mxu0 %v4308
    %4359 = vmatpush.msra.mxu0 %v4307
    %4360 = vmatpush.msra.mxu0 %v4306
    %4361 = vmatpush.msra.mxu0 %v4305
    %4362 = vmatmul.f32.gmra.mxu0 %v4287
    %v4363 = vpop.f32.mrf.mxu0
    %v4364 = vadd.f32 %v4344, %v4363
    %4365 = vdwg.mxu0
    %v4366 = vmax.f32 %v4364, 0.0
    %s4367 = scalar_lea.vmem %s8, 64
    %v4368 = vld [vmem:[%s4367] sm:$0xff]
    %v4369 = vld [vmem:[%s4367 + $0x8] sm:$0xff]
    %v4370 = vld [vmem:[%s4367 + $0x10] sm:$0xff]
    %v4371 = vld [vmem:[%s4367 + $0x18] sm:$0xff]
    %s4372 = scalar_lea.vmem %s9, 2
    %v4373 = vld [vmem:[%s4372] sm:$0x1]
    %v4375 = vperm.slane %v4373, 0
    %v4378 = vsel %vm247, %v4366, 0
    %4380 = vmatpush.msra.mxu0 0.0
    %4381 = vmatpush.msra.mxu0 0.0
    %4382 = vmatpush.msra.mxu0 0.0
    %4383 = vmatpush.msra.mxu0 0.0
    %4384 = vmatpush.msra.mxu0 0.0
    %4385 = vmatpush.msra.mxu0 0.0
    %4386 = vmatpush.msra.mxu0 0.0
    %4387 = vmatpush.msra.mxu0 0.0
    %4388 = vmatpush.msra.mxu0 0.0
    %4389 = vmatpush.msra.mxu0 0.0
    %4390 = vmatpush.msra.mxu0 0.0
    %4391 = vmatpush.msra.mxu0 0.0
    %4392 = vmatpush.msra.mxu0 %v4371
    %4393 = vmatpush.msra.mxu0 %v4370
    %4394 = vmatpush.msra.mxu0 %v4369
    %4395 = vmatpush.msra.mxu0 %v4368
    %4396 = vmatmul.f32.gmra.mxu0 %v4378
    %v4397 = vpop.f32.mrf.mxu0
    %v4398 = vadd.f32 %v4375, %v4397
    %4399 = vdwg.mxu0
    %v4400 = vmax.f32 %v4398, 0.0
    %s4401 = scalar_lea.vmem %s10, 128
    %v4402 = vld [vmem:[%s4401] sm:$0xff]
    %v4403 = vld [vmem:[%s4401 + $0x8] sm:$0xff]
    %v4404 = vld [vmem:[%s4401 + $0x10] sm:$0xff]
    %v4405 = vld [vmem:[%s4401 + $0x18] sm:$0xff]
    %v4406 = vld [vmem:[%s4401 + $0x20] sm:$0xff]
    %v4407 = vld [vmem:[%s4401 + $0x28] sm:$0xff]
    %v4408 = vld [vmem:[%s4401 + $0x30] sm:$0xff]
    %v4409 = vld [vmem:[%s4401 + $0x38] sm:$0xff]
    %s4410 = scalar_lea.vmem %s11, 4
    %v4411 = vld [vmem:[%s4410] sm:$0x3]
    %v4413 = vperm.slane %v4411, 0
    %v4414 = vperm.slane %v4411, 1
    %v4418 = vsel %vm247, %v4400, 0
    %4420 = vmatpush.msra.mxu0 0.0
    %4421 = vmatpush.msra.mxu0 0.0
    %4422 = vmatpush.msra.mxu0 0.0
    %4423 = vmatpush.msra.mxu0 0.0
    %4424 = vmatpush.msra.mxu0 0.0
    %4425 = vmatpush.msra.mxu0 0.0
    %4426 = vmatpush.msra.mxu0 0.0
    %4427 = vmatpush.msra.mxu0 0.0
    %4428 = vmatpush.msra.mxu0 0.0
    %4429 = vmatpush.msra.mxu0 0.0
    %4430 = vmatpush.msra.mxu0 0.0
    %4431 = vmatpush.msra.mxu0 0.0
    %4432 = vmatpush.msra.mxu0 %v4408
    %4433 = vmatpush.msra.mxu0 %v4406
    %4434 = vmatpush.msra.mxu0 %v4404
    %4435 = vmatpush.msra.mxu0 %v4402
    %4436 = vmatmul.f32.gmra.mxu0 %v4418
    %v4437 = vpop.f32.mrf.mxu0
    %v4438 = vadd.f32 %v4413, %v4437
    %4439 = vdwg.mxu0
    %4440 = vmatpush.msra.mxu0 0.0
    %4441 = vmatpush.msra.mxu0 0.0
    %4442 = vmatpush.msra.mxu0 0.0
    %4443 = vmatpush.msra.mxu0 0.0
    %4444 = vmatpush.msra.mxu0 0.0
    %4445 = vmatpush.msra.mxu0 0.0
    %4446 = vmatpush.msra.mxu0 0.0
    %4447 = vmatpush.msra.mxu0 0.0
    %4448 = vmatpush.msra.mxu0 0.0
    %4449 = vmatpush.msra.mxu0 0.0
    %4450 = vmatpush.msra.mxu0 0.0
    %4451 = vmatpush.msra.mxu0 0.0
    %4452 = vmatpush.msra.mxu0 %v4409
    %4453 = vmatpush.msra.mxu0 %v4407
    %4454 = vmatpush.msra.mxu0 %v4405
    %4455 = vmatpush.msra.mxu0 %v4403
    %4456 = vmatmul.f32.gmra.mxu0 %v4418
    %v4457 = vpop.f32.mrf.mxu0
    %v4458 = vadd.f32 %v4414, %v4457
    %4459 = vdwg.mxu0
    %v4460 = vsel %vm4282, %v4438, %v4276
    %v4461 = vsel %vm4283, %v4458, %v4277
    %vm4462 = vcmp.ge.s32.totalorder %v3914, 96
    %vm4463 = vcmp.ge.s32.totalorder %v3915, 96
    %vm4464 = vcmp.lt.s32.totalorder %v3914, 128
    %vm4465 = vcmp.lt.s32.totalorder %v3915, 128
    %vm4466 = vmand %vm4462, %vm4464
    %vm4467 = vmand %vm4463, %vm4465
    %v4468 = vsel %vm4466, %v3909, %v4460
    %v4469 = vsel %vm4467, %v3910, %v4461
    %v4470 = vmax.f32 %v4468, 0.0
    %v4471 = vmax.f32 %v4469, 0.0
    %s4472 = scalar_lea.vmem %s6, 768
    %v4473 = vld [vmem:[%s4472] sm:$0xff]
    %v4474 = vld [vmem:[%s4472 + $0x8] sm:$0xff]
    %v4475 = vld [vmem:[%s4472 + $0x10] sm:$0xff]
    %v4476 = vld [vmem:[%s4472 + $0x18] sm:$0xff]
    %v4477 = vld [vmem:[%s4472 + $0x20] sm:$0xff]
    %v4478 = vld [vmem:[%s4472 + $0x28] sm:$0xff]
    %v4479 = vld [vmem:[%s4472 + $0x30] sm:$0xff]
    %v4480 = vld [vmem:[%s4472 + $0x38] sm:$0xff]
    %v4481 = vld [vmem:[%s4472 + $0x40] sm:$0xff]
    %v4482 = vld [vmem:[%s4472 + $0x48] sm:$0xff]
    %v4483 = vld [vmem:[%s4472 + $0x50] sm:$0xff]
    %v4484 = vld [vmem:[%s4472 + $0x58] sm:$0xff]
    %v4485 = vld [vmem:[%s4472 + $0x60] sm:$0xff]
    %v4486 = vld [vmem:[%s4472 + $0x68] sm:$0xff]
    %v4487 = vld [vmem:[%s4472 + $0x70] sm:$0xff]
    %v4488 = vld [vmem:[%s4472 + $0x78] sm:$0xff]
    %v4489 = vld [vmem:[%s4472 + $0x80] sm:$0xff]
    %v4490 = vld [vmem:[%s4472 + $0x88] sm:$0xff]
    %v4491 = vld [vmem:[%s4472 + $0x90] sm:$0xff]
    %v4492 = vld [vmem:[%s4472 + $0x98] sm:$0xff]
    %v4493 = vld [vmem:[%s4472 + $0xa0] sm:$0xff]
    %v4494 = vld [vmem:[%s4472 + $0xa8] sm:$0xff]
    %v4495 = vld [vmem:[%s4472 + $0xb0] sm:$0xff]
    %v4496 = vld [vmem:[%s4472 + $0xb8] sm:$0xff]
    %v4497 = vld [vmem:[%s4472 + $0xc0] sm:$0xff]
    %v4498 = vld [vmem:[%s4472 + $0xc8] sm:$0xff]
    %v4499 = vld [vmem:[%s4472 + $0xd0] sm:$0xff]
    %v4500 = vld [vmem:[%s4472 + $0xd8] sm:$0xff]
    %v4501 = vld [vmem:[%s4472 + $0xe0] sm:$0xff]
    %v4502 = vld [vmem:[%s4472 + $0xe8] sm:$0xff]
    %v4503 = vld [vmem:[%s4472 + $0xf0] sm:$0xff]
    %v4504 = vld [vmem:[%s4472 + $0xf8] sm:$0xff]
    %s4505 = scalar_lea.vmem %s7, 3
    %v4506 = vld [vmem:[%s4505] sm:$0x1]
    %v4508 = vperm.slane %v4506, 0
    %4510 = vmatpush.msra.mxu0 %v4488
    %4511 = vmatpush.msra.mxu0 %v4487
    %4512 = vmatpush.msra.mxu0 %v4486
    %4513 = vmatpush.msra.mxu0 %v4485
    %4514 = vmatpush.msra.mxu0 %v4484
    %4515 = vmatpush.msra.mxu0 %v4483
    %4516 = vmatpush.msra.mxu0 %v4482
    %4517 = vmatpush.msra.mxu0 %v4481
    %4518 = vmatpush.msra.mxu0 %v4480
    %4519 = vmatpush.msra.mxu0 %v4479
    %4520 = vmatpush.msra.mxu0 %v4478
    %4521 = vmatpush.msra.mxu0 %v4477
    %4522 = vmatpush.msra.mxu0 %v4476
    %4523 = vmatpush.msra.mxu0 %v4475
    %4524 = vmatpush.msra.mxu0 %v4474
    %4525 = vmatpush.msra.mxu0 %v4473
    %4526 = vmatmul.f32.gmra.mxu0 %v4470
    %v4527 = vpop.f32.mrf.mxu0
    %v4528 = vadd.f32 %v4508, %v4527
    %4529 = vdwg.mxu0
    %4530 = vmatpush.msra.mxu0 %v4504
    %4531 = vmatpush.msra.mxu0 %v4503
    %4532 = vmatpush.msra.mxu0 %v4502
    %4533 = vmatpush.msra.mxu0 %v4501
    %4534 = vmatpush.msra.mxu0 %v4500
    %4535 = vmatpush.msra.mxu0 %v4499
    %4536 = vmatpush.msra.mxu0 %v4498
    %4537 = vmatpush.msra.mxu0 %v4497
    %4538 = vmatpush.msra.mxu0 %v4496
    %4539 = vmatpush.msra.mxu0 %v4495
    %4540 = vmatpush.msra.mxu0 %v4494
    %4541 = vmatpush.msra.mxu0 %v4493
    %4542 = vmatpush.msra.mxu0 %v4492
    %4543 = vmatpush.msra.mxu0 %v4491
    %4544 = vmatpush.msra.mxu0 %v4490
    %4545 = vmatpush.msra.mxu0 %v4489
    %4546 = vmatmul.f32.gmra.mxu0 %v4471
    %v4547 = vpop.f32.mrf.mxu0
    %v4548 = vadd.f32 %v4528, %v4547
    %4549 = vdwg.mxu0
    %v4550 = vmax.f32 %v4548, 0.0
    %s4551 = scalar_lea.vmem %s8, 96
    %v4552 = vld [vmem:[%s4551] sm:$0xff]
    %v4553 = vld [vmem:[%s4551 + $0x8] sm:$0xff]
    %v4554 = vld [vmem:[%s4551 + $0x10] sm:$0xff]
    %v4555 = vld [vmem:[%s4551 + $0x18] sm:$0xff]
    %s4556 = scalar_lea.vmem %s9, 3
    %v4557 = vld [vmem:[%s4556] sm:$0x1]
    %v4559 = vperm.slane %v4557, 0
    %v4562 = vsel %vm247, %v4550, 0
    %4564 = vmatpush.msra.mxu0 0.0
    %4565 = vmatpush.msra.mxu0 0.0
    %4566 = vmatpush.msra.mxu0 0.0
    %4567 = vmatpush.msra.mxu0 0.0
    %4568 = vmatpush.msra.mxu0 0.0
    %4569 = vmatpush.msra.mxu0 0.0
    %4570 = vmatpush.msra.mxu0 0.0
    %4571 = vmatpush.msra.mxu0 0.0
    %4572 = vmatpush.msra.mxu0 0.0
    %4573 = vmatpush.msra.mxu0 0.0
    %4574 = vmatpush.msra.mxu0 0.0
    %4575 = vmatpush.msra.mxu0 0.0
    %4576 = vmatpush.msra.mxu0 %v4555
    %4577 = vmatpush.msra.mxu0 %v4554
    %4578 = vmatpush.msra.mxu0 %v4553
    %4579 = vmatpush.msra.mxu0 %v4552
    %4580 = vmatmul.f32.gmra.mxu0 %v4562
    %v4581 = vpop.f32.mrf.mxu0
    %v4582 = vadd.f32 %v4559, %v4581
    %4583 = vdwg.mxu0
    %v4584 = vmax.f32 %v4582, 0.0
    %s4585 = scalar_lea.vmem %s10, 192
    %v4586 = vld [vmem:[%s4585] sm:$0xff]
    %v4587 = vld [vmem:[%s4585 + $0x8] sm:$0xff]
    %v4588 = vld [vmem:[%s4585 + $0x10] sm:$0xff]
    %v4589 = vld [vmem:[%s4585 + $0x18] sm:$0xff]
    %v4590 = vld [vmem:[%s4585 + $0x20] sm:$0xff]
    %v4591 = vld [vmem:[%s4585 + $0x28] sm:$0xff]
    %v4592 = vld [vmem:[%s4585 + $0x30] sm:$0xff]
    %v4593 = vld [vmem:[%s4585 + $0x38] sm:$0xff]
    %s4594 = scalar_lea.vmem %s11, 6
    %v4595 = vld [vmem:[%s4594] sm:$0x3]
    %v4597 = vperm.slane %v4595, 0
    %v4598 = vperm.slane %v4595, 1
    %v4602 = vsel %vm247, %v4584, 0
    %4604 = vmatpush.msra.mxu0 0.0
    %4605 = vmatpush.msra.mxu0 0.0
    %4606 = vmatpush.msra.mxu0 0.0
    %4607 = vmatpush.msra.mxu0 0.0
    %4608 = vmatpush.msra.mxu0 0.0
    %4609 = vmatpush.msra.mxu0 0.0
    %4610 = vmatpush.msra.mxu0 0.0
    %4611 = vmatpush.msra.mxu0 0.0
    %4612 = vmatpush.msra.mxu0 0.0
    %4613 = vmatpush.msra.mxu0 0.0
    %4614 = vmatpush.msra.mxu0 0.0
    %4615 = vmatpush.msra.mxu0 0.0
    %4616 = vmatpush.msra.mxu0 %v4592
    %4617 = vmatpush.msra.mxu0 %v4590
    %4618 = vmatpush.msra.mxu0 %v4588
    %4619 = vmatpush.msra.mxu0 %v4586
    %4620 = vmatmul.f32.gmra.mxu0 %v4602
    %v4621 = vpop.f32.mrf.mxu0
    %v4622 = vadd.f32 %v4597, %v4621
    %4623 = vdwg.mxu0
    %4624 = vmatpush.msra.mxu0 0.0
    %4625 = vmatpush.msra.mxu0 0.0
    %4626 = vmatpush.msra.mxu0 0.0
    %4627 = vmatpush.msra.mxu0 0.0
    %4628 = vmatpush.msra.mxu0 0.0
    %4629 = vmatpush.msra.mxu0 0.0
    %4630 = vmatpush.msra.mxu0 0.0
    %4631 = vmatpush.msra.mxu0 0.0
    %4632 = vmatpush.msra.mxu0 0.0
    %4633 = vmatpush.msra.mxu0 0.0
    %4634 = vmatpush.msra.mxu0 0.0
    %4635 = vmatpush.msra.mxu0 0.0
    %4636 = vmatpush.msra.mxu0 %v4593
    %4637 = vmatpush.msra.mxu0 %v4591
    %4638 = vmatpush.msra.mxu0 %v4589
    %4639 = vmatpush.msra.mxu0 %v4587
    %4640 = vmatmul.f32.gmra.mxu0 %v4602
    %v4641 = vpop.f32.mrf.mxu0
    %v4642 = vadd.f32 %v4598, %v4641
    %4643 = vdwg.mxu0
    %v4644 = vsel %vm4466, %v4622, %v4460
    %v4645 = vsel %vm4467, %v4642, %v4461
    %vm4646 = vcmp.ge.s32.totalorder %v3914, 128
    %vm4647 = vcmp.ge.s32.totalorder %v3915, 128
    %vm4648 = vcmp.lt.s32.totalorder %v3914, 160
    %vm4649 = vcmp.lt.s32.totalorder %v3915, 160
    %vm4650 = vmand %vm4646, %vm4648
    %vm4651 = vmand %vm4647, %vm4649
    %v4652 = vsel %vm4650, %v3909, %v4644
    %v4653 = vsel %vm4651, %v3910, %v4645
    %v4654 = vmax.f32 %v4652, 0.0
    %v4655 = vmax.f32 %v4653, 0.0
    %s4656 = scalar_lea.vmem %s6, 1024
    %v4657 = vld [vmem:[%s4656] sm:$0xff]
    %v4658 = vld [vmem:[%s4656 + $0x8] sm:$0xff]
    %v4659 = vld [vmem:[%s4656 + $0x10] sm:$0xff]
    %v4660 = vld [vmem:[%s4656 + $0x18] sm:$0xff]
    %v4661 = vld [vmem:[%s4656 + $0x20] sm:$0xff]
    %v4662 = vld [vmem:[%s4656 + $0x28] sm:$0xff]
    %v4663 = vld [vmem:[%s4656 + $0x30] sm:$0xff]
    %v4664 = vld [vmem:[%s4656 + $0x38] sm:$0xff]
    %v4665 = vld [vmem:[%s4656 + $0x40] sm:$0xff]
    %v4666 = vld [vmem:[%s4656 + $0x48] sm:$0xff]
    %v4667 = vld [vmem:[%s4656 + $0x50] sm:$0xff]
    %v4668 = vld [vmem:[%s4656 + $0x58] sm:$0xff]
    %v4669 = vld [vmem:[%s4656 + $0x60] sm:$0xff]
    %v4670 = vld [vmem:[%s4656 + $0x68] sm:$0xff]
    %v4671 = vld [vmem:[%s4656 + $0x70] sm:$0xff]
    %v4672 = vld [vmem:[%s4656 + $0x78] sm:$0xff]
    %v4673 = vld [vmem:[%s4656 + $0x80] sm:$0xff]
    %v4674 = vld [vmem:[%s4656 + $0x88] sm:$0xff]
    %v4675 = vld [vmem:[%s4656 + $0x90] sm:$0xff]
    %v4676 = vld [vmem:[%s4656 + $0x98] sm:$0xff]
    %v4677 = vld [vmem:[%s4656 + $0xa0] sm:$0xff]
    %v4678 = vld [vmem:[%s4656 + $0xa8] sm:$0xff]
    %v4679 = vld [vmem:[%s4656 + $0xb0] sm:$0xff]
    %v4680 = vld [vmem:[%s4656 + $0xb8] sm:$0xff]
    %v4681 = vld [vmem:[%s4656 + $0xc0] sm:$0xff]
    %v4682 = vld [vmem:[%s4656 + $0xc8] sm:$0xff]
    %v4683 = vld [vmem:[%s4656 + $0xd0] sm:$0xff]
    %v4684 = vld [vmem:[%s4656 + $0xd8] sm:$0xff]
    %v4685 = vld [vmem:[%s4656 + $0xe0] sm:$0xff]
    %v4686 = vld [vmem:[%s4656 + $0xe8] sm:$0xff]
    %v4687 = vld [vmem:[%s4656 + $0xf0] sm:$0xff]
    %v4688 = vld [vmem:[%s4656 + $0xf8] sm:$0xff]
    %s4689 = scalar_lea.vmem %s7, 4
    %v4690 = vld [vmem:[%s4689] sm:$0x1]
    %v4692 = vperm.slane %v4690, 0
    %4694 = vmatpush.msra.mxu0 %v4672
    %4695 = vmatpush.msra.mxu0 %v4671
    %4696 = vmatpush.msra.mxu0 %v4670
    %4697 = vmatpush.msra.mxu0 %v4669
    %4698 = vmatpush.msra.mxu0 %v4668
    %4699 = vmatpush.msra.mxu0 %v4667
    %4700 = vmatpush.msra.mxu0 %v4666
    %4701 = vmatpush.msra.mxu0 %v4665
    %4702 = vmatpush.msra.mxu0 %v4664
    %4703 = vmatpush.msra.mxu0 %v4663
    %4704 = vmatpush.msra.mxu0 %v4662
    %4705 = vmatpush.msra.mxu0 %v4661
    %4706 = vmatpush.msra.mxu0 %v4660
    %4707 = vmatpush.msra.mxu0 %v4659
    %4708 = vmatpush.msra.mxu0 %v4658
    %4709 = vmatpush.msra.mxu0 %v4657
    %4710 = vmatmul.f32.gmra.mxu0 %v4654
    %v4711 = vpop.f32.mrf.mxu0
    %v4712 = vadd.f32 %v4692, %v4711
    %4713 = vdwg.mxu0
    %4714 = vmatpush.msra.mxu0 %v4688
    %4715 = vmatpush.msra.mxu0 %v4687
    %4716 = vmatpush.msra.mxu0 %v4686
    %4717 = vmatpush.msra.mxu0 %v4685
    %4718 = vmatpush.msra.mxu0 %v4684
    %4719 = vmatpush.msra.mxu0 %v4683
    %4720 = vmatpush.msra.mxu0 %v4682
    %4721 = vmatpush.msra.mxu0 %v4681
    %4722 = vmatpush.msra.mxu0 %v4680
    %4723 = vmatpush.msra.mxu0 %v4679
    %4724 = vmatpush.msra.mxu0 %v4678
    %4725 = vmatpush.msra.mxu0 %v4677
    %4726 = vmatpush.msra.mxu0 %v4676
    %4727 = vmatpush.msra.mxu0 %v4675
    %4728 = vmatpush.msra.mxu0 %v4674
    %4729 = vmatpush.msra.mxu0 %v4673
    %4730 = vmatmul.f32.gmra.mxu0 %v4655
    %v4731 = vpop.f32.mrf.mxu0
    %v4732 = vadd.f32 %v4712, %v4731
    %4733 = vdwg.mxu0
    %v4734 = vmax.f32 %v4732, 0.0
    %s4735 = scalar_lea.vmem %s8, 128
    %v4736 = vld [vmem:[%s4735] sm:$0xff]
    %v4737 = vld [vmem:[%s4735 + $0x8] sm:$0xff]
    %v4738 = vld [vmem:[%s4735 + $0x10] sm:$0xff]
    %v4739 = vld [vmem:[%s4735 + $0x18] sm:$0xff]
    %s4740 = scalar_lea.vmem %s9, 4
    %v4741 = vld [vmem:[%s4740] sm:$0x1]
    %v4743 = vperm.slane %v4741, 0
    %v4746 = vsel %vm247, %v4734, 0
    %4748 = vmatpush.msra.mxu0 0.0
    %4749 = vmatpush.msra.mxu0 0.0
    %4750 = vmatpush.msra.mxu0 0.0
    %4751 = vmatpush.msra.mxu0 0.0
    %4752 = vmatpush.msra.mxu0 0.0
    %4753 = vmatpush.msra.mxu0 0.0
    %4754 = vmatpush.msra.mxu0 0.0
    %4755 = vmatpush.msra.mxu0 0.0
    %4756 = vmatpush.msra.mxu0 0.0
    %4757 = vmatpush.msra.mxu0 0.0
    %4758 = vmatpush.msra.mxu0 0.0
    %4759 = vmatpush.msra.mxu0 0.0
    %4760 = vmatpush.msra.mxu0 %v4739
    %4761 = vmatpush.msra.mxu0 %v4738
    %4762 = vmatpush.msra.mxu0 %v4737
    %4763 = vmatpush.msra.mxu0 %v4736
    %4764 = vmatmul.f32.gmra.mxu0 %v4746
    %v4765 = vpop.f32.mrf.mxu0
    %v4766 = vadd.f32 %v4743, %v4765
    %4767 = vdwg.mxu0
    %v4768 = vmax.f32 %v4766, 0.0
    %s4769 = scalar_lea.vmem %s10, 256
    %v4770 = vld [vmem:[%s4769] sm:$0xff]
    %v4771 = vld [vmem:[%s4769 + $0x8] sm:$0xff]
    %v4772 = vld [vmem:[%s4769 + $0x10] sm:$0xff]
    %v4773 = vld [vmem:[%s4769 + $0x18] sm:$0xff]
    %v4774 = vld [vmem:[%s4769 + $0x20] sm:$0xff]
    %v4775 = vld [vmem:[%s4769 + $0x28] sm:$0xff]
    %v4776 = vld [vmem:[%s4769 + $0x30] sm:$0xff]
    %v4777 = vld [vmem:[%s4769 + $0x38] sm:$0xff]
    %s4778 = scalar_lea.vmem %s11, 8
    %v4779 = vld [vmem:[%s4778] sm:$0x3]
    %v4781 = vperm.slane %v4779, 0
    %v4782 = vperm.slane %v4779, 1
    %v4786 = vsel %vm247, %v4768, 0
    %4788 = vmatpush.msra.mxu0 0.0
    %4789 = vmatpush.msra.mxu0 0.0
    %4790 = vmatpush.msra.mxu0 0.0
    %4791 = vmatpush.msra.mxu0 0.0
    %4792 = vmatpush.msra.mxu0 0.0
    %4793 = vmatpush.msra.mxu0 0.0
    %4794 = vmatpush.msra.mxu0 0.0
    %4795 = vmatpush.msra.mxu0 0.0
    %4796 = vmatpush.msra.mxu0 0.0
    %4797 = vmatpush.msra.mxu0 0.0
    %4798 = vmatpush.msra.mxu0 0.0
    %4799 = vmatpush.msra.mxu0 0.0
    %4800 = vmatpush.msra.mxu0 %v4776
    %4801 = vmatpush.msra.mxu0 %v4774
    %4802 = vmatpush.msra.mxu0 %v4772
    %4803 = vmatpush.msra.mxu0 %v4770
    %4804 = vmatmul.f32.gmra.mxu0 %v4786
    %v4805 = vpop.f32.mrf.mxu0
    %v4806 = vadd.f32 %v4781, %v4805
    %4807 = vdwg.mxu0
    %4808 = vmatpush.msra.mxu0 0.0
    %4809 = vmatpush.msra.mxu0 0.0
    %4810 = vmatpush.msra.mxu0 0.0
    %4811 = vmatpush.msra.mxu0 0.0
    %4812 = vmatpush.msra.mxu0 0.0
    %4813 = vmatpush.msra.mxu0 0.0
    %4814 = vmatpush.msra.mxu0 0.0
    %4815 = vmatpush.msra.mxu0 0.0
    %4816 = vmatpush.msra.mxu0 0.0
    %4817 = vmatpush.msra.mxu0 0.0
    %4818 = vmatpush.msra.mxu0 0.0
    %4819 = vmatpush.msra.mxu0 0.0
    %4820 = vmatpush.msra.mxu0 %v4777
    %4821 = vmatpush.msra.mxu0 %v4775
    %4822 = vmatpush.msra.mxu0 %v4773
    %4823 = vmatpush.msra.mxu0 %v4771
    %4824 = vmatmul.f32.gmra.mxu0 %v4786
    %v4825 = vpop.f32.mrf.mxu0
    %v4826 = vadd.f32 %v4782, %v4825
    %4827 = vdwg.mxu0
    %v4828 = vsel %vm4650, %v4806, %v4644
    %v4829 = vsel %vm4651, %v4826, %v4645
    %vm4830 = vcmp.ge.s32.totalorder %v3914, 160
    %vm4831 = vcmp.ge.s32.totalorder %v3915, 160
    %vm4832 = vcmp.lt.s32.totalorder %v3914, 192
    %vm4833 = vcmp.lt.s32.totalorder %v3915, 192
    %vm4834 = vmand %vm4830, %vm4832
    %vm4835 = vmand %vm4831, %vm4833
    %v4836 = vsel %vm4834, %v3909, %v4828
    %v4837 = vsel %vm4835, %v3910, %v4829
    %v4838 = vmax.f32 %v4836, 0.0
    %v4839 = vmax.f32 %v4837, 0.0
    %s4840 = scalar_lea.vmem %s6, 1280
    %v4841 = vld [vmem:[%s4840] sm:$0xff]
    %v4842 = vld [vmem:[%s4840 + $0x8] sm:$0xff]
    %v4843 = vld [vmem:[%s4840 + $0x10] sm:$0xff]
    %v4844 = vld [vmem:[%s4840 + $0x18] sm:$0xff]
    %v4845 = vld [vmem:[%s4840 + $0x20] sm:$0xff]
    %v4846 = vld [vmem:[%s4840 + $0x28] sm:$0xff]
    %v4847 = vld [vmem:[%s4840 + $0x30] sm:$0xff]
    %v4848 = vld [vmem:[%s4840 + $0x38] sm:$0xff]
    %v4849 = vld [vmem:[%s4840 + $0x40] sm:$0xff]
    %v4850 = vld [vmem:[%s4840 + $0x48] sm:$0xff]
    %v4851 = vld [vmem:[%s4840 + $0x50] sm:$0xff]
    %v4852 = vld [vmem:[%s4840 + $0x58] sm:$0xff]
    %v4853 = vld [vmem:[%s4840 + $0x60] sm:$0xff]
    %v4854 = vld [vmem:[%s4840 + $0x68] sm:$0xff]
    %v4855 = vld [vmem:[%s4840 + $0x70] sm:$0xff]
    %v4856 = vld [vmem:[%s4840 + $0x78] sm:$0xff]
    %v4857 = vld [vmem:[%s4840 + $0x80] sm:$0xff]
    %v4858 = vld [vmem:[%s4840 + $0x88] sm:$0xff]
    %v4859 = vld [vmem:[%s4840 + $0x90] sm:$0xff]
    %v4860 = vld [vmem:[%s4840 + $0x98] sm:$0xff]
    %v4861 = vld [vmem:[%s4840 + $0xa0] sm:$0xff]
    %v4862 = vld [vmem:[%s4840 + $0xa8] sm:$0xff]
    %v4863 = vld [vmem:[%s4840 + $0xb0] sm:$0xff]
    %v4864 = vld [vmem:[%s4840 + $0xb8] sm:$0xff]
    %v4865 = vld [vmem:[%s4840 + $0xc0] sm:$0xff]
    %v4866 = vld [vmem:[%s4840 + $0xc8] sm:$0xff]
    %v4867 = vld [vmem:[%s4840 + $0xd0] sm:$0xff]
    %v4868 = vld [vmem:[%s4840 + $0xd8] sm:$0xff]
    %v4869 = vld [vmem:[%s4840 + $0xe0] sm:$0xff]
    %v4870 = vld [vmem:[%s4840 + $0xe8] sm:$0xff]
    %v4871 = vld [vmem:[%s4840 + $0xf0] sm:$0xff]
    %v4872 = vld [vmem:[%s4840 + $0xf8] sm:$0xff]
    %s4873 = scalar_lea.vmem %s7, 5
    %v4874 = vld [vmem:[%s4873] sm:$0x1]
    %v4876 = vperm.slane %v4874, 0
    %4878 = vmatpush.msra.mxu0 %v4856
    %4879 = vmatpush.msra.mxu0 %v4855
    %4880 = vmatpush.msra.mxu0 %v4854
    %4881 = vmatpush.msra.mxu0 %v4853
    %4882 = vmatpush.msra.mxu0 %v4852
    %4883 = vmatpush.msra.mxu0 %v4851
    %4884 = vmatpush.msra.mxu0 %v4850
    %4885 = vmatpush.msra.mxu0 %v4849
    %4886 = vmatpush.msra.mxu0 %v4848
    %4887 = vmatpush.msra.mxu0 %v4847
    %4888 = vmatpush.msra.mxu0 %v4846
    %4889 = vmatpush.msra.mxu0 %v4845
    %4890 = vmatpush.msra.mxu0 %v4844
    %4891 = vmatpush.msra.mxu0 %v4843
    %4892 = vmatpush.msra.mxu0 %v4842
    %4893 = vmatpush.msra.mxu0 %v4841
    %4894 = vmatmul.f32.gmra.mxu0 %v4838
    %v4895 = vpop.f32.mrf.mxu0
    %v4896 = vadd.f32 %v4876, %v4895
    %4897 = vdwg.mxu0
    %4898 = vmatpush.msra.mxu0 %v4872
    %4899 = vmatpush.msra.mxu0 %v4871
    %4900 = vmatpush.msra.mxu0 %v4870
    %4901 = vmatpush.msra.mxu0 %v4869
    %4902 = vmatpush.msra.mxu0 %v4868
    %4903 = vmatpush.msra.mxu0 %v4867
    %4904 = vmatpush.msra.mxu0 %v4866
    %4905 = vmatpush.msra.mxu0 %v4865
    %4906 = vmatpush.msra.mxu0 %v4864
    %4907 = vmatpush.msra.mxu0 %v4863
    %4908 = vmatpush.msra.mxu0 %v4862
    %4909 = vmatpush.msra.mxu0 %v4861
    %4910 = vmatpush.msra.mxu0 %v4860
    %4911 = vmatpush.msra.mxu0 %v4859
    %4912 = vmatpush.msra.mxu0 %v4858
    %4913 = vmatpush.msra.mxu0 %v4857
    %4914 = vmatmul.f32.gmra.mxu0 %v4839
    %v4915 = vpop.f32.mrf.mxu0
    %v4916 = vadd.f32 %v4896, %v4915
    %4917 = vdwg.mxu0
    %v4918 = vmax.f32 %v4916, 0.0
    %s4919 = scalar_lea.vmem %s8, 160
    %v4920 = vld [vmem:[%s4919] sm:$0xff]
    %v4921 = vld [vmem:[%s4919 + $0x8] sm:$0xff]
    %v4922 = vld [vmem:[%s4919 + $0x10] sm:$0xff]
    %v4923 = vld [vmem:[%s4919 + $0x18] sm:$0xff]
    %s4924 = scalar_lea.vmem %s9, 5
    %v4925 = vld [vmem:[%s4924] sm:$0x1]
    %v4927 = vperm.slane %v4925, 0
    %v4930 = vsel %vm247, %v4918, 0
    %4932 = vmatpush.msra.mxu0 0.0
    %4933 = vmatpush.msra.mxu0 0.0
    %4934 = vmatpush.msra.mxu0 0.0
    %4935 = vmatpush.msra.mxu0 0.0
    %4936 = vmatpush.msra.mxu0 0.0
    %4937 = vmatpush.msra.mxu0 0.0
    %4938 = vmatpush.msra.mxu0 0.0
    %4939 = vmatpush.msra.mxu0 0.0
    %4940 = vmatpush.msra.mxu0 0.0
    %4941 = vmatpush.msra.mxu0 0.0
    %4942 = vmatpush.msra.mxu0 0.0
    %4943 = vmatpush.msra.mxu0 0.0
    %4944 = vmatpush.msra.mxu0 %v4923
    %4945 = vmatpush.msra.mxu0 %v4922
    %4946 = vmatpush.msra.mxu0 %v4921
    %4947 = vmatpush.msra.mxu0 %v4920
    %4948 = vmatmul.f32.gmra.mxu0 %v4930
    %v4949 = vpop.f32.mrf.mxu0
    %v4950 = vadd.f32 %v4927, %v4949
    %4951 = vdwg.mxu0
    %v4952 = vmax.f32 %v4950, 0.0
    %s4953 = scalar_lea.vmem %s10, 320
    %v4954 = vld [vmem:[%s4953] sm:$0xff]
    %v4955 = vld [vmem:[%s4953 + $0x8] sm:$0xff]
    %v4956 = vld [vmem:[%s4953 + $0x10] sm:$0xff]
    %v4957 = vld [vmem:[%s4953 + $0x18] sm:$0xff]
    %v4958 = vld [vmem:[%s4953 + $0x20] sm:$0xff]
    %v4959 = vld [vmem:[%s4953 + $0x28] sm:$0xff]
    %v4960 = vld [vmem:[%s4953 + $0x30] sm:$0xff]
    %v4961 = vld [vmem:[%s4953 + $0x38] sm:$0xff]
    %s4962 = scalar_lea.vmem %s11, 10
    %v4963 = vld [vmem:[%s4962] sm:$0x3]
    %v4965 = vperm.slane %v4963, 0
    %v4966 = vperm.slane %v4963, 1
    %v4970 = vsel %vm247, %v4952, 0
    %4972 = vmatpush.msra.mxu0 0.0
    %4973 = vmatpush.msra.mxu0 0.0
    %4974 = vmatpush.msra.mxu0 0.0
    %4975 = vmatpush.msra.mxu0 0.0
    %4976 = vmatpush.msra.mxu0 0.0
    %4977 = vmatpush.msra.mxu0 0.0
    %4978 = vmatpush.msra.mxu0 0.0
    %4979 = vmatpush.msra.mxu0 0.0
    %4980 = vmatpush.msra.mxu0 0.0
    %4981 = vmatpush.msra.mxu0 0.0
    %4982 = vmatpush.msra.mxu0 0.0
    %4983 = vmatpush.msra.mxu0 0.0
    %4984 = vmatpush.msra.mxu0 %v4960
    %4985 = vmatpush.msra.mxu0 %v4958
    %4986 = vmatpush.msra.mxu0 %v4956
    %4987 = vmatpush.msra.mxu0 %v4954
    %4988 = vmatmul.f32.gmra.mxu0 %v4970
    %v4989 = vpop.f32.mrf.mxu0
    %v4990 = vadd.f32 %v4965, %v4989
    %4991 = vdwg.mxu0
    %4992 = vmatpush.msra.mxu0 0.0
    %4993 = vmatpush.msra.mxu0 0.0
    %4994 = vmatpush.msra.mxu0 0.0
    %4995 = vmatpush.msra.mxu0 0.0
    %4996 = vmatpush.msra.mxu0 0.0
    %4997 = vmatpush.msra.mxu0 0.0
    %4998 = vmatpush.msra.mxu0 0.0
    %4999 = vmatpush.msra.mxu0 0.0
    %5000 = vmatpush.msra.mxu0 0.0
    %5001 = vmatpush.msra.mxu0 0.0
    %5002 = vmatpush.msra.mxu0 0.0
    %5003 = vmatpush.msra.mxu0 0.0
    %5004 = vmatpush.msra.mxu0 %v4961
    %5005 = vmatpush.msra.mxu0 %v4959
    %5006 = vmatpush.msra.mxu0 %v4957
    %5007 = vmatpush.msra.mxu0 %v4955
    %5008 = vmatmul.f32.gmra.mxu0 %v4970
    %v5009 = vpop.f32.mrf.mxu0
    %v5010 = vadd.f32 %v4966, %v5009
    %5011 = vdwg.mxu0
    %v5012 = vsel %vm4834, %v4990, %v4828
    %v5013 = vsel %vm4835, %v5010, %v4829
    %v5014 = vmax.f32 %v5012, 0.0
    %v5015 = vmax.f32 %v5013, 0.0
    %v5016 = vld [vmem:[%s12] sm:$0xff]
    %v5017 = vld [vmem:[%s12 + $0x8] sm:$0xff]
    %v5018 = vld [vmem:[%s12 + $0x10] sm:$0xff]
    %v5019 = vld [vmem:[%s12 + $0x18] sm:$0xff]
    %v5020 = vld [vmem:[%s12 + $0x20] sm:$0xff]
    %v5021 = vld [vmem:[%s12 + $0x28] sm:$0xff]
    %v5022 = vld [vmem:[%s12 + $0x30] sm:$0xff]
    %v5023 = vld [vmem:[%s12 + $0x38] sm:$0xff]
    %v5024 = vld [vmem:[%s12 + $0x40] sm:$0xff]
    %v5025 = vld [vmem:[%s12 + $0x48] sm:$0xff]
    %v5026 = vld [vmem:[%s12 + $0x50] sm:$0xff]
    %v5027 = vld [vmem:[%s12 + $0x58] sm:$0xff]
    %v5028 = vld [vmem:[%s12 + $0x60] sm:$0xff]
    %v5029 = vld [vmem:[%s12 + $0x68] sm:$0xff]
    %v5030 = vld [vmem:[%s12 + $0x70] sm:$0xff]
    %v5031 = vld [vmem:[%s12 + $0x78] sm:$0xff]
    %v5032 = vld [vmem:[%s12 + $0x80] sm:$0xff]
    %v5033 = vld [vmem:[%s12 + $0x88] sm:$0xff]
    %v5034 = vld [vmem:[%s12 + $0x90] sm:$0xff]
    %v5035 = vld [vmem:[%s12 + $0x98] sm:$0xff]
    %v5036 = vld [vmem:[%s12 + $0xa0] sm:$0xff]
    %v5037 = vld [vmem:[%s12 + $0xa8] sm:$0xff]
    %v5038 = vld [vmem:[%s12 + $0xb0] sm:$0xff]
    %v5039 = vld [vmem:[%s12 + $0xb8] sm:$0xff]
    %v5040 = vld [vmem:[%s12 + $0xc0] sm:$0xff]
    %v5041 = vld [vmem:[%s12 + $0xc8] sm:$0xff]
    %v5042 = vld [vmem:[%s12 + $0xd0] sm:$0xff]
    %v5043 = vld [vmem:[%s12 + $0xd8] sm:$0xff]
    %v5044 = vld [vmem:[%s12 + $0xe0] sm:$0xff]
    %v5045 = vld [vmem:[%s12 + $0xe8] sm:$0xff]
    %v5046 = vld [vmem:[%s12 + $0xf0] sm:$0xff]
    %v5047 = vld [vmem:[%s12 + $0xf8] sm:$0xff]
    %v5048 = vld [vmem:[%s13] sm:$0x1]
    %v5050 = vperm.slane %v5048, 0
    %5052 = vmatpush.msra.mxu0 %v5031
    %5053 = vmatpush.msra.mxu0 %v5030
    %5054 = vmatpush.msra.mxu0 %v5029
    %5055 = vmatpush.msra.mxu0 %v5028
    %5056 = vmatpush.msra.mxu0 %v5027
    %5057 = vmatpush.msra.mxu0 %v5026
    %5058 = vmatpush.msra.mxu0 %v5025
    %5059 = vmatpush.msra.mxu0 %v5024
    %5060 = vmatpush.msra.mxu0 %v5023
    %5061 = vmatpush.msra.mxu0 %v5022
    %5062 = vmatpush.msra.mxu0 %v5021
    %5063 = vmatpush.msra.mxu0 %v5020
    %5064 = vmatpush.msra.mxu0 %v5019
    %5065 = vmatpush.msra.mxu0 %v5018
    %5066 = vmatpush.msra.mxu0 %v5017
    %5067 = vmatpush.msra.mxu0 %v5016
    %5068 = vmatmul.f32.gmra.mxu0 %v5014
    %v5069 = vpop.f32.mrf.mxu0
    %v5070 = vadd.f32 %v5050, %v5069
    %5071 = vdwg.mxu0
    %5072 = vmatpush.msra.mxu0 %v5047
    %5073 = vmatpush.msra.mxu0 %v5046
    %5074 = vmatpush.msra.mxu0 %v5045
    %5075 = vmatpush.msra.mxu0 %v5044
    %5076 = vmatpush.msra.mxu0 %v5043
    %5077 = vmatpush.msra.mxu0 %v5042
    %5078 = vmatpush.msra.mxu0 %v5041
    %5079 = vmatpush.msra.mxu0 %v5040
    %5080 = vmatpush.msra.mxu0 %v5039
    %5081 = vmatpush.msra.mxu0 %v5038
    %5082 = vmatpush.msra.mxu0 %v5037
    %5083 = vmatpush.msra.mxu0 %v5036
    %5084 = vmatpush.msra.mxu0 %v5035
    %5085 = vmatpush.msra.mxu0 %v5034
    %5086 = vmatpush.msra.mxu0 %v5033
    %5087 = vmatpush.msra.mxu0 %v5032
    %5088 = vmatmul.f32.gmra.mxu0 %v5015
    %v5089 = vpop.f32.mrf.mxu0
    %v5090 = vadd.f32 %v5070, %v5089
    %5091 = vdwg.mxu0
    %vm5092 = vcmask 130048
    %5093 = vst.msk [vmem:[#allocation4] sm:$0xff] %vm5092, %v5090
    // Predicated region
    $region58: #{tpu_custom_call.1} parent=1 // pred_check
      _
    $region59: #{tpu_custom_call.1} parent=1 // pred_check_branch
      %5095 = sbr.rel (0) target = $region61
    $region60: #{tpu_custom_call.1} parent=1 // pred_region
      %5097 = vsyncadd [#allocation5], 0
      %s5099 = sshll.u32 [#allocation4], 4
      %s5100 = int_to_ptr.vmem [resolvable:$true] %s5099
      %s5101 = sshll.u32 %s14, 4
      %s5102 = int_to_ptr.hbm [resolvable:$true] %s5101
      %5104 = dma.vmem_to_hbm [thread:$0]  %s5100, 128, %s5102, [#allocation5]
    $region61: #{tpu_custom_call.1} parent=1 // pred_fallthru
      _
    // Predicated region
    $region62: #{tpu_custom_call.1} parent=1 // pred_check
      _
    $region63: #{tpu_custom_call.1} parent=1 // pred_check_branch
      %5106 = sbr.rel (0) target = $region65
    $region64: #{tpu_custom_call.1} parent=1 // pred_region
      %5108 = vsyncadd [#allocation7], 0
      %s5110 = sshll.u32 [#allocation6], 4
      %s5111 = int_to_ptr.vmem [resolvable:$true] %s5110
      %s5112 = sshll.u32 %s15, 4
      %s5113 = int_to_ptr.hbm [resolvable:$true] %s5112
      %5115 = dma.vmem_to_hbm [thread:$0]  %s5111, 256, %s5113, [#allocation7]
    $region65: #{tpu_custom_call.1} parent=1 // pred_fallthru
      _
    // Predicated region
    $region66: #{tpu_custom_call.1} parent=1 // pred_check
      _
    $region67: #{tpu_custom_call.1} parent=1 // pred_check_branch
      %5117 = sbr.rel (0) target = $region69
    $region68: #{tpu_custom_call.1} parent=1 // pred_region
      %5119 = dma.done [#allocation5], 128
    $region69: #{tpu_custom_call.1} parent=1 // pred_fallthru
      _
    // Predicated region
    $region70: #{tpu_custom_call.1} parent=1 // pred_check
      _
    $region71: #{tpu_custom_call.1} parent=1 // pred_check_branch
      %5121 = sbr.rel (0) target = $region73
    $region72: #{tpu_custom_call.1} parent=1 // pred_region
      %5123 = dma.done [#allocation7], 256
    $region73: #{tpu_custom_call.1} parent=1 // pred_fallthru
      _
    %5124 = vsyncpa [#allocation5], 1
    %5125 = vsyncpa [#allocation7], 1

</llo_original>
